<compile_context>
chip_gen: v7x
topology: tpu7x:2x2x1
jax: 0.10.0
libtpu: 0.0.40
codegen_flags: <defaults>
</compile_context>

<pallas_src>
import functools

import jax
import jax.numpy as jnp
from jax.experimental import pallas as pl
from jax.experimental.pallas import tpu as pltpu


LANES = 128
GROUP_K_TARGET = 640      # pack spatial taps into >=128-deep MXU contractions


def _round_up(x, m):
    return (x + m - 1) // m * m


# ----------------------------------------------------------------------------
# Pallas kernel: flattened-row direct conv, K-packed taps, fused epilogue
# ----------------------------------------------------------------------------
def _conv_body(x_ref, w_ref, b_ref, add_ref, o_ref, pack_ref, *,
               tap_offsets, kc, m_rows, groups, apply_relu):
    """One grid step = one sample.

    x_ref   : (rows_in, kc)    bf16  whole-sample input slab (spatial positions
                                     flattened into rows, channels x angular
                                     positions on lanes)
    w_ref   : (T*kc, cop)      bf16  K-packed weights (resident across steps)
    b_ref   : (1, cop)         f32   bias
    add_ref : (m_rows, cop)    f32   optional fused-add operand (ReconBlock sum)
    o_ref   : (m_rows, cop)          output; doubles as the f32 accumulator
                                     when the taps are split into >1 K-group
    pack_ref: (m_rows, max_kg) bf16  scratch holding the K-packed LHS
    """
    n_groups = len(groups)
    acc = None
    for gi, grp in enumerate(groups):
        # Pack this group's spatial taps along the contraction dim: one
        # sublane-shifted VMEM copy per tap (paid once), then a single wide
        # MXU matmul instead of T tiny K=kc pushes.
        for li, t in enumerate(grp):
            s = tap_offsets[t]
            pack_ref[:, li * kc:(li + 1) * kc] = x_ref[s:s + m_rows, :]
        kg = len(grp) * kc
        r0 = grp[0] * kc
        part = jnp.dot(pack_ref[:, :kg], w_ref[r0:r0 + kg, :],
                       preferred_element_type=jnp.float32)
        if n_groups == 1:
            acc = part
        elif gi == 0:
            o_ref[...] = part                     # f32 output == accumulator
        elif gi < n_groups - 1:
            o_ref[...] += part
        else:
            acc = o_ref[...] + part
    res = acc + b_ref[...]
    if apply_relu:
        res = jnp.maximum(res, 0.0)
    if add_ref is not None:                       # fused ReconBlock add
        res = res + add_ref[...].astype(jnp.float32)
    o_ref[...] = res.astype(o_ref.dtype)


def _conv_kernel(x_ref, w_ref, b_ref, o_ref, pack_ref, **statics):
    _conv_body(x_ref, w_ref, b_ref, None, o_ref, pack_ref, **statics)


def _conv_add_kernel(x_ref, w_ref, b_ref, add_ref, o_ref, pack_ref, **statics):
    _conv_body(x_ref, w_ref, b_ref, add_ref, o_ref, pack_ref, **statics)


def conv_flat(x, wt, bias_row, *, kc, kh, kw, wf, m_rows, apply_relu,
              out_dtype, add=None, vmem_limit=64 * 1024 * 1024):
    """Direct conv on the flattened full-width-row representation.

    x   : (N, rows_in, kc) bf16 — spatial positions flattened (row width = the
          full padded width `wf`) on the row axis; channels x angular taps on
          lanes.
    wt  : (kh*kw*kc, cop) bf16 K-packed weights; bias_row: (1, cop) f32.
    add : optional (N, m_rows, cop) f32 tensor added in the epilogue.
    Returns (N, m_rows, cop) in `out_dtype`.  Rows keep the full width `wf`,
    so the trailing (wf - valid_width) columns of each spatial row are
    don't-care (finite) garbage that downstream consumers ignore.
    """
    N, rows_in, kcx = x.shape
    assert kcx == kc
    ktot, cop = wt.shape
    n_taps = kh * kw
    assert ktot == n_taps * kc
    if add is not None:
        assert add.shape == (N, m_rows, cop)

    tap_offsets = tuple(i * wf + j for i in range(kh) for j in range(kw))
    assert rows_in >= tap_offsets[-1] + m_rows

    per = max(1, GROUP_K_TARGET // kc)
    if out_dtype != jnp.float32:
        per = n_taps                   # bf16 output cannot act as accumulator
    groups = tuple(tuple(range(i, min(i + per, n_taps)))
                   for i in range(0, n_taps, per))
    pack_k = max(len(g) for g in groups) * kc

    statics = dict(tap_offsets=tap_offsets, kc=kc, m_rows=m_rows,
                   groups=groups, apply_relu=apply_relu)

    in_specs = [
        pl.BlockSpec((None, rows_in, kc), lambda n: (n, 0, 0)),
        pl.BlockSpec((ktot, cop), lambda n: (0, 0)),
        pl.BlockSpec((1, cop), lambda n: (0, 0)),
    ]
    inputs = [x, wt, bias_row]
    if add is not None:
        in_specs.append(pl.BlockSpec((None, m_rows, cop), lambda n: (n, 0, 0)))
        inputs.append(add)
        kernel = functools.partial(_conv_add_kernel, **statics)
    else:
        kernel = functools.partial(_conv_kernel, **statics)

    return pl.pallas_call(
        kernel,
        out_shape=jax.ShapeDtypeStruct((N, m_rows, cop), out_dtype),
        grid_spec=pltpu.PrefetchScalarGridSpec(
            num_scalar_prefetch=0,
            grid=(N,),
            in_specs=in_specs,
            out_specs=pl.BlockSpec((None, m_rows, cop), lambda n: (n, 0, 0)),
            scratch_shapes=[pltpu.VMEM((m_rows, pack_k), jnp.bfloat16)],
        ),
        compiler_params=pltpu.CompilerParams(
            dimension_semantics=("parallel",),
            vmem_limit_bytes=vmem_limit),
    )(*inputs)


# ----------------------------------------------------------------------------
# One-time weight packing (done in __init__, off the forward path)
# ----------------------------------------------------------------------------
def pack_weights_full_angular(w, b, kc_pad, cop):
    """Conv whose angular kernel covers the whole angular extent of its input
    (angular output 1x1): fold (angular a,b ; channel c) into K.
    w: (Co, C, ku, kv, kh, kw) -> rows ordered (tap i,j | a, b, c)."""
    co, c, ku, kv, kh, kw = w.shape
    kc = ku * kv * c
    wt = jnp.transpose(w, (4, 5, 2, 3, 1, 0)).reshape(kh * kw, kc, co)
    wt = jnp.pad(wt, ((0, 0), (0, kc_pad - kc), (0, cop - co)))
    wt = wt.reshape(kh * kw * kc_pad, cop).astype(jnp.bfloat16)
    bias = jnp.pad(b.astype(jnp.float32), (0, cop - co)).reshape(1, cop)
    return wt, bias


def pack_weights_angular_expand(w, b, ang_in, cop):
    """Conv with angular kernel smaller than the angular extent (conv_2_1):
    embed the angular-output selection into a block-sparse weight over ALL
    ang_in*ang_in angular input positions, so the output channels become
    (uo, vo, co) and the input needs no angular fold.
    w: (Co, 1, ku, kv, kh, kw)."""
    co, ci, ku, kv, kh, kw = w.shape
    assert ci == 1
    uo_n, vo_n = ang_in - ku + 1, ang_in - kv + 1
    base = jnp.transpose(w[:, 0], (3, 4, 1, 2, 0))      # (kh, kw, ku, kv, co)
    cols = []
    for uo in range(uo_n):
        for vo in range(vo_n):
            blk = jnp.pad(base, ((0, 0), (0, 0),
                                 (uo, ang_in - ku - uo),
                                 (vo, ang_in - kv - vo),
                                 (0, 0)))
            cols.append(blk.reshape(kh * kw * ang_in * ang_in, co))
    co_e = uo_n * vo_n * co
    wt = jnp.concatenate(cols, axis=-1)                 # (T*A*A, co_e)
    wt = jnp.pad(wt, ((0, 0), (0, cop - co_e))).astype(jnp.bfloat16)
    bias = jnp.tile(b.astype(jnp.float32), uo_n * vo_n)
    bias = jnp.pad(bias, (0, cop - co_e)).reshape(1, cop)
    return wt, bias, co_e


# ----------------------------------------------------------------------------
# DimNet_Minus
# ----------------------------------------------------------------------------
class DimNetMinusPallas:
    def __init__(self, ang_res, receptive_field, upscale_factor, activation,
                 key):
        assert ang_res % 2 == 1 and ((ang_res + 1) // 2) % 2 == 1
        assert receptive_field % 2 == 1 and ((receptive_field + 1) // 2) % 2 == 1
        self.ang_res = ang_res
        self.receptive_field = receptive_field
        self.upscale_factor = upscale_factor
        self.activation = activation
        # TODO(synk): only 'relu' / 'linear' activations implemented.
        self._apply_relu = activation == "relu"

        A, R, u = ang_res, receptive_field, upscale_factor
        A2, R2 = (A + 1) // 2, (R + 1) // 2
        self._A2, self._R2 = A2, R2
        ks1 = (A, A, R, R)
        ks2 = (A2, A2, R2, R2)

        def winit(k_, co, ci, ks):
            shape = (co, ci) + ks
            fan_in = ci * ks[0] * ks[1] * ks[2] * ks[3]
            return jax.random.normal(k_, shape, jnp.float32) / jnp.sqrt(
                jnp.float32(fan_in))

        ks = jax.random.split(key, 6)
        w1 = winit(ks[0], u * u * A * A, 1, ks1)
        b1 = 0.01 * jax.random.normal(ks[1], (u * u * A * A,), jnp.float32)
        w21 = winit(ks[2], A * u, 1, ks2)
        b21 = 0.01 * jax.random.normal(ks[3], (A * u,), jnp.float32)
        w22 = winit(ks[4], A * A * u * u, A * u, ks2)
        b22 = 0.01 * jax.random.normal(ks[5], (A * A * u * u,), jnp.float32)

        self._cop_out = _round_up(u * u * A * A, LANES)          # conv1 / conv2_2
        self._cop_mid = _round_up(A2 * A2 * A * u, LANES)        # conv2_1 (expanded)

        # Pack (transpose / expand / pad / bf16-cast) ONCE, off the fwd path.
        self.w1p, self.b1p = pack_weights_full_angular(
            w1, b1, kc_pad=A * A, cop=self._cop_out)
        self.w21p, self.b21p, _ = pack_weights_angular_expand(
            w21, b21, ang_in=A, cop=self._cop_mid)
        self.w22p, self.b22p = pack_weights_full_angular(
            w22, b22, kc_pad=self._cop_mid, cop=self._cop_out)

    def __call__(self, pic_in):
        # pic_in: (N, A, A, H, W) f32   (the torch unsqueeze(1) is implicit:
        # the single input channel is folded together with the angular taps)
        N, A, _, H, W = pic_in.shape
        assert A == self.ang_res
        R, R2, u = self.receptive_field, self._R2, self.upscale_factor
        relu = self._apply_relu

        pad = R - 1
        p0, p1 = pad // 2, pad - pad // 2
        Hp, Wp = H + pad, W + pad
        wf = Wp                                  # full flattened-row width

        # Row extents (flattened full-width rows).  conv1 / conv2_2 need the
        # first H*wf rows; conv2_1 additionally needs a halo so conv2_2's taps
        # stay inside its valid region.
        m_rows = _round_up(H * wf, 8)
        halo2 = (R2 - 1) * wf + (R2 - 1)
        m1_rows = _round_up(m_rows + halo2, 8)
        rows_in = _round_up(max(m1_rows + halo2,
                                m_rows + (R - 1) * wf + (R - 1)), 8)

        # Channel-last flattened input slab, zero-padded spatially and along
        # rows, cast to bf16 ONCE (shared by conv_1 and conv_2_1).
        xp = jnp.pad(pic_in, ((0, 0), (0, 0), (0, 0), (p0, p1), (p0, p1)))
        xs = jnp.transpose(xp, (0, 3, 4, 1, 2)).reshape(N, Hp * Wp, A * A)
        xs = jnp.pad(xs, ((0, 0), (0, rows_in - Hp * Wp), (0, 0)))
        xs = xs.astype(jnp.bfloat16)

        # buffer_1 = conv_kernel_1(buffer)                    (f32 output)
        out1 = conv_flat(xs, self.w1p, self.b1p, kc=A * A, kh=R, kw=R, wf=wf,
                         m_rows=m_rows, apply_relu=relu,
                         out_dtype=jnp.float32)
        # conv_kernel_2_1: angular outputs folded into channels; bf16 output
        # stays in the flattened full-width layout and feeds conv_2_2 directly.
        mid = conv_flat(xs, self.w21p, self.b21p, kc=A * A, kh=R2, kw=R2,
                        wf=wf, m_rows=m1_rows, apply_relu=relu,
                        out_dtype=jnp.bfloat16)
        # conv_kernel_2_2 + fused ReconBlock add (buffer_1 + buffer_2).
        summed = conv_flat(mid, self.w22p, self.b22p, kc=self._cop_mid,
                           kh=R2, kw=R2, wf=wf, m_rows=m_rows,
                           apply_relu=relu, out_dtype=jnp.float32, add=out1)

        # Crop the valid (H, W) region and apply BOTH pixel shuffles
        # (spatial x u, angular x A) with one transpose.
        co = u * u * A * A
        s = summed[:, :H * wf, :co].reshape(N, H, wf, co)[:, :, :W, :]
        s = s.reshape(N, H, W, A, A, u, u)            # channels -> (a, b, i, j)
        out = jnp.transpose(s, (0, 3, 4, 1, 5, 2, 6))
        return out.reshape(N, A, A, H * u, W * u)


# ----------------------------------------------------------------------------
# Demo
# ----------------------------------------------------------------------------
if __name__ == "__main__":
    ang_res = 5            # smallest value satisfying the module's assertions
    receptive_field = 5
    upscale_factor = 2
    N, H, W = 2, 8, 8

    key = jax.random.PRNGKey(0)
    k_params, k_input = jax.random.split(key)

    net = DimNetMinusPallas(ang_res, receptive_field, upscale_factor,
                            "relu", k_params)

    pic_in = jax.random.uniform(
        k_input, (N, ang_res, ang_res, H, W), jnp.float32)

    out = jax.jit(net.__call__)(pic_in)
    out = jax.block_until_ready(out)

    expected = (N, ang_res, ang_res, upscale_factor * H, upscale_factor * W)
    assert out.shape == expected, (out.shape, expected)
    assert jnp.all(jnp.isfinite(out))
    print("KERNEL_OK")
</pallas_src>

<mosaic_0001>
module attributes {stable_mosaic.version = 11 : i64} {
  func.func @_conv_kernel(%arg0: i32, %arg1: memref<1x160x25xbf16, #tpu.memory_space<vmem>>, %arg2: memref<225x128xbf16, #tpu.memory_space<vmem>>, %arg3: memref<1x128xf32, #tpu.memory_space<vmem>>, %arg4: memref<1x128x128xbf16, #tpu.memory_space<vmem>>, %arg5: memref<128x225xbf16, #tpu.memory_space<vmem>>) attributes {dimension_semantics = [#tpu.dimension_semantics<parallel>], iteration_bounds = array<i64: 2>, scalar_prefetch = 0 : i64, scratch_operands = 1 : i64, tpu.core_type = #tpu.core_type<tc>, window_params = [{transform_indices = @transform_0, window_bounds = array<i64: 1, 160, 25>}, {pipeline_mode = #tpu.pipeline_mode<synchronous>, transform_indices = @transform_1, window_bounds = array<i64: 225, 128>}, {pipeline_mode = #tpu.pipeline_mode<synchronous>, transform_indices = @transform_2, window_bounds = array<i64: 1, 128>}, {transform_indices = @transform_3, window_bounds = array<i64: 1, 128, 128>}]} {
    %c0 = arith.constant 0 : index
    %c0_0 = arith.constant 0 : index
    %c0_1 = arith.constant 0 : index
    %0 = vector.load %arg1[%c0, %c0_0, %c0_1] : memref<1x160x25xbf16, #tpu.memory_space<vmem>>, vector<1x128x25xbf16>
    %1 = vector.shape_cast %0 : vector<1x128x25xbf16> to vector<128x25xbf16>
    %c0_2 = arith.constant 0 : index
    %c0_3 = arith.constant 0 : index
    %2 = vector.load %arg5[%c0_2, %c0_3] : memref<128x225xbf16, #tpu.memory_space<vmem>>, vector<128x25xbf16>
    tpu.vector_store %arg5[%c0_2, %c0_3], %1 {strides = array<i32>} : memref<128x225xbf16, #tpu.memory_space<vmem>>, vector<128x25xbf16>,
    %c0_4 = arith.constant 0 : index
    %c1 = arith.constant 1 : index
    %c0_5 = arith.constant 0 : index
    %3 = vector.load %arg1[%c0_4, %c1, %c0_5] : memref<1x160x25xbf16, #tpu.memory_space<vmem>>, vector<1x128x25xbf16>
    %4 = vector.shape_cast %3 : vector<1x128x25xbf16> to vector<128x25xbf16>
    %c0_6 = arith.constant 0 : index
    %c25 = arith.constant 25 : index
    %5 = vector.load %arg5[%c0_6, %c25] : memref<128x225xbf16, #tpu.memory_space<vmem>>, vector<128x25xbf16>
    tpu.vector_store %arg5[%c0_6, %c25], %4 {strides = array<i32>} : memref<128x225xbf16, #tpu.memory_space<vmem>>, vector<128x25xbf16>,
    %c0_7 = arith.constant 0 : index
    %c2 = arith.constant 2 : index
    %c0_8 = arith.constant 0 : index
    %6 = vector.load %arg1[%c0_7, %c2, %c0_8] : memref<1x160x25xbf16, #tpu.memory_space<vmem>>, vector<1x128x25xbf16>
    %7 = vector.shape_cast %6 : vector<1x128x25xbf16> to vector<128x25xbf16>
    %c0_9 = arith.constant 0 : index
    %c50 = arith.constant 50 : index
    %8 = vector.load %arg5[%c0_9, %c50] : memref<128x225xbf16, #tpu.memory_space<vmem>>, vector<128x25xbf16>
    tpu.vector_store %arg5[%c0_9, %c50], %7 {strides = array<i32>} : memref<128x225xbf16, #tpu.memory_space<vmem>>, vector<128x25xbf16>,
    %c0_10 = arith.constant 0 : index
    %c12 = arith.constant 12 : index
    %c0_11 = arith.constant 0 : index
    %9 = vector.load %arg1[%c0_10, %c12, %c0_11] : memref<1x160x25xbf16, #tpu.memory_space<vmem>>, vector<1x128x25xbf16>
    %10 = vector.shape_cast %9 : vector<1x128x25xbf16> to vector<128x25xbf16>
    %c0_12 = arith.constant 0 : index
    %c75 = arith.constant 75 : index
    %11 = vector.load %arg5[%c0_12, %c75] : memref<128x225xbf16, #tpu.memory_space<vmem>>, vector<128x25xbf16>
    tpu.vector_store %arg5[%c0_12, %c75], %10 {strides = array<i32>} : memref<128x225xbf16, #tpu.memory_space<vmem>>, vector<128x25xbf16>,
    %c0_13 = arith.constant 0 : index
    %c13 = arith.constant 13 : index
    %c0_14 = arith.constant 0 : index
    %12 = vector.load %arg1[%c0_13, %c13, %c0_14] : memref<1x160x25xbf16, #tpu.memory_space<vmem>>, vector<1x128x25xbf16>
    %13 = vector.shape_cast %12 : vector<1x128x25xbf16> to vector<128x25xbf16>
    %c0_15 = arith.constant 0 : index
    %c100 = arith.constant 100 : index
    %14 = vector.load %arg5[%c0_15, %c100] : memref<128x225xbf16, #tpu.memory_space<vmem>>, vector<128x25xbf16>
    tpu.vector_store %arg5[%c0_15, %c100], %13 {strides = array<i32>} : memref<128x225xbf16, #tpu.memory_space<vmem>>, vector<128x25xbf16>,
    %c0_16 = arith.constant 0 : index
    %c14 = arith.constant 14 : index
    %c0_17 = arith.constant 0 : index
    %15 = vector.load %arg1[%c0_16, %c14, %c0_17] : memref<1x160x25xbf16, #tpu.memory_space<vmem>>, vector<1x128x25xbf16>
    %16 = vector.shape_cast %15 : vector<1x128x25xbf16> to vector<128x25xbf16>
    %c0_18 = arith.constant 0 : index
    %c125 = arith.constant 125 : index
    %17 = vector.load %arg5[%c0_18, %c125] : memref<128x225xbf16, #tpu.memory_space<vmem>>, vector<128x25xbf16>
    tpu.vector_store %arg5[%c0_18, %c125], %16 {strides = array<i32>} : memref<128x225xbf16, #tpu.memory_space<vmem>>, vector<128x25xbf16>,
    %c0_19 = arith.constant 0 : index
    %c24 = arith.constant 24 : index
    %c0_20 = arith.constant 0 : index
    %18 = vector.load %arg1[%c0_19, %c24, %c0_20] : memref<1x160x25xbf16, #tpu.memory_space<vmem>>, vector<1x128x25xbf16>
    %19 = vector.shape_cast %18 : vector<1x128x25xbf16> to vector<128x25xbf16>
    %c0_21 = arith.constant 0 : index
    %c150 = arith.constant 150 : index
    %20 = vector.load %arg5[%c0_21, %c150] : memref<128x225xbf16, #tpu.memory_space<vmem>>, vector<128x25xbf16>
    tpu.vector_store %arg5[%c0_21, %c150], %19 {strides = array<i32>} : memref<128x225xbf16, #tpu.memory_space<vmem>>, vector<128x25xbf16>,
    %c0_22 = arith.constant 0 : index
    %c25_23 = arith.constant 25 : index
    %c0_24 = arith.constant 0 : index
    %21 = vector.load %arg1[%c0_22, %c25_23, %c0_24] : memref<1x160x25xbf16, #tpu.memory_space<vmem>>, vector<1x128x25xbf16>
    %22 = vector.shape_cast %21 : vector<1x128x25xbf16> to vector<128x25xbf16>
    %c0_25 = arith.constant 0 : index
    %c175 = arith.constant 175 : index
    %23 = vector.load %arg5[%c0_25, %c175] : memref<128x225xbf16, #tpu.memory_space<vmem>>, vector<128x25xbf16>
    tpu.vector_store %arg5[%c0_25, %c175], %22 {strides = array<i32>} : memref<128x225xbf16, #tpu.memory_space<vmem>>, vector<128x25xbf16>,
    %c0_26 = arith.constant 0 : index
    %c26 = arith.constant 26 : index
    %c0_27 = arith.constant 0 : index
    %24 = vector.load %arg1[%c0_26, %c26, %c0_27] : memref<1x160x25xbf16, #tpu.memory_space<vmem>>, vector<1x128x25xbf16>
    %25 = vector.shape_cast %24 : vector<1x128x25xbf16> to vector<128x25xbf16>
    %c0_28 = arith.constant 0 : index
    %c200 = arith.constant 200 : index
    %26 = vector.load %arg5[%c0_28, %c200] : memref<128x225xbf16, #tpu.memory_space<vmem>>, vector<128x25xbf16>
    tpu.vector_store %arg5[%c0_28, %c200], %25 {strides = array<i32>} : memref<128x225xbf16, #tpu.memory_space<vmem>>, vector<128x25xbf16>,
    %c0_29 = arith.constant 0 : index
    %c0_30 = arith.constant 0 : index
    %27 = vector.load %arg5[%c0_29, %c0_30] : memref<128x225xbf16, #tpu.memory_space<vmem>>, vector<128x225xbf16>
    %c0_31 = arith.constant 0 : index
    %c0_32 = arith.constant 0 : index
    %28 = vector.load %arg2[%c0_31, %c0_32] : memref<225x128xbf16, #tpu.memory_space<vmem>>, vector<225x128xbf16>
    %cst = arith.constant dense<0.000000e+00> : vector<128x128xf32>
    %29 = tpu.matmul %27, %28, %cst {dimension_numbers = #tpu.dot_dimension_numbers<[1], [0], [0], [1], [0, 0, 1, 1], [], []>} : vector<128x225xbf16>, vector<225x128xbf16>, vector<128x128xf32> -> vector<128x128xf32>
    %c0_33 = arith.constant 0 : index
    %c0_34 = arith.constant 0 : index
    %30 = vector.load %arg3[%c0_33, %c0_34] : memref<1x128xf32, #tpu.memory_space<vmem>>, vector<1x128xf32>
    %31 = vector.broadcast %30 : vector<1x128xf32> to vector<128x128xf32>
    %32 = arith.addf %29, %31 : vector<128x128xf32>
    %cst_35 = arith.constant 0.000000e+00 : f32
    %33 = vector.broadcast %cst_35 : f32 to vector<128x128xf32>
    %34 = arith.maximumf %32, %33 : vector<128x128xf32>
    %35 = arith.truncf %34 : vector<128x128xf32> to vector<128x128xbf16>
    %c0_36 = arith.constant 0 : index
    %c0_37 = arith.constant 0 : index
    %c0_38 = arith.constant 0 : index
    %36 = vector.load %arg4[%c0_36, %c0_37, %c0_38] : memref<1x128x128xbf16, #tpu.memory_space<vmem>>, vector<1x128x128xbf16>
    %37 = vector.shape_cast %36 : vector<1x128x128xbf16> to vector<128x128xbf16>
    %38 = vector.shape_cast %35 : vector<128x128xbf16> to vector<1x128x128xbf16>
    tpu.vector_store %arg4[%c0_36, %c0_37, %c0_38], %38 {strides = array<i32>} : memref<1x128x128xbf16, #tpu.memory_space<vmem>>, vector<1x128x128xbf16>,
    return
  }
  func.func @transform_0(%arg0: i32) -> (i32, i32, i32) {
    %c0_i32 = arith.constant 0 : i32
    %c0_i32_0 = arith.constant 0 : i32
    %c0_i32_1 = arith.constant 0 : i32
    return %arg0, %c0_i32, %c0_i32_0 : i32, i32, i32
  }
  func.func @transform_1(%arg0: i32) -> (i32, i32) {
    %c0_i32 = arith.constant 0 : i32
    %c0_i32_0 = arith.constant 0 : i32
    %c0_i32_1 = arith.constant 0 : i32
    return %c0_i32, %c0_i32_0 : i32, i32
  }
  func.func @transform_2(%arg0: i32) -> (i32, i32) {
    %c0_i32 = arith.constant 0 : i32
    %c0_i32_0 = arith.constant 0 : i32
    %c0_i32_1 = arith.constant 0 : i32
    return %c0_i32, %c0_i32_0 : i32, i32
  }
  func.func @transform_3(%arg0: i32) -> (i32, i32, i32) {
    %c0_i32 = arith.constant 0 : i32
    %c0_i32_0 = arith.constant 0 : i32
    %c0_i32_1 = arith.constant 0 : i32
    return %arg0, %c0_i32, %c0_i32_0 : i32, i32, i32
  }
}

module attributes {stable_mosaic.version = 11 : i64} {
  func.func @_conv_kernel(%arg0: i32, %arg1: memref<1x160x25xbf16, #tpu.memory_space<vmem>>, %arg2: memref<625x128xbf16, #tpu.memory_space<vmem>>, %arg3: memref<1x128xf32, #tpu.memory_space<vmem>>, %arg4: memref<1x96x128xf32, #tpu.memory_space<vmem>>, %arg5: memref<96x625xbf16, #tpu.memory_space<vmem>>) attributes {dimension_semantics = [#tpu.dimension_semantics<parallel>], iteration_bounds = array<i64: 2>, scalar_prefetch = 0 : i64, scratch_operands = 1 : i64, tpu.core_type = #tpu.core_type<tc>, window_params = [{transform_indices = @transform_0, window_bounds = array<i64: 1, 160, 25>}, {pipeline_mode = #tpu.pipeline_mode<synchronous>, transform_indices = @transform_1, window_bounds = array<i64: 625, 128>}, {pipeline_mode = #tpu.pipeline_mode<synchronous>, transform_indices = @transform_2, window_bounds = array<i64: 1, 128>}, {transform_indices = @transform_3, window_bounds = array<i64: 1, 96, 128>}]} {
    %c0 = arith.constant 0 : index
    %c0_0 = arith.constant 0 : index
    %c0_1 = arith.constant 0 : index
    %0 = vector.load %arg1[%c0, %c0_0, %c0_1] : memref<1x160x25xbf16, #tpu.memory_space<vmem>>, vector<1x96x25xbf16>
    %1 = vector.shape_cast %0 : vector<1x96x25xbf16> to vector<96x25xbf16>
    %c0_2 = arith.constant 0 : index
    %c0_3 = arith.constant 0 : index
    %2 = vector.load %arg5[%c0_2, %c0_3] : memref<96x625xbf16, #tpu.memory_space<vmem>>, vector<96x25xbf16>
    tpu.vector_store %arg5[%c0_2, %c0_3], %1 {strides = array<i32>} : memref<96x625xbf16, #tpu.memory_space<vmem>>, vector<96x25xbf16>,
    %c0_4 = arith.constant 0 : index
    %c1 = arith.constant 1 : index
    %c0_5 = arith.constant 0 : index
    %3 = vector.load %arg1[%c0_4, %c1, %c0_5] : memref<1x160x25xbf16, #tpu.memory_space<vmem>>, vector<1x96x25xbf16>
    %4 = vector.shape_cast %3 : vector<1x96x25xbf16> to vector<96x25xbf16>
    %c0_6 = arith.constant 0 : index
    %c25 = arith.constant 25 : index
    %5 = vector.load %arg5[%c0_6, %c25] : memref<96x625xbf16, #tpu.memory_space<vmem>>, vector<96x25xbf16>
    tpu.vector_store %arg5[%c0_6, %c25], %4 {strides = array<i32>} : memref<96x625xbf16, #tpu.memory_space<vmem>>, vector<96x25xbf16>,
    %c0_7 = arith.constant 0 : index
    %c2 = arith.constant 2 : index
    %c0_8 = arith.constant 0 : index
    %6 = vector.load %arg1[%c0_7, %c2, %c0_8] : memref<1x160x25xbf16, #tpu.memory_space<vmem>>, vector<1x96x25xbf16>
    %7 = vector.shape_cast %6 : vector<1x96x25xbf16> to vector<96x25xbf16>
    %c0_9 = arith.constant 0 : index
    %c50 = arith.constant 50 : index
    %8 = vector.load %arg5[%c0_9, %c50] : memref<96x625xbf16, #tpu.memory_space<vmem>>, vector<96x25xbf16>
    tpu.vector_store %arg5[%c0_9, %c50], %7 {strides = array<i32>} : memref<96x625xbf16, #tpu.memory_space<vmem>>, vector<96x25xbf16>,
    %c0_10 = arith.constant 0 : index
    %c3 = arith.constant 3 : index
    %c0_11 = arith.constant 0 : index
    %9 = vector.load %arg1[%c0_10, %c3, %c0_11] : memref<1x160x25xbf16, #tpu.memory_space<vmem>>, vector<1x96x25xbf16>
    %10 = vector.shape_cast %9 : vector<1x96x25xbf16> to vector<96x25xbf16>
    %c0_12 = arith.constant 0 : index
    %c75 = arith.constant 75 : index
    %11 = vector.load %arg5[%c0_12, %c75] : memref<96x625xbf16, #tpu.memory_space<vmem>>, vector<96x25xbf16>
    tpu.vector_store %arg5[%c0_12, %c75], %10 {strides = array<i32>} : memref<96x625xbf16, #tpu.memory_space<vmem>>, vector<96x25xbf16>,
    %c0_13 = arith.constant 0 : index
    %c4 = arith.constant 4 : index
    %c0_14 = arith.constant 0 : index
    %12 = vector.load %arg1[%c0_13, %c4, %c0_14] : memref<1x160x25xbf16, #tpu.memory_space<vmem>>, vector<1x96x25xbf16>
    %13 = vector.shape_cast %12 : vector<1x96x25xbf16> to vector<96x25xbf16>
    %c0_15 = arith.constant 0 : index
    %c100 = arith.constant 100 : index
    %14 = vector.load %arg5[%c0_15, %c100] : memref<96x625xbf16, #tpu.memory_space<vmem>>, vector<96x25xbf16>
    tpu.vector_store %arg5[%c0_15, %c100], %13 {strides = array<i32>} : memref<96x625xbf16, #tpu.memory_space<vmem>>, vector<96x25xbf16>,
    %c0_16 = arith.constant 0 : index
    %c12 = arith.constant 12 : index
    %c0_17 = arith.constant 0 : index
    %15 = vector.load %arg1[%c0_16, %c12, %c0_17] : memref<1x160x25xbf16, #tpu.memory_space<vmem>>, vector<1x96x25xbf16>
    %16 = vector.shape_cast %15 : vector<1x96x25xbf16> to vector<96x25xbf16>
    %c0_18 = arith.constant 0 : index
    %c125 = arith.constant 125 : index
    %17 = vector.load %arg5[%c0_18, %c125] : memref<96x625xbf16, #tpu.memory_space<vmem>>, vector<96x25xbf16>
    tpu.vector_store %arg5[%c0_18, %c125], %16 {strides = array<i32>} : memref<96x625xbf16, #tpu.memory_space<vmem>>, vector<96x25xbf16>,
    %c0_19 = arith.constant 0 : index
    %c13 = arith.constant 13 : index
    %c0_20 = arith.constant 0 : index
    %18 = vector.load %arg1[%c0_19, %c13, %c0_20] : memref<1x160x25xbf16, #tpu.memory_space<vmem>>, vector<1x96x25xbf16>
    %19 = vector.shape_cast %18 : vector<1x96x25xbf16> to vector<96x25xbf16>
    %c0_21 = arith.constant 0 : index
    %c150 = arith.constant 150 : index
    %20 = vector.load %arg5[%c0_21, %c150] : memref<96x625xbf16, #tpu.memory_space<vmem>>, vector<96x25xbf16>
    tpu.vector_store %arg5[%c0_21, %c150], %19 {strides = array<i32>} : memref<96x625xbf16, #tpu.memory_space<vmem>>, vector<96x25xbf16>,
    %c0_22 = arith.constant 0 : index
    %c14 = arith.constant 14 : index
    %c0_23 = arith.constant 0 : index
    %21 = vector.load %arg1[%c0_22, %c14, %c0_23] : memref<1x160x25xbf16, #tpu.memory_space<vmem>>, vector<1x96x25xbf16>
    %22 = vector.shape_cast %21 : vector<1x96x25xbf16> to vector<96x25xbf16>
    %c0_24 = arith.constant 0 : index
    %c175 = arith.constant 175 : index
    %23 = vector.load %arg5[%c0_24, %c175] : memref<96x625xbf16, #tpu.memory_space<vmem>>, vector<96x25xbf16>
    tpu.vector_store %arg5[%c0_24, %c175], %22 {strides = array<i32>} : memref<96x625xbf16, #tpu.memory_space<vmem>>, vector<96x25xbf16>,
    %c0_25 = arith.constant 0 : index
    %c15 = arith.constant 15 : index
    %c0_26 = arith.constant 0 : index
    %24 = vector.load %arg1[%c0_25, %c15, %c0_26] : memref<1x160x25xbf16, #tpu.memory_space<vmem>>, vector<1x96x25xbf16>
    %25 = vector.shape_cast %24 : vector<1x96x25xbf16> to vector<96x25xbf16>
    %c0_27 = arith.constant 0 : index
    %c200 = arith.constant 200 : index
    %26 = vector.load %arg5[%c0_27, %c200] : memref<96x625xbf16, #tpu.memory_space<vmem>>, vector<96x25xbf16>
    tpu.vector_store %arg5[%c0_27, %c200], %25 {strides = array<i32>} : memref<96x625xbf16, #tpu.memory_space<vmem>>, vector<96x25xbf16>,
    %c0_28 = arith.constant 0 : index
    %c16 = arith.constant 16 : index
    %c0_29 = arith.constant 0 : index
    %27 = vector.load %arg1[%c0_28, %c16, %c0_29] : memref<1x160x25xbf16, #tpu.memory_space<vmem>>, vector<1x96x25xbf16>
    %28 = vector.shape_cast %27 : vector<1x96x25xbf16> to vector<96x25xbf16>
    %c0_30 = arith.constant 0 : index
    %c225 = arith.constant 225 : index
    %29 = vector.load %arg5[%c0_30, %c225] : memref<96x625xbf16, #tpu.memory_space<vmem>>, vector<96x25xbf16>
    tpu.vector_store %arg5[%c0_30, %c225], %28 {strides = array<i32>} : memref<96x625xbf16, #tpu.memory_space<vmem>>, vector<96x25xbf16>,
    %c0_31 = arith.constant 0 : index
    %c24 = arith.constant 24 : index
    %c0_32 = arith.constant 0 : index
    %30 = vector.load %arg1[%c0_31, %c24, %c0_32] : memref<1x160x25xbf16, #tpu.memory_space<vmem>>, vector<1x96x25xbf16>
    %31 = vector.shape_cast %30 : vector<1x96x25xbf16> to vector<96x25xbf16>
    %c0_33 = arith.constant 0 : index
    %c250 = arith.constant 250 : index
    %32 = vector.load %arg5[%c0_33, %c250] : memref<96x625xbf16, #tpu.memory_space<vmem>>, vector<96x25xbf16>
    tpu.vector_store %arg5[%c0_33, %c250], %31 {strides = array<i32>} : memref<96x625xbf16, #tpu.memory_space<vmem>>, vector<96x25xbf16>,
    %c0_34 = arith.constant 0 : index
    %c25_35 = arith.constant 25 : index
    %c0_36 = arith.constant 0 : index
    %33 = vector.load %arg1[%c0_34, %c25_35, %c0_36] : memref<1x160x25xbf16, #tpu.memory_space<vmem>>, vector<1x96x25xbf16>
    %34 = vector.shape_cast %33 : vector<1x96x25xbf16> to vector<96x25xbf16>
    %c0_37 = arith.constant 0 : index
    %c275 = arith.constant 275 : index
    %35 = vector.load %arg5[%c0_37, %c275] : memref<96x625xbf16, #tpu.memory_space<vmem>>, vector<96x25xbf16>
    tpu.vector_store %arg5[%c0_37, %c275], %34 {strides = array<i32>} : memref<96x625xbf16, #tpu.memory_space<vmem>>, vector<96x25xbf16>,
    %c0_38 = arith.constant 0 : index
    %c26 = arith.constant 26 : index
    %c0_39 = arith.constant 0 : index
    %36 = vector.load %arg1[%c0_38, %c26, %c0_39] : memref<1x160x25xbf16, #tpu.memory_space<vmem>>, vector<1x96x25xbf16>
    %37 = vector.shape_cast %36 : vector<1x96x25xbf16> to vector<96x25xbf16>
    %c0_40 = arith.constant 0 : index
    %c300 = arith.constant 300 : index
    %38 = vector.load %arg5[%c0_40, %c300] : memref<96x625xbf16, #tpu.memory_space<vmem>>, vector<96x25xbf16>
    tpu.vector_store %arg5[%c0_40, %c300], %37 {strides = array<i32>} : memref<96x625xbf16, #tpu.memory_space<vmem>>, vector<96x25xbf16>,
    %c0_41 = arith.constant 0 : index
    %c27 = arith.constant 27 : index
    %c0_42 = arith.constant 0 : index
    %39 = vector.load %arg1[%c0_41, %c27, %c0_42] : memref<1x160x25xbf16, #tpu.memory_space<vmem>>, vector<1x96x25xbf16>
    %40 = vector.shape_cast %39 : vector<1x96x25xbf16> to vector<96x25xbf16>
    %c0_43 = arith.constant 0 : index
    %c325 = arith.constant 325 : index
    %41 = vector.load %arg5[%c0_43, %c325] : memref<96x625xbf16, #tpu.memory_space<vmem>>, vector<96x25xbf16>
    tpu.vector_store %arg5[%c0_43, %c325], %40 {strides = array<i32>} : memref<96x625xbf16, #tpu.memory_space<vmem>>, vector<96x25xbf16>,
    %c0_44 = arith.constant 0 : index
    %c28 = arith.constant 28 : index
    %c0_45 = arith.constant 0 : index
    %42 = vector.load %arg1[%c0_44, %c28, %c0_45] : memref<1x160x25xbf16, #tpu.memory_space<vmem>>, vector<1x96x25xbf16>
    %43 = vector.shape_cast %42 : vector<1x96x25xbf16> to vector<96x25xbf16>
    %c0_46 = arith.constant 0 : index
    %c350 = arith.constant 350 : index
    %44 = vector.load %arg5[%c0_46, %c350] : memref<96x625xbf16, #tpu.memory_space<vmem>>, vector<96x25xbf16>
    tpu.vector_store %arg5[%c0_46, %c350], %43 {strides = array<i32>} : memref<96x625xbf16, #tpu.memory_space<vmem>>, vector<96x25xbf16>,
    %c0_47 = arith.constant 0 : index
    %c36 = arith.constant 36 : index
    %c0_48 = arith.constant 0 : index
    %45 = vector.load %arg1[%c0_47, %c36, %c0_48] : memref<1x160x25xbf16, #tpu.memory_space<vmem>>, vector<1x96x25xbf16>
    %46 = vector.shape_cast %45 : vector<1x96x25xbf16> to vector<96x25xbf16>
    %c0_49 = arith.constant 0 : index
    %c375 = arith.constant 375 : index
    %47 = vector.load %arg5[%c0_49, %c375] : memref<96x625xbf16, #tpu.memory_space<vmem>>, vector<96x25xbf16>
    tpu.vector_store %arg5[%c0_49, %c375], %46 {strides = array<i32>} : memref<96x625xbf16, #tpu.memory_space<vmem>>, vector<96x25xbf16>,
    %c0_50 = arith.constant 0 : index
    %c37 = arith.constant 37 : index
    %c0_51 = arith.constant 0 : index
    %48 = vector.load %arg1[%c0_50, %c37, %c0_51] : memref<1x160x25xbf16, #tpu.memory_space<vmem>>, vector<1x96x25xbf16>
    %49 = vector.shape_cast %48 : vector<1x96x25xbf16> to vector<96x25xbf16>
    %c0_52 = arith.constant 0 : index
    %c400 = arith.constant 400 : index
    %50 = vector.load %arg5[%c0_52, %c400] : memref<96x625xbf16, #tpu.memory_space<vmem>>, vector<96x25xbf16>
    tpu.vector_store %arg5[%c0_52, %c400], %49 {strides = array<i32>} : memref<96x625xbf16, #tpu.memory_space<vmem>>, vector<96x25xbf16>,
    %c0_53 = arith.constant 0 : index
    %c38 = arith.constant 38 : index
    %c0_54 = arith.constant 0 : index
    %51 = vector.load %arg1[%c0_53, %c38, %c0_54] : memref<1x160x25xbf16, #tpu.memory_space<vmem>>, vector<1x96x25xbf16>
    %52 = vector.shape_cast %51 : vector<1x96x25xbf16> to vector<96x25xbf16>
    %c0_55 = arith.constant 0 : index
    %c425 = arith.constant 425 : index
    %53 = vector.load %arg5[%c0_55, %c425] : memref<96x625xbf16, #tpu.memory_space<vmem>>, vector<96x25xbf16>
    tpu.vector_store %arg5[%c0_55, %c425], %52 {strides = array<i32>} : memref<96x625xbf16, #tpu.memory_space<vmem>>, vector<96x25xbf16>,
    %c0_56 = arith.constant 0 : index
    %c39 = arith.constant 39 : index
    %c0_57 = arith.constant 0 : index
    %54 = vector.load %arg1[%c0_56, %c39, %c0_57] : memref<1x160x25xbf16, #tpu.memory_space<vmem>>, vector<1x96x25xbf16>
    %55 = vector.shape_cast %54 : vector<1x96x25xbf16> to vector<96x25xbf16>
    %c0_58 = arith.constant 0 : index
    %c450 = arith.constant 450 : index
    %56 = vector.load %arg5[%c0_58, %c450] : memref<96x625xbf16, #tpu.memory_space<vmem>>, vector<96x25xbf16>
    tpu.vector_store %arg5[%c0_58, %c450], %55 {strides = array<i32>} : memref<96x625xbf16, #tpu.memory_space<vmem>>, vector<96x25xbf16>,
    %c0_59 = arith.constant 0 : index
    %c40 = arith.constant 40 : index
    %c0_60 = arith.constant 0 : index
    %57 = vector.load %arg1[%c0_59, %c40, %c0_60] : memref<1x160x25xbf16, #tpu.memory_space<vmem>>, vector<1x96x25xbf16>
    %58 = vector.shape_cast %57 : vector<1x96x25xbf16> to vector<96x25xbf16>
    %c0_61 = arith.constant 0 : index
    %c475 = arith.constant 475 : index
    %59 = vector.load %arg5[%c0_61, %c475] : memref<96x625xbf16, #tpu.memory_space<vmem>>, vector<96x25xbf16>
    tpu.vector_store %arg5[%c0_61, %c475], %58 {strides = array<i32>} : memref<96x625xbf16, #tpu.memory_space<vmem>>, vector<96x25xbf16>,
    %c0_62 = arith.constant 0 : index
    %c48 = arith.constant 48 : index
    %c0_63 = arith.constant 0 : index
    %60 = vector.load %arg1[%c0_62, %c48, %c0_63] : memref<1x160x25xbf16, #tpu.memory_space<vmem>>, vector<1x96x25xbf16>
    %61 = vector.shape_cast %60 : vector<1x96x25xbf16> to vector<96x25xbf16>
    %c0_64 = arith.constant 0 : index
    %c500 = arith.constant 500 : index
    %62 = vector.load %arg5[%c0_64, %c500] : memref<96x625xbf16, #tpu.memory_space<vmem>>, vector<96x25xbf16>
    tpu.vector_store %arg5[%c0_64, %c500], %61 {strides = array<i32>} : memref<96x625xbf16, #tpu.memory_space<vmem>>, vector<96x25xbf16>,
    %c0_65 = arith.constant 0 : index
    %c49 = arith.constant 49 : index
    %c0_66 = arith.constant 0 : index
    %63 = vector.load %arg1[%c0_65, %c49, %c0_66] : memref<1x160x25xbf16, #tpu.memory_space<vmem>>, vector<1x96x25xbf16>
    %64 = vector.shape_cast %63 : vector<1x96x25xbf16> to vector<96x25xbf16>
    %c0_67 = arith.constant 0 : index
    %c525 = arith.constant 525 : index
    %65 = vector.load %arg5[%c0_67, %c525] : memref<96x625xbf16, #tpu.memory_space<vmem>>, vector<96x25xbf16>
    tpu.vector_store %arg5[%c0_67, %c525], %64 {strides = array<i32>} : memref<96x625xbf16, #tpu.memory_space<vmem>>, vector<96x25xbf16>,
    %c0_68 = arith.constant 0 : index
    %c50_69 = arith.constant 50 : index
    %c0_70 = arith.constant 0 : index
    %66 = vector.load %arg1[%c0_68, %c50_69, %c0_70] : memref<1x160x25xbf16, #tpu.memory_space<vmem>>, vector<1x96x25xbf16>
    %67 = vector.shape_cast %66 : vector<1x96x25xbf16> to vector<96x25xbf16>
    %c0_71 = arith.constant 0 : index
    %c550 = arith.constant 550 : index
    %68 = vector.load %arg5[%c0_71, %c550] : memref<96x625xbf16, #tpu.memory_space<vmem>>, vector<96x25xbf16>
    tpu.vector_store %arg5[%c0_71, %c550], %67 {strides = array<i32>} : memref<96x625xbf16, #tpu.memory_space<vmem>>, vector<96x25xbf16>,
    %c0_72 = arith.constant 0 : index
    %c51 = arith.constant 51 : index
    %c0_73 = arith.constant 0 : index
    %69 = vector.load %arg1[%c0_72, %c51, %c0_73] : memref<1x160x25xbf16, #tpu.memory_space<vmem>>, vector<1x96x25xbf16>
    %70 = vector.shape_cast %69 : vector<1x96x25xbf16> to vector<96x25xbf16>
    %c0_74 = arith.constant 0 : index
    %c575 = arith.constant 575 : index
    %71 = vector.load %arg5[%c0_74, %c575] : memref<96x625xbf16, #tpu.memory_space<vmem>>, vector<96x25xbf16>
    tpu.vector_store %arg5[%c0_74, %c575], %70 {strides = array<i32>} : memref<96x625xbf16, #tpu.memory_space<vmem>>, vector<96x25xbf16>,
    %c0_75 = arith.constant 0 : index
    %c52 = arith.constant 52 : index
    %c0_76 = arith.constant 0 : index
    %72 = vector.load %arg1[%c0_75, %c52, %c0_76] : memref<1x160x25xbf16, #tpu.memory_space<vmem>>, vector<1x96x25xbf16>
    %73 = vector.shape_cast %72 : vector<1x96x25xbf16> to vector<96x25xbf16>
    %c0_77 = arith.constant 0 : index
    %c600 = arith.constant 600 : index
    %74 = vector.load %arg5[%c0_77, %c600] : memref<96x625xbf16, #tpu.memory_space<vmem>>, vector<96x25xbf16>
    tpu.vector_store %arg5[%c0_77, %c600], %73 {strides = array<i32>} : memref<96x625xbf16, #tpu.memory_space<vmem>>, vector<96x25xbf16>,
    %c0_78 = arith.constant 0 : index
    %c0_79 = arith.constant 0 : index
    %75 = vector.load %arg5[%c0_78, %c0_79] : memref<96x625xbf16, #tpu.memory_space<vmem>>, vector<96x625xbf16>
    %c0_80 = arith.constant 0 : index
    %c0_81 = arith.constant 0 : index
    %76 = vector.load %arg2[%c0_80, %c0_81] : memref<625x128xbf16, #tpu.memory_space<vmem>>, vector<625x128xbf16>
    %cst = arith.constant dense<0.000000e+00> : vector<96x128xf32>
    %77 = tpu.matmul %75, %76, %cst {dimension_numbers = #tpu.dot_dimension_numbers<[1], [0], [0], [1], [0, 0, 1, 1], [], []>} : vector<96x625xbf16>, vector<625x128xbf16>, vector<96x128xf32> -> vector<96x128xf32>
    %c0_82 = arith.constant 0 : index
    %c0_83 = arith.constant 0 : index
    %78 = vector.load %arg3[%c0_82, %c0_83] : memref<1x128xf32, #tpu.memory_space<vmem>>, vector<1x128xf32>
    %79 = vector.broadcast %78 : vector<1x128xf32> to vector<96x128xf32>
    %80 = arith.addf %77, %79 : vector<96x128xf32>
    %cst_84 = arith.constant 0.000000e+00 : f32
    %81 = vector.broadcast %cst_84 : f32 to vector<96x128xf32>
    %82 = arith.maximumf %80, %81 : vector<96x128xf32>
    %c0_85 = arith.constant 0 : index
    %c0_86 = arith.constant 0 : index
    %c0_87 = arith.constant 0 : index
    %83 = vector.load %arg4[%c0_85, %c0_86, %c0_87] : memref<1x96x128xf32, #tpu.memory_space<vmem>>, vector<1x96x128xf32>
    %84 = vector.shape_cast %83 : vector<1x96x128xf32> to vector<96x128xf32>
    %85 = vector.shape_cast %82 : vector<96x128xf32> to vector<1x96x128xf32>
    tpu.vector_store %arg4[%c0_85, %c0_86, %c0_87], %85 {strides = array<i32>} : memref<1x96x128xf32, #tpu.memory_space<vmem>>, vector<1x96x128xf32>,
    return
  }
  func.func @transform_0(%arg0: i32) -> (i32, i32, i32) {
    %c0_i32 = arith.constant 0 : i32
    %c0_i32_0 = arith.constant 0 : i32
    %c0_i32_1 = arith.constant 0 : i32
    return %arg0, %c0_i32, %c0_i32_0 : i32, i32, i32
  }
  func.func @transform_1(%arg0: i32) -> (i32, i32) {
    %c0_i32 = arith.constant 0 : i32
    %c0_i32_0 = arith.constant 0 : i32
    %c0_i32_1 = arith.constant 0 : i32
    return %c0_i32, %c0_i32_0 : i32, i32
  }
  func.func @transform_2(%arg0: i32) -> (i32, i32) {
    %c0_i32 = arith.constant 0 : i32
    %c0_i32_0 = arith.constant 0 : i32
    %c0_i32_1 = arith.constant 0 : i32
    return %c0_i32, %c0_i32_0 : i32, i32
  }
  func.func @transform_3(%arg0: i32) -> (i32, i32, i32) {
    %c0_i32 = arith.constant 0 : i32
    %c0_i32_0 = arith.constant 0 : i32
    %c0_i32_1 = arith.constant 0 : i32
    return %arg0, %c0_i32, %c0_i32_0 : i32, i32, i32
  }
}

module attributes {stable_mosaic.version = 11 : i64} {
  func.func @_conv_add_kernel(%arg0: i32, %arg1: memref<1x128x128xbf16, #tpu.memory_space<vmem>>, %arg2: memref<1152x128xbf16, #tpu.memory_space<vmem>>, %arg3: memref<1x128xf32, #tpu.memory_space<vmem>>, %arg4: memref<1x96x128xf32, #tpu.memory_space<vmem>>, %arg5: memref<1x96x128xf32, #tpu.memory_space<vmem>>, %arg6: memref<96x640xbf16, #tpu.memory_space<vmem>>) attributes {dimension_semantics = [#tpu.dimension_semantics<parallel>], iteration_bounds = array<i64: 2>, scalar_prefetch = 0 : i64, scratch_operands = 1 : i64, tpu.core_type = #tpu.core_type<tc>, window_params = [{transform_indices = @transform_0, window_bounds = array<i64: 1, 128, 128>}, {pipeline_mode = #tpu.pipeline_mode<synchronous>, transform_indices = @transform_1, window_bounds = array<i64: 1152, 128>}, {pipeline_mode = #tpu.pipeline_mode<synchronous>, transform_indices = @transform_2, window_bounds = array<i64: 1, 128>}, {transform_indices = @transform_3, window_bounds = array<i64: 1, 96, 128>}, {transform_indices = @transform_4, window_bounds = array<i64: 1, 96, 128>}]} {
    %c0 = arith.constant 0 : index
    %c0_0 = arith.constant 0 : index
    %c0_1 = arith.constant 0 : index
    %0 = vector.load %arg1[%c0, %c0_0, %c0_1] : memref<1x128x128xbf16, #tpu.memory_space<vmem>>, vector<1x96x128xbf16>
    %1 = vector.shape_cast %0 : vector<1x96x128xbf16> to vector<96x128xbf16>
    %c0_2 = arith.constant 0 : index
    %c0_3 = arith.constant 0 : index
    %2 = vector.load %arg6[%c0_2, %c0_3] : memref<96x640xbf16, #tpu.memory_space<vmem>>, vector<96x128xbf16>
    tpu.vector_store %arg6[%c0_2, %c0_3], %1 {strides = array<i32>} : memref<96x640xbf16, #tpu.memory_space<vmem>>, vector<96x128xbf16>,
    %c0_4 = arith.constant 0 : index
    %c1 = arith.constant 1 : index
    %c0_5 = arith.constant 0 : index
    %3 = vector.load %arg1[%c0_4, %c1, %c0_5] : memref<1x128x128xbf16, #tpu.memory_space<vmem>>, vector<1x96x128xbf16>
    %4 = vector.shape_cast %3 : vector<1x96x128xbf16> to vector<96x128xbf16>
    %c0_6 = arith.constant 0 : index
    %c128 = arith.constant 128 : index
    %5 = vector.load %arg6[%c0_6, %c128] : memref<96x640xbf16, #tpu.memory_space<vmem>>, vector<96x128xbf16>
    tpu.vector_store %arg6[%c0_6, %c128], %4 {strides = array<i32>} : memref<96x640xbf16, #tpu.memory_space<vmem>>, vector<96x128xbf16>,
    %c0_7 = arith.constant 0 : index
    %c2 = arith.constant 2 : index
    %c0_8 = arith.constant 0 : index
    %6 = vector.load %arg1[%c0_7, %c2, %c0_8] : memref<1x128x128xbf16, #tpu.memory_space<vmem>>, vector<1x96x128xbf16>
    %7 = vector.shape_cast %6 : vector<1x96x128xbf16> to vector<96x128xbf16>
    %c0_9 = arith.constant 0 : index
    %c256 = arith.constant 256 : index
    %8 = vector.load %arg6[%c0_9, %c256] : memref<96x640xbf16, #tpu.memory_space<vmem>>, vector<96x128xbf16>
    tpu.vector_store %arg6[%c0_9, %c256], %7 {strides = array<i32>} : memref<96x640xbf16, #tpu.memory_space<vmem>>, vector<96x128xbf16>,
    %c0_10 = arith.constant 0 : index
    %c12 = arith.constant 12 : index
    %c0_11 = arith.constant 0 : index
    %9 = vector.load %arg1[%c0_10, %c12, %c0_11] : memref<1x128x128xbf16, #tpu.memory_space<vmem>>, vector<1x96x128xbf16>
    %10 = vector.shape_cast %9 : vector<1x96x128xbf16> to vector<96x128xbf16>
    %c0_12 = arith.constant 0 : index
    %c384 = arith.constant 384 : index
    %11 = vector.load %arg6[%c0_12, %c384] : memref<96x640xbf16, #tpu.memory_space<vmem>>, vector<96x128xbf16>
    tpu.vector_store %arg6[%c0_12, %c384], %10 {strides = array<i32>} : memref<96x640xbf16, #tpu.memory_space<vmem>>, vector<96x128xbf16>,
    %c0_13 = arith.constant 0 : index
    %c13 = arith.constant 13 : index
    %c0_14 = arith.constant 0 : index
    %12 = vector.load %arg1[%c0_13, %c13, %c0_14] : memref<1x128x128xbf16, #tpu.memory_space<vmem>>, vector<1x96x128xbf16>
    %13 = vector.shape_cast %12 : vector<1x96x128xbf16> to vector<96x128xbf16>
    %c0_15 = arith.constant 0 : index
    %c512 = arith.constant 512 : index
    %14 = vector.load %arg6[%c0_15, %c512] : memref<96x640xbf16, #tpu.memory_space<vmem>>, vector<96x128xbf16>
    tpu.vector_store %arg6[%c0_15, %c512], %13 {strides = array<i32>} : memref<96x640xbf16, #tpu.memory_space<vmem>>, vector<96x128xbf16>,
    %c0_16 = arith.constant 0 : index
    %c0_17 = arith.constant 0 : index
    %15 = vector.load %arg6[%c0_16, %c0_17] : memref<96x640xbf16, #tpu.memory_space<vmem>>, vector<96x640xbf16>
    %c0_18 = arith.constant 0 : index
    %c0_19 = arith.constant 0 : index
    %16 = vector.load %arg2[%c0_18, %c0_19] : memref<1152x128xbf16, #tpu.memory_space<vmem>>, vector<640x128xbf16>
    %cst = arith.constant dense<0.000000e+00> : vector<96x128xf32>
    %17 = tpu.matmul %15, %16, %cst {dimension_numbers = #tpu.dot_dimension_numbers<[1], [0], [0], [1], [0, 0, 1, 1], [], []>} : vector<96x640xbf16>, vector<640x128xbf16>, vector<96x128xf32> -> vector<96x128xf32>
    %c0_20 = arith.constant 0 : index
    %c0_21 = arith.constant 0 : index
    %c0_22 = arith.constant 0 : index
    %18 = vector.load %arg5[%c0_20, %c0_21, %c0_22] : memref<1x96x128xf32, #tpu.memory_space<vmem>>, vector<1x96x128xf32>
    %19 = vector.shape_cast %18 : vector<1x96x128xf32> to vector<96x128xf32>
    %20 = vector.shape_cast %17 : vector<96x128xf32> to vector<1x96x128xf32>
    tpu.vector_store %arg5[%c0_20, %c0_21, %c0_22], %20 {strides = array<i32>} : memref<1x96x128xf32, #tpu.memory_space<vmem>>, vector<1x96x128xf32>,
    %c0_23 = arith.constant 0 : index
    %c14 = arith.constant 14 : index
    %c0_24 = arith.constant 0 : index
    %21 = vector.load %arg1[%c0_23, %c14, %c0_24] : memref<1x128x128xbf16, #tpu.memory_space<vmem>>, vector<1x96x128xbf16>
    %22 = vector.shape_cast %21 : vector<1x96x128xbf16> to vector<96x128xbf16>
    %c0_25 = arith.constant 0 : index
    %c0_26 = arith.constant 0 : index
    %23 = vector.load %arg6[%c0_25, %c0_26] : memref<96x640xbf16, #tpu.memory_space<vmem>>, vector<96x128xbf16>
    tpu.vector_store %arg6[%c0_25, %c0_26], %22 {strides = array<i32>} : memref<96x640xbf16, #tpu.memory_space<vmem>>, vector<96x128xbf16>,
    %c0_27 = arith.constant 0 : index
    %c24 = arith.constant 24 : index
    %c0_28 = arith.constant 0 : index
    %24 = vector.load %arg1[%c0_27, %c24, %c0_28] : memref<1x128x128xbf16, #tpu.memory_space<vmem>>, vector<1x96x128xbf16>
    %25 = vector.shape_cast %24 : vector<1x96x128xbf16> to vector<96x128xbf16>
    %c0_29 = arith.constant 0 : index
    %c128_30 = arith.constant 128 : index
    %26 = vector.load %arg6[%c0_29, %c128_30] : memref<96x640xbf16, #tpu.memory_space<vmem>>, vector<96x128xbf16>
    tpu.vector_store %arg6[%c0_29, %c128_30], %25 {strides = array<i32>} : memref<96x640xbf16, #tpu.memory_space<vmem>>, vector<96x128xbf16>,
    %c0_31 = arith.constant 0 : index
    %c25 = arith.constant 25 : index
    %c0_32 = arith.constant 0 : index
    %27 = vector.load %arg1[%c0_31, %c25, %c0_32] : memref<1x128x128xbf16, #tpu.memory_space<vmem>>, vector<1x96x128xbf16>
    %28 = vector.shape_cast %27 : vector<1x96x128xbf16> to vector<96x128xbf16>
    %c0_33 = arith.constant 0 : index
    %c256_34 = arith.constant 256 : index
    %29 = vector.load %arg6[%c0_33, %c256_34] : memref<96x640xbf16, #tpu.memory_space<vmem>>, vector<96x128xbf16>
    tpu.vector_store %arg6[%c0_33, %c256_34], %28 {strides = array<i32>} : memref<96x640xbf16, #tpu.memory_space<vmem>>, vector<96x128xbf16>,
    %c0_35 = arith.constant 0 : index
    %c26 = arith.constant 26 : index
    %c0_36 = arith.constant 0 : index
    %30 = vector.load %arg1[%c0_35, %c26, %c0_36] : memref<1x128x128xbf16, #tpu.memory_space<vmem>>, vector<1x96x128xbf16>
    %31 = vector.shape_cast %30 : vector<1x96x128xbf16> to vector<96x128xbf16>
    %c0_37 = arith.constant 0 : index
    %c384_38 = arith.constant 384 : index
    %32 = vector.load %arg6[%c0_37, %c384_38] : memref<96x640xbf16, #tpu.memory_space<vmem>>, vector<96x128xbf16>
    tpu.vector_store %arg6[%c0_37, %c384_38], %31 {strides = array<i32>} : memref<96x640xbf16, #tpu.memory_space<vmem>>, vector<96x128xbf16>,
    %c0_39 = arith.constant 0 : index
    %c0_40 = arith.constant 0 : index
    %33 = vector.load %arg6[%c0_39, %c0_40] : memref<96x640xbf16, #tpu.memory_space<vmem>>, vector<96x512xbf16>
    %c640 = arith.constant 640 : index
    %c0_41 = arith.constant 0 : index
    %34 = vector.load %arg2[%c640, %c0_41] : memref<1152x128xbf16, #tpu.memory_space<vmem>>, vector<512x128xbf16>
    %cst_42 = arith.constant dense<0.000000e+00> : vector<96x128xf32>
    %35 = tpu.matmul %33, %34, %cst_42 {dimension_numbers = #tpu.dot_dimension_numbers<[1], [0], [0], [1], [0, 0, 1, 1], [], []>} : vector<96x512xbf16>, vector<512x128xbf16>, vector<96x128xf32> -> vector<96x128xf32>
    %c0_43 = arith.constant 0 : index
    %c0_44 = arith.constant 0 : index
    %c0_45 = arith.constant 0 : index
    %36 = vector.load %arg5[%c0_43, %c0_44, %c0_45] : memref<1x96x128xf32, #tpu.memory_space<vmem>>, vector<1x96x128xf32>
    %37 = vector.shape_cast %36 : vector<1x96x128xf32> to vector<96x128xf32>
    %38 = arith.addf %37, %35 : vector<96x128xf32>
    %c0_46 = arith.constant 0 : index
    %c0_47 = arith.constant 0 : index
    %39 = vector.load %arg3[%c0_46, %c0_47] : memref<1x128xf32, #tpu.memory_space<vmem>>, vector<1x128xf32>
    %40 = vector.broadcast %39 : vector<1x128xf32> to vector<96x128xf32>
    %41 = arith.addf %38, %40 : vector<96x128xf32>
    %cst_48 = arith.constant 0.000000e+00 : f32
    %42 = vector.broadcast %cst_48 : f32 to vector<96x128xf32>
    %43 = arith.maximumf %41, %42 : vector<96x128xf32>
    %c0_49 = arith.constant 0 : index
    %c0_50 = arith.constant 0 : index
    %c0_51 = arith.constant 0 : index
    %44 = vector.load %arg4[%c0_49, %c0_50, %c0_51] : memref<1x96x128xf32, #tpu.memory_space<vmem>>, vector<1x96x128xf32>
    %45 = vector.shape_cast %44 : vector<1x96x128xf32> to vector<96x128xf32>
    %46 = arith.addf %43, %45 : vector<96x128xf32>
    %c0_52 = arith.constant 0 : index
    %c0_53 = arith.constant 0 : index
    %c0_54 = arith.constant 0 : index
    %47 = vector.load %arg5[%c0_52, %c0_53, %c0_54] : memref<1x96x128xf32, #tpu.memory_space<vmem>>, vector<1x96x128xf32>
    %48 = vector.shape_cast %47 : vector<1x96x128xf32> to vector<96x128xf32>
    %49 = vector.shape_cast %46 : vector<96x128xf32> to vector<1x96x128xf32>
    tpu.vector_store %arg5[%c0_52, %c0_53, %c0_54], %49 {strides = array<i32>} : memref<1x96x128xf32, #tpu.memory_space<vmem>>, vector<1x96x128xf32>,
    return
  }
  func.func @transform_0(%arg0: i32) -> (i32, i32, i32) {
    %c0_i32 = arith.constant 0 : i32
    %c0_i32_0 = arith.constant 0 : i32
    %c0_i32_1 = arith.constant 0 : i32
    return %arg0, %c0_i32, %c0_i32_0 : i32, i32, i32
  }
  func.func @transform_1(%arg0: i32) -> (i32, i32) {
    %c0_i32 = arith.constant 0 : i32
    %c0_i32_0 = arith.constant 0 : i32
    %c0_i32_1 = arith.constant 0 : i32
    return %c0_i32, %c0_i32_0 : i32, i32
  }
  func.func @transform_2(%arg0: i32) -> (i32, i32) {
    %c0_i32 = arith.constant 0 : i32
    %c0_i32_0 = arith.constant 0 : i32
    %c0_i32_1 = arith.constant 0 : i32
    return %c0_i32, %c0_i32_0 : i32, i32
  }
  func.func @transform_3(%arg0: i32) -> (i32, i32, i32) {
    %c0_i32 = arith.constant 0 : i32
    %c0_i32_0 = arith.constant 0 : i32
    %c0_i32_1 = arith.constant 0 : i32
    return %arg0, %c0_i32, %c0_i32_0 : i32, i32, i32
  }
  func.func @transform_4(%arg0: i32) -> (i32, i32, i32) {
    %c0_i32 = arith.constant 0 : i32
    %c0_i32_0 = arith.constant 0 : i32
    %c0_i32_1 = arith.constant 0 : i32
    return %arg0, %c0_i32, %c0_i32_0 : i32, i32, i32
  }
}

</mosaic_0001>

<llo_original>
// kernel: a_call__.4
$region0: #{a_call__.4}
  #allocation0 [shape = 'u32[]', space=smem, size = 0x4, offset = 0x4, fixed_abs, tag = 'smem constant byte address 0x4 - core index']
  #allocation1 [shape = 'u32[144,128]{1,0:T(1,128)}', space=vmem, size = 0x12000, scoped, tag = 'internal scratch']
  #allocation2 [shape = 'bf16[128,225]{1,0:T(16,128)(2,1)}', space=vmem, size = 0x10000, scoped, tag = 'scratch operand']
  %s0 = inlined_call_operand.hbm [shape: bf16[2,160,25], index: 0, kind: input, shape index: {}]
  %s1 = inlined_call_operand.hbm [shape: bf16[225,128], index: 1, kind: input, shape index: {}]
  %s2 = inlined_call_operand.hbm [shape: f32[1,128], index: 2, kind: input, shape index: {}]
  %s3 = inlined_call_operand.hbm [shape: bf16[2,128,128], index: 3, kind: output, shape index: {}]
  %s4 = sld [smem:[#allocation0]]
  $region57: #{a_call__.4} parent=0
    _
  %s6 = ssub.s32 1, %s4
  %s7 = scalar_select 0, %s6, %s4
  $region1: #{a_call__.4} parent=0
    #allocation3 [shape = 'u8[81920]{0}', space=vmem, size = 0x14000, scoped, tag = 'input window, operand 0']
    #allocation4 [shape = 's32[2]{0}', space=sflag, size = 0x8, scoped, tag = 'scoped memory for a_call__.4']
    #allocation5 [shape = 's32[2]{0}', space=sflag, size = 0x8, scoped, tag = 'scoped memory for a_call__.4']
    #allocation6 [shape = 'u8[59392]{0}', space=vmem, size = 0xe800, scoped, tag = 'input window, operand 1, single buffered']
    #allocation7 [shape = 's32[1]{0}', space=sflag, size = 0x4, scoped, tag = 'scoped memory for a_call__.4']
    #allocation8 [shape = 'u8[512]{0}', space=vmem, size = 0x400, scoped, tag = 'input window, operand 2, single buffered']
    #allocation9 [shape = 'u8[65536]{0}', space=vmem, size = 0x10000, scoped, tag = 'output window, operand 0']
    %8 = vsyncpa [#allocation4], 0
    %s9 = scalar_lea.sflag [#allocation4], 1
    %10 = vsyncpa %s9, 0
    %11 = vsyncpa [#allocation7], 0
    %12 = vsyncpa [#allocation5], 0
    %s13 = scalar_lea.sflag [#allocation5], 1
    %14 = vsyncpa %s13, 0
    loop: start=0, step=1, limit=4
    $region2: #{a_call__.4} parent=1 // loop_pre_header
      _
    $region3: #{a_call__.4} parent=1 // loop_header
      %s16 = sphi 0, %s20
      %p17 = scmp.ge.s32.totalorder %s16, 4
      %s26 = sphi 0, %s28
      %s29 = sphi 0, %s26
      %s30 = sphi 0, %s29
      %s46 = sphi 0, %s30
      %s50 = sphi 0, %s50
      %s52 = sphi 0, %s50
      %s53 = sphi 0, %s52
      %s67 = sphi 0, %s53
      %s71 = sphi 0, %s71
      %s73 = sphi 0, %s71
      %s74 = sphi 0, %s73
      %s88 = sphi 0, %s74
      %s94 = sphi 0, %s96
      %s97 = sphi 0, %s94
      %s98 = sphi 0, %s97
      %s114 = sphi 0, %s98
    $region4: #{a_call__.4} parent=1 // loop_header_branch
      %19 = sbr.rel (%p17) target = $region8
    $region5: #{a_call__.4} parent=1 // loop_body
      %s21 = ssub.s32 %s16, 1
      %s22 = ssub.s32 %s16, 2
      %s23 = sadd.s32 %s16, 1
      %s24 = ssub.s32 %s16, %s23
      %p25 = scmp.eq.s32.totalorder %s24, 0
      %s27 = sadd.s32 %s26, 1
      %s28 = scalar_select %p25, %s26, %s27
      %p31 = pneg %p25
      %p32 = scmp.eq.s32.totalorder %s16, 1
      %p33 = por %p31, %p32
      %p34 = scmp.ne.s32.totalorder %s26, %s29
      %p35 = scmp.eq.s32.totalorder %s16, 0
      %p36 = por %p34, %p35
      %p37 = scmp.ne.s32.totalorder %s26, %s29
      %p38 = scmp.eq.s32.totalorder %s21, 1
      %p39 = por %p37, %p38
      %p40 = scmp.ne.s32.totalorder %s29, %s30
      %p41 = scmp.eq.s32.totalorder %s21, 0
      %p42 = por %p40, %p41
      %p43 = scmp.ne.s32.totalorder %s29, %s30
      %p44 = scmp.eq.s32.totalorder %s22, 1
      %p45 = por %p43, %p44
      %p47 = scmp.ne.s32.totalorder %s30, %s46
      %p48 = scmp.eq.s32.totalorder %s22, 0
      %p49 = por %p47, %p48
      %s51 = sadd.s32 %s50, 1
      %p54 = scmp.eq.s32.totalorder %s16, 1
      %p55 = scmp.ne.s32.totalorder %s50, %s52
      %p56 = scmp.eq.s32.totalorder %s16, 0
      %p57 = por %p55, %p56
      %p58 = scmp.ne.s32.totalorder %s50, %s52
      %p59 = scmp.eq.s32.totalorder %s21, 1
      %p60 = por %p58, %p59
      %p61 = scmp.ne.s32.totalorder %s52, %s53
      %p62 = scmp.eq.s32.totalorder %s21, 0
      %p63 = por %p61, %p62
      %p64 = scmp.ne.s32.totalorder %s52, %s53
      %p65 = scmp.eq.s32.totalorder %s22, 1
      %p66 = por %p64, %p65
      %p68 = scmp.ne.s32.totalorder %s53, %s67
      %p69 = scmp.eq.s32.totalorder %s22, 0
      %p70 = por %p68, %p69
      %s72 = sadd.s32 %s71, 1
      %p75 = scmp.eq.s32.totalorder %s16, 1
      %p76 = scmp.ne.s32.totalorder %s71, %s73
      %p77 = scmp.eq.s32.totalorder %s16, 0
      %p78 = por %p76, %p77
      %p79 = scmp.ne.s32.totalorder %s71, %s73
      %p80 = scmp.eq.s32.totalorder %s21, 1
      %p81 = por %p79, %p80
      %p82 = scmp.ne.s32.totalorder %s73, %s74
      %p83 = scmp.eq.s32.totalorder %s21, 0
      %p84 = por %p82, %p83
      %p85 = scmp.ne.s32.totalorder %s73, %s74
      %p86 = scmp.eq.s32.totalorder %s22, 1
      %p87 = por %p85, %p86
      %p89 = scmp.ne.s32.totalorder %s74, %s88
      %p90 = scmp.eq.s32.totalorder %s22, 0
      %p91 = por %p89, %p90
      %s92 = ssub.s32 %s16, %s23
      %p93 = scmp.eq.s32.totalorder %s92, 0
      %s95 = sadd.s32 %s94, 1
      %s96 = scalar_select %p93, %s94, %s95
      %p99 = pneg %p93
      %p100 = scmp.eq.s32.totalorder %s16, 1
      %p101 = por %p99, %p100
      %p102 = scmp.ne.s32.totalorder %s94, %s97
      %p103 = scmp.eq.s32.totalorder %s16, 0
      %p104 = por %p102, %p103
      %p105 = scmp.ne.s32.totalorder %s94, %s97
      %p106 = scmp.eq.s32.totalorder %s21, 1
      %p107 = por %p105, %p106
      %p108 = scmp.ne.s32.totalorder %s97, %s98
      %p109 = scmp.eq.s32.totalorder %s21, 0
      %p110 = por %p108, %p109
      %p111 = scmp.ne.s32.totalorder %s97, %s98
      %p112 = scmp.eq.s32.totalorder %s22, 1
      %p113 = por %p111, %p112
      %p115 = scmp.ne.s32.totalorder %s98, %s114
      %p116 = scmp.eq.s32.totalorder %s22, 0
      %p117 = por %p115, %p116
      %p118 = scmp.le.s32.totalorder 1, %s16
      %p119 = scmp.lt.s32.totalorder %s16, 3
      %p120 = pnand %p118, %p119
      %p121 = pneg %p120
      // Predicated region
      $region9: #{a_call__.4} parent=5 // pred_check
        _
      $region10: #{a_call__.4} parent=5 // pred_check_branch
        %123 = sbr.rel (%p120) target = $region12
      $region11: #{a_call__.4} parent=5 // pred_region
        %s124 = ssub.s32 %s16, 1
        // Predicated region
        $region13: #{a_call__.4} parent=11 // pred_check
          %p125 = pneg %p63
        $region14: #{a_call__.4} parent=11 // pred_check_branch
          %127 = sbr.rel (%p125) target = $region16
        $region15: #{a_call__.4} parent=11 // pred_region
          %s129 = ssub.s32 1856, 1856
          %130 = vsyncadd [#allocation7], %s129
          %s131 = sshll.u32 [#allocation6], 4
          %s132 = int_to_ptr.vmem [resolvable:$true] %s131
          %137 = dma.hbm_to_vmem [thread:$0]  %s1, 1856, %s132, [#allocation7], 64, 64, 4
        $region16: #{a_call__.4} parent=11 // pred_fallthru
          _
        // Predicated region
        $region17: #{a_call__.4} parent=11 // pred_check
          %p138 = pneg %p84
        $region18: #{a_call__.4} parent=11 // pred_check_branch
          %140 = sbr.rel (%p138) target = $region20
        $region19: #{a_call__.4} parent=11 // pred_region
          %s142 = ssub.s32 16, 16
          %143 = vsyncadd [#allocation7], %s142
          %s145 = sshll.u32 [#allocation8], 4
          %s146 = int_to_ptr.vmem [resolvable:$true] %s145
          %148 = dma.hbm_to_vmem [thread:$0]  %s2, 16, %s146, [#allocation7]
        $region20: #{a_call__.4} parent=11 // pred_fallthru
          _
      $region12: #{a_call__.4} parent=5 // pred_fallthru
        _
      %p149 = scmp.lt.s32.totalorder %s16, 2
      // Predicated region
      $region21: #{a_call__.4} parent=5 // pred_check
        %p150 = pneg %p149
      $region22: #{a_call__.4} parent=5 // pred_check_branch
        %152 = sbr.rel (%p150) target = $region24
      $region23: #{a_call__.4} parent=5 // pred_region
        // Predicated region
        $region25: #{a_call__.4} parent=23 // pred_check
          %p153 = pneg %p36
        $region26: #{a_call__.4} parent=23 // pred_check_branch
          %155 = sbr.rel (%p153) target = $region28
        $region27: #{a_call__.4} parent=23 // pred_region
          %s156 = sand.u32 %s26, 1
          %s157 = scalar_lea.sflag [#allocation4], %s156
          %s158 = sand.u32 %s26, 1
          %s159 = smul.addr %s158, 80
          %s160 = scalar_lea.vmem [#allocation3], %s159
          %s162 = ssub.s32 1280, 1280
          %163 = vsyncadd %s157, %s162
          %s164 = smul.addr %s16, 20
          %s165 = smul.addr %s164, 64
          %s166 = scalar_lea.hbm %s0, %s165
          %s167 = sshll.u32 %s160, 4
          %s168 = int_to_ptr.vmem [resolvable:$true] %s167
          %173 = dma.hbm_to_vmem [thread:$0]  %s166, 1280, %s168, %s157, 64, 64, 4
        $region28: #{a_call__.4} parent=23 // pred_fallthru
          _
      $region24: #{a_call__.4} parent=5 // pred_fallthru
        _
      %p174 = scmp.le.s32.totalorder 1, %s16
      %p175 = scmp.lt.s32.totalorder %s16, 3
      %p176 = pnand %p174, %p175
      %p177 = pneg %p176
      // Predicated region
      $region29: #{a_call__.4} parent=5 // pred_check
        _
      $region30: #{a_call__.4} parent=5 // pred_check_branch
        %179 = sbr.rel (%p176) target = $region32
      $region31: #{a_call__.4} parent=5 // pred_region
        %s180 = ssub.s32 %s16, 1
        %s181 = sand.u32 %s29, 1
        %s182 = scalar_lea.sflag [#allocation4], %s181
        %s183 = sand.u32 %s29, 1
        %s184 = smul.addr %s183, 80
        %s185 = scalar_lea.vmem [#allocation3], %s184
        // Predicated region
        $region33: #{a_call__.4} parent=31 // pred_check
          %p186 = pneg %p42
        $region34: #{a_call__.4} parent=31 // pred_check_branch
          %188 = sbr.rel (%p186) target = $region36
        $region35: #{a_call__.4} parent=31 // pred_region
          %189 = dma.done %s182, 1280
        $region36: #{a_call__.4} parent=31 // pred_fallthru
          _
        // Predicated region
        $region37: #{a_call__.4} parent=31 // pred_check
          %p190 = pneg %p63
        $region38: #{a_call__.4} parent=31 // pred_check_branch
          %192 = sbr.rel (%p190) target = $region40
        $region39: #{a_call__.4} parent=31 // pred_region
          %193 = dma.done [#allocation7], 1856
        $region40: #{a_call__.4} parent=31 // pred_fallthru
          _
        // Predicated region
        $region41: #{a_call__.4} parent=31 // pred_check
          %p194 = pneg %p84
        $region42: #{a_call__.4} parent=31 // pred_check_branch
          %196 = sbr.rel (%p194) target = $region44
        $region43: #{a_call__.4} parent=31 // pred_region
          %197 = dma.done [#allocation7], 16
        $region44: #{a_call__.4} parent=31 // pred_fallthru
          _
        %s198 = sand.u32 %s29, 1
        %s199 = scalar_lea.sflag [#allocation4], %s198
        %s200 = sand.u32 %s29, 1
        %s201 = smul.addr %s200, 80
        %s202 = scalar_lea.vmem [#allocation3], %s201
        %p203 = pneg %p42
        %p204 = pneg %p39
        %p205 = pneg %p63
        %p206 = pneg %p60
        %p207 = pneg %p84
        %p208 = pneg %p81
        %p209 = pneg %p110
        %p210 = pneg %p107
        %s211 = sand.u32 %s97, 1
        %s212 = scalar_lea.sflag [#allocation5], %s211
        %s213 = sand.u32 %s97, 1
        %s214 = smul.addr %s213, 64
        %s215 = scalar_lea.vmem [#allocation9], %s214
        %v217 = vld [vmem:[%s185] sm:$0xf]
        %v218 = vld [vmem:[%s185 + $0x4] sm:$0xf]
        %v219 = vld [vmem:[%s185 + $0x8] sm:$0xf]
        %v220 = vld [vmem:[%s185 + $0xc] sm:$0xf]
        %v221 = vld [vmem:[%s185 + $0x10] sm:$0xf]
        %v222 = vld [vmem:[%s185 + $0x14] sm:$0xf]
        %v223 = vld [vmem:[%s185 + $0x18] sm:$0xf]
        %v224 = vld [vmem:[%s185 + $0x1c] sm:$0xf]
        %v225 = vld [vmem:[%s185 + $0x20] sm:$0xf]
        %v226 = vld [vmem:[%s185 + $0x24] sm:$0xf]
        %v227 = vld [vmem:[%s185 + $0x28] sm:$0xf]
        %v228 = vld [vmem:[%s185 + $0x2c] sm:$0xf]
        %v229 = vld [vmem:[%s185 + $0x30] sm:$0xf]
        %v230 = vld [vmem:[%s185 + $0x34] sm:$0xf]
        %v231 = vld [vmem:[%s185 + $0x38] sm:$0xf]
        %v232 = vld [vmem:[%s185 + $0x3c] sm:$0xf]
        %v249 = vunpack.c.l.b16 %v217
        %v250 = vunpack.c.l.b16 %v218
        %v251 = vunpack.c.l.b16 %v219
        %v252 = vunpack.c.l.b16 %v220
        %v253 = vunpack.c.l.b16 %v221
        %v254 = vunpack.c.l.b16 %v222
        %v255 = vunpack.c.l.b16 %v223
        %v256 = vunpack.c.l.b16 %v224
        %v257 = vunpack.c.l.b16 %v225
        %v258 = vunpack.c.l.b16 %v226
        %v259 = vunpack.c.l.b16 %v227
        %v260 = vunpack.c.l.b16 %v228
        %v261 = vunpack.c.l.b16 %v229
        %v262 = vunpack.c.l.b16 %v230
        %v263 = vunpack.c.l.b16 %v231
        %v264 = vunpack.c.l.b16 %v232
        %v265 = vpack.c.b16 %v250, %v249
        %v266 = vpack.c.b16 %v252, %v251
        %v267 = vpack.c.b16 %v254, %v253
        %v268 = vpack.c.b16 %v256, %v255
        %v269 = vpack.c.b16 %v258, %v257
        %v270 = vpack.c.b16 %v260, %v259
        %v271 = vpack.c.b16 %v262, %v261
        %v272 = vpack.c.b16 %v264, %v263
        %vm281 = vcmask 203776
        %282 = vst.msk [vmem:[#allocation2] sm:$0xff] %vm281, %v265
        %283 = vst.msk [vmem:[#allocation2 + $0x10] sm:$0xff] %vm281, %v266
        %284 = vst.msk [vmem:[#allocation2 + $0x20] sm:$0xff] %vm281, %v267
        %285 = vst.msk [vmem:[#allocation2 + $0x30] sm:$0xff] %vm281, %v268
        %286 = vst.msk [vmem:[#allocation2 + $0x40] sm:$0xff] %vm281, %v269
        %287 = vst.msk [vmem:[#allocation2 + $0x50] sm:$0xff] %vm281, %v270
        %288 = vst.msk [vmem:[#allocation2 + $0x60] sm:$0xff] %vm281, %v271
        %289 = vst.msk [vmem:[#allocation2 + $0x70] sm:$0xff] %vm281, %v272
        %v290 = vld [vmem:[%s185] sm:$0xf]
        %v291 = vld [vmem:[%s185 + $0x4] sm:$0xf]
        %v292 = vld [vmem:[%s185 + $0x8] sm:$0xf]
        %v293 = vld [vmem:[%s185 + $0xc] sm:$0xf]
        %v294 = vld [vmem:[%s185 + $0x10] sm:$0xf]
        %v295 = vld [vmem:[%s185 + $0x14] sm:$0xf]
        %v296 = vld [vmem:[%s185 + $0x18] sm:$0xf]
        %v297 = vld [vmem:[%s185 + $0x1c] sm:$0xf]
        %v298 = vld [vmem:[%s185 + $0x20] sm:$0xf]
        %v299 = vld [vmem:[%s185 + $0x24] sm:$0xf]
        %v300 = vld [vmem:[%s185 + $0x28] sm:$0xf]
        %v301 = vld [vmem:[%s185 + $0x2c] sm:$0xf]
        %v302 = vld [vmem:[%s185 + $0x30] sm:$0xf]
        %v303 = vld [vmem:[%s185 + $0x34] sm:$0xf]
        %v304 = vld [vmem:[%s185 + $0x38] sm:$0xf]
        %v305 = vld [vmem:[%s185 + $0x3c] sm:$0xf]
        %v306 = vld [vmem:[%s185 + $0x40] sm:$0x1]
        %v324 = vunpack.c.l.b16 %v290
        %v325 = vunpack.c.l.b16 %v291
        %v326 = vunpack.c.l.b16 %v292
        %v327 = vunpack.c.l.b16 %v293
        %v328 = vunpack.c.l.b16 %v294
        %v329 = vunpack.c.l.b16 %v295
        %v330 = vunpack.c.l.b16 %v296
        %v331 = vunpack.c.l.b16 %v297
        %v332 = vunpack.c.l.b16 %v298
        %v333 = vunpack.c.l.b16 %v299
        %v334 = vunpack.c.l.b16 %v300
        %v335 = vunpack.c.l.b16 %v301
        %v336 = vunpack.c.l.b16 %v302
        %v337 = vunpack.c.l.b16 %v303
        %v338 = vunpack.c.l.b16 %v304
        %v339 = vunpack.c.l.b16 %v305
        %v340 = vunpack.c.l.b16 %v306
        %v341 = vpack.c.b16 %v325, %v324
        %v342 = vpack.c.b16 %v327, %v326
        %v343 = vpack.c.b16 %v329, %v328
        %v344 = vpack.c.b16 %v331, %v330
        %v345 = vpack.c.b16 %v333, %v332
        %v346 = vpack.c.b16 %v335, %v334
        %v347 = vpack.c.b16 %v337, %v336
        %v348 = vpack.c.b16 %v339, %v338
        %v349 = vpack.c.b16 %v340, %v340
        %vm350 = vsmask.f32 7424
        %v352 = vshrl.u32 %v341, 16
        %v354 = vshll.u32 %v341, 16
        %v356 = vrot.slane %v354, 1
        %v357 = vor.u32 %v352, %v356
        %v359 = vshll.u32 %v342, 16
        %v361 = vrot.slane %v359, 1
        %v362 = vsel %vm350, %v357, %v361
        %v363 = vshrl.u32 %v342, 16
        %v365 = vor.u32 %v363, %v361
        %v367 = vshll.u32 %v343, 16
        %v369 = vrot.slane %v367, 1
        %v370 = vsel %vm350, %v365, %v369
        %v371 = vshrl.u32 %v343, 16
        %v373 = vor.u32 %v371, %v369
        %v375 = vshll.u32 %v344, 16
        %v377 = vrot.slane %v375, 1
        %v378 = vsel %vm350, %v373, %v377
        %v379 = vshrl.u32 %v344, 16
        %v381 = vor.u32 %v379, %v377
        %v383 = vshll.u32 %v345, 16
        %v385 = vrot.slane %v383, 1
        %v386 = vsel %vm350, %v381, %v385
        %v387 = vshrl.u32 %v345, 16
        %v389 = vor.u32 %v387, %v385
        %v391 = vshll.u32 %v346, 16
        %v393 = vrot.slane %v391, 1
        %v394 = vsel %vm350, %v389, %v393
        %v395 = vshrl.u32 %v346, 16
        %v397 = vor.u32 %v395, %v393
        %v399 = vshll.u32 %v347, 16
        %v401 = vrot.slane %v399, 1
        %v402 = vsel %vm350, %v397, %v401
        %v403 = vshrl.u32 %v347, 16
        %v405 = vor.u32 %v403, %v401
        %v407 = vshll.u32 %v348, 16
        %v409 = vrot.slane %v407, 1
        %v410 = vsel %vm350, %v405, %v409
        %v411 = vshrl.u32 %v348, 16
        %v413 = vor.u32 %v411, %v409
        %v415 = vshll.u32 %v349, 16
        %v417 = vrot.slane %v415, 1
        %v418 = vsel %vm350, %v413, %v417
        %419 = vrot.lane.b32.xlu0 %v362, 25
        %v420 = vpop.permute.xlu0 %419
        %421 = vrot.lane.b32.xlu0 %v370, 25
        %v422 = vpop.permute.xlu0 %421
        %423 = vrot.lane.b32.xlu0 %v378, 25
        %v424 = vpop.permute.xlu0 %423
        %425 = vrot.lane.b32.xlu0 %v386, 25
        %v426 = vpop.permute.xlu0 %425
        %427 = vrot.lane.b32.xlu0 %v394, 25
        %v428 = vpop.permute.xlu0 %427
        %429 = vrot.lane.b32.xlu0 %v402, 25
        %v430 = vpop.permute.xlu0 %429
        %431 = vrot.lane.b32.xlu0 %v410, 25
        %v432 = vpop.permute.xlu0 %431
        %433 = vrot.lane.b32.xlu0 %v418, 25
        %v434 = vpop.permute.xlu0 %433
        %vm443 = vcmask 408776
        %444 = vst.msk [vmem:[#allocation2] sm:$0xff] %vm443, %v420
        %445 = vst.msk [vmem:[#allocation2 + $0x10] sm:$0xff] %vm443, %v422
        %446 = vst.msk [vmem:[#allocation2 + $0x20] sm:$0xff] %vm443, %v424
        %447 = vst.msk [vmem:[#allocation2 + $0x30] sm:$0xff] %vm443, %v426
        %448 = vst.msk [vmem:[#allocation2 + $0x40] sm:$0xff] %vm443, %v428
        %449 = vst.msk [vmem:[#allocation2 + $0x50] sm:$0xff] %vm443, %v430
        %450 = vst.msk [vmem:[#allocation2 + $0x60] sm:$0xff] %vm443, %v432
        %451 = vst.msk [vmem:[#allocation2 + $0x70] sm:$0xff] %vm443, %v434
        %v452 = vld [vmem:[%s185] sm:$0xe]
        %v453 = vld [vmem:[%s185 + $0x4] sm:$0xf]
        %v454 = vld [vmem:[%s185 + $0x8] sm:$0xf]
        %v455 = vld [vmem:[%s185 + $0xc] sm:$0xf]
        %v456 = vld [vmem:[%s185 + $0x10] sm:$0xf]
        %v457 = vld [vmem:[%s185 + $0x14] sm:$0xf]
        %v458 = vld [vmem:[%s185 + $0x18] sm:$0xf]
        %v459 = vld [vmem:[%s185 + $0x1c] sm:$0xf]
        %v460 = vld [vmem:[%s185 + $0x20] sm:$0xf]
        %v461 = vld [vmem:[%s185 + $0x24] sm:$0xf]
        %v462 = vld [vmem:[%s185 + $0x28] sm:$0xf]
        %v463 = vld [vmem:[%s185 + $0x2c] sm:$0xf]
        %v464 = vld [vmem:[%s185 + $0x30] sm:$0xf]
        %v465 = vld [vmem:[%s185 + $0x34] sm:$0xf]
        %v466 = vld [vmem:[%s185 + $0x38] sm:$0xf]
        %v467 = vld [vmem:[%s185 + $0x3c] sm:$0xf]
        %v468 = vld [vmem:[%s185 + $0x40] sm:$0x1]
        %v486 = vunpack.c.l.b16 %v452
        %v487 = vunpack.c.l.b16 %v453
        %v488 = vunpack.c.l.b16 %v454
        %v489 = vunpack.c.l.b16 %v455
        %v490 = vunpack.c.l.b16 %v456
        %v491 = vunpack.c.l.b16 %v457
        %v492 = vunpack.c.l.b16 %v458
        %v493 = vunpack.c.l.b16 %v459
        %v494 = vunpack.c.l.b16 %v460
        %v495 = vunpack.c.l.b16 %v461
        %v496 = vunpack.c.l.b16 %v462
        %v497 = vunpack.c.l.b16 %v463
        %v498 = vunpack.c.l.b16 %v464
        %v499 = vunpack.c.l.b16 %v465
        %v500 = vunpack.c.l.b16 %v466
        %v501 = vunpack.c.l.b16 %v467
        %v502 = vunpack.c.l.b16 %v468
        %v503 = vpack.c.b16 %v487, %v486
        %v504 = vpack.c.b16 %v489, %v488
        %v505 = vpack.c.b16 %v491, %v490
        %v506 = vpack.c.b16 %v493, %v492
        %v507 = vpack.c.b16 %v495, %v494
        %v508 = vpack.c.b16 %v497, %v496
        %v509 = vpack.c.b16 %v499, %v498
        %v510 = vpack.c.b16 %v501, %v500
        %v511 = vpack.c.b16 %v502, %v502
        %vm512 = vcmask 1046528
        %v513 = vrot.slane %v503, 1
        %v514 = vrot.slane %v504, 1
        %v515 = vsel %vm512, %v513, %v514
        %v516 = vrot.slane %v505, 1
        %v517 = vsel %vm512, %v514, %v516
        %v518 = vrot.slane %v506, 1
        %v519 = vsel %vm512, %v516, %v518
        %v520 = vrot.slane %v507, 1
        %v521 = vsel %vm512, %v518, %v520
        %v522 = vrot.slane %v508, 1
        %v523 = vsel %vm512, %v520, %v522
        %v524 = vrot.slane %v509, 1
        %v525 = vsel %vm512, %v522, %v524
        %v526 = vrot.slane %v510, 1
        %v527 = vsel %vm512, %v524, %v526
        %v528 = vrot.slane %v511, 1
        %v529 = vsel %vm512, %v526, %v528
        %530 = vrot.lane.b32.xlu0 %v515, 50
        %v531 = vpop.permute.xlu0 %530
        %532 = vrot.lane.b32.xlu0 %v517, 50
        %v533 = vpop.permute.xlu0 %532
        %534 = vrot.lane.b32.xlu0 %v519, 50
        %v535 = vpop.permute.xlu0 %534
        %536 = vrot.lane.b32.xlu0 %v521, 50
        %v537 = vpop.permute.xlu0 %536
        %538 = vrot.lane.b32.xlu0 %v523, 50
        %v539 = vpop.permute.xlu0 %538
        %540 = vrot.lane.b32.xlu0 %v525, 50
        %v541 = vpop.permute.xlu0 %540
        %542 = vrot.lane.b32.xlu0 %v527, 50
        %v543 = vpop.permute.xlu0 %542
        %544 = vrot.lane.b32.xlu0 %v529, 50
        %v545 = vpop.permute.xlu0 %544
        %vm554 = vcmask 613776
        %555 = vst.msk [vmem:[#allocation2] sm:$0xff] %vm554, %v531
        %556 = vst.msk [vmem:[#allocation2 + $0x10] sm:$0xff] %vm554, %v533
        %557 = vst.msk [vmem:[#allocation2 + $0x20] sm:$0xff] %vm554, %v535
        %558 = vst.msk [vmem:[#allocation2 + $0x30] sm:$0xff] %vm554, %v537
        %559 = vst.msk [vmem:[#allocation2 + $0x40] sm:$0xff] %vm554, %v539
        %560 = vst.msk [vmem:[#allocation2 + $0x50] sm:$0xff] %vm554, %v541
        %561 = vst.msk [vmem:[#allocation2 + $0x60] sm:$0xff] %vm554, %v543
        %562 = vst.msk [vmem:[#allocation2 + $0x70] sm:$0xff] %vm554, %v545
        %v563 = vld [vmem:[%s185 + $0x4] sm:$0xc]
        %v564 = vld [vmem:[%s185 + $0x8] sm:$0xf]
        %v565 = vld [vmem:[%s185 + $0xc] sm:$0xf]
        %v566 = vld [vmem:[%s185 + $0x10] sm:$0xf]
        %v567 = vld [vmem:[%s185 + $0x14] sm:$0xf]
        %v568 = vld [vmem:[%s185 + $0x18] sm:$0xf]
        %v569 = vld [vmem:[%s185 + $0x1c] sm:$0xf]
        %v570 = vld [vmem:[%s185 + $0x20] sm:$0xf]
        %v571 = vld [vmem:[%s185 + $0x24] sm:$0xf]
        %v572 = vld [vmem:[%s185 + $0x28] sm:$0xf]
        %v573 = vld [vmem:[%s185 + $0x2c] sm:$0xf]
        %v574 = vld [vmem:[%s185 + $0x30] sm:$0xf]
        %v575 = vld [vmem:[%s185 + $0x34] sm:$0xf]
        %v576 = vld [vmem:[%s185 + $0x38] sm:$0xf]
        %v577 = vld [vmem:[%s185 + $0x3c] sm:$0xf]
        %v578 = vld [vmem:[%s185 + $0x40] sm:$0xf]
        %v579 = vld [vmem:[%s185 + $0x44] sm:$0x3]
        %v597 = vunpack.c.l.b16 %v563
        %v598 = vunpack.c.l.b16 %v564
        %v599 = vunpack.c.l.b16 %v565
        %v600 = vunpack.c.l.b16 %v566
        %v601 = vunpack.c.l.b16 %v567
        %v602 = vunpack.c.l.b16 %v568
        %v603 = vunpack.c.l.b16 %v569
        %v604 = vunpack.c.l.b16 %v570
        %v605 = vunpack.c.l.b16 %v571
        %v606 = vunpack.c.l.b16 %v572
        %v607 = vunpack.c.l.b16 %v573
        %v608 = vunpack.c.l.b16 %v574
        %v609 = vunpack.c.l.b16 %v575
        %v610 = vunpack.c.l.b16 %v576
        %v611 = vunpack.c.l.b16 %v577
        %v612 = vunpack.c.l.b16 %v578
        %v613 = vunpack.c.l.b16 %v579
        %v614 = vpack.c.b16 %v598, %v597
        %v615 = vpack.c.b16 %v600, %v599
        %v616 = vpack.c.b16 %v602, %v601
        %v617 = vpack.c.b16 %v604, %v603
        %v618 = vpack.c.b16 %v606, %v605
        %v619 = vpack.c.b16 %v608, %v607
        %v620 = vpack.c.b16 %v610, %v609
        %v621 = vpack.c.b16 %v612, %v611
        %v622 = vpack.c.b16 %v613, %v613
        %vm623 = vcmask 1045504
        %v624 = vrot.slane %v614, 2
        %v625 = vrot.slane %v615, 2
        %v626 = vsel %vm623, %v624, %v625
        %v627 = vrot.slane %v616, 2
        %v628 = vsel %vm623, %v625, %v627
        %v629 = vrot.slane %v617, 2
        %v630 = vsel %vm623, %v627, %v629
        %v631 = vrot.slane %v618, 2
        %v632 = vsel %vm623, %v629, %v631
        %v633 = vrot.slane %v619, 2
        %v634 = vsel %vm623, %v631, %v633
        %v635 = vrot.slane %v620, 2
        %v636 = vsel %vm623, %v633, %v635
        %v637 = vrot.slane %v621, 2
        %v638 = vsel %vm623, %v635, %v637
        %v639 = vrot.slane %v622, 2
        %v640 = vsel %vm623, %v637, %v639
        %641 = vrot.lane.b32.xlu0 %v626, 75
        %v642 = vpop.permute.xlu0 %641
        %643 = vrot.lane.b32.xlu0 %v628, 75
        %v644 = vpop.permute.xlu0 %643
        %645 = vrot.lane.b32.xlu0 %v630, 75
        %v646 = vpop.permute.xlu0 %645
        %647 = vrot.lane.b32.xlu0 %v632, 75
        %v648 = vpop.permute.xlu0 %647
        %649 = vrot.lane.b32.xlu0 %v634, 75
        %v650 = vpop.permute.xlu0 %649
        %651 = vrot.lane.b32.xlu0 %v636, 75
        %v652 = vpop.permute.xlu0 %651
        %653 = vrot.lane.b32.xlu0 %v638, 75
        %v654 = vpop.permute.xlu0 %653
        %655 = vrot.lane.b32.xlu0 %v640, 75
        %v656 = vpop.permute.xlu0 %655
        %vm665 = vcmask 818776
        %666 = vst.msk [vmem:[#allocation2] sm:$0xff] %vm665, %v642
        %667 = vst.msk [vmem:[#allocation2 + $0x10] sm:$0xff] %vm665, %v644
        %668 = vst.msk [vmem:[#allocation2 + $0x20] sm:$0xff] %vm665, %v646
        %669 = vst.msk [vmem:[#allocation2 + $0x30] sm:$0xff] %vm665, %v648
        %670 = vst.msk [vmem:[#allocation2 + $0x40] sm:$0xff] %vm665, %v650
        %671 = vst.msk [vmem:[#allocation2 + $0x50] sm:$0xff] %vm665, %v652
        %672 = vst.msk [vmem:[#allocation2 + $0x60] sm:$0xff] %vm665, %v654
        %673 = vst.msk [vmem:[#allocation2 + $0x70] sm:$0xff] %vm665, %v656
        %v674 = vld [vmem:[%s185 + $0x4] sm:$0xc]
        %v675 = vld [vmem:[%s185 + $0x8] sm:$0xf]
        %v676 = vld [vmem:[%s185 + $0xc] sm:$0xf]
        %v677 = vld [vmem:[%s185 + $0x10] sm:$0xf]
        %v678 = vld [vmem:[%s185 + $0x14] sm:$0xf]
        %v679 = vld [vmem:[%s185 + $0x18] sm:$0xf]
        %v680 = vld [vmem:[%s185 + $0x1c] sm:$0xf]
        %v681 = vld [vmem:[%s185 + $0x20] sm:$0xf]
        %v682 = vld [vmem:[%s185 + $0x24] sm:$0xf]
        %v683 = vld [vmem:[%s185 + $0x28] sm:$0xf]
        %v684 = vld [vmem:[%s185 + $0x2c] sm:$0xf]
        %v685 = vld [vmem:[%s185 + $0x30] sm:$0xf]
        %v686 = vld [vmem:[%s185 + $0x34] sm:$0xf]
        %v687 = vld [vmem:[%s185 + $0x38] sm:$0xf]
        %v688 = vld [vmem:[%s185 + $0x3c] sm:$0xf]
        %v689 = vld [vmem:[%s185 + $0x40] sm:$0xf]
        %v690 = vld [vmem:[%s185 + $0x44] sm:$0x7]
        %v708 = vunpack.c.l.b16 %v674
        %v709 = vunpack.c.l.b16 %v675
        %v710 = vunpack.c.l.b16 %v676
        %v711 = vunpack.c.l.b16 %v677
        %v712 = vunpack.c.l.b16 %v678
        %v713 = vunpack.c.l.b16 %v679
        %v714 = vunpack.c.l.b16 %v680
        %v715 = vunpack.c.l.b16 %v681
        %v716 = vunpack.c.l.b16 %v682
        %v717 = vunpack.c.l.b16 %v683
        %v718 = vunpack.c.l.b16 %v684
        %v719 = vunpack.c.l.b16 %v685
        %v720 = vunpack.c.l.b16 %v686
        %v721 = vunpack.c.l.b16 %v687
        %v722 = vunpack.c.l.b16 %v688
        %v723 = vunpack.c.l.b16 %v689
        %v724 = vunpack.c.l.b16 %v690
        %v725 = vpack.c.b16 %v709, %v708
        %v726 = vpack.c.b16 %v711, %v710
        %v727 = vpack.c.b16 %v713, %v712
        %v728 = vpack.c.b16 %v715, %v714
        %v729 = vpack.c.b16 %v717, %v716
        %v730 = vpack.c.b16 %v719, %v718
        %v731 = vpack.c.b16 %v721, %v720
        %v732 = vpack.c.b16 %v723, %v722
        %v733 = vpack.c.b16 %v724, %v724
        %vm734 = vsmask.f32 5376
        %v736 = vshrl.u32 %v725, 16
        %v738 = vrot.slane %v736, 2
        %v739 = vshll.u32 %v725, 16
        %v741 = vrot.slane %v739, 3
        %v742 = vor.u32 %v738, %v741
        %v744 = vshrl.u32 %v726, 16
        %v746 = vrot.slane %v744, 2
        %v747 = vshll.u32 %v726, 16
        %v749 = vrot.slane %v747, 3
        %v750 = vor.u32 %v746, %v749
        %v751 = vsel %vm734, %v742, %v750
        %v753 = vshrl.u32 %v727, 16
        %v755 = vrot.slane %v753, 2
        %v756 = vshll.u32 %v727, 16
        %v758 = vrot.slane %v756, 3
        %v759 = vor.u32 %v755, %v758
        %v760 = vsel %vm734, %v750, %v759
        %v762 = vshrl.u32 %v728, 16
        %v764 = vrot.slane %v762, 2
        %v765 = vshll.u32 %v728, 16
        %v767 = vrot.slane %v765, 3
        %v768 = vor.u32 %v764, %v767
        %v769 = vsel %vm734, %v759, %v768
        %v771 = vshrl.u32 %v729, 16
        %v773 = vrot.slane %v771, 2
        %v774 = vshll.u32 %v729, 16
        %v776 = vrot.slane %v774, 3
        %v777 = vor.u32 %v773, %v776
        %v778 = vsel %vm734, %v768, %v777
        %v780 = vshrl.u32 %v730, 16
        %v782 = vrot.slane %v780, 2
        %v783 = vshll.u32 %v730, 16
        %v785 = vrot.slane %v783, 3
        %v786 = vor.u32 %v782, %v785
        %v787 = vsel %vm734, %v777, %v786
        %v789 = vshrl.u32 %v731, 16
        %v791 = vrot.slane %v789, 2
        %v792 = vshll.u32 %v731, 16
        %v794 = vrot.slane %v792, 3
        %v795 = vor.u32 %v791, %v794
        %v796 = vsel %vm734, %v786, %v795
        %v798 = vshrl.u32 %v732, 16
        %v800 = vrot.slane %v798, 2
        %v801 = vshll.u32 %v732, 16
        %v803 = vrot.slane %v801, 3
        %v804 = vor.u32 %v800, %v803
        %v805 = vsel %vm734, %v795, %v804
        %v807 = vshrl.u32 %v733, 16
        %v809 = vrot.slane %v807, 2
        %v810 = vshll.u32 %v733, 16
        %v812 = vrot.slane %v810, 3
        %v813 = vor.u32 %v809, %v812
        %v814 = vsel %vm734, %v804, %v813
        %815 = vrot.lane.b32.xlu0 %v751, 100
        %v816 = vpop.permute.xlu0 %815
        %817 = vrot.lane.b32.xlu0 %v760, 100
        %v818 = vpop.permute.xlu0 %817
        %819 = vrot.lane.b32.xlu0 %v769, 100
        %v820 = vpop.permute.xlu0 %819
        %821 = vrot.lane.b32.xlu0 %v778, 100
        %v822 = vpop.permute.xlu0 %821
        %823 = vrot.lane.b32.xlu0 %v787, 100
        %v824 = vpop.permute.xlu0 %823
        %825 = vrot.lane.b32.xlu0 %v796, 100
        %v826 = vpop.permute.xlu0 %825
        %827 = vrot.lane.b32.xlu0 %v805, 100
        %v828 = vpop.permute.xlu0 %827
        %829 = vrot.lane.b32.xlu0 %v814, 100
        %v830 = vpop.permute.xlu0 %829
        %vm839 = vcmask 1023776
        %840 = vst.msk [vmem:[#allocation2] sm:$0xff] %vm839, %v816
        %841 = vst.msk [vmem:[#allocation2 + $0x10] sm:$0xff] %vm839, %v818
        %842 = vst.msk [vmem:[#allocation2 + $0x20] sm:$0xff] %vm839, %v820
        %843 = vst.msk [vmem:[#allocation2 + $0x30] sm:$0xff] %vm839, %v822
        %844 = vst.msk [vmem:[#allocation2 + $0x40] sm:$0xff] %vm839, %v824
        %845 = vst.msk [vmem:[#allocation2 + $0x50] sm:$0xff] %vm839, %v826
        %846 = vst.msk [vmem:[#allocation2 + $0x60] sm:$0xff] %vm839, %v828
        %847 = vst.msk [vmem:[#allocation2 + $0x70] sm:$0xff] %vm839, %v830
        %v848 = vld [vmem:[%s185 + $0x4] sm:$0x8]
        %v849 = vld [vmem:[%s185 + $0x8] sm:$0xf]
        %v850 = vld [vmem:[%s185 + $0xc] sm:$0xf]
        %v851 = vld [vmem:[%s185 + $0x10] sm:$0xf]
        %v852 = vld [vmem:[%s185 + $0x14] sm:$0xf]
        %v853 = vld [vmem:[%s185 + $0x18] sm:$0xf]
        %v854 = vld [vmem:[%s185 + $0x1c] sm:$0xf]
        %v855 = vld [vmem:[%s185 + $0x20] sm:$0xf]
        %v856 = vld [vmem:[%s185 + $0x24] sm:$0xf]
        %v857 = vld [vmem:[%s185 + $0x28] sm:$0xf]
        %v858 = vld [vmem:[%s185 + $0x2c] sm:$0xf]
        %v859 = vld [vmem:[%s185 + $0x30] sm:$0xf]
        %v860 = vld [vmem:[%s185 + $0x34] sm:$0xf]
        %v861 = vld [vmem:[%s185 + $0x38] sm:$0xf]
        %v862 = vld [vmem:[%s185 + $0x3c] sm:$0xf]
        %v863 = vld [vmem:[%s185 + $0x40] sm:$0xf]
        %v864 = vld [vmem:[%s185 + $0x44] sm:$0x7]
        %v882 = vunpack.c.l.b16 %v848
        %v883 = vunpack.c.l.b16 %v849
        %v884 = vunpack.c.l.b16 %v850
        %v885 = vunpack.c.l.b16 %v851
        %v886 = vunpack.c.l.b16 %v852
        %v887 = vunpack.c.l.b16 %v853
        %v888 = vunpack.c.l.b16 %v854
        %v889 = vunpack.c.l.b16 %v855
        %v890 = vunpack.c.l.b16 %v856
        %v891 = vunpack.c.l.b16 %v857
        %v892 = vunpack.c.l.b16 %v858
        %v893 = vunpack.c.l.b16 %v859
        %v894 = vunpack.c.l.b16 %v860
        %v895 = vunpack.c.l.b16 %v861
        %v896 = vunpack.c.l.b16 %v862
        %v897 = vunpack.c.l.b16 %v863
        %v898 = vunpack.c.l.b16 %v864
        %v899 = vpack.c.b16 %v883, %v882
        %v900 = vpack.c.b16 %v885, %v884
        %v901 = vpack.c.b16 %v887, %v886
        %v902 = vpack.c.b16 %v889, %v888
        %v903 = vpack.c.b16 %v891, %v890
        %v904 = vpack.c.b16 %v893, %v892
        %v905 = vpack.c.b16 %v895, %v894
        %v906 = vpack.c.b16 %v897, %v896
        %v907 = vpack.c.b16 %v898, %v898
        %vm908 = vcmask 1044480
        %v909 = vrot.slane %v899, 3
        %v910 = vrot.slane %v900, 3
        %v911 = vsel %vm908, %v909, %v910
        %v912 = vrot.slane %v901, 3
        %v913 = vsel %vm908, %v910, %v912
        %v914 = vrot.slane %v902, 3
        %v915 = vsel %vm908, %v912, %v914
        %v916 = vrot.slane %v903, 3
        %v917 = vsel %vm908, %v914, %v916
        %v918 = vrot.slane %v904, 3
        %v919 = vsel %vm908, %v916, %v918
        %v920 = vrot.slane %v905, 3
        %v921 = vsel %vm908, %v918, %v920
        %v922 = vrot.slane %v906, 3
        %v923 = vsel %vm908, %v920, %v922
        %v924 = vrot.slane %v907, 3
        %v925 = vsel %vm908, %v922, %v924
        %926 = vrot.lane.b32.xlu0 %v911, 125
        %v927 = vpop.permute.xlu0 %926
        %928 = vrot.lane.b32.xlu0 %v913, 125
        %v929 = vpop.permute.xlu0 %928
        %930 = vrot.lane.b32.xlu0 %v915, 125
        %v931 = vpop.permute.xlu0 %930
        %932 = vrot.lane.b32.xlu0 %v917, 125
        %v933 = vpop.permute.xlu0 %932
        %934 = vrot.lane.b32.xlu0 %v919, 125
        %v935 = vpop.permute.xlu0 %934
        %936 = vrot.lane.b32.xlu0 %v921, 125
        %v937 = vpop.permute.xlu0 %936
        %938 = vrot.lane.b32.xlu0 %v923, 125
        %v939 = vpop.permute.xlu0 %938
        %940 = vrot.lane.b32.xlu0 %v925, 125
        %v941 = vpop.permute.xlu0 %940
        %vm950 = vcmask 1048552
        %951 = vst.msk [vmem:[#allocation2] sm:$0xff] %vm950, %v927
        %vm952 = vcmask 179200
        %953 = vst.msk [vmem:[#allocation2 + $0x8] sm:$0xff] %vm952, %v927
        %954 = vst.msk [vmem:[#allocation2 + $0x10] sm:$0xff] %vm950, %v929
        %955 = vst.msk [vmem:[#allocation2 + $0x18] sm:$0xff] %vm952, %v929
        %956 = vst.msk [vmem:[#allocation2 + $0x20] sm:$0xff] %vm950, %v931
        %957 = vst.msk [vmem:[#allocation2 + $0x28] sm:$0xff] %vm952, %v931
        %958 = vst.msk [vmem:[#allocation2 + $0x30] sm:$0xff] %vm950, %v933
        %959 = vst.msk [vmem:[#allocation2 + $0x38] sm:$0xff] %vm952, %v933
        %960 = vst.msk [vmem:[#allocation2 + $0x40] sm:$0xff] %vm950, %v935
        %961 = vst.msk [vmem:[#allocation2 + $0x48] sm:$0xff] %vm952, %v935
        %962 = vst.msk [vmem:[#allocation2 + $0x50] sm:$0xff] %vm950, %v937
        %963 = vst.msk [vmem:[#allocation2 + $0x58] sm:$0xff] %vm952, %v937
        %964 = vst.msk [vmem:[#allocation2 + $0x60] sm:$0xff] %vm950, %v939
        %965 = vst.msk [vmem:[#allocation2 + $0x68] sm:$0xff] %vm952, %v939
        %966 = vst.msk [vmem:[#allocation2 + $0x70] sm:$0xff] %vm950, %v941
        %967 = vst.msk [vmem:[#allocation2 + $0x78] sm:$0xff] %vm952, %v941
        %v968 = vld [vmem:[%s185 + $0xc] sm:$0xf]
        %v969 = vld [vmem:[%s185 + $0x10] sm:$0xf]
        %v970 = vld [vmem:[%s185 + $0x14] sm:$0xf]
        %v971 = vld [vmem:[%s185 + $0x18] sm:$0xf]
        %v972 = vld [vmem:[%s185 + $0x1c] sm:$0xf]
        %v973 = vld [vmem:[%s185 + $0x20] sm:$0xf]
        %v974 = vld [vmem:[%s185 + $0x24] sm:$0xf]
        %v975 = vld [vmem:[%s185 + $0x28] sm:$0xf]
        %v976 = vld [vmem:[%s185 + $0x2c] sm:$0xf]
        %v977 = vld [vmem:[%s185 + $0x30] sm:$0xf]
        %v978 = vld [vmem:[%s185 + $0x34] sm:$0xf]
        %v979 = vld [vmem:[%s185 + $0x38] sm:$0xf]
        %v980 = vld [vmem:[%s185 + $0x3c] sm:$0xf]
        %v981 = vld [vmem:[%s185 + $0x40] sm:$0xf]
        %v982 = vld [vmem:[%s185 + $0x44] sm:$0xf]
        %v983 = vld [vmem:[%s185 + $0x48] sm:$0xf]
        %v1000 = vunpack.c.l.b16 %v968
        %v1001 = vunpack.c.l.b16 %v969
        %v1002 = vunpack.c.l.b16 %v970
        %v1003 = vunpack.c.l.b16 %v971
        %v1004 = vunpack.c.l.b16 %v972
        %v1005 = vunpack.c.l.b16 %v973
        %v1006 = vunpack.c.l.b16 %v974
        %v1007 = vunpack.c.l.b16 %v975
        %v1008 = vunpack.c.l.b16 %v976
        %v1009 = vunpack.c.l.b16 %v977
        %v1010 = vunpack.c.l.b16 %v978
        %v1011 = vunpack.c.l.b16 %v979
        %v1012 = vunpack.c.l.b16 %v980
        %v1013 = vunpack.c.l.b16 %v981
        %v1014 = vunpack.c.l.b16 %v982
        %v1015 = vunpack.c.l.b16 %v983
        %v1016 = vpack.c.b16 %v1001, %v1000
        %v1017 = vpack.c.b16 %v1003, %v1002
        %v1018 = vpack.c.b16 %v1005, %v1004
        %v1019 = vpack.c.b16 %v1007, %v1006
        %v1020 = vpack.c.b16 %v1009, %v1008
        %v1021 = vpack.c.b16 %v1011, %v1010
        %v1022 = vpack.c.b16 %v1013, %v1012
        %v1023 = vpack.c.b16 %v1015, %v1014
        %1024 = vrot.lane.b32.xlu0 %v1016, 22
        %v1025 = vpop.permute.xlu0 %1024
        %1026 = vrot.lane.b32.xlu0 %v1017, 22
        %v1027 = vpop.permute.xlu0 %1026
        %1028 = vrot.lane.b32.xlu0 %v1018, 22
        %v1029 = vpop.permute.xlu0 %1028
        %1030 = vrot.lane.b32.xlu0 %v1019, 22
        %v1031 = vpop.permute.xlu0 %1030
        %1032 = vrot.lane.b32.xlu0 %v1020, 22
        %v1033 = vpop.permute.xlu0 %1032
        %1034 = vrot.lane.b32.xlu0 %v1021, 22
        %v1035 = vpop.permute.xlu0 %1034
        %1036 = vrot.lane.b32.xlu0 %v1022, 22
        %v1037 = vpop.permute.xlu0 %1036
        %1038 = vrot.lane.b32.xlu0 %v1023, 22
        %v1039 = vpop.permute.xlu0 %1038
        %vm1048 = vcmask 384176
        %1049 = vst.msk [vmem:[#allocation2 + $0x8] sm:$0xff] %vm1048, %v1025
        %1050 = vst.msk [vmem:[#allocation2 + $0x18] sm:$0xff] %vm1048, %v1027
        %1051 = vst.msk [vmem:[#allocation2 + $0x28] sm:$0xff] %vm1048, %v1029
        %1052 = vst.msk [vmem:[#allocation2 + $0x38] sm:$0xff] %vm1048, %v1031
        %1053 = vst.msk [vmem:[#allocation2 + $0x48] sm:$0xff] %vm1048, %v1033
        %1054 = vst.msk [vmem:[#allocation2 + $0x58] sm:$0xff] %vm1048, %v1035
        %1055 = vst.msk [vmem:[#allocation2 + $0x68] sm:$0xff] %vm1048, %v1037
        %1056 = vst.msk [vmem:[#allocation2 + $0x78] sm:$0xff] %vm1048, %v1039
        %v1057 = vld [vmem:[%s185 + $0xc] sm:$0xf]
        %v1058 = vld [vmem:[%s185 + $0x10] sm:$0xf]
        %v1059 = vld [vmem:[%s185 + $0x14] sm:$0xf]
        %v1060 = vld [vmem:[%s185 + $0x18] sm:$0xf]
        %v1061 = vld [vmem:[%s185 + $0x1c] sm:$0xf]
        %v1062 = vld [vmem:[%s185 + $0x20] sm:$0xf]
        %v1063 = vld [vmem:[%s185 + $0x24] sm:$0xf]
        %v1064 = vld [vmem:[%s185 + $0x28] sm:$0xf]
        %v1065 = vld [vmem:[%s185 + $0x2c] sm:$0xf]
        %v1066 = vld [vmem:[%s185 + $0x30] sm:$0xf]
        %v1067 = vld [vmem:[%s185 + $0x34] sm:$0xf]
        %v1068 = vld [vmem:[%s185 + $0x38] sm:$0xf]
        %v1069 = vld [vmem:[%s185 + $0x3c] sm:$0xf]
        %v1070 = vld [vmem:[%s185 + $0x40] sm:$0xf]
        %v1071 = vld [vmem:[%s185 + $0x44] sm:$0xf]
        %v1072 = vld [vmem:[%s185 + $0x48] sm:$0xf]
        %v1073 = vld [vmem:[%s185 + $0x4c] sm:$0x1]
        %v1091 = vunpack.c.l.b16 %v1057
        %v1092 = vunpack.c.l.b16 %v1058
        %v1093 = vunpack.c.l.b16 %v1059
        %v1094 = vunpack.c.l.b16 %v1060
        %v1095 = vunpack.c.l.b16 %v1061
        %v1096 = vunpack.c.l.b16 %v1062
        %v1097 = vunpack.c.l.b16 %v1063
        %v1098 = vunpack.c.l.b16 %v1064
        %v1099 = vunpack.c.l.b16 %v1065
        %v1100 = vunpack.c.l.b16 %v1066
        %v1101 = vunpack.c.l.b16 %v1067
        %v1102 = vunpack.c.l.b16 %v1068
        %v1103 = vunpack.c.l.b16 %v1069
        %v1104 = vunpack.c.l.b16 %v1070
        %v1105 = vunpack.c.l.b16 %v1071
        %v1106 = vunpack.c.l.b16 %v1072
        %v1107 = vunpack.c.l.b16 %v1073
        %v1108 = vpack.c.b16 %v1092, %v1091
        %v1109 = vpack.c.b16 %v1094, %v1093
        %v1110 = vpack.c.b16 %v1096, %v1095
        %v1111 = vpack.c.b16 %v1098, %v1097
        %v1112 = vpack.c.b16 %v1100, %v1099
        %v1113 = vpack.c.b16 %v1102, %v1101
        %v1114 = vpack.c.b16 %v1104, %v1103
        %v1115 = vpack.c.b16 %v1106, %v1105
        %v1116 = vpack.c.b16 %v1107, %v1107
        %v1118 = vshrl.u32 %v1108, 16
        %v1120 = vshll.u32 %v1108, 16
        %v1122 = vrot.slane %v1120, 1
        %v1123 = vor.u32 %v1118, %v1122
        %v1125 = vshll.u32 %v1109, 16
        %v1127 = vrot.slane %v1125, 1
        %v1128 = vsel %vm350, %v1123, %v1127
        %v1129 = vshrl.u32 %v1109, 16
        %v1131 = vor.u32 %v1129, %v1127
        %v1133 = vshll.u32 %v1110, 16
        %v1135 = vrot.slane %v1133, 1
        %v1136 = vsel %vm350, %v1131, %v1135
        %v1137 = vshrl.u32 %v1110, 16
        %v1139 = vor.u32 %v1137, %v1135
        %v1141 = vshll.u32 %v1111, 16
        %v1143 = vrot.slane %v1141, 1
        %v1144 = vsel %vm350, %v1139, %v1143
        %v1145 = vshrl.u32 %v1111, 16
        %v1147 = vor.u32 %v1145, %v1143
        %v1149 = vshll.u32 %v1112, 16
        %v1151 = vrot.slane %v1149, 1
        %v1152 = vsel %vm350, %v1147, %v1151
        %v1153 = vshrl.u32 %v1112, 16
        %v1155 = vor.u32 %v1153, %v1151
        %v1157 = vshll.u32 %v1113, 16
        %v1159 = vrot.slane %v1157, 1
        %v1160 = vsel %vm350, %v1155, %v1159
        %v1161 = vshrl.u32 %v1113, 16
        %v1163 = vor.u32 %v1161, %v1159
        %v1165 = vshll.u32 %v1114, 16
        %v1167 = vrot.slane %v1165, 1
        %v1168 = vsel %vm350, %v1163, %v1167
        %v1169 = vshrl.u32 %v1114, 16
        %v1171 = vor.u32 %v1169, %v1167
        %v1173 = vshll.u32 %v1115, 16
        %v1175 = vrot.slane %v1173, 1
        %v1176 = vsel %vm350, %v1171, %v1175
        %v1177 = vshrl.u32 %v1115, 16
        %v1179 = vor.u32 %v1177, %v1175
        %v1181 = vshll.u32 %v1116, 16
        %v1183 = vrot.slane %v1181, 1
        %v1184 = vsel %vm350, %v1179, %v1183
        %1185 = vrot.lane.b32.xlu0 %v1128, 47
        %v1186 = vpop.permute.xlu0 %1185
        %1187 = vrot.lane.b32.xlu0 %v1136, 47
        %v1188 = vpop.permute.xlu0 %1187
        %1189 = vrot.lane.b32.xlu0 %v1144, 47
        %v1190 = vpop.permute.xlu0 %1189
        %1191 = vrot.lane.b32.xlu0 %v1152, 47
        %v1192 = vpop.permute.xlu0 %1191
        %1193 = vrot.lane.b32.xlu0 %v1160, 47
        %v1194 = vpop.permute.xlu0 %1193
        %1195 = vrot.lane.b32.xlu0 %v1168, 47
        %v1196 = vpop.permute.xlu0 %1195
        %1197 = vrot.lane.b32.xlu0 %v1176, 47
        %v1198 = vpop.permute.xlu0 %1197
        %1199 = vrot.lane.b32.xlu0 %v1184, 47
        %v1200 = vpop.permute.xlu0 %1199
        %vm1209 = vcmask 589176
        %1210 = vst.msk [vmem:[#allocation2 + $0x8] sm:$0xff] %vm1209, %v1186
        %1211 = vst.msk [vmem:[#allocation2 + $0x18] sm:$0xff] %vm1209, %v1188
        %1212 = vst.msk [vmem:[#allocation2 + $0x28] sm:$0xff] %vm1209, %v1190
        %1213 = vst.msk [vmem:[#allocation2 + $0x38] sm:$0xff] %vm1209, %v1192
        %1214 = vst.msk [vmem:[#allocation2 + $0x48] sm:$0xff] %vm1209, %v1194
        %1215 = vst.msk [vmem:[#allocation2 + $0x58] sm:$0xff] %vm1209, %v1196
        %1216 = vst.msk [vmem:[#allocation2 + $0x68] sm:$0xff] %vm1209, %v1198
        %1217 = vst.msk [vmem:[#allocation2 + $0x78] sm:$0xff] %vm1209, %v1200
        %v1218 = vld [vmem:[%s185 + $0xc] sm:$0xe]
        %v1219 = vld [vmem:[%s185 + $0x10] sm:$0xf]
        %v1220 = vld [vmem:[%s185 + $0x14] sm:$0xf]
        %v1221 = vld [vmem:[%s185 + $0x18] sm:$0xf]
        %v1222 = vld [vmem:[%s185 + $0x1c] sm:$0xf]
        %v1223 = vld [vmem:[%s185 + $0x20] sm:$0xf]
        %v1224 = vld [vmem:[%s185 + $0x24] sm:$0xf]
        %v1225 = vld [vmem:[%s185 + $0x28] sm:$0xf]
        %v1226 = vld [vmem:[%s185 + $0x2c] sm:$0xf]
        %v1227 = vld [vmem:[%s185 + $0x30] sm:$0xf]
        %v1228 = vld [vmem:[%s185 + $0x34] sm:$0xf]
        %v1229 = vld [vmem:[%s185 + $0x38] sm:$0xf]
        %v1230 = vld [vmem:[%s185 + $0x3c] sm:$0xf]
        %v1231 = vld [vmem:[%s185 + $0x40] sm:$0xf]
        %v1232 = vld [vmem:[%s185 + $0x44] sm:$0xf]
        %v1233 = vld [vmem:[%s185 + $0x48] sm:$0xf]
        %v1234 = vld [vmem:[%s185 + $0x4c] sm:$0x1]
        %v1252 = vunpack.c.l.b16 %v1218
        %v1253 = vunpack.c.l.b16 %v1219
        %v1254 = vunpack.c.l.b16 %v1220
        %v1255 = vunpack.c.l.b16 %v1221
        %v1256 = vunpack.c.l.b16 %v1222
        %v1257 = vunpack.c.l.b16 %v1223
        %v1258 = vunpack.c.l.b16 %v1224
        %v1259 = vunpack.c.l.b16 %v1225
        %v1260 = vunpack.c.l.b16 %v1226
        %v1261 = vunpack.c.l.b16 %v1227
        %v1262 = vunpack.c.l.b16 %v1228
        %v1263 = vunpack.c.l.b16 %v1229
        %v1264 = vunpack.c.l.b16 %v1230
        %v1265 = vunpack.c.l.b16 %v1231
        %v1266 = vunpack.c.l.b16 %v1232
        %v1267 = vunpack.c.l.b16 %v1233
        %v1268 = vunpack.c.l.b16 %v1234
        %v1269 = vpack.c.b16 %v1253, %v1252
        %v1270 = vpack.c.b16 %v1255, %v1254
        %v1271 = vpack.c.b16 %v1257, %v1256
        %v1272 = vpack.c.b16 %v1259, %v1258
        %v1273 = vpack.c.b16 %v1261, %v1260
        %v1274 = vpack.c.b16 %v1263, %v1262
        %v1275 = vpack.c.b16 %v1265, %v1264
        %v1276 = vpack.c.b16 %v1267, %v1266
        %v1277 = vpack.c.b16 %v1268, %v1268
        %v1278 = vrot.slane %v1269, 1
        %v1279 = vrot.slane %v1270, 1
        %v1280 = vsel %vm512, %v1278, %v1279
        %v1281 = vrot.slane %v1271, 1
        %v1282 = vsel %vm512, %v1279, %v1281
        %v1283 = vrot.slane %v1272, 1
        %v1284 = vsel %vm512, %v1281, %v1283
        %v1285 = vrot.slane %v1273, 1
        %v1286 = vsel %vm512, %v1283, %v1285
        %v1287 = vrot.slane %v1274, 1
        %v1288 = vsel %vm512, %v1285, %v1287
        %v1289 = vrot.slane %v1275, 1
        %v1290 = vsel %vm512, %v1287, %v1289
        %v1291 = vrot.slane %v1276, 1
        %v1292 = vsel %vm512, %v1289, %v1291
        %v1293 = vrot.slane %v1277, 1
        %v1294 = vsel %vm512, %v1291, %v1293
        %1295 = vrot.lane.b32.xlu0 %v1280, 72
        %v1296 = vpop.permute.xlu0 %1295
        %1297 = vrot.lane.b32.xlu0 %v1282, 72
        %v1298 = vpop.permute.xlu0 %1297
        %1299 = vrot.lane.b32.xlu0 %v1284, 72
        %v1300 = vpop.permute.xlu0 %1299
        %1301 = vrot.lane.b32.xlu0 %v1286, 72
        %v1302 = vpop.permute.xlu0 %1301
        %1303 = vrot.lane.b32.xlu0 %v1288, 72
        %v1304 = vpop.permute.xlu0 %1303
        %1305 = vrot.lane.b32.xlu0 %v1290, 72
        %v1306 = vpop.permute.xlu0 %1305
        %1307 = vrot.lane.b32.xlu0 %v1292, 72
        %v1308 = vpop.permute.xlu0 %1307
        %1309 = vrot.lane.b32.xlu0 %v1294, 72
        %v1310 = vpop.permute.xlu0 %1309
        %vm1319 = vcmask 794176
        %1320 = vst.msk [vmem:[#allocation2 + $0x8] sm:$0xff] %vm1319, %v1296
        %1321 = vst.msk [vmem:[#allocation2 + $0x18] sm:$0xff] %vm1319, %v1298
        %1322 = vst.msk [vmem:[#allocation2 + $0x28] sm:$0xff] %vm1319, %v1300
        %1323 = vst.msk [vmem:[#allocation2 + $0x38] sm:$0xff] %vm1319, %v1302
        %1324 = vst.msk [vmem:[#allocation2 + $0x48] sm:$0xff] %vm1319, %v1304
        %1325 = vst.msk [vmem:[#allocation2 + $0x58] sm:$0xff] %vm1319, %v1306
        %1326 = vst.msk [vmem:[#allocation2 + $0x68] sm:$0xff] %vm1319, %v1308
        %1327 = vst.msk [vmem:[#allocation2 + $0x78] sm:$0xff] %vm1319, %v1310
        %v1328 = vld [vmem:[#allocation2] sm:$0xff]
        %v1329 = vld [vmem:[#allocation2 + $0x8] sm:$0xff]
        %v1330 = vld [vmem:[#allocation2 + $0x10] sm:$0xff]
        %v1331 = vld [vmem:[#allocation2 + $0x18] sm:$0xff]
        %v1332 = vld [vmem:[#allocation2 + $0x20] sm:$0xff]
        %v1333 = vld [vmem:[#allocation2 + $0x28] sm:$0xff]
        %v1334 = vld [vmem:[#allocation2 + $0x30] sm:$0xff]
        %v1335 = vld [vmem:[#allocation2 + $0x38] sm:$0xff]
        %v1336 = vld [vmem:[#allocation2 + $0x40] sm:$0xff]
        %v1337 = vld [vmem:[#allocation2 + $0x48] sm:$0xff]
        %v1338 = vld [vmem:[#allocation2 + $0x50] sm:$0xff]
        %v1339 = vld [vmem:[#allocation2 + $0x58] sm:$0xff]
        %v1340 = vld [vmem:[#allocation2 + $0x60] sm:$0xff]
        %v1341 = vld [vmem:[#allocation2 + $0x68] sm:$0xff]
        %v1342 = vld [vmem:[#allocation2 + $0x70] sm:$0xff]
        %v1343 = vld [vmem:[#allocation2 + $0x78] sm:$0xff]
        %v1344 = vld [vmem:[#allocation6] sm:$0xf]
        %v1345 = vld [vmem:[#allocation6 + $0x4] sm:$0xf]
        %v1346 = vld [vmem:[#allocation6 + $0x8] sm:$0xf]
        %v1347 = vld [vmem:[#allocation6 + $0xc] sm:$0xf]
        %v1348 = vld [vmem:[#allocation6 + $0x10] sm:$0xf]
        %v1349 = vld [vmem:[#allocation6 + $0x14] sm:$0xf]
        %v1350 = vld [vmem:[#allocation6 + $0x18] sm:$0xf]
        %v1351 = vld [vmem:[#allocation6 + $0x1c] sm:$0xf]
        %v1352 = vld [vmem:[#allocation6 + $0x20] sm:$0xf]
        %v1353 = vld [vmem:[#allocation6 + $0x24] sm:$0xf]
        %v1354 = vld [vmem:[#allocation6 + $0x28] sm:$0xf]
        %v1355 = vld [vmem:[#allocation6 + $0x2c] sm:$0xf]
        %v1356 = vld [vmem:[#allocation6 + $0x30] sm:$0xf]
        %v1357 = vld [vmem:[#allocation6 + $0x34] sm:$0xf]
        %v1358 = vld [vmem:[#allocation6 + $0x38] sm:$0xf]
        %v1359 = vld [vmem:[#allocation6 + $0x3c] sm:$0xf]
        %v1360 = vld [vmem:[#allocation6 + $0x40] sm:$0xf]
        %v1361 = vld [vmem:[#allocation6 + $0x44] sm:$0xf]
        %v1362 = vld [vmem:[#allocation6 + $0x48] sm:$0xf]
        %v1363 = vld [vmem:[#allocation6 + $0x4c] sm:$0xf]
        %v1364 = vld [vmem:[#allocation6 + $0x50] sm:$0xf]
        %v1365 = vld [vmem:[#allocation6 + $0x54] sm:$0xf]
        %v1366 = vld [vmem:[#allocation6 + $0x58] sm:$0xf]
        %v1367 = vld [vmem:[#allocation6 + $0x5c] sm:$0xf]
        %v1368 = vld [vmem:[#allocation6 + $0x60] sm:$0xf]
        %v1369 = vld [vmem:[#allocation6 + $0x64] sm:$0xf]
        %v1370 = vld [vmem:[#allocation6 + $0x68] sm:$0xf]
        %v1371 = vld [vmem:[#allocation6 + $0x6c] sm:$0xf]
        %v1372 = vld [vmem:[#allocation6 + $0x70] sm:$0x1]
        %v1373 = vld [vmem:[#allocation8] sm:$0x1]
        %v1375 = vlaneseq
        %v1376 = vshrl.u32 %v1375, 7
        %v1377 = vsub.s32 0, %v1376
        %v1378 = vrot.slane %v1373, %v1377
        %v1409 = vunpack.c.l.b16 %v1344
        %v1410 = vunpack.c.l.b16 %v1345
        %v1411 = vunpack.c.l.b16 %v1346
        %v1412 = vunpack.c.l.b16 %v1347
        %v1413 = vunpack.c.l.b16 %v1348
        %v1414 = vunpack.c.l.b16 %v1349
        %v1415 = vunpack.c.l.b16 %v1350
        %v1416 = vunpack.c.l.b16 %v1351
        %v1417 = vunpack.c.l.b16 %v1352
        %v1418 = vunpack.c.l.b16 %v1353
        %v1419 = vunpack.c.l.b16 %v1354
        %v1420 = vunpack.c.l.b16 %v1355
        %v1421 = vunpack.c.l.b16 %v1356
        %v1422 = vunpack.c.l.b16 %v1357
        %v1423 = vunpack.c.l.b16 %v1358
        %v1424 = vunpack.c.l.b16 %v1359
        %v1425 = vunpack.c.l.b16 %v1360
        %v1426 = vunpack.c.l.b16 %v1361
        %v1427 = vunpack.c.l.b16 %v1362
        %v1428 = vunpack.c.l.b16 %v1363
        %v1429 = vunpack.c.l.b16 %v1364
        %v1430 = vunpack.c.l.b16 %v1365
        %v1431 = vunpack.c.l.b16 %v1366
        %v1432 = vunpack.c.l.b16 %v1367
        %v1433 = vunpack.c.l.b16 %v1368
        %v1434 = vunpack.c.l.b16 %v1369
        %v1435 = vunpack.c.l.b16 %v1370
        %v1436 = vunpack.c.l.b16 %v1371
        %v1437 = vunpack.c.l.b16 %v1372
        %v1438 = vpack.c.b16 %v1410, %v1409
        %v1439 = vpack.c.b16 %v1412, %v1411
        %v1440 = vpack.c.b16 %v1414, %v1413
        %v1441 = vpack.c.b16 %v1416, %v1415
        %v1442 = vpack.c.b16 %v1418, %v1417
        %v1443 = vpack.c.b16 %v1420, %v1419
        %v1444 = vpack.c.b16 %v1422, %v1421
        %v1445 = vpack.c.b16 %v1424, %v1423
        %v1446 = vpack.c.b16 %v1426, %v1425
        %v1447 = vpack.c.b16 %v1428, %v1427
        %v1448 = vpack.c.b16 %v1430, %v1429
        %v1449 = vpack.c.b16 %v1432, %v1431
        %v1450 = vpack.c.b16 %v1434, %v1433
        %v1451 = vpack.c.b16 %v1436, %v1435
        %v1452 = vpack.c.b16 %v1437, %v1437
        %vm1467 = vcmask 793600
        %v1469 = vsel %vm1467, %v1329, 0
        %v1472 = vsel %vm1467, %v1331, 0
        %v1475 = vsel %vm1467, %v1333, 0
        %v1478 = vsel %vm1467, %v1335, 0
        %v1481 = vsel %vm1467, %v1337, 0
        %v1484 = vsel %vm1467, %v1339, 0
        %v1487 = vsel %vm1467, %v1341, 0
        %v1490 = vsel %vm1467, %v1343, 0
        %vm1492 = vcmask 1040384
        %v1493 = vsel 0, 4294967295, 65535
        %v1494 = vsel %vm1492, %v1493, 0
        %v1496 = vand.u32 %v1452, %v1494
        %1498 = vmatprep.subr.bf16.mxu0 0
        %1499 = vmatpush1.bf16.msra.mxu0 %v1438
        %1500 = vmatprep.subr.bf16.mxu0 0
        %1501 = vmatpush1.bf16.msra.mxu0 %v1439
        %1502 = vmatprep.subr.bf16.mxu0 0
        %1503 = vmatpush1.bf16.msra.mxu0 %v1440
        %1504 = vmatprep.subr.bf16.mxu0 0
        %1505 = vmatpush1.bf16.msra.mxu0 %v1441
        %1506 = vmatprep.subr.bf16.mxu0 0
        %1507 = vmatpush1.bf16.msra.mxu0 %v1442
        %1508 = vmatprep.subr.bf16.mxu0 0
        %1509 = vmatpush1.bf16.msra.mxu0 %v1443
        %1510 = vmatprep.subr.bf16.mxu0 0
        %1511 = vmatpush1.bf16.msra.mxu0 %v1444
        %1512 = vmatprep.subr.bf16.mxu0 0
        %1513 = vmatpush1.bf16.msra.mxu0 %v1445
        %1514 = vmatprep.subr.bf16.mxu0 0
        %1515 = vmatpush1.bf16.msra.mxu0 %v1446
        %1516 = vmatprep.subr.bf16.mxu0 0
        %1517 = vmatpush1.bf16.msra.mxu0 %v1447
        %1518 = vmatprep.subr.bf16.mxu0 0
        %1519 = vmatpush1.bf16.msra.mxu0 %v1448
        %1520 = vmatprep.subr.bf16.mxu0 0
        %1521 = vmatpush1.bf16.msra.mxu0 %v1449
        %1522 = vmatprep.subr.bf16.mxu0 0
        %1523 = vmatpush1.bf16.msra.mxu0 %v1450
        %1524 = vmatprep.subr.bf16.mxu0 0
        %1525 = vmatpush1.bf16.msra.mxu0 %v1451
        %1526 = vmatprep.subr.bf16.mxu0 0
        %1527 = vmatpush1.bf16.msra.mxu0 %v1496
        %1528 = vmatprep.subr.bf16.mxu0 0
        %1529 = vmatpush1.bf16.msra.mxu0 0
        %1530 = vmatprep.mubr.bf16.mxu0 %v1469
        %1531 = vmatmul.mubr.bf16.gmra.mrb[0].mxu0 %v1328
        %v1532 = vpop.f32.mrb[0].mxu0
        %v1533 = vadd.f32 %v1378, %v1532
        %v1534 = vpop.f32.mrb[0].mxu0
        %v1535 = vpop.f32.mrb[0].mxu0
        %v1536 = vadd.f32 %v1378, %v1535
        %v1537 = vpop.f32.mrb[0].mxu0
        %1538 = vmatprep.mubr.bf16.mxu0 %v1472
        %1539 = vmatmul.mubr.bf16.gmra.mrb[0].mxu0 %v1330
        %v1540 = vpop.f32.mrb[0].mxu0
        %v1541 = vadd.f32 %v1378, %v1540
        %v1542 = vpop.f32.mrb[0].mxu0
        %v1543 = vpop.f32.mrb[0].mxu0
        %v1544 = vadd.f32 %v1378, %v1543
        %v1545 = vpop.f32.mrb[0].mxu0
        %1546 = vmatprep.mubr.bf16.mxu0 %v1475
        %1547 = vmatmul.mubr.bf16.gmra.mrb[0].mxu0 %v1332
        %v1548 = vpop.f32.mrb[0].mxu0
        %v1549 = vadd.f32 %v1378, %v1548
        %v1550 = vpop.f32.mrb[0].mxu0
        %v1551 = vpop.f32.mrb[0].mxu0
        %v1552 = vadd.f32 %v1378, %v1551
        %v1553 = vpop.f32.mrb[0].mxu0
        %1554 = vmatprep.mubr.bf16.mxu0 %v1478
        %1555 = vmatmul.mubr.bf16.gmra.mrb[0].mxu0 %v1334
        %v1556 = vpop.f32.mrb[0].mxu0
        %v1557 = vadd.f32 %v1378, %v1556
        %v1558 = vpop.f32.mrb[0].mxu0
        %v1559 = vpop.f32.mrb[0].mxu0
        %v1560 = vadd.f32 %v1378, %v1559
        %v1561 = vpop.f32.mrb[0].mxu0
        %1562 = vmatprep.mubr.bf16.mxu0 %v1481
        %1563 = vmatmul.mubr.bf16.gmra.mrb[0].mxu0 %v1336
        %v1564 = vpop.f32.mrb[0].mxu0
        %v1565 = vadd.f32 %v1378, %v1564
        %v1566 = vpop.f32.mrb[0].mxu0
        %v1567 = vpop.f32.mrb[0].mxu0
        %v1568 = vadd.f32 %v1378, %v1567
        %v1569 = vpop.f32.mrb[0].mxu0
        %1570 = vmatprep.mubr.bf16.mxu0 %v1484
        %1571 = vmatmul.mubr.bf16.gmra.mrb[0].mxu0 %v1338
        %v1572 = vpop.f32.mrb[0].mxu0
        %v1573 = vadd.f32 %v1378, %v1572
        %v1574 = vpop.f32.mrb[0].mxu0
        %v1575 = vpop.f32.mrb[0].mxu0
        %v1576 = vadd.f32 %v1378, %v1575
        %v1577 = vpop.f32.mrb[0].mxu0
        %1578 = vmatprep.mubr.bf16.mxu0 %v1487
        %1579 = vmatmul.mubr.bf16.gmra.mrb[0].mxu0 %v1340
        %v1580 = vpop.f32.mrb[0].mxu0
        %v1581 = vadd.f32 %v1378, %v1580
        %v1582 = vpop.f32.mrb[0].mxu0
        %v1583 = vpop.f32.mrb[0].mxu0
        %v1584 = vadd.f32 %v1378, %v1583
        %v1585 = vpop.f32.mrb[0].mxu0
        %1586 = vmatprep.mubr.bf16.mxu0 %v1490
        %1587 = vmatmul.mubr.bf16.gmra.mrb[0].mxu0 %v1342
        %v1588 = vpop.f32.mrb[0].mxu0
        %v1589 = vadd.f32 %v1378, %v1588
        %v1590 = vpop.f32.mrb[0].mxu0
        %v1591 = vpop.f32.mrb[0].mxu0
        %v1592 = vadd.f32 %v1378, %v1591
        %v1593 = vpop.f32.mrb[0].mxu0
        %1594 = vdwg.mxu0
        %v1595 = vmax.f32 %v1533, 0.0
        %v1596 = vmax.f32 %v1536, 0.0
        %v1597 = vmax.f32 %v1541, 0.0
        %v1598 = vmax.f32 %v1544, 0.0
        %v1599 = vmax.f32 %v1549, 0.0
        %v1600 = vmax.f32 %v1552, 0.0
        %v1601 = vmax.f32 %v1557, 0.0
        %v1602 = vmax.f32 %v1560, 0.0
        %v1603 = vmax.f32 %v1565, 0.0
        %v1604 = vmax.f32 %v1568, 0.0
        %v1605 = vmax.f32 %v1573, 0.0
        %v1606 = vmax.f32 %v1576, 0.0
        %v1607 = vmax.f32 %v1581, 0.0
        %v1608 = vmax.f32 %v1584, 0.0
        %v1609 = vmax.f32 %v1589, 0.0
        %v1610 = vmax.f32 %v1592, 0.0
        %v1611 = vpack.c.bf16 %v1596, %v1595
        %v1612 = vpack.c.bf16 %v1598, %v1597
        %v1613 = vpack.c.bf16 %v1600, %v1599
        %v1614 = vpack.c.bf16 %v1602, %v1601
        %v1615 = vpack.c.bf16 %v1604, %v1603
        %v1616 = vpack.c.bf16 %v1606, %v1605
        %v1617 = vpack.c.bf16 %v1608, %v1607
        %v1618 = vpack.c.bf16 %v1610, %v1609
        %v1627 = vunpack.c.l.b16 %v1611
        %v1628 = vunpack.c.h.b16 %v1611
        %v1629 = vunpack.c.l.b16 %v1612
        %v1630 = vunpack.c.h.b16 %v1612
        %v1631 = vunpack.c.l.b16 %v1613
        %v1632 = vunpack.c.h.b16 %v1613
        %v1633 = vunpack.c.l.b16 %v1614
        %v1634 = vunpack.c.h.b16 %v1614
        %v1635 = vunpack.c.l.b16 %v1615
        %v1636 = vunpack.c.h.b16 %v1615
        %v1637 = vunpack.c.l.b16 %v1616
        %v1638 = vunpack.c.h.b16 %v1616
        %v1639 = vunpack.c.l.b16 %v1617
        %v1640 = vunpack.c.h.b16 %v1617
        %v1641 = vunpack.c.l.b16 %v1618
        %v1642 = vunpack.c.h.b16 %v1618
        %v1643 = vpack.c.b16 %v1627, %v1627
        %v1644 = vpack.c.b16 %v1628, %v1628
        %v1645 = vpack.c.b16 %v1629, %v1629
        %v1646 = vpack.c.b16 %v1630, %v1630
        %v1647 = vpack.c.b16 %v1631, %v1631
        %v1648 = vpack.c.b16 %v1632, %v1632
        %v1649 = vpack.c.b16 %v1633, %v1633
        %v1650 = vpack.c.b16 %v1634, %v1634
        %v1651 = vpack.c.b16 %v1635, %v1635
        %v1652 = vpack.c.b16 %v1636, %v1636
        %v1653 = vpack.c.b16 %v1637, %v1637
        %v1654 = vpack.c.b16 %v1638, %v1638
        %v1655 = vpack.c.b16 %v1639, %v1639
        %v1656 = vpack.c.b16 %v1640, %v1640
        %v1657 = vpack.c.b16 %v1641, %v1641
        %v1658 = vpack.c.b16 %v1642, %v1642
        %1675 = vst [vmem:[%s215] sm:$0xf] %v1643
        %1676 = vst [vmem:[%s215 + $0x4] sm:$0xf] %v1644
        %1677 = vst [vmem:[%s215 + $0x8] sm:$0xf] %v1645
        %1678 = vst [vmem:[%s215 + $0xc] sm:$0xf] %v1646
        %1679 = vst [vmem:[%s215 + $0x10] sm:$0xf] %v1647
        %1680 = vst [vmem:[%s215 + $0x14] sm:$0xf] %v1648
        %1681 = vst [vmem:[%s215 + $0x18] sm:$0xf] %v1649
        %1682 = vst [vmem:[%s215 + $0x1c] sm:$0xf] %v1650
        %1683 = vst [vmem:[%s215 + $0x20] sm:$0xf] %v1651
        %1684 = vst [vmem:[%s215 + $0x24] sm:$0xf] %v1652
        %1685 = vst [vmem:[%s215 + $0x28] sm:$0xf] %v1653
        %1686 = vst [vmem:[%s215 + $0x2c] sm:$0xf] %v1654
        %1687 = vst [vmem:[%s215 + $0x30] sm:$0xf] %v1655
        %1688 = vst [vmem:[%s215 + $0x34] sm:$0xf] %v1656
        %1689 = vst [vmem:[%s215 + $0x38] sm:$0xf] %v1657
        %1690 = vst [vmem:[%s215 + $0x3c] sm:$0xf] %v1658
        %s1691 = sand.u32 %s97, 1
        %s1692 = scalar_lea.sflag [#allocation5], %s1691
        %s1693 = sand.u32 %s97, 1
        %s1694 = smul.addr %s1693, 64
        %s1695 = scalar_lea.vmem [#allocation9], %s1694
        // Predicated region
        $region45: #{a_call__.4} parent=31 // pred_check
          %p1696 = pneg %p107
        $region46: #{a_call__.4} parent=31 // pred_check_branch
          %1698 = sbr.rel (%p1696) target = $region48
        $region47: #{a_call__.4} parent=31 // pred_region
          %s1700 = ssub.s32 1024, 1024
          %1701 = vsyncadd %s1692, %s1700
          %s1702 = smul.addr %s21, 16
          %s1703 = smul.addr %s1702, 64
          %s1704 = scalar_lea.hbm %s3, %s1703
          %s1705 = sshll.u32 %s1695, 4
          %s1706 = int_to_ptr.vmem [resolvable:$true] %s1705
          %1711 = dma.vmem_to_hbm [thread:$0]  %s1706, 1024, %s1704, %s1692, 64, 64, 4
        $region48: #{a_call__.4} parent=31 // pred_fallthru
          _
      $region32: #{a_call__.4} parent=5 // pred_fallthru
        _
      %p1712 = scmp.le.s32.totalorder 2, %s16
      // Predicated region
      $region49: #{a_call__.4} parent=5 // pred_check
        %p1713 = pneg %p1712
      $region50: #{a_call__.4} parent=5 // pred_check_branch
        %1715 = sbr.rel (%p1713) target = $region52
      $region51: #{a_call__.4} parent=5 // pred_region
        %s1716 = ssub.s32 %s16, 2
        // Predicated region
        $region53: #{a_call__.4} parent=51 // pred_check
          %p1717 = pneg %p113
        $region54: #{a_call__.4} parent=51 // pred_check_branch
          %1719 = sbr.rel (%p1717) target = $region56
        $region55: #{a_call__.4} parent=51 // pred_region
          %s1720 = sand.u32 %s98, 1
          %s1721 = scalar_lea.sflag [#allocation5], %s1720
          %s1722 = sand.u32 %s98, 1
          %s1723 = smul.addr %s1722, 64
          %s1724 = scalar_lea.vmem [#allocation9], %s1723
          %1725 = dma.done %s1721, 1024
        $region56: #{a_call__.4} parent=51 // pred_fallthru
          _
      $region52: #{a_call__.4} parent=5 // pred_fallthru
        _
    $region6: #{a_call__.4} parent=1 // loop_footer
      %s20 = sadd.s32 1, %s16
    $region7: #{a_call__.4} parent=1 // loop_footer_branch
      %15 = sbr.rel target = $region3
    $region8: #{a_call__.4} parent=1 // loop_exit
      _
    %1726 = vsyncpa [#allocation4], 1
    %s1727 = scalar_lea.sflag [#allocation4], 1
    %1728 = vsyncpa %s1727, 1
    %1729 = vsyncpa [#allocation7], 1
    %1730 = vsyncpa [#allocation5], 1
    %s1731 = scalar_lea.sflag [#allocation5], 1
    %1732 = vsyncpa %s1731, 1

// kernel: a_call__.5
$region0: #{a_call__.5}
  #allocation0 [shape = 'u32[]', space=smem, size = 0x4, offset = 0x4, fixed_abs, tag = 'smem constant byte address 0x4 - core index']
  #allocation1 [shape = 'u32[144,128]{1,0:T(1,128)}', space=vmem, size = 0x12000, scoped, tag = 'internal scratch']
  #allocation2 [shape = 'bf16[96,640]{1,0:T(16,128)(2,1)}', space=vmem, size = 0x1e000, scoped, tag = 'scratch operand']
  %s0 = inlined_call_operand.hbm [shape: bf16[2,128,128], index: 0, kind: input, shape index: {}]
  %s1 = inlined_call_operand.hbm [shape: bf16[1152,128], index: 1, kind: input, shape index: {}]
  %s2 = inlined_call_operand.hbm [shape: f32[1,128], index: 2, kind: input, shape index: {}]
  %s3 = inlined_call_operand.hbm [shape: f32[2,96,128], index: 3, kind: input, shape index: {}]
  %s4 = inlined_call_operand.hbm [shape: f32[2,96,128], index: 4, kind: output, shape index: {}]
  %s5 = sld [smem:[#allocation0]]
  $region65: #{a_call__.5} parent=0
    _
  %s7 = ssub.s32 1, %s5
  %s8 = scalar_select 0, %s7, %s5
  $region1: #{a_call__.5} parent=0
    #allocation3 [shape = 'u8[65536]{0}', space=vmem, size = 0x10000, scoped, tag = 'input window, operand 0']
    #allocation4 [shape = 's32[2]{0}', space=sflag, size = 0x8, scoped, tag = 'scoped memory for a_call__.5']
    #allocation5 [shape = 's32[2]{0}', space=sflag, size = 0x8, scoped, tag = 'scoped memory for a_call__.5']
    #allocation6 [shape = 'u8[294912]{0}', space=vmem, size = 0x48000, scoped, tag = 'input window, operand 1, single buffered']
    #allocation7 [shape = 's32[1]{0}', space=sflag, size = 0x4, scoped, tag = 'scoped memory for a_call__.5']
    #allocation8 [shape = 'u8[512]{0}', space=vmem, size = 0x400, scoped, tag = 'input window, operand 2, single buffered']
    #allocation9 [shape = 'u8[98304]{0}', space=vmem, size = 0x18000, scoped, tag = 'input window, operand 3']
    #allocation10 [shape = 's32[2]{0}', space=sflag, size = 0x8, scoped, tag = 'scoped memory for a_call__.5']
    #allocation11 [shape = 'u8[98304]{0}', space=vmem, size = 0x18000, scoped, tag = 'output window, operand 0']
    %9 = vsyncpa [#allocation4], 0
    %s10 = scalar_lea.sflag [#allocation4], 1
    %11 = vsyncpa %s10, 0
    %12 = vsyncpa [#allocation7], 0
    %13 = vsyncpa [#allocation10], 0
    %s14 = scalar_lea.sflag [#allocation10], 1
    %15 = vsyncpa %s14, 0
    %16 = vsyncpa [#allocation5], 0
    %s17 = scalar_lea.sflag [#allocation5], 1
    %18 = vsyncpa %s17, 0
    loop: start=0, step=1, limit=4
    $region2: #{a_call__.5} parent=1 // loop_pre_header
      _
    $region3: #{a_call__.5} parent=1 // loop_header
      %s20 = sphi 0, %s24
      %p21 = scmp.ge.s32.totalorder %s20, 4
      %s30 = sphi 0, %s32
      %s33 = sphi 0, %s30
      %s34 = sphi 0, %s33
      %s50 = sphi 0, %s34
      %s54 = sphi 0, %s54
      %s56 = sphi 0, %s54
      %s57 = sphi 0, %s56
      %s71 = sphi 0, %s57
      %s75 = sphi 0, %s75
      %s77 = sphi 0, %s75
      %s78 = sphi 0, %s77
      %s92 = sphi 0, %s78
      %s98 = sphi 0, %s100
      %s101 = sphi 0, %s98
      %s102 = sphi 0, %s101
      %s118 = sphi 0, %s102
      %s124 = sphi 0, %s126
      %s127 = sphi 0, %s124
      %s128 = sphi 0, %s127
      %s144 = sphi 0, %s128
    $region4: #{a_call__.5} parent=1 // loop_header_branch
      %23 = sbr.rel (%p21) target = $region8
    $region5: #{a_call__.5} parent=1 // loop_body
      %s25 = ssub.s32 %s20, 1
      %s26 = ssub.s32 %s20, 2
      %s27 = sadd.s32 %s20, 1
      %s28 = ssub.s32 %s20, %s27
      %p29 = scmp.eq.s32.totalorder %s28, 0
      %s31 = sadd.s32 %s30, 1
      %s32 = scalar_select %p29, %s30, %s31
      %p35 = pneg %p29
      %p36 = scmp.eq.s32.totalorder %s20, 1
      %p37 = por %p35, %p36
      %p38 = scmp.ne.s32.totalorder %s30, %s33
      %p39 = scmp.eq.s32.totalorder %s20, 0
      %p40 = por %p38, %p39
      %p41 = scmp.ne.s32.totalorder %s30, %s33
      %p42 = scmp.eq.s32.totalorder %s25, 1
      %p43 = por %p41, %p42
      %p44 = scmp.ne.s32.totalorder %s33, %s34
      %p45 = scmp.eq.s32.totalorder %s25, 0
      %p46 = por %p44, %p45
      %p47 = scmp.ne.s32.totalorder %s33, %s34
      %p48 = scmp.eq.s32.totalorder %s26, 1
      %p49 = por %p47, %p48
      %p51 = scmp.ne.s32.totalorder %s34, %s50
      %p52 = scmp.eq.s32.totalorder %s26, 0
      %p53 = por %p51, %p52
      %s55 = sadd.s32 %s54, 1
      %p58 = scmp.eq.s32.totalorder %s20, 1
      %p59 = scmp.ne.s32.totalorder %s54, %s56
      %p60 = scmp.eq.s32.totalorder %s20, 0
      %p61 = por %p59, %p60
      %p62 = scmp.ne.s32.totalorder %s54, %s56
      %p63 = scmp.eq.s32.totalorder %s25, 1
      %p64 = por %p62, %p63
      %p65 = scmp.ne.s32.totalorder %s56, %s57
      %p66 = scmp.eq.s32.totalorder %s25, 0
      %p67 = por %p65, %p66
      %p68 = scmp.ne.s32.totalorder %s56, %s57
      %p69 = scmp.eq.s32.totalorder %s26, 1
      %p70 = por %p68, %p69
      %p72 = scmp.ne.s32.totalorder %s57, %s71
      %p73 = scmp.eq.s32.totalorder %s26, 0
      %p74 = por %p72, %p73
      %s76 = sadd.s32 %s75, 1
      %p79 = scmp.eq.s32.totalorder %s20, 1
      %p80 = scmp.ne.s32.totalorder %s75, %s77
      %p81 = scmp.eq.s32.totalorder %s20, 0
      %p82 = por %p80, %p81
      %p83 = scmp.ne.s32.totalorder %s75, %s77
      %p84 = scmp.eq.s32.totalorder %s25, 1
      %p85 = por %p83, %p84
      %p86 = scmp.ne.s32.totalorder %s77, %s78
      %p87 = scmp.eq.s32.totalorder %s25, 0
      %p88 = por %p86, %p87
      %p89 = scmp.ne.s32.totalorder %s77, %s78
      %p90 = scmp.eq.s32.totalorder %s26, 1
      %p91 = por %p89, %p90
      %p93 = scmp.ne.s32.totalorder %s78, %s92
      %p94 = scmp.eq.s32.totalorder %s26, 0
      %p95 = por %p93, %p94
      %s96 = ssub.s32 %s20, %s27
      %p97 = scmp.eq.s32.totalorder %s96, 0
      %s99 = sadd.s32 %s98, 1
      %s100 = scalar_select %p97, %s98, %s99
      %p103 = pneg %p97
      %p104 = scmp.eq.s32.totalorder %s20, 1
      %p105 = por %p103, %p104
      %p106 = scmp.ne.s32.totalorder %s98, %s101
      %p107 = scmp.eq.s32.totalorder %s20, 0
      %p108 = por %p106, %p107
      %p109 = scmp.ne.s32.totalorder %s98, %s101
      %p110 = scmp.eq.s32.totalorder %s25, 1
      %p111 = por %p109, %p110
      %p112 = scmp.ne.s32.totalorder %s101, %s102
      %p113 = scmp.eq.s32.totalorder %s25, 0
      %p114 = por %p112, %p113
      %p115 = scmp.ne.s32.totalorder %s101, %s102
      %p116 = scmp.eq.s32.totalorder %s26, 1
      %p117 = por %p115, %p116
      %p119 = scmp.ne.s32.totalorder %s102, %s118
      %p120 = scmp.eq.s32.totalorder %s26, 0
      %p121 = por %p119, %p120
      %s122 = ssub.s32 %s20, %s27
      %p123 = scmp.eq.s32.totalorder %s122, 0
      %s125 = sadd.s32 %s124, 1
      %s126 = scalar_select %p123, %s124, %s125
      %p129 = pneg %p123
      %p130 = scmp.eq.s32.totalorder %s20, 1
      %p131 = por %p129, %p130
      %p132 = scmp.ne.s32.totalorder %s124, %s127
      %p133 = scmp.eq.s32.totalorder %s20, 0
      %p134 = por %p132, %p133
      %p135 = scmp.ne.s32.totalorder %s124, %s127
      %p136 = scmp.eq.s32.totalorder %s25, 1
      %p137 = por %p135, %p136
      %p138 = scmp.ne.s32.totalorder %s127, %s128
      %p139 = scmp.eq.s32.totalorder %s25, 0
      %p140 = por %p138, %p139
      %p141 = scmp.ne.s32.totalorder %s127, %s128
      %p142 = scmp.eq.s32.totalorder %s26, 1
      %p143 = por %p141, %p142
      %p145 = scmp.ne.s32.totalorder %s128, %s144
      %p146 = scmp.eq.s32.totalorder %s26, 0
      %p147 = por %p145, %p146
      %p148 = scmp.le.s32.totalorder 1, %s20
      %p149 = scmp.lt.s32.totalorder %s20, 3
      %p150 = pnand %p148, %p149
      %p151 = pneg %p150
      // Predicated region
      $region9: #{a_call__.5} parent=5 // pred_check
        _
      $region10: #{a_call__.5} parent=5 // pred_check_branch
        %153 = sbr.rel (%p150) target = $region12
      $region11: #{a_call__.5} parent=5 // pred_region
        %s154 = ssub.s32 %s20, 1
        // Predicated region
        $region13: #{a_call__.5} parent=11 // pred_check
          %p155 = pneg %p67
        $region14: #{a_call__.5} parent=11 // pred_check_branch
          %157 = sbr.rel (%p155) target = $region16
        $region15: #{a_call__.5} parent=11 // pred_region
          %s159 = ssub.s32 9216, 9216
          %160 = vsyncadd [#allocation7], %s159
          %s161 = sshll.u32 [#allocation6], 4
          %s162 = int_to_ptr.vmem [resolvable:$true] %s161
          %167 = dma.hbm_to_vmem [thread:$0]  %s1, 9216, %s162, [#allocation7], 64, 64, 4
        $region16: #{a_call__.5} parent=11 // pred_fallthru
          _
        // Predicated region
        $region17: #{a_call__.5} parent=11 // pred_check
          %p168 = pneg %p88
        $region18: #{a_call__.5} parent=11 // pred_check_branch
          %170 = sbr.rel (%p168) target = $region20
        $region19: #{a_call__.5} parent=11 // pred_region
          %s172 = ssub.s32 16, 16
          %173 = vsyncadd [#allocation7], %s172
          %s175 = sshll.u32 [#allocation8], 4
          %s176 = int_to_ptr.vmem [resolvable:$true] %s175
          %178 = dma.hbm_to_vmem [thread:$0]  %s2, 16, %s176, [#allocation7]
        $region20: #{a_call__.5} parent=11 // pred_fallthru
          _
      $region12: #{a_call__.5} parent=5 // pred_fallthru
        _
      %p179 = scmp.lt.s32.totalorder %s20, 2
      // Predicated region
      $region21: #{a_call__.5} parent=5 // pred_check
        %p180 = pneg %p179
      $region22: #{a_call__.5} parent=5 // pred_check_branch
        %182 = sbr.rel (%p180) target = $region24
      $region23: #{a_call__.5} parent=5 // pred_region
        // Predicated region
        $region25: #{a_call__.5} parent=23 // pred_check
          %p183 = pneg %p40
        $region26: #{a_call__.5} parent=23 // pred_check_branch
          %185 = sbr.rel (%p183) target = $region28
        $region27: #{a_call__.5} parent=23 // pred_region
          %s186 = sand.u32 %s30, 1
          %s187 = scalar_lea.sflag [#allocation4], %s186
          %s188 = sand.u32 %s30, 1
          %s189 = smul.addr %s188, 64
          %s190 = scalar_lea.vmem [#allocation3], %s189
          %s192 = ssub.s32 1024, 1024
          %193 = vsyncadd %s187, %s192
          %s194 = smul.addr %s20, 16
          %s195 = smul.addr %s194, 64
          %s196 = scalar_lea.hbm %s0, %s195
          %s197 = sshll.u32 %s190, 4
          %s198 = int_to_ptr.vmem [resolvable:$true] %s197
          %203 = dma.hbm_to_vmem [thread:$0]  %s196, 1024, %s198, %s187, 64, 64, 4
        $region28: #{a_call__.5} parent=23 // pred_fallthru
          _
        // Predicated region
        $region29: #{a_call__.5} parent=23 // pred_check
          %p204 = pneg %p108
        $region30: #{a_call__.5} parent=23 // pred_check_branch
          %206 = sbr.rel (%p204) target = $region32
        $region31: #{a_call__.5} parent=23 // pred_region
          %s207 = sand.u32 %s98, 1
          %s208 = scalar_lea.sflag [#allocation10], %s207
          %s209 = sand.u32 %s98, 1
          %s210 = smul.addr %s209, 96
          %s211 = scalar_lea.vmem [#allocation9], %s210
          %s213 = ssub.s32 1536, 1536
          %214 = vsyncadd %s208, %s213
          %s215 = smul.addr %s20, 12
          %s216 = smul.addr %s215, 128
          %s217 = scalar_lea.hbm %s3, %s216
          %s218 = sshll.u32 %s211, 4
          %s219 = int_to_ptr.vmem [resolvable:$true] %s218
          %224 = dma.hbm_to_vmem [thread:$0]  %s217, 1536, %s219, %s208, 128, 128, 8
        $region32: #{a_call__.5} parent=23 // pred_fallthru
          _
      $region24: #{a_call__.5} parent=5 // pred_fallthru
        _
      %p225 = scmp.le.s32.totalorder 1, %s20
      %p226 = scmp.lt.s32.totalorder %s20, 3
      %p227 = pnand %p225, %p226
      %p228 = pneg %p227
      // Predicated region
      $region33: #{a_call__.5} parent=5 // pred_check
        _
      $region34: #{a_call__.5} parent=5 // pred_check_branch
        %230 = sbr.rel (%p227) target = $region36
      $region35: #{a_call__.5} parent=5 // pred_region
        %s231 = ssub.s32 %s20, 1
        %s232 = sand.u32 %s33, 1
        %s233 = scalar_lea.sflag [#allocation4], %s232
        %s234 = sand.u32 %s33, 1
        %s235 = smul.addr %s234, 64
        %s236 = scalar_lea.vmem [#allocation3], %s235
        // Predicated region
        $region37: #{a_call__.5} parent=35 // pred_check
          %p237 = pneg %p46
        $region38: #{a_call__.5} parent=35 // pred_check_branch
          %239 = sbr.rel (%p237) target = $region40
        $region39: #{a_call__.5} parent=35 // pred_region
          %240 = dma.done %s233, 1024
        $region40: #{a_call__.5} parent=35 // pred_fallthru
          _
        // Predicated region
        $region41: #{a_call__.5} parent=35 // pred_check
          %p241 = pneg %p67
        $region42: #{a_call__.5} parent=35 // pred_check_branch
          %243 = sbr.rel (%p241) target = $region44
        $region43: #{a_call__.5} parent=35 // pred_region
          %244 = dma.done [#allocation7], 9216
        $region44: #{a_call__.5} parent=35 // pred_fallthru
          _
        // Predicated region
        $region45: #{a_call__.5} parent=35 // pred_check
          %p245 = pneg %p88
        $region46: #{a_call__.5} parent=35 // pred_check_branch
          %247 = sbr.rel (%p245) target = $region48
        $region47: #{a_call__.5} parent=35 // pred_region
          %248 = dma.done [#allocation7], 16
        $region48: #{a_call__.5} parent=35 // pred_fallthru
          _
        %s249 = sand.u32 %s101, 1
        %s250 = scalar_lea.sflag [#allocation10], %s249
        %s251 = sand.u32 %s101, 1
        %s252 = smul.addr %s251, 96
        %s253 = scalar_lea.vmem [#allocation9], %s252
        // Predicated region
        $region49: #{a_call__.5} parent=35 // pred_check
          %p254 = pneg %p114
        $region50: #{a_call__.5} parent=35 // pred_check_branch
          %256 = sbr.rel (%p254) target = $region52
        $region51: #{a_call__.5} parent=35 // pred_region
          %257 = dma.done %s250, 1536
        $region52: #{a_call__.5} parent=35 // pred_fallthru
          _
        %s258 = sand.u32 %s33, 1
        %s259 = scalar_lea.sflag [#allocation4], %s258
        %s260 = sand.u32 %s33, 1
        %s261 = smul.addr %s260, 64
        %s262 = scalar_lea.vmem [#allocation3], %s261
        %p263 = pneg %p46
        %p264 = pneg %p43
        %p265 = pneg %p67
        %p266 = pneg %p64
        %p267 = pneg %p88
        %p268 = pneg %p85
        %s269 = sand.u32 %s101, 1
        %s270 = scalar_lea.sflag [#allocation10], %s269
        %s271 = sand.u32 %s101, 1
        %s272 = smul.addr %s271, 96
        %s273 = scalar_lea.vmem [#allocation9], %s272
        %p274 = pneg %p114
        %p275 = pneg %p111
        %p276 = pneg %p140
        %p277 = pneg %p137
        %s278 = sand.u32 %s127, 1
        %s279 = scalar_lea.sflag [#allocation5], %s278
        %s280 = sand.u32 %s127, 1
        %s281 = smul.addr %s280, 96
        %s282 = scalar_lea.vmem [#allocation11], %s281
        %v284 = vld [vmem:[%s236] sm:$0xf]
        %v285 = vld [vmem:[%s236 + $0x4] sm:$0xf]
        %v286 = vld [vmem:[%s236 + $0x8] sm:$0xf]
        %v287 = vld [vmem:[%s236 + $0xc] sm:$0xf]
        %v288 = vld [vmem:[%s236 + $0x10] sm:$0xf]
        %v289 = vld [vmem:[%s236 + $0x14] sm:$0xf]
        %v290 = vld [vmem:[%s236 + $0x18] sm:$0xf]
        %v291 = vld [vmem:[%s236 + $0x1c] sm:$0xf]
        %v292 = vld [vmem:[%s236 + $0x20] sm:$0xf]
        %v293 = vld [vmem:[%s236 + $0x24] sm:$0xf]
        %v294 = vld [vmem:[%s236 + $0x28] sm:$0xf]
        %v295 = vld [vmem:[%s236 + $0x2c] sm:$0xf]
        %v308 = vunpack.c.l.b16 %v284
        %v309 = vunpack.c.l.b16 %v285
        %v310 = vunpack.c.l.b16 %v286
        %v311 = vunpack.c.l.b16 %v287
        %v312 = vunpack.c.l.b16 %v288
        %v313 = vunpack.c.l.b16 %v289
        %v314 = vunpack.c.l.b16 %v290
        %v315 = vunpack.c.l.b16 %v291
        %v316 = vunpack.c.l.b16 %v292
        %v317 = vunpack.c.l.b16 %v293
        %v318 = vunpack.c.l.b16 %v294
        %v319 = vunpack.c.l.b16 %v295
        %v320 = vpack.c.b16 %v309, %v308
        %v321 = vpack.c.b16 %v311, %v310
        %v322 = vpack.c.b16 %v313, %v312
        %v323 = vpack.c.b16 %v315, %v314
        %v324 = vpack.c.b16 %v317, %v316
        %v325 = vpack.c.b16 %v319, %v318
        %332 = vst [vmem:[#allocation2] sm:$0xff] %v320
        %333 = vst [vmem:[#allocation2 + $0x28] sm:$0xff] %v321
        %334 = vst [vmem:[#allocation2 + $0x50] sm:$0xff] %v322
        %335 = vst [vmem:[#allocation2 + $0x78] sm:$0xff] %v323
        %336 = vst [vmem:[#allocation2 + $0xa0] sm:$0xff] %v324
        %337 = vst [vmem:[#allocation2 + $0xc8] sm:$0xff] %v325
        %v338 = vld [vmem:[%s236] sm:$0xf]
        %v339 = vld [vmem:[%s236 + $0x4] sm:$0xf]
        %v340 = vld [vmem:[%s236 + $0x8] sm:$0xf]
        %v341 = vld [vmem:[%s236 + $0xc] sm:$0xf]
        %v342 = vld [vmem:[%s236 + $0x10] sm:$0xf]
        %v343 = vld [vmem:[%s236 + $0x14] sm:$0xf]
        %v344 = vld [vmem:[%s236 + $0x18] sm:$0xf]
        %v345 = vld [vmem:[%s236 + $0x1c] sm:$0xf]
        %v346 = vld [vmem:[%s236 + $0x20] sm:$0xf]
        %v347 = vld [vmem:[%s236 + $0x24] sm:$0xf]
        %v348 = vld [vmem:[%s236 + $0x28] sm:$0xf]
        %v349 = vld [vmem:[%s236 + $0x2c] sm:$0xf]
        %v350 = vld [vmem:[%s236 + $0x30] sm:$0x1]
        %v364 = vunpack.c.l.b16 %v338
        %v365 = vunpack.c.l.b16 %v339
        %v366 = vunpack.c.l.b16 %v340
        %v367 = vunpack.c.l.b16 %v341
        %v368 = vunpack.c.l.b16 %v342
        %v369 = vunpack.c.l.b16 %v343
        %v370 = vunpack.c.l.b16 %v344
        %v371 = vunpack.c.l.b16 %v345
        %v372 = vunpack.c.l.b16 %v346
        %v373 = vunpack.c.l.b16 %v347
        %v374 = vunpack.c.l.b16 %v348
        %v375 = vunpack.c.l.b16 %v349
        %v376 = vunpack.c.l.b16 %v350
        %v377 = vpack.c.b16 %v365, %v364
        %v378 = vpack.c.b16 %v367, %v366
        %v379 = vpack.c.b16 %v369, %v368
        %v380 = vpack.c.b16 %v371, %v370
        %v381 = vpack.c.b16 %v373, %v372
        %v382 = vpack.c.b16 %v375, %v374
        %v383 = vpack.c.b16 %v376, %v376
        %vm384 = vsmask.f32 7424
        %v386 = vshrl.u32 %v377, 16
        %v388 = vshll.u32 %v377, 16
        %v390 = vrot.slane %v388, 1
        %v391 = vor.u32 %v386, %v390
        %v393 = vshll.u32 %v378, 16
        %v395 = vrot.slane %v393, 1
        %v396 = vsel %vm384, %v391, %v395
        %v397 = vshrl.u32 %v378, 16
        %v399 = vor.u32 %v397, %v395
        %v401 = vshll.u32 %v379, 16
        %v403 = vrot.slane %v401, 1
        %v404 = vsel %vm384, %v399, %v403
        %v405 = vshrl.u32 %v379, 16
        %v407 = vor.u32 %v405, %v403
        %v409 = vshll.u32 %v380, 16
        %v411 = vrot.slane %v409, 1
        %v412 = vsel %vm384, %v407, %v411
        %v413 = vshrl.u32 %v380, 16
        %v415 = vor.u32 %v413, %v411
        %v417 = vshll.u32 %v381, 16
        %v419 = vrot.slane %v417, 1
        %v420 = vsel %vm384, %v415, %v419
        %v421 = vshrl.u32 %v381, 16
        %v423 = vor.u32 %v421, %v419
        %v425 = vshll.u32 %v382, 16
        %v427 = vrot.slane %v425, 1
        %v428 = vsel %vm384, %v423, %v427
        %v429 = vshrl.u32 %v382, 16
        %v431 = vor.u32 %v429, %v427
        %v433 = vshll.u32 %v383, 16
        %v435 = vrot.slane %v433, 1
        %v436 = vsel %vm384, %v431, %v435
        %443 = vst [vmem:[#allocation2 + $0x8] sm:$0xff] %v396
        %444 = vst [vmem:[#allocation2 + $0x30] sm:$0xff] %v404
        %445 = vst [vmem:[#allocation2 + $0x58] sm:$0xff] %v412
        %446 = vst [vmem:[#allocation2 + $0x80] sm:$0xff] %v420
        %447 = vst [vmem:[#allocation2 + $0xa8] sm:$0xff] %v428
        %448 = vst [vmem:[#allocation2 + $0xd0] sm:$0xff] %v436
        %v449 = vld [vmem:[%s236] sm:$0xe]
        %v450 = vld [vmem:[%s236 + $0x4] sm:$0xf]
        %v451 = vld [vmem:[%s236 + $0x8] sm:$0xf]
        %v452 = vld [vmem:[%s236 + $0xc] sm:$0xf]
        %v453 = vld [vmem:[%s236 + $0x10] sm:$0xf]
        %v454 = vld [vmem:[%s236 + $0x14] sm:$0xf]
        %v455 = vld [vmem:[%s236 + $0x18] sm:$0xf]
        %v456 = vld [vmem:[%s236 + $0x1c] sm:$0xf]
        %v457 = vld [vmem:[%s236 + $0x20] sm:$0xf]
        %v458 = vld [vmem:[%s236 + $0x24] sm:$0xf]
        %v459 = vld [vmem:[%s236 + $0x28] sm:$0xf]
        %v460 = vld [vmem:[%s236 + $0x2c] sm:$0xf]
        %v461 = vld [vmem:[%s236 + $0x30] sm:$0x1]
        %v475 = vunpack.c.l.b16 %v449
        %v476 = vunpack.c.l.b16 %v450
        %v477 = vunpack.c.l.b16 %v451
        %v478 = vunpack.c.l.b16 %v452
        %v479 = vunpack.c.l.b16 %v453
        %v480 = vunpack.c.l.b16 %v454
        %v481 = vunpack.c.l.b16 %v455
        %v482 = vunpack.c.l.b16 %v456
        %v483 = vunpack.c.l.b16 %v457
        %v484 = vunpack.c.l.b16 %v458
        %v485 = vunpack.c.l.b16 %v459
        %v486 = vunpack.c.l.b16 %v460
        %v487 = vunpack.c.l.b16 %v461
        %v488 = vpack.c.b16 %v476, %v475
        %v489 = vpack.c.b16 %v478, %v477
        %v490 = vpack.c.b16 %v480, %v479
        %v491 = vpack.c.b16 %v482, %v481
        %v492 = vpack.c.b16 %v484, %v483
        %v493 = vpack.c.b16 %v486, %v485
        %v494 = vpack.c.b16 %v487, %v487
        %vm495 = vcmask 1046528
        %v496 = vrot.slane %v488, 1
        %v497 = vrot.slane %v489, 1
        %v498 = vsel %vm495, %v496, %v497
        %v499 = vrot.slane %v490, 1
        %v500 = vsel %vm495, %v497, %v499
        %v501 = vrot.slane %v491, 1
        %v502 = vsel %vm495, %v499, %v501
        %v503 = vrot.slane %v492, 1
        %v504 = vsel %vm495, %v501, %v503
        %v505 = vrot.slane %v493, 1
        %v506 = vsel %vm495, %v503, %v505
        %v507 = vrot.slane %v494, 1
        %v508 = vsel %vm495, %v505, %v507
        %515 = vst [vmem:[#allocation2 + $0x10] sm:$0xff] %v498
        %516 = vst [vmem:[#allocation2 + $0x38] sm:$0xff] %v500
        %517 = vst [vmem:[#allocation2 + $0x60] sm:$0xff] %v502
        %518 = vst [vmem:[#allocation2 + $0x88] sm:$0xff] %v504
        %519 = vst [vmem:[#allocation2 + $0xb0] sm:$0xff] %v506
        %520 = vst [vmem:[#allocation2 + $0xd8] sm:$0xff] %v508
        %v521 = vld [vmem:[%s236 + $0x4] sm:$0xc]
        %v522 = vld [vmem:[%s236 + $0x8] sm:$0xf]
        %v523 = vld [vmem:[%s236 + $0xc] sm:$0xf]
        %v524 = vld [vmem:[%s236 + $0x10] sm:$0xf]
        %v525 = vld [vmem:[%s236 + $0x14] sm:$0xf]
        %v526 = vld [vmem:[%s236 + $0x18] sm:$0xf]
        %v527 = vld [vmem:[%s236 + $0x1c] sm:$0xf]
        %v528 = vld [vmem:[%s236 + $0x20] sm:$0xf]
        %v529 = vld [vmem:[%s236 + $0x24] sm:$0xf]
        %v530 = vld [vmem:[%s236 + $0x28] sm:$0xf]
        %v531 = vld [vmem:[%s236 + $0x2c] sm:$0xf]
        %v532 = vld [vmem:[%s236 + $0x30] sm:$0xf]
        %v533 = vld [vmem:[%s236 + $0x34] sm:$0x3]
        %v547 = vunpack.c.l.b16 %v521
        %v548 = vunpack.c.l.b16 %v522
        %v549 = vunpack.c.l.b16 %v523
        %v550 = vunpack.c.l.b16 %v524
        %v551 = vunpack.c.l.b16 %v525
        %v552 = vunpack.c.l.b16 %v526
        %v553 = vunpack.c.l.b16 %v527
        %v554 = vunpack.c.l.b16 %v528
        %v555 = vunpack.c.l.b16 %v529
        %v556 = vunpack.c.l.b16 %v530
        %v557 = vunpack.c.l.b16 %v531
        %v558 = vunpack.c.l.b16 %v532
        %v559 = vunpack.c.l.b16 %v533
        %v560 = vpack.c.b16 %v548, %v547
        %v561 = vpack.c.b16 %v550, %v549
        %v562 = vpack.c.b16 %v552, %v551
        %v563 = vpack.c.b16 %v554, %v553
        %v564 = vpack.c.b16 %v556, %v555
        %v565 = vpack.c.b16 %v558, %v557
        %v566 = vpack.c.b16 %v559, %v559
        %vm567 = vcmask 1045504
        %v568 = vrot.slane %v560, 2
        %v569 = vrot.slane %v561, 2
        %v570 = vsel %vm567, %v568, %v569
        %v571 = vrot.slane %v562, 2
        %v572 = vsel %vm567, %v569, %v571
        %v573 = vrot.slane %v563, 2
        %v574 = vsel %vm567, %v571, %v573
        %v575 = vrot.slane %v564, 2
        %v576 = vsel %vm567, %v573, %v575
        %v577 = vrot.slane %v565, 2
        %v578 = vsel %vm567, %v575, %v577
        %v579 = vrot.slane %v566, 2
        %v580 = vsel %vm567, %v577, %v579
        %587 = vst [vmem:[#allocation2 + $0x18] sm:$0xff] %v570
        %588 = vst [vmem:[#allocation2 + $0x40] sm:$0xff] %v572
        %589 = vst [vmem:[#allocation2 + $0x68] sm:$0xff] %v574
        %590 = vst [vmem:[#allocation2 + $0x90] sm:$0xff] %v576
        %591 = vst [vmem:[#allocation2 + $0xb8] sm:$0xff] %v578
        %592 = vst [vmem:[#allocation2 + $0xe0] sm:$0xff] %v580
        %v593 = vld [vmem:[%s236 + $0x4] sm:$0xc]
        %v594 = vld [vmem:[%s236 + $0x8] sm:$0xf]
        %v595 = vld [vmem:[%s236 + $0xc] sm:$0xf]
        %v596 = vld [vmem:[%s236 + $0x10] sm:$0xf]
        %v597 = vld [vmem:[%s236 + $0x14] sm:$0xf]
        %v598 = vld [vmem:[%s236 + $0x18] sm:$0xf]
        %v599 = vld [vmem:[%s236 + $0x1c] sm:$0xf]
        %v600 = vld [vmem:[%s236 + $0x20] sm:$0xf]
        %v601 = vld [vmem:[%s236 + $0x24] sm:$0xf]
        %v602 = vld [vmem:[%s236 + $0x28] sm:$0xf]
        %v603 = vld [vmem:[%s236 + $0x2c] sm:$0xf]
        %v604 = vld [vmem:[%s236 + $0x30] sm:$0xf]
        %v605 = vld [vmem:[%s236 + $0x34] sm:$0x7]
        %v619 = vunpack.c.l.b16 %v593
        %v620 = vunpack.c.l.b16 %v594
        %v621 = vunpack.c.l.b16 %v595
        %v622 = vunpack.c.l.b16 %v596
        %v623 = vunpack.c.l.b16 %v597
        %v624 = vunpack.c.l.b16 %v598
        %v625 = vunpack.c.l.b16 %v599
        %v626 = vunpack.c.l.b16 %v600
        %v627 = vunpack.c.l.b16 %v601
        %v628 = vunpack.c.l.b16 %v602
        %v629 = vunpack.c.l.b16 %v603
        %v630 = vunpack.c.l.b16 %v604
        %v631 = vunpack.c.l.b16 %v605
        %v632 = vpack.c.b16 %v620, %v619
        %v633 = vpack.c.b16 %v622, %v621
        %v634 = vpack.c.b16 %v624, %v623
        %v635 = vpack.c.b16 %v626, %v625
        %v636 = vpack.c.b16 %v628, %v627
        %v637 = vpack.c.b16 %v630, %v629
        %v638 = vpack.c.b16 %v631, %v631
        %vm639 = vsmask.f32 5376
        %v641 = vshrl.u32 %v632, 16
        %v643 = vrot.slane %v641, 2
        %v644 = vshll.u32 %v632, 16
        %v646 = vrot.slane %v644, 3
        %v647 = vor.u32 %v643, %v646
        %v649 = vshrl.u32 %v633, 16
        %v651 = vrot.slane %v649, 2
        %v652 = vshll.u32 %v633, 16
        %v654 = vrot.slane %v652, 3
        %v655 = vor.u32 %v651, %v654
        %v656 = vsel %vm639, %v647, %v655
        %v658 = vshrl.u32 %v634, 16
        %v660 = vrot.slane %v658, 2
        %v661 = vshll.u32 %v634, 16
        %v663 = vrot.slane %v661, 3
        %v664 = vor.u32 %v660, %v663
        %v665 = vsel %vm639, %v655, %v664
        %v667 = vshrl.u32 %v635, 16
        %v669 = vrot.slane %v667, 2
        %v670 = vshll.u32 %v635, 16
        %v672 = vrot.slane %v670, 3
        %v673 = vor.u32 %v669, %v672
        %v674 = vsel %vm639, %v664, %v673
        %v676 = vshrl.u32 %v636, 16
        %v678 = vrot.slane %v676, 2
        %v679 = vshll.u32 %v636, 16
        %v681 = vrot.slane %v679, 3
        %v682 = vor.u32 %v678, %v681
        %v683 = vsel %vm639, %v673, %v682
        %v685 = vshrl.u32 %v637, 16
        %v687 = vrot.slane %v685, 2
        %v688 = vshll.u32 %v637, 16
        %v690 = vrot.slane %v688, 3
        %v691 = vor.u32 %v687, %v690
        %v692 = vsel %vm639, %v682, %v691
        %v694 = vshrl.u32 %v638, 16
        %v696 = vrot.slane %v694, 2
        %v697 = vshll.u32 %v638, 16
        %v699 = vrot.slane %v697, 3
        %v700 = vor.u32 %v696, %v699
        %v701 = vsel %vm639, %v691, %v700
        %708 = vst [vmem:[#allocation2 + $0x20] sm:$0xff] %v656
        %709 = vst [vmem:[#allocation2 + $0x48] sm:$0xff] %v665
        %710 = vst [vmem:[#allocation2 + $0x70] sm:$0xff] %v674
        %711 = vst [vmem:[#allocation2 + $0x98] sm:$0xff] %v683
        %712 = vst [vmem:[#allocation2 + $0xc0] sm:$0xff] %v692
        %713 = vst [vmem:[#allocation2 + $0xe8] sm:$0xff] %v701
        %v714 = vld [vmem:[#allocation2] sm:$0xff]
        %v715 = vld [vmem:[#allocation2 + $0x8] sm:$0xff]
        %v716 = vld [vmem:[#allocation2 + $0x10] sm:$0xff]
        %v717 = vld [vmem:[#allocation2 + $0x18] sm:$0xff]
        %v718 = vld [vmem:[#allocation2 + $0x20] sm:$0xff]
        %v719 = vld [vmem:[#allocation2 + $0x28] sm:$0xff]
        %v720 = vld [vmem:[#allocation2 + $0x30] sm:$0xff]
        %v721 = vld [vmem:[#allocation2 + $0x38] sm:$0xff]
        %v722 = vld [vmem:[#allocation2 + $0x40] sm:$0xff]
        %v723 = vld [vmem:[#allocation2 + $0x48] sm:$0xff]
        %v724 = vld [vmem:[#allocation2 + $0x50] sm:$0xff]
        %v725 = vld [vmem:[#allocation2 + $0x58] sm:$0xff]
        %v726 = vld [vmem:[#allocation2 + $0x60] sm:$0xff]
        %v727 = vld [vmem:[#allocation2 + $0x68] sm:$0xff]
        %v728 = vld [vmem:[#allocation2 + $0x70] sm:$0xff]
        %v729 = vld [vmem:[#allocation2 + $0x78] sm:$0xff]
        %v730 = vld [vmem:[#allocation2 + $0x80] sm:$0xff]
        %v731 = vld [vmem:[#allocation2 + $0x88] sm:$0xff]
        %v732 = vld [vmem:[#allocation2 + $0x90] sm:$0xff]
        %v733 = vld [vmem:[#allocation2 + $0x98] sm:$0xff]
        %v734 = vld [vmem:[#allocation2 + $0xa0] sm:$0xff]
        %v735 = vld [vmem:[#allocation2 + $0xa8] sm:$0xff]
        %v736 = vld [vmem:[#allocation2 + $0xb0] sm:$0xff]
        %v737 = vld [vmem:[#allocation2 + $0xb8] sm:$0xff]
        %v738 = vld [vmem:[#allocation2 + $0xc0] sm:$0xff]
        %v739 = vld [vmem:[#allocation2 + $0xc8] sm:$0xff]
        %v740 = vld [vmem:[#allocation2 + $0xd0] sm:$0xff]
        %v741 = vld [vmem:[#allocation2 + $0xd8] sm:$0xff]
        %v742 = vld [vmem:[#allocation2 + $0xe0] sm:$0xff]
        %v743 = vld [vmem:[#allocation2 + $0xe8] sm:$0xff]
        %v744 = vld [vmem:[#allocation6] sm:$0xf]
        %v745 = vld [vmem:[#allocation6 + $0x4] sm:$0xf]
        %v746 = vld [vmem:[#allocation6 + $0x8] sm:$0xf]
        %v747 = vld [vmem:[#allocation6 + $0xc] sm:$0xf]
        %v748 = vld [vmem:[#allocation6 + $0x10] sm:$0xf]
        %v749 = vld [vmem:[#allocation6 + $0x14] sm:$0xf]
        %v750 = vld [vmem:[#allocation6 + $0x18] sm:$0xf]
        %v751 = vld [vmem:[#allocation6 + $0x1c] sm:$0xf]
        %v752 = vld [vmem:[#allocation6 + $0x20] sm:$0xf]
        %v753 = vld [vmem:[#allocation6 + $0x24] sm:$0xf]
        %v754 = vld [vmem:[#allocation6 + $0x28] sm:$0xf]
        %v755 = vld [vmem:[#allocation6 + $0x2c] sm:$0xf]
        %v756 = vld [vmem:[#allocation6 + $0x30] sm:$0xf]
        %v757 = vld [vmem:[#allocation6 + $0x34] sm:$0xf]
        %v758 = vld [vmem:[#allocation6 + $0x38] sm:$0xf]
        %v759 = vld [vmem:[#allocation6 + $0x3c] sm:$0xf]
        %v760 = vld [vmem:[#allocation6 + $0x40] sm:$0xf]
        %v761 = vld [vmem:[#allocation6 + $0x44] sm:$0xf]
        %v762 = vld [vmem:[#allocation6 + $0x48] sm:$0xf]
        %v763 = vld [vmem:[#allocation6 + $0x4c] sm:$0xf]
        %v764 = vld [vmem:[#allocation6 + $0x50] sm:$0xf]
        %v765 = vld [vmem:[#allocation6 + $0x54] sm:$0xf]
        %v766 = vld [vmem:[#allocation6 + $0x58] sm:$0xf]
        %v767 = vld [vmem:[#allocation6 + $0x5c] sm:$0xf]
        %v768 = vld [vmem:[#allocation6 + $0x60] sm:$0xf]
        %v769 = vld [vmem:[#allocation6 + $0x64] sm:$0xf]
        %v770 = vld [vmem:[#allocation6 + $0x68] sm:$0xf]
        %v771 = vld [vmem:[#allocation6 + $0x6c] sm:$0xf]
        %v772 = vld [vmem:[#allocation6 + $0x70] sm:$0xf]
        %v773 = vld [vmem:[#allocation6 + $0x74] sm:$0xf]
        %v774 = vld [vmem:[#allocation6 + $0x78] sm:$0xf]
        %v775 = vld [vmem:[#allocation6 + $0x7c] sm:$0xf]
        %v776 = vld [vmem:[#allocation6 + $0x80] sm:$0xf]
        %v777 = vld [vmem:[#allocation6 + $0x84] sm:$0xf]
        %v778 = vld [vmem:[#allocation6 + $0x88] sm:$0xf]
        %v779 = vld [vmem:[#allocation6 + $0x8c] sm:$0xf]
        %v780 = vld [vmem:[#allocation6 + $0x90] sm:$0xf]
        %v781 = vld [vmem:[#allocation6 + $0x94] sm:$0xf]
        %v782 = vld [vmem:[#allocation6 + $0x98] sm:$0xf]
        %v783 = vld [vmem:[#allocation6 + $0x9c] sm:$0xf]
        %v784 = vld [vmem:[#allocation6 + $0xa0] sm:$0xf]
        %v785 = vld [vmem:[#allocation6 + $0xa4] sm:$0xf]
        %v786 = vld [vmem:[#allocation6 + $0xa8] sm:$0xf]
        %v787 = vld [vmem:[#allocation6 + $0xac] sm:$0xf]
        %v788 = vld [vmem:[#allocation6 + $0xb0] sm:$0xf]
        %v789 = vld [vmem:[#allocation6 + $0xb4] sm:$0xf]
        %v790 = vld [vmem:[#allocation6 + $0xb8] sm:$0xf]
        %v791 = vld [vmem:[#allocation6 + $0xbc] sm:$0xf]
        %v792 = vld [vmem:[#allocation6 + $0xc0] sm:$0xf]
        %v793 = vld [vmem:[#allocation6 + $0xc4] sm:$0xf]
        %v794 = vld [vmem:[#allocation6 + $0xc8] sm:$0xf]
        %v795 = vld [vmem:[#allocation6 + $0xcc] sm:$0xf]
        %v796 = vld [vmem:[#allocation6 + $0xd0] sm:$0xf]
        %v797 = vld [vmem:[#allocation6 + $0xd4] sm:$0xf]
        %v798 = vld [vmem:[#allocation6 + $0xd8] sm:$0xf]
        %v799 = vld [vmem:[#allocation6 + $0xdc] sm:$0xf]
        %v800 = vld [vmem:[#allocation6 + $0xe0] sm:$0xf]
        %v801 = vld [vmem:[#allocation6 + $0xe4] sm:$0xf]
        %v802 = vld [vmem:[#allocation6 + $0xe8] sm:$0xf]
        %v803 = vld [vmem:[#allocation6 + $0xec] sm:$0xf]
        %v804 = vld [vmem:[#allocation6 + $0xf0] sm:$0xf]
        %v805 = vld [vmem:[#allocation6 + $0xf4] sm:$0xf]
        %v806 = vld [vmem:[#allocation6 + $0xf8] sm:$0xf]
        %v807 = vld [vmem:[#allocation6 + $0xfc] sm:$0xf]
        %v808 = vld [vmem:[#allocation6 + $0x100] sm:$0xf]
        %v809 = vld [vmem:[#allocation6 + $0x104] sm:$0xf]
        %v810 = vld [vmem:[#allocation6 + $0x108] sm:$0xf]
        %v811 = vld [vmem:[#allocation6 + $0x10c] sm:$0xf]
        %v812 = vld [vmem:[#allocation6 + $0x110] sm:$0xf]
        %v813 = vld [vmem:[#allocation6 + $0x114] sm:$0xf]
        %v814 = vld [vmem:[#allocation6 + $0x118] sm:$0xf]
        %v815 = vld [vmem:[#allocation6 + $0x11c] sm:$0xf]
        %v816 = vld [vmem:[#allocation6 + $0x120] sm:$0xf]
        %v817 = vld [vmem:[#allocation6 + $0x124] sm:$0xf]
        %v818 = vld [vmem:[#allocation6 + $0x128] sm:$0xf]
        %v819 = vld [vmem:[#allocation6 + $0x12c] sm:$0xf]
        %v820 = vld [vmem:[#allocation6 + $0x130] sm:$0xf]
        %v821 = vld [vmem:[#allocation6 + $0x134] sm:$0xf]
        %v822 = vld [vmem:[#allocation6 + $0x138] sm:$0xf]
        %v823 = vld [vmem:[#allocation6 + $0x13c] sm:$0xf]
        %v904 = vunpack.c.l.b16 %v744
        %v905 = vunpack.c.l.b16 %v745
        %v906 = vunpack.c.l.b16 %v746
        %v907 = vunpack.c.l.b16 %v747
        %v908 = vunpack.c.l.b16 %v748
        %v909 = vunpack.c.l.b16 %v749
        %v910 = vunpack.c.l.b16 %v750
        %v911 = vunpack.c.l.b16 %v751
        %v912 = vunpack.c.l.b16 %v752
        %v913 = vunpack.c.l.b16 %v753
        %v914 = vunpack.c.l.b16 %v754
        %v915 = vunpack.c.l.b16 %v755
        %v916 = vunpack.c.l.b16 %v756
        %v917 = vunpack.c.l.b16 %v757
        %v918 = vunpack.c.l.b16 %v758
        %v919 = vunpack.c.l.b16 %v759
        %v920 = vunpack.c.l.b16 %v760
        %v921 = vunpack.c.l.b16 %v761
        %v922 = vunpack.c.l.b16 %v762
        %v923 = vunpack.c.l.b16 %v763
        %v924 = vunpack.c.l.b16 %v764
        %v925 = vunpack.c.l.b16 %v765
        %v926 = vunpack.c.l.b16 %v766
        %v927 = vunpack.c.l.b16 %v767
        %v928 = vunpack.c.l.b16 %v768
        %v929 = vunpack.c.l.b16 %v769
        %v930 = vunpack.c.l.b16 %v770
        %v931 = vunpack.c.l.b16 %v771
        %v932 = vunpack.c.l.b16 %v772
        %v933 = vunpack.c.l.b16 %v773
        %v934 = vunpack.c.l.b16 %v774
        %v935 = vunpack.c.l.b16 %v775
        %v936 = vunpack.c.l.b16 %v776
        %v937 = vunpack.c.l.b16 %v777
        %v938 = vunpack.c.l.b16 %v778
        %v939 = vunpack.c.l.b16 %v779
        %v940 = vunpack.c.l.b16 %v780
        %v941 = vunpack.c.l.b16 %v781
        %v942 = vunpack.c.l.b16 %v782
        %v943 = vunpack.c.l.b16 %v783
        %v944 = vunpack.c.l.b16 %v784
        %v945 = vunpack.c.l.b16 %v785
        %v946 = vunpack.c.l.b16 %v786
        %v947 = vunpack.c.l.b16 %v787
        %v948 = vunpack.c.l.b16 %v788
        %v949 = vunpack.c.l.b16 %v789
        %v950 = vunpack.c.l.b16 %v790
        %v951 = vunpack.c.l.b16 %v791
        %v952 = vunpack.c.l.b16 %v792
        %v953 = vunpack.c.l.b16 %v793
        %v954 = vunpack.c.l.b16 %v794
        %v955 = vunpack.c.l.b16 %v795
        %v956 = vunpack.c.l.b16 %v796
        %v957 = vunpack.c.l.b16 %v797
        %v958 = vunpack.c.l.b16 %v798
        %v959 = vunpack.c.l.b16 %v799
        %v960 = vunpack.c.l.b16 %v800
        %v961 = vunpack.c.l.b16 %v801
        %v962 = vunpack.c.l.b16 %v802
        %v963 = vunpack.c.l.b16 %v803
        %v964 = vunpack.c.l.b16 %v804
        %v965 = vunpack.c.l.b16 %v805
        %v966 = vunpack.c.l.b16 %v806
        %v967 = vunpack.c.l.b16 %v807
        %v968 = vunpack.c.l.b16 %v808
        %v969 = vunpack.c.l.b16 %v809
        %v970 = vunpack.c.l.b16 %v810
        %v971 = vunpack.c.l.b16 %v811
        %v972 = vunpack.c.l.b16 %v812
        %v973 = vunpack.c.l.b16 %v813
        %v974 = vunpack.c.l.b16 %v814
        %v975 = vunpack.c.l.b16 %v815
        %v976 = vunpack.c.l.b16 %v816
        %v977 = vunpack.c.l.b16 %v817
        %v978 = vunpack.c.l.b16 %v818
        %v979 = vunpack.c.l.b16 %v819
        %v980 = vunpack.c.l.b16 %v820
        %v981 = vunpack.c.l.b16 %v821
        %v982 = vunpack.c.l.b16 %v822
        %v983 = vunpack.c.l.b16 %v823
        %v984 = vpack.c.b16 %v905, %v904
        %v985 = vpack.c.b16 %v907, %v906
        %v986 = vpack.c.b16 %v909, %v908
        %v987 = vpack.c.b16 %v911, %v910
        %v988 = vpack.c.b16 %v913, %v912
        %v989 = vpack.c.b16 %v915, %v914
        %v990 = vpack.c.b16 %v917, %v916
        %v991 = vpack.c.b16 %v919, %v918
        %v992 = vpack.c.b16 %v921, %v920
        %v993 = vpack.c.b16 %v923, %v922
        %v994 = vpack.c.b16 %v925, %v924
        %v995 = vpack.c.b16 %v927, %v926
        %v996 = vpack.c.b16 %v929, %v928
        %v997 = vpack.c.b16 %v931, %v930
        %v998 = vpack.c.b16 %v933, %v932
        %v999 = vpack.c.b16 %v935, %v934
        %v1000 = vpack.c.b16 %v937, %v936
        %v1001 = vpack.c.b16 %v939, %v938
        %v1002 = vpack.c.b16 %v941, %v940
        %v1003 = vpack.c.b16 %v943, %v942
        %v1004 = vpack.c.b16 %v945, %v944
        %v1005 = vpack.c.b16 %v947, %v946
        %v1006 = vpack.c.b16 %v949, %v948
        %v1007 = vpack.c.b16 %v951, %v950
        %v1008 = vpack.c.b16 %v953, %v952
        %v1009 = vpack.c.b16 %v955, %v954
        %v1010 = vpack.c.b16 %v957, %v956
        %v1011 = vpack.c.b16 %v959, %v958
        %v1012 = vpack.c.b16 %v961, %v960
        %v1013 = vpack.c.b16 %v963, %v962
        %v1014 = vpack.c.b16 %v965, %v964
        %v1015 = vpack.c.b16 %v967, %v966
        %v1016 = vpack.c.b16 %v969, %v968
        %v1017 = vpack.c.b16 %v971, %v970
        %v1018 = vpack.c.b16 %v973, %v972
        %v1019 = vpack.c.b16 %v975, %v974
        %v1020 = vpack.c.b16 %v977, %v976
        %v1021 = vpack.c.b16 %v979, %v978
        %v1022 = vpack.c.b16 %v981, %v980
        %v1023 = vpack.c.b16 %v983, %v982
        %1064 = vmatprep.subr.bf16.mxu0 0
        %1065 = vmatpush1.bf16.msra.mxu0 %v984
        %1066 = vmatprep.subr.bf16.mxu0 0
        %1067 = vmatpush1.bf16.msra.mxu0 %v985
        %1068 = vmatprep.subr.bf16.mxu0 0
        %1069 = vmatpush1.bf16.msra.mxu0 %v986
        %1070 = vmatprep.subr.bf16.mxu0 0
        %1071 = vmatpush1.bf16.msra.mxu0 %v987
        %1072 = vmatprep.subr.bf16.mxu0 0
        %1073 = vmatpush1.bf16.msra.mxu0 %v988
        %1074 = vmatprep.subr.bf16.mxu0 0
        %1075 = vmatpush1.bf16.msra.mxu0 %v989
        %1076 = vmatprep.subr.bf16.mxu0 0
        %1077 = vmatpush1.bf16.msra.mxu0 %v990
        %1078 = vmatprep.subr.bf16.mxu0 0
        %1079 = vmatpush1.bf16.msra.mxu0 %v991
        %1080 = vmatprep.subr.bf16.mxu0 0
        %1081 = vmatpush1.bf16.msra.mxu0 %v992
        %1082 = vmatprep.subr.bf16.mxu0 0
        %1083 = vmatpush1.bf16.msra.mxu0 %v993
        %1084 = vmatprep.subr.bf16.mxu0 0
        %1085 = vmatpush1.bf16.msra.mxu0 %v994
        %1086 = vmatprep.subr.bf16.mxu0 0
        %1087 = vmatpush1.bf16.msra.mxu0 %v995
        %1088 = vmatprep.subr.bf16.mxu0 0
        %1089 = vmatpush1.bf16.msra.mxu0 %v996
        %1090 = vmatprep.subr.bf16.mxu0 0
        %1091 = vmatpush1.bf16.msra.mxu0 %v997
        %1092 = vmatprep.subr.bf16.mxu0 0
        %1093 = vmatpush1.bf16.msra.mxu0 %v998
        %1094 = vmatprep.subr.bf16.mxu0 0
        %1095 = vmatpush1.bf16.msra.mxu0 %v999
        %1096 = vmatprep.mubr.bf16.mxu0 %v715
        %1097 = vmatmul.mubr.bf16.gmra.mrb[0].mxu0 %v714
        %v1098 = vpop.f32.mrb[0].mxu0
        %v1099 = vadd.f32 0.0, %v1098
        %v1100 = vpop.f32.mrb[0].mxu0
        %v1101 = vpop.f32.mrb[0].mxu0
        %v1102 = vadd.f32 0.0, %v1101
        %v1103 = vpop.f32.mrb[0].mxu0
        %1104 = vmatprep.mubr.bf16.mxu0 %v720
        %1105 = vmatmul.mubr.bf16.gmra.mrb[0].mxu0 %v719
        %v1106 = vpop.f32.mrb[0].mxu0
        %v1107 = vadd.f32 0.0, %v1106
        %v1108 = vpop.f32.mrb[0].mxu0
        %v1109 = vpop.f32.mrb[0].mxu0
        %v1110 = vadd.f32 0.0, %v1109
        %v1111 = vpop.f32.mrb[0].mxu0
        %1112 = vmatprep.mubr.bf16.mxu0 %v725
        %1113 = vmatmul.mubr.bf16.gmra.mrb[0].mxu0 %v724
        %v1114 = vpop.f32.mrb[0].mxu0
        %v1115 = vadd.f32 0.0, %v1114
        %v1116 = vpop.f32.mrb[0].mxu0
        %v1117 = vpop.f32.mrb[0].mxu0
        %v1118 = vadd.f32 0.0, %v1117
        %v1119 = vpop.f32.mrb[0].mxu0
        %1120 = vmatprep.mubr.bf16.mxu0 %v730
        %1121 = vmatmul.mubr.bf16.gmra.mrb[0].mxu0 %v729
        %v1122 = vpop.f32.mrb[0].mxu0
        %v1123 = vadd.f32 0.0, %v1122
        %v1124 = vpop.f32.mrb[0].mxu0
        %v1125 = vpop.f32.mrb[0].mxu0
        %v1126 = vadd.f32 0.0, %v1125
        %v1127 = vpop.f32.mrb[0].mxu0
        %1128 = vmatprep.mubr.bf16.mxu0 %v735
        %1129 = vmatmul.mubr.bf16.gmra.mrb[0].mxu0 %v734
        %v1130 = vpop.f32.mrb[0].mxu0
        %v1131 = vadd.f32 0.0, %v1130
        %v1132 = vpop.f32.mrb[0].mxu0
        %v1133 = vpop.f32.mrb[0].mxu0
        %v1134 = vadd.f32 0.0, %v1133
        %v1135 = vpop.f32.mrb[0].mxu0
        %1136 = vmatprep.mubr.bf16.mxu0 %v740
        %1137 = vmatmul.mubr.bf16.gmra.mrb[0].mxu0 %v739
        %v1138 = vpop.f32.mrb[0].mxu0
        %v1139 = vadd.f32 0.0, %v1138
        %v1140 = vpop.f32.mrb[0].mxu0
        %v1141 = vpop.f32.mrb[0].mxu0
        %v1142 = vadd.f32 0.0, %v1141
        %v1143 = vpop.f32.mrb[0].mxu0
        %1144 = vdwg.mxu0
        %1145 = vmatprep.subr.bf16.mxu0 0
        %1146 = vmatpush1.bf16.msra.mxu0 %v1000
        %1147 = vmatprep.subr.bf16.mxu0 0
        %1148 = vmatpush1.bf16.msra.mxu0 %v1001
        %1149 = vmatprep.subr.bf16.mxu0 0
        %1150 = vmatpush1.bf16.msra.mxu0 %v1002
        %1151 = vmatprep.subr.bf16.mxu0 0
        %1152 = vmatpush1.bf16.msra.mxu0 %v1003
        %1153 = vmatprep.subr.bf16.mxu0 0
        %1154 = vmatpush1.bf16.msra.mxu0 %v1004
        %1155 = vmatprep.subr.bf16.mxu0 0
        %1156 = vmatpush1.bf16.msra.mxu0 %v1005
        %1157 = vmatprep.subr.bf16.mxu0 0
        %1158 = vmatpush1.bf16.msra.mxu0 %v1006
        %1159 = vmatprep.subr.bf16.mxu0 0
        %1160 = vmatpush1.bf16.msra.mxu0 %v1007
        %1161 = vmatprep.subr.bf16.mxu0 0
        %1162 = vmatpush1.bf16.msra.mxu0 %v1008
        %1163 = vmatprep.subr.bf16.mxu0 0
        %1164 = vmatpush1.bf16.msra.mxu0 %v1009
        %1165 = vmatprep.subr.bf16.mxu0 0
        %1166 = vmatpush1.bf16.msra.mxu0 %v1010
        %1167 = vmatprep.subr.bf16.mxu0 0
        %1168 = vmatpush1.bf16.msra.mxu0 %v1011
        %1169 = vmatprep.subr.bf16.mxu0 0
        %1170 = vmatpush1.bf16.msra.mxu0 %v1012
        %1171 = vmatprep.subr.bf16.mxu0 0
        %1172 = vmatpush1.bf16.msra.mxu0 %v1013
        %1173 = vmatprep.subr.bf16.mxu0 0
        %1174 = vmatpush1.bf16.msra.mxu0 %v1014
        %1175 = vmatprep.subr.bf16.mxu0 0
        %1176 = vmatpush1.bf16.msra.mxu0 %v1015
        %1177 = vmatprep.mubr.bf16.mxu0 %v717
        %1178 = vmatmul.mubr.bf16.gmra.mrb[0].mxu0 %v716
        %v1179 = vpop.f32.mrb[0].mxu0
        %v1180 = vadd.f32 %v1099, %v1179
        %v1181 = vpop.f32.mrb[0].mxu0
        %v1182 = vpop.f32.mrb[0].mxu0
        %v1183 = vadd.f32 %v1102, %v1182
        %v1184 = vpop.f32.mrb[0].mxu0
        %1185 = vmatprep.mubr.bf16.mxu0 %v722
        %1186 = vmatmul.mubr.bf16.gmra.mrb[0].mxu0 %v721
        %v1187 = vpop.f32.mrb[0].mxu0
        %v1188 = vadd.f32 %v1107, %v1187
        %v1189 = vpop.f32.mrb[0].mxu0
        %v1190 = vpop.f32.mrb[0].mxu0
        %v1191 = vadd.f32 %v1110, %v1190
        %v1192 = vpop.f32.mrb[0].mxu0
        %1193 = vmatprep.mubr.bf16.mxu0 %v727
        %1194 = vmatmul.mubr.bf16.gmra.mrb[0].mxu0 %v726
        %v1195 = vpop.f32.mrb[0].mxu0
        %v1196 = vadd.f32 %v1115, %v1195
        %v1197 = vpop.f32.mrb[0].mxu0
        %v1198 = vpop.f32.mrb[0].mxu0
        %v1199 = vadd.f32 %v1118, %v1198
        %v1200 = vpop.f32.mrb[0].mxu0
        %1201 = vmatprep.mubr.bf16.mxu0 %v732
        %1202 = vmatmul.mubr.bf16.gmra.mrb[0].mxu0 %v731
        %v1203 = vpop.f32.mrb[0].mxu0
        %v1204 = vadd.f32 %v1123, %v1203
        %v1205 = vpop.f32.mrb[0].mxu0
        %v1206 = vpop.f32.mrb[0].mxu0
        %v1207 = vadd.f32 %v1126, %v1206
        %v1208 = vpop.f32.mrb[0].mxu0
        %1209 = vmatprep.mubr.bf16.mxu0 %v737
        %1210 = vmatmul.mubr.bf16.gmra.mrb[0].mxu0 %v736
        %v1211 = vpop.f32.mrb[0].mxu0
        %v1212 = vadd.f32 %v1131, %v1211
        %v1213 = vpop.f32.mrb[0].mxu0
        %v1214 = vpop.f32.mrb[0].mxu0
        %v1215 = vadd.f32 %v1134, %v1214
        %v1216 = vpop.f32.mrb[0].mxu0
        %1217 = vmatprep.mubr.bf16.mxu0 %v742
        %1218 = vmatmul.mubr.bf16.gmra.mrb[0].mxu0 %v741
        %v1219 = vpop.f32.mrb[0].mxu0
        %v1220 = vadd.f32 %v1139, %v1219
        %v1221 = vpop.f32.mrb[0].mxu0
        %v1222 = vpop.f32.mrb[0].mxu0
        %v1223 = vadd.f32 %v1142, %v1222
        %v1224 = vpop.f32.mrb[0].mxu0
        %1225 = vdwg.mxu0
        %1226 = vmatprep.subr.bf16.mxu0 0
        %1227 = vmatpush1.bf16.msra.mxu0 %v1016
        %1228 = vmatprep.subr.bf16.mxu0 0
        %1229 = vmatpush1.bf16.msra.mxu0 %v1017
        %1230 = vmatprep.subr.bf16.mxu0 0
        %1231 = vmatpush1.bf16.msra.mxu0 %v1018
        %1232 = vmatprep.subr.bf16.mxu0 0
        %1233 = vmatpush1.bf16.msra.mxu0 %v1019
        %1234 = vmatprep.subr.bf16.mxu0 0
        %1235 = vmatpush1.bf16.msra.mxu0 %v1020
        %1236 = vmatprep.subr.bf16.mxu0 0
        %1237 = vmatpush1.bf16.msra.mxu0 %v1021
        %1238 = vmatprep.subr.bf16.mxu0 0
        %1239 = vmatpush1.bf16.msra.mxu0 %v1022
        %1240 = vmatprep.subr.bf16.mxu0 0
        %1241 = vmatpush1.bf16.msra.mxu0 %v1023
        %1242 = vmatprep.subr.bf16.mxu0 0
        %1243 = vmatpush1.bf16.msra.mxu0 0
        %1244 = vmatprep.subr.bf16.mxu0 0
        %1245 = vmatpush1.bf16.msra.mxu0 0
        %1246 = vmatprep.subr.bf16.mxu0 0
        %1247 = vmatpush1.bf16.msra.mxu0 0
        %1248 = vmatprep.subr.bf16.mxu0 0
        %1249 = vmatpush1.bf16.msra.mxu0 0
        %1250 = vmatprep.subr.bf16.mxu0 0
        %1251 = vmatpush1.bf16.msra.mxu0 0
        %1252 = vmatprep.subr.bf16.mxu0 0
        %1253 = vmatpush1.bf16.msra.mxu0 0
        %1254 = vmatprep.subr.bf16.mxu0 0
        %1255 = vmatpush1.bf16.msra.mxu0 0
        %1256 = vmatprep.subr.bf16.mxu0 0
        %1257 = vmatpush1.bf16.msra.mxu0 0
        %1258 = vmatprep.mubr.bf16.mxu0 0
        %1259 = vmatmul.mubr.bf16.gmra.mrb[0].mxu0 %v718
        %v1260 = vpop.f32.mrb[0].mxu0
        %v1261 = vadd.f32 %v1180, %v1260
        %v1262 = vpop.f32.mrb[0].mxu0
        %v1263 = vpop.f32.mrb[0].mxu0
        %v1264 = vadd.f32 %v1183, %v1263
        %v1265 = vpop.f32.mrb[0].mxu0
        %1266 = vmatprep.mubr.bf16.mxu0 0
        %1267 = vmatmul.mubr.bf16.gmra.mrb[0].mxu0 %v723
        %v1268 = vpop.f32.mrb[0].mxu0
        %v1269 = vadd.f32 %v1188, %v1268
        %v1270 = vpop.f32.mrb[0].mxu0
        %v1271 = vpop.f32.mrb[0].mxu0
        %v1272 = vadd.f32 %v1191, %v1271
        %v1273 = vpop.f32.mrb[0].mxu0
        %1274 = vmatprep.mubr.bf16.mxu0 0
        %1275 = vmatmul.mubr.bf16.gmra.mrb[0].mxu0 %v728
        %v1276 = vpop.f32.mrb[0].mxu0
        %v1277 = vadd.f32 %v1196, %v1276
        %v1278 = vpop.f32.mrb[0].mxu0
        %v1279 = vpop.f32.mrb[0].mxu0
        %v1280 = vadd.f32 %v1199, %v1279
        %v1281 = vpop.f32.mrb[0].mxu0
        %1282 = vmatprep.mubr.bf16.mxu0 0
        %1283 = vmatmul.mubr.bf16.gmra.mrb[0].mxu0 %v733
        %v1284 = vpop.f32.mrb[0].mxu0
        %v1285 = vadd.f32 %v1204, %v1284
        %v1286 = vpop.f32.mrb[0].mxu0
        %v1287 = vpop.f32.mrb[0].mxu0
        %v1288 = vadd.f32 %v1207, %v1287
        %v1289 = vpop.f32.mrb[0].mxu0
        %1290 = vmatprep.mubr.bf16.mxu0 0
        %1291 = vmatmul.mubr.bf16.gmra.mrb[0].mxu0 %v738
        %v1292 = vpop.f32.mrb[0].mxu0
        %v1293 = vadd.f32 %v1212, %v1292
        %v1294 = vpop.f32.mrb[0].mxu0
        %v1295 = vpop.f32.mrb[0].mxu0
        %v1296 = vadd.f32 %v1215, %v1295
        %v1297 = vpop.f32.mrb[0].mxu0
        %1298 = vmatprep.mubr.bf16.mxu0 0
        %1299 = vmatmul.mubr.bf16.gmra.mrb[0].mxu0 %v743
        %v1300 = vpop.f32.mrb[0].mxu0
        %v1301 = vadd.f32 %v1220, %v1300
        %v1302 = vpop.f32.mrb[0].mxu0
        %v1303 = vpop.f32.mrb[0].mxu0
        %v1304 = vadd.f32 %v1223, %v1303
        %v1305 = vpop.f32.mrb[0].mxu0
        %1306 = vdwg.mxu0
        %1307 = vst [vmem:[%s282] sm:$0xff] %v1261
        %1308 = vst [vmem:[%s282 + $0x8] sm:$0xff] %v1264
        %1309 = vst [vmem:[%s282 + $0x10] sm:$0xff] %v1269
        %1310 = vst [vmem:[%s282 + $0x18] sm:$0xff] %v1272
        %1311 = vst [vmem:[%s282 + $0x20] sm:$0xff] %v1277
        %1312 = vst [vmem:[%s282 + $0x28] sm:$0xff] %v1280
        %1313 = vst [vmem:[%s282 + $0x30] sm:$0xff] %v1285
        %1314 = vst [vmem:[%s282 + $0x38] sm:$0xff] %v1288
        %1315 = vst [vmem:[%s282 + $0x40] sm:$0xff] %v1293
        %1316 = vst [vmem:[%s282 + $0x48] sm:$0xff] %v1296
        %1317 = vst [vmem:[%s282 + $0x50] sm:$0xff] %v1301
        %1318 = vst [vmem:[%s282 + $0x58] sm:$0xff] %v1304
        %v1319 = vld [vmem:[%s236 + $0x4] sm:$0x8]
        %v1320 = vld [vmem:[%s236 + $0x8] sm:$0xf]
        %v1321 = vld [vmem:[%s236 + $0xc] sm:$0xf]
        %v1322 = vld [vmem:[%s236 + $0x10] sm:$0xf]
        %v1323 = vld [vmem:[%s236 + $0x14] sm:$0xf]
        %v1324 = vld [vmem:[%s236 + $0x18] sm:$0xf]
        %v1325 = vld [vmem:[%s236 + $0x1c] sm:$0xf]
        %v1326 = vld [vmem:[%s236 + $0x20] sm:$0xf]
        %v1327 = vld [vmem:[%s236 + $0x24] sm:$0xf]
        %v1328 = vld [vmem:[%s236 + $0x28] sm:$0xf]
        %v1329 = vld [vmem:[%s236 + $0x2c] sm:$0xf]
        %v1330 = vld [vmem:[%s236 + $0x30] sm:$0xf]
        %v1331 = vld [vmem:[%s236 + $0x34] sm:$0x7]
        %v1345 = vunpack.c.l.b16 %v1319
        %v1346 = vunpack.c.l.b16 %v1320
        %v1347 = vunpack.c.l.b16 %v1321
        %v1348 = vunpack.c.l.b16 %v1322
        %v1349 = vunpack.c.l.b16 %v1323
        %v1350 = vunpack.c.l.b16 %v1324
        %v1351 = vunpack.c.l.b16 %v1325
        %v1352 = vunpack.c.l.b16 %v1326
        %v1353 = vunpack.c.l.b16 %v1327
        %v1354 = vunpack.c.l.b16 %v1328
        %v1355 = vunpack.c.l.b16 %v1329
        %v1356 = vunpack.c.l.b16 %v1330
        %v1357 = vunpack.c.l.b16 %v1331
        %v1358 = vpack.c.b16 %v1346, %v1345
        %v1359 = vpack.c.b16 %v1348, %v1347
        %v1360 = vpack.c.b16 %v1350, %v1349
        %v1361 = vpack.c.b16 %v1352, %v1351
        %v1362 = vpack.c.b16 %v1354, %v1353
        %v1363 = vpack.c.b16 %v1356, %v1355
        %v1364 = vpack.c.b16 %v1357, %v1357
        %vm1365 = vcmask 1044480
        %v1366 = vrot.slane %v1358, 3
        %v1367 = vrot.slane %v1359, 3
        %v1368 = vsel %vm1365, %v1366, %v1367
        %v1369 = vrot.slane %v1360, 3
        %v1370 = vsel %vm1365, %v1367, %v1369
        %v1371 = vrot.slane %v1361, 3
        %v1372 = vsel %vm1365, %v1369, %v1371
        %v1373 = vrot.slane %v1362, 3
        %v1374 = vsel %vm1365, %v1371, %v1373
        %v1375 = vrot.slane %v1363, 3
        %v1376 = vsel %vm1365, %v1373, %v1375
        %v1377 = vrot.slane %v1364, 3
        %v1378 = vsel %vm1365, %v1375, %v1377
        %1385 = vst [vmem:[#allocation2] sm:$0xff] %v1368
        %1386 = vst [vmem:[#allocation2 + $0x28] sm:$0xff] %v1370
        %1387 = vst [vmem:[#allocation2 + $0x50] sm:$0xff] %v1372
        %1388 = vst [vmem:[#allocation2 + $0x78] sm:$0xff] %v1374
        %1389 = vst [vmem:[#allocation2 + $0xa0] sm:$0xff] %v1376
        %1390 = vst [vmem:[#allocation2 + $0xc8] sm:$0xff] %v1378
        %v1391 = vld [vmem:[%s236 + $0xc] sm:$0xf]
        %v1392 = vld [vmem:[%s236 + $0x10] sm:$0xf]
        %v1393 = vld [vmem:[%s236 + $0x14] sm:$0xf]
        %v1394 = vld [vmem:[%s236 + $0x18] sm:$0xf]
        %v1395 = vld [vmem:[%s236 + $0x1c] sm:$0xf]
        %v1396 = vld [vmem:[%s236 + $0x20] sm:$0xf]
        %v1397 = vld [vmem:[%s236 + $0x24] sm:$0xf]
        %v1398 = vld [vmem:[%s236 + $0x28] sm:$0xf]
        %v1399 = vld [vmem:[%s236 + $0x2c] sm:$0xf]
        %v1400 = vld [vmem:[%s236 + $0x30] sm:$0xf]
        %v1401 = vld [vmem:[%s236 + $0x34] sm:$0xf]
        %v1402 = vld [vmem:[%s236 + $0x38] sm:$0xf]
        %v1415 = vunpack.c.l.b16 %v1391
        %v1416 = vunpack.c.l.b16 %v1392
        %v1417 = vunpack.c.l.b16 %v1393
        %v1418 = vunpack.c.l.b16 %v1394
        %v1419 = vunpack.c.l.b16 %v1395
        %v1420 = vunpack.c.l.b16 %v1396
        %v1421 = vunpack.c.l.b16 %v1397
        %v1422 = vunpack.c.l.b16 %v1398
        %v1423 = vunpack.c.l.b16 %v1399
        %v1424 = vunpack.c.l.b16 %v1400
        %v1425 = vunpack.c.l.b16 %v1401
        %v1426 = vunpack.c.l.b16 %v1402
        %v1427 = vpack.c.b16 %v1416, %v1415
        %v1428 = vpack.c.b16 %v1418, %v1417
        %v1429 = vpack.c.b16 %v1420, %v1419
        %v1430 = vpack.c.b16 %v1422, %v1421
        %v1431 = vpack.c.b16 %v1424, %v1423
        %v1432 = vpack.c.b16 %v1426, %v1425
        %1439 = vst [vmem:[#allocation2 + $0x8] sm:$0xff] %v1427
        %1440 = vst [vmem:[#allocation2 + $0x30] sm:$0xff] %v1428
        %1441 = vst [vmem:[#allocation2 + $0x58] sm:$0xff] %v1429
        %1442 = vst [vmem:[#allocation2 + $0x80] sm:$0xff] %v1430
        %1443 = vst [vmem:[#allocation2 + $0xa8] sm:$0xff] %v1431
        %1444 = vst [vmem:[#allocation2 + $0xd0] sm:$0xff] %v1432
        %v1445 = vld [vmem:[%s236 + $0xc] sm:$0xf]
        %v1446 = vld [vmem:[%s236 + $0x10] sm:$0xf]
        %v1447 = vld [vmem:[%s236 + $0x14] sm:$0xf]
        %v1448 = vld [vmem:[%s236 + $0x18] sm:$0xf]
        %v1449 = vld [vmem:[%s236 + $0x1c] sm:$0xf]
        %v1450 = vld [vmem:[%s236 + $0x20] sm:$0xf]
        %v1451 = vld [vmem:[%s236 + $0x24] sm:$0xf]
        %v1452 = vld [vmem:[%s236 + $0x28] sm:$0xf]
        %v1453 = vld [vmem:[%s236 + $0x2c] sm:$0xf]
        %v1454 = vld [vmem:[%s236 + $0x30] sm:$0xf]
        %v1455 = vld [vmem:[%s236 + $0x34] sm:$0xf]
        %v1456 = vld [vmem:[%s236 + $0x38] sm:$0xf]
        %v1457 = vld [vmem:[%s236 + $0x3c] sm:$0x1]
        %v1471 = vunpack.c.l.b16 %v1445
        %v1472 = vunpack.c.l.b16 %v1446
        %v1473 = vunpack.c.l.b16 %v1447
        %v1474 = vunpack.c.l.b16 %v1448
        %v1475 = vunpack.c.l.b16 %v1449
        %v1476 = vunpack.c.l.b16 %v1450
        %v1477 = vunpack.c.l.b16 %v1451
        %v1478 = vunpack.c.l.b16 %v1452
        %v1479 = vunpack.c.l.b16 %v1453
        %v1480 = vunpack.c.l.b16 %v1454
        %v1481 = vunpack.c.l.b16 %v1455
        %v1482 = vunpack.c.l.b16 %v1456
        %v1483 = vunpack.c.l.b16 %v1457
        %v1484 = vpack.c.b16 %v1472, %v1471
        %v1485 = vpack.c.b16 %v1474, %v1473
        %v1486 = vpack.c.b16 %v1476, %v1475
        %v1487 = vpack.c.b16 %v1478, %v1477
        %v1488 = vpack.c.b16 %v1480, %v1479
        %v1489 = vpack.c.b16 %v1482, %v1481
        %v1490 = vpack.c.b16 %v1483, %v1483
        %v1492 = vshrl.u32 %v1484, 16
        %v1494 = vshll.u32 %v1484, 16
        %v1496 = vrot.slane %v1494, 1
        %v1497 = vor.u32 %v1492, %v1496
        %v1499 = vshll.u32 %v1485, 16
        %v1501 = vrot.slane %v1499, 1
        %v1502 = vsel %vm384, %v1497, %v1501
        %v1503 = vshrl.u32 %v1485, 16
        %v1505 = vor.u32 %v1503, %v1501
        %v1507 = vshll.u32 %v1486, 16
        %v1509 = vrot.slane %v1507, 1
        %v1510 = vsel %vm384, %v1505, %v1509
        %v1511 = vshrl.u32 %v1486, 16
        %v1513 = vor.u32 %v1511, %v1509
        %v1515 = vshll.u32 %v1487, 16
        %v1517 = vrot.slane %v1515, 1
        %v1518 = vsel %vm384, %v1513, %v1517
        %v1519 = vshrl.u32 %v1487, 16
        %v1521 = vor.u32 %v1519, %v1517
        %v1523 = vshll.u32 %v1488, 16
        %v1525 = vrot.slane %v1523, 1
        %v1526 = vsel %vm384, %v1521, %v1525
        %v1527 = vshrl.u32 %v1488, 16
        %v1529 = vor.u32 %v1527, %v1525
        %v1531 = vshll.u32 %v1489, 16
        %v1533 = vrot.slane %v1531, 1
        %v1534 = vsel %vm384, %v1529, %v1533
        %v1535 = vshrl.u32 %v1489, 16
        %v1537 = vor.u32 %v1535, %v1533
        %v1539 = vshll.u32 %v1490, 16
        %v1541 = vrot.slane %v1539, 1
        %v1542 = vsel %vm384, %v1537, %v1541
        %1549 = vst [vmem:[#allocation2 + $0x10] sm:$0xff] %v1502
        %1550 = vst [vmem:[#allocation2 + $0x38] sm:$0xff] %v1510
        %1551 = vst [vmem:[#allocation2 + $0x60] sm:$0xff] %v1518
        %1552 = vst [vmem:[#allocation2 + $0x88] sm:$0xff] %v1526
        %1553 = vst [vmem:[#allocation2 + $0xb0] sm:$0xff] %v1534
        %1554 = vst [vmem:[#allocation2 + $0xd8] sm:$0xff] %v1542
        %v1555 = vld [vmem:[%s236 + $0xc] sm:$0xe]
        %v1556 = vld [vmem:[%s236 + $0x10] sm:$0xf]
        %v1557 = vld [vmem:[%s236 + $0x14] sm:$0xf]
        %v1558 = vld [vmem:[%s236 + $0x18] sm:$0xf]
        %v1559 = vld [vmem:[%s236 + $0x1c] sm:$0xf]
        %v1560 = vld [vmem:[%s236 + $0x20] sm:$0xf]
        %v1561 = vld [vmem:[%s236 + $0x24] sm:$0xf]
        %v1562 = vld [vmem:[%s236 + $0x28] sm:$0xf]
        %v1563 = vld [vmem:[%s236 + $0x2c] sm:$0xf]
        %v1564 = vld [vmem:[%s236 + $0x30] sm:$0xf]
        %v1565 = vld [vmem:[%s236 + $0x34] sm:$0xf]
        %v1566 = vld [vmem:[%s236 + $0x38] sm:$0xf]
        %v1567 = vld [vmem:[%s236 + $0x3c] sm:$0x1]
        %v1581 = vunpack.c.l.b16 %v1555
        %v1582 = vunpack.c.l.b16 %v1556
        %v1583 = vunpack.c.l.b16 %v1557
        %v1584 = vunpack.c.l.b16 %v1558
        %v1585 = vunpack.c.l.b16 %v1559
        %v1586 = vunpack.c.l.b16 %v1560
        %v1587 = vunpack.c.l.b16 %v1561
        %v1588 = vunpack.c.l.b16 %v1562
        %v1589 = vunpack.c.l.b16 %v1563
        %v1590 = vunpack.c.l.b16 %v1564
        %v1591 = vunpack.c.l.b16 %v1565
        %v1592 = vunpack.c.l.b16 %v1566
        %v1593 = vunpack.c.l.b16 %v1567
        %v1594 = vpack.c.b16 %v1582, %v1581
        %v1595 = vpack.c.b16 %v1584, %v1583
        %v1596 = vpack.c.b16 %v1586, %v1585
        %v1597 = vpack.c.b16 %v1588, %v1587
        %v1598 = vpack.c.b16 %v1590, %v1589
        %v1599 = vpack.c.b16 %v1592, %v1591
        %v1600 = vpack.c.b16 %v1593, %v1593
        %v1601 = vrot.slane %v1594, 1
        %v1602 = vrot.slane %v1595, 1
        %v1603 = vsel %vm495, %v1601, %v1602
        %v1604 = vrot.slane %v1596, 1
        %v1605 = vsel %vm495, %v1602, %v1604
        %v1606 = vrot.slane %v1597, 1
        %v1607 = vsel %vm495, %v1604, %v1606
        %v1608 = vrot.slane %v1598, 1
        %v1609 = vsel %vm495, %v1606, %v1608
        %v1610 = vrot.slane %v1599, 1
        %v1611 = vsel %vm495, %v1608, %v1610
        %v1612 = vrot.slane %v1600, 1
        %v1613 = vsel %vm495, %v1610, %v1612
        %1620 = vst [vmem:[#allocation2 + $0x18] sm:$0xff] %v1603
        %1621 = vst [vmem:[#allocation2 + $0x40] sm:$0xff] %v1605
        %1622 = vst [vmem:[#allocation2 + $0x68] sm:$0xff] %v1607
        %1623 = vst [vmem:[#allocation2 + $0x90] sm:$0xff] %v1609
        %1624 = vst [vmem:[#allocation2 + $0xb8] sm:$0xff] %v1611
        %1625 = vst [vmem:[#allocation2 + $0xe0] sm:$0xff] %v1613
        %v1626 = vld [vmem:[#allocation2] sm:$0xff]
        %v1627 = vld [vmem:[#allocation2 + $0x8] sm:$0xff]
        %v1628 = vld [vmem:[#allocation2 + $0x10] sm:$0xff]
        %v1629 = vld [vmem:[#allocation2 + $0x18] sm:$0xff]
        %v1630 = vld [vmem:[#allocation2 + $0x28] sm:$0xff]
        %v1631 = vld [vmem:[#allocation2 + $0x30] sm:$0xff]
        %v1632 = vld [vmem:[#allocation2 + $0x38] sm:$0xff]
        %v1633 = vld [vmem:[#allocation2 + $0x40] sm:$0xff]
        %v1634 = vld [vmem:[#allocation2 + $0x50] sm:$0xff]
        %v1635 = vld [vmem:[#allocation2 + $0x58] sm:$0xff]
        %v1636 = vld [vmem:[#allocation2 + $0x60] sm:$0xff]
        %v1637 = vld [vmem:[#allocation2 + $0x68] sm:$0xff]
        %v1638 = vld [vmem:[#allocation2 + $0x78] sm:$0xff]
        %v1639 = vld [vmem:[#allocation2 + $0x80] sm:$0xff]
        %v1640 = vld [vmem:[#allocation2 + $0x88] sm:$0xff]
        %v1641 = vld [vmem:[#allocation2 + $0x90] sm:$0xff]
        %v1642 = vld [vmem:[#allocation2 + $0xa0] sm:$0xff]
        %v1643 = vld [vmem:[#allocation2 + $0xa8] sm:$0xff]
        %v1644 = vld [vmem:[#allocation2 + $0xb0] sm:$0xff]
        %v1645 = vld [vmem:[#allocation2 + $0xb8] sm:$0xff]
        %v1646 = vld [vmem:[#allocation2 + $0xc8] sm:$0xff]
        %v1647 = vld [vmem:[#allocation2 + $0xd0] sm:$0xff]
        %v1648 = vld [vmem:[#allocation2 + $0xd8] sm:$0xff]
        %v1649 = vld [vmem:[#allocation2 + $0xe0] sm:$0xff]
        %v1650 = vld [vmem:[#allocation6 + $0x140] sm:$0xf]
        %v1651 = vld [vmem:[#allocation6 + $0x144] sm:$0xf]
        %v1652 = vld [vmem:[#allocation6 + $0x148] sm:$0xf]
        %v1653 = vld [vmem:[#allocation6 + $0x14c] sm:$0xf]
        %v1654 = vld [vmem:[#allocation6 + $0x150] sm:$0xf]
        %v1655 = vld [vmem:[#allocation6 + $0x154] sm:$0xf]
        %v1656 = vld [vmem:[#allocation6 + $0x158] sm:$0xf]
        %v1657 = vld [vmem:[#allocation6 + $0x15c] sm:$0xf]
        %v1658 = vld [vmem:[#allocation6 + $0x160] sm:$0xf]
        %v1659 = vld [vmem:[#allocation6 + $0x164] sm:$0xf]
        %v1660 = vld [vmem:[#allocation6 + $0x168] sm:$0xf]
        %v1661 = vld [vmem:[#allocation6 + $0x16c] sm:$0xf]
        %v1662 = vld [vmem:[#allocation6 + $0x170] sm:$0xf]
        %v1663 = vld [vmem:[#allocation6 + $0x174] sm:$0xf]
        %v1664 = vld [vmem:[#allocation6 + $0x178] sm:$0xf]
        %v1665 = vld [vmem:[#allocation6 + $0x17c] sm:$0xf]
        %v1666 = vld [vmem:[#allocation6 + $0x180] sm:$0xf]
        %v1667 = vld [vmem:[#allocation6 + $0x184] sm:$0xf]
        %v1668 = vld [vmem:[#allocation6 + $0x188] sm:$0xf]
        %v1669 = vld [vmem:[#allocation6 + $0x18c] sm:$0xf]
        %v1670 = vld [vmem:[#allocation6 + $0x190] sm:$0xf]
        %v1671 = vld [vmem:[#allocation6 + $0x194] sm:$0xf]
        %v1672 = vld [vmem:[#allocation6 + $0x198] sm:$0xf]
        %v1673 = vld [vmem:[#allocation6 + $0x19c] sm:$0xf]
        %v1674 = vld [vmem:[#allocation6 + $0x1a0] sm:$0xf]
        %v1675 = vld [vmem:[#allocation6 + $0x1a4] sm:$0xf]
        %v1676 = vld [vmem:[#allocation6 + $0x1a8] sm:$0xf]
        %v1677 = vld [vmem:[#allocation6 + $0x1ac] sm:$0xf]
        %v1678 = vld [vmem:[#allocation6 + $0x1b0] sm:$0xf]
        %v1679 = vld [vmem:[#allocation6 + $0x1b4] sm:$0xf]
        %v1680 = vld [vmem:[#allocation6 + $0x1b8] sm:$0xf]
        %v1681 = vld [vmem:[#allocation6 + $0x1bc] sm:$0xf]
        %v1682 = vld [vmem:[#allocation6 + $0x1c0] sm:$0xf]
        %v1683 = vld [vmem:[#allocation6 + $0x1c4] sm:$0xf]
        %v1684 = vld [vmem:[#allocation6 + $0x1c8] sm:$0xf]
        %v1685 = vld [vmem:[#allocation6 + $0x1cc] sm:$0xf]
        %v1686 = vld [vmem:[#allocation6 + $0x1d0] sm:$0xf]
        %v1687 = vld [vmem:[#allocation6 + $0x1d4] sm:$0xf]
        %v1688 = vld [vmem:[#allocation6 + $0x1d8] sm:$0xf]
        %v1689 = vld [vmem:[#allocation6 + $0x1dc] sm:$0xf]
        %v1690 = vld [vmem:[#allocation6 + $0x1e0] sm:$0xf]
        %v1691 = vld [vmem:[#allocation6 + $0x1e4] sm:$0xf]
        %v1692 = vld [vmem:[#allocation6 + $0x1e8] sm:$0xf]
        %v1693 = vld [vmem:[#allocation6 + $0x1ec] sm:$0xf]
        %v1694 = vld [vmem:[#allocation6 + $0x1f0] sm:$0xf]
        %v1695 = vld [vmem:[#allocation6 + $0x1f4] sm:$0xf]
        %v1696 = vld [vmem:[#allocation6 + $0x1f8] sm:$0xf]
        %v1697 = vld [vmem:[#allocation6 + $0x1fc] sm:$0xf]
        %v1698 = vld [vmem:[#allocation6 + $0x200] sm:$0xf]
        %v1699 = vld [vmem:[#allocation6 + $0x204] sm:$0xf]
        %v1700 = vld [vmem:[#allocation6 + $0x208] sm:$0xf]
        %v1701 = vld [vmem:[#allocation6 + $0x20c] sm:$0xf]
        %v1702 = vld [vmem:[#allocation6 + $0x210] sm:$0xf]
        %v1703 = vld [vmem:[#allocation6 + $0x214] sm:$0xf]
        %v1704 = vld [vmem:[#allocation6 + $0x218] sm:$0xf]
        %v1705 = vld [vmem:[#allocation6 + $0x21c] sm:$0xf]
        %v1706 = vld [vmem:[#allocation6 + $0x220] sm:$0xf]
        %v1707 = vld [vmem:[#allocation6 + $0x224] sm:$0xf]
        %v1708 = vld [vmem:[#allocation6 + $0x228] sm:$0xf]
        %v1709 = vld [vmem:[#allocation6 + $0x22c] sm:$0xf]
        %v1710 = vld [vmem:[#allocation6 + $0x230] sm:$0xf]
        %v1711 = vld [vmem:[#allocation6 + $0x234] sm:$0xf]
        %v1712 = vld [vmem:[#allocation6 + $0x238] sm:$0xf]
        %v1713 = vld [vmem:[#allocation6 + $0x23c] sm:$0xf]
        %v1778 = vunpack.c.l.b16 %v1650
        %v1779 = vunpack.c.l.b16 %v1651
        %v1780 = vunpack.c.l.b16 %v1652
        %v1781 = vunpack.c.l.b16 %v1653
        %v1782 = vunpack.c.l.b16 %v1654
        %v1783 = vunpack.c.l.b16 %v1655
        %v1784 = vunpack.c.l.b16 %v1656
        %v1785 = vunpack.c.l.b16 %v1657
        %v1786 = vunpack.c.l.b16 %v1658
        %v1787 = vunpack.c.l.b16 %v1659
        %v1788 = vunpack.c.l.b16 %v1660
        %v1789 = vunpack.c.l.b16 %v1661
        %v1790 = vunpack.c.l.b16 %v1662
        %v1791 = vunpack.c.l.b16 %v1663
        %v1792 = vunpack.c.l.b16 %v1664
        %v1793 = vunpack.c.l.b16 %v1665
        %v1794 = vunpack.c.l.b16 %v1666
        %v1795 = vunpack.c.l.b16 %v1667
        %v1796 = vunpack.c.l.b16 %v1668
        %v1797 = vunpack.c.l.b16 %v1669
        %v1798 = vunpack.c.l.b16 %v1670
        %v1799 = vunpack.c.l.b16 %v1671
        %v1800 = vunpack.c.l.b16 %v1672
        %v1801 = vunpack.c.l.b16 %v1673
        %v1802 = vunpack.c.l.b16 %v1674
        %v1803 = vunpack.c.l.b16 %v1675
        %v1804 = vunpack.c.l.b16 %v1676
        %v1805 = vunpack.c.l.b16 %v1677
        %v1806 = vunpack.c.l.b16 %v1678
        %v1807 = vunpack.c.l.b16 %v1679
        %v1808 = vunpack.c.l.b16 %v1680
        %v1809 = vunpack.c.l.b16 %v1681
        %v1810 = vunpack.c.l.b16 %v1682
        %v1811 = vunpack.c.l.b16 %v1683
        %v1812 = vunpack.c.l.b16 %v1684
        %v1813 = vunpack.c.l.b16 %v1685
        %v1814 = vunpack.c.l.b16 %v1686
        %v1815 = vunpack.c.l.b16 %v1687
        %v1816 = vunpack.c.l.b16 %v1688
        %v1817 = vunpack.c.l.b16 %v1689
        %v1818 = vunpack.c.l.b16 %v1690
        %v1819 = vunpack.c.l.b16 %v1691
        %v1820 = vunpack.c.l.b16 %v1692
        %v1821 = vunpack.c.l.b16 %v1693
        %v1822 = vunpack.c.l.b16 %v1694
        %v1823 = vunpack.c.l.b16 %v1695
        %v1824 = vunpack.c.l.b16 %v1696
        %v1825 = vunpack.c.l.b16 %v1697
        %v1826 = vunpack.c.l.b16 %v1698
        %v1827 = vunpack.c.l.b16 %v1699
        %v1828 = vunpack.c.l.b16 %v1700
        %v1829 = vunpack.c.l.b16 %v1701
        %v1830 = vunpack.c.l.b16 %v1702
        %v1831 = vunpack.c.l.b16 %v1703
        %v1832 = vunpack.c.l.b16 %v1704
        %v1833 = vunpack.c.l.b16 %v1705
        %v1834 = vunpack.c.l.b16 %v1706
        %v1835 = vunpack.c.l.b16 %v1707
        %v1836 = vunpack.c.l.b16 %v1708
        %v1837 = vunpack.c.l.b16 %v1709
        %v1838 = vunpack.c.l.b16 %v1710
        %v1839 = vunpack.c.l.b16 %v1711
        %v1840 = vunpack.c.l.b16 %v1712
        %v1841 = vunpack.c.l.b16 %v1713
        %v1842 = vpack.c.b16 %v1779, %v1778
        %v1843 = vpack.c.b16 %v1781, %v1780
        %v1844 = vpack.c.b16 %v1783, %v1782
        %v1845 = vpack.c.b16 %v1785, %v1784
        %v1846 = vpack.c.b16 %v1787, %v1786
        %v1847 = vpack.c.b16 %v1789, %v1788
        %v1848 = vpack.c.b16 %v1791, %v1790
        %v1849 = vpack.c.b16 %v1793, %v1792
        %v1850 = vpack.c.b16 %v1795, %v1794
        %v1851 = vpack.c.b16 %v1797, %v1796
        %v1852 = vpack.c.b16 %v1799, %v1798
        %v1853 = vpack.c.b16 %v1801, %v1800
        %v1854 = vpack.c.b16 %v1803, %v1802
        %v1855 = vpack.c.b16 %v1805, %v1804
        %v1856 = vpack.c.b16 %v1807, %v1806
        %v1857 = vpack.c.b16 %v1809, %v1808
        %v1858 = vpack.c.b16 %v1811, %v1810
        %v1859 = vpack.c.b16 %v1813, %v1812
        %v1860 = vpack.c.b16 %v1815, %v1814
        %v1861 = vpack.c.b16 %v1817, %v1816
        %v1862 = vpack.c.b16 %v1819, %v1818
        %v1863 = vpack.c.b16 %v1821, %v1820
        %v1864 = vpack.c.b16 %v1823, %v1822
        %v1865 = vpack.c.b16 %v1825, %v1824
        %v1866 = vpack.c.b16 %v1827, %v1826
        %v1867 = vpack.c.b16 %v1829, %v1828
        %v1868 = vpack.c.b16 %v1831, %v1830
        %v1869 = vpack.c.b16 %v1833, %v1832
        %v1870 = vpack.c.b16 %v1835, %v1834
        %v1871 = vpack.c.b16 %v1837, %v1836
        %v1872 = vpack.c.b16 %v1839, %v1838
        %v1873 = vpack.c.b16 %v1841, %v1840
        %1906 = vmatprep.subr.bf16.mxu0 0
        %1907 = vmatpush1.bf16.msra.mxu0 %v1842
        %1908 = vmatprep.subr.bf16.mxu0 0
        %1909 = vmatpush1.bf16.msra.mxu0 %v1843
        %1910 = vmatprep.subr.bf16.mxu0 0
        %1911 = vmatpush1.bf16.msra.mxu0 %v1844
        %1912 = vmatprep.subr.bf16.mxu0 0
        %1913 = vmatpush1.bf16.msra.mxu0 %v1845
        %1914 = vmatprep.subr.bf16.mxu0 0
        %1915 = vmatpush1.bf16.msra.mxu0 %v1846
        %1916 = vmatprep.subr.bf16.mxu0 0
        %1917 = vmatpush1.bf16.msra.mxu0 %v1847
        %1918 = vmatprep.subr.bf16.mxu0 0
        %1919 = vmatpush1.bf16.msra.mxu0 %v1848
        %1920 = vmatprep.subr.bf16.mxu0 0
        %1921 = vmatpush1.bf16.msra.mxu0 %v1849
        %1922 = vmatprep.subr.bf16.mxu0 0
        %1923 = vmatpush1.bf16.msra.mxu0 %v1850
        %1924 = vmatprep.subr.bf16.mxu0 0
        %1925 = vmatpush1.bf16.msra.mxu0 %v1851
        %1926 = vmatprep.subr.bf16.mxu0 0
        %1927 = vmatpush1.bf16.msra.mxu0 %v1852
        %1928 = vmatprep.subr.bf16.mxu0 0
        %1929 = vmatpush1.bf16.msra.mxu0 %v1853
        %1930 = vmatprep.subr.bf16.mxu0 0
        %1931 = vmatpush1.bf16.msra.mxu0 %v1854
        %1932 = vmatprep.subr.bf16.mxu0 0
        %1933 = vmatpush1.bf16.msra.mxu0 %v1855
        %1934 = vmatprep.subr.bf16.mxu0 0
        %1935 = vmatpush1.bf16.msra.mxu0 %v1856
        %1936 = vmatprep.subr.bf16.mxu0 0
        %1937 = vmatpush1.bf16.msra.mxu0 %v1857
        %1938 = vmatprep.mubr.bf16.mxu0 %v1627
        %1939 = vmatmul.mubr.bf16.gmra.mrb[0].mxu0 %v1626
        %v1940 = vpop.f32.mrb[0].mxu0
        %v1941 = vadd.f32 0.0, %v1940
        %v1942 = vpop.f32.mrb[0].mxu0
        %v1943 = vpop.f32.mrb[0].mxu0
        %v1944 = vadd.f32 0.0, %v1943
        %v1945 = vpop.f32.mrb[0].mxu0
        %1946 = vmatprep.mubr.bf16.mxu0 %v1631
        %1947 = vmatmul.mubr.bf16.gmra.mrb[0].mxu0 %v1630
        %v1948 = vpop.f32.mrb[0].mxu0
        %v1949 = vadd.f32 0.0, %v1948
        %v1950 = vpop.f32.mrb[0].mxu0
        %v1951 = vpop.f32.mrb[0].mxu0
        %v1952 = vadd.f32 0.0, %v1951
        %v1953 = vpop.f32.mrb[0].mxu0
        %1954 = vmatprep.mubr.bf16.mxu0 %v1635
        %1955 = vmatmul.mubr.bf16.gmra.mrb[0].mxu0 %v1634
        %v1956 = vpop.f32.mrb[0].mxu0
        %v1957 = vadd.f32 0.0, %v1956
        %v1958 = vpop.f32.mrb[0].mxu0
        %v1959 = vpop.f32.mrb[0].mxu0
        %v1960 = vadd.f32 0.0, %v1959
        %v1961 = vpop.f32.mrb[0].mxu0
        %1962 = vmatprep.mubr.bf16.mxu0 %v1639
        %1963 = vmatmul.mubr.bf16.gmra.mrb[0].mxu0 %v1638
        %v1964 = vpop.f32.mrb[0].mxu0
        %v1965 = vadd.f32 0.0, %v1964
        %v1966 = vpop.f32.mrb[0].mxu0
        %v1967 = vpop.f32.mrb[0].mxu0
        %v1968 = vadd.f32 0.0, %v1967
        %v1969 = vpop.f32.mrb[0].mxu0
        %1970 = vmatprep.mubr.bf16.mxu0 %v1643
        %1971 = vmatmul.mubr.bf16.gmra.mrb[0].mxu0 %v1642
        %v1972 = vpop.f32.mrb[0].mxu0
        %v1973 = vadd.f32 0.0, %v1972
        %v1974 = vpop.f32.mrb[0].mxu0
        %v1975 = vpop.f32.mrb[0].mxu0
        %v1976 = vadd.f32 0.0, %v1975
        %v1977 = vpop.f32.mrb[0].mxu0
        %1978 = vmatprep.mubr.bf16.mxu0 %v1647
        %1979 = vmatmul.mubr.bf16.gmra.mrb[0].mxu0 %v1646
        %v1980 = vpop.f32.mrb[0].mxu0
        %v1981 = vadd.f32 0.0, %v1980
        %v1982 = vpop.f32.mrb[0].mxu0
        %v1983 = vpop.f32.mrb[0].mxu0
        %v1984 = vadd.f32 0.0, %v1983
        %v1985 = vpop.f32.mrb[0].mxu0
        %1986 = vdwg.mxu0
        %1987 = vmatprep.subr.bf16.mxu0 0
        %1988 = vmatpush1.bf16.msra.mxu0 %v1858
        %1989 = vmatprep.subr.bf16.mxu0 0
        %1990 = vmatpush1.bf16.msra.mxu0 %v1859
        %1991 = vmatprep.subr.bf16.mxu0 0
        %1992 = vmatpush1.bf16.msra.mxu0 %v1860
        %1993 = vmatprep.subr.bf16.mxu0 0
        %1994 = vmatpush1.bf16.msra.mxu0 %v1861
        %1995 = vmatprep.subr.bf16.mxu0 0
        %1996 = vmatpush1.bf16.msra.mxu0 %v1862
        %1997 = vmatprep.subr.bf16.mxu0 0
        %1998 = vmatpush1.bf16.msra.mxu0 %v1863
        %1999 = vmatprep.subr.bf16.mxu0 0
        %2000 = vmatpush1.bf16.msra.mxu0 %v1864
        %2001 = vmatprep.subr.bf16.mxu0 0
        %2002 = vmatpush1.bf16.msra.mxu0 %v1865
        %2003 = vmatprep.subr.bf16.mxu0 0
        %2004 = vmatpush1.bf16.msra.mxu0 %v1866
        %2005 = vmatprep.subr.bf16.mxu0 0
        %2006 = vmatpush1.bf16.msra.mxu0 %v1867
        %2007 = vmatprep.subr.bf16.mxu0 0
        %2008 = vmatpush1.bf16.msra.mxu0 %v1868
        %2009 = vmatprep.subr.bf16.mxu0 0
        %2010 = vmatpush1.bf16.msra.mxu0 %v1869
        %2011 = vmatprep.subr.bf16.mxu0 0
        %2012 = vmatpush1.bf16.msra.mxu0 %v1870
        %2013 = vmatprep.subr.bf16.mxu0 0
        %2014 = vmatpush1.bf16.msra.mxu0 %v1871
        %2015 = vmatprep.subr.bf16.mxu0 0
        %2016 = vmatpush1.bf16.msra.mxu0 %v1872
        %2017 = vmatprep.subr.bf16.mxu0 0
        %2018 = vmatpush1.bf16.msra.mxu0 %v1873
        %2019 = vmatprep.mubr.bf16.mxu0 %v1629
        %2020 = vmatmul.mubr.bf16.gmra.mrb[0].mxu0 %v1628
        %v2021 = vpop.f32.mrb[0].mxu0
        %v2022 = vadd.f32 %v1941, %v2021
        %v2023 = vpop.f32.mrb[0].mxu0
        %v2024 = vpop.f32.mrb[0].mxu0
        %v2025 = vadd.f32 %v1944, %v2024
        %v2026 = vpop.f32.mrb[0].mxu0
        %2027 = vmatprep.mubr.bf16.mxu0 %v1633
        %2028 = vmatmul.mubr.bf16.gmra.mrb[0].mxu0 %v1632
        %v2029 = vpop.f32.mrb[0].mxu0
        %v2030 = vadd.f32 %v1949, %v2029
        %v2031 = vpop.f32.mrb[0].mxu0
        %v2032 = vpop.f32.mrb[0].mxu0
        %v2033 = vadd.f32 %v1952, %v2032
        %v2034 = vpop.f32.mrb[0].mxu0
        %2035 = vmatprep.mubr.bf16.mxu0 %v1637
        %2036 = vmatmul.mubr.bf16.gmra.mrb[0].mxu0 %v1636
        %v2037 = vpop.f32.mrb[0].mxu0
        %v2038 = vadd.f32 %v1957, %v2037
        %v2039 = vpop.f32.mrb[0].mxu0
        %v2040 = vpop.f32.mrb[0].mxu0
        %v2041 = vadd.f32 %v1960, %v2040
        %v2042 = vpop.f32.mrb[0].mxu0
        %2043 = vmatprep.mubr.bf16.mxu0 %v1641
        %2044 = vmatmul.mubr.bf16.gmra.mrb[0].mxu0 %v1640
        %v2045 = vpop.f32.mrb[0].mxu0
        %v2046 = vadd.f32 %v1965, %v2045
        %v2047 = vpop.f32.mrb[0].mxu0
        %v2048 = vpop.f32.mrb[0].mxu0
        %v2049 = vadd.f32 %v1968, %v2048
        %v2050 = vpop.f32.mrb[0].mxu0
        %2051 = vmatprep.mubr.bf16.mxu0 %v1645
        %2052 = vmatmul.mubr.bf16.gmra.mrb[0].mxu0 %v1644
        %v2053 = vpop.f32.mrb[0].mxu0
        %v2054 = vadd.f32 %v1973, %v2053
        %v2055 = vpop.f32.mrb[0].mxu0
        %v2056 = vpop.f32.mrb[0].mxu0
        %v2057 = vadd.f32 %v1976, %v2056
        %v2058 = vpop.f32.mrb[0].mxu0
        %2059 = vmatprep.mubr.bf16.mxu0 %v1649
        %2060 = vmatmul.mubr.bf16.gmra.mrb[0].mxu0 %v1648
        %v2061 = vpop.f32.mrb[0].mxu0
        %v2062 = vadd.f32 %v1981, %v2061
        %v2063 = vpop.f32.mrb[0].mxu0
        %v2064 = vpop.f32.mrb[0].mxu0
        %v2065 = vadd.f32 %v1984, %v2064
        %v2066 = vpop.f32.mrb[0].mxu0
        %2067 = vdwg.mxu0
        %v2068 = vld [vmem:[%s282] sm:$0xff]
        %v2069 = vld [vmem:[%s282 + $0x8] sm:$0xff]
        %v2070 = vld [vmem:[%s282 + $0x10] sm:$0xff]
        %v2071 = vld [vmem:[%s282 + $0x18] sm:$0xff]
        %v2072 = vld [vmem:[%s282 + $0x20] sm:$0xff]
        %v2073 = vld [vmem:[%s282 + $0x28] sm:$0xff]
        %v2074 = vld [vmem:[%s282 + $0x30] sm:$0xff]
        %v2075 = vld [vmem:[%s282 + $0x38] sm:$0xff]
        %v2076 = vld [vmem:[%s282 + $0x40] sm:$0xff]
        %v2077 = vld [vmem:[%s282 + $0x48] sm:$0xff]
        %v2078 = vld [vmem:[%s282 + $0x50] sm:$0xff]
        %v2079 = vld [vmem:[%s282 + $0x58] sm:$0xff]
        %v2080 = vadd.f32 %v2068, %v2022
        %v2081 = vadd.f32 %v2069, %v2025
        %v2082 = vadd.f32 %v2070, %v2030
        %v2083 = vadd.f32 %v2071, %v2033
        %v2084 = vadd.f32 %v2072, %v2038
        %v2085 = vadd.f32 %v2073, %v2041
        %v2086 = vadd.f32 %v2074, %v2046
        %v2087 = vadd.f32 %v2075, %v2049
        %v2088 = vadd.f32 %v2076, %v2054
        %v2089 = vadd.f32 %v2077, %v2057
        %v2090 = vadd.f32 %v2078, %v2062
        %v2091 = vadd.f32 %v2079, %v2065
        %v2092 = vld [vmem:[#allocation8] sm:$0x1]
        %v2094 = vlaneseq
        %v2095 = vshrl.u32 %v2094, 7
        %v2096 = vsub.s32 0, %v2095
        %v2097 = vrot.slane %v2092, %v2096
        %v2099 = vadd.f32 %v2080, %v2097
        %v2100 = vadd.f32 %v2081, %v2097
        %v2101 = vadd.f32 %v2082, %v2097
        %v2102 = vadd.f32 %v2083, %v2097
        %v2103 = vadd.f32 %v2084, %v2097
        %v2104 = vadd.f32 %v2085, %v2097
        %v2105 = vadd.f32 %v2086, %v2097
        %v2106 = vadd.f32 %v2087, %v2097
        %v2107 = vadd.f32 %v2088, %v2097
        %v2108 = vadd.f32 %v2089, %v2097
        %v2109 = vadd.f32 %v2090, %v2097
        %v2110 = vadd.f32 %v2091, %v2097
        %v2111 = vmax.f32 %v2099, 0.0
        %v2112 = vmax.f32 %v2100, 0.0
        %v2113 = vmax.f32 %v2101, 0.0
        %v2114 = vmax.f32 %v2102, 0.0
        %v2115 = vmax.f32 %v2103, 0.0
        %v2116 = vmax.f32 %v2104, 0.0
        %v2117 = vmax.f32 %v2105, 0.0
        %v2118 = vmax.f32 %v2106, 0.0
        %v2119 = vmax.f32 %v2107, 0.0
        %v2120 = vmax.f32 %v2108, 0.0
        %v2121 = vmax.f32 %v2109, 0.0
        %v2122 = vmax.f32 %v2110, 0.0
        %v2123 = vld [vmem:[%s253] sm:$0xff]
        %v2124 = vld [vmem:[%s253 + $0x8] sm:$0xff]
        %v2125 = vld [vmem:[%s253 + $0x10] sm:$0xff]
        %v2126 = vld [vmem:[%s253 + $0x18] sm:$0xff]
        %v2127 = vld [vmem:[%s253 + $0x20] sm:$0xff]
        %v2128 = vld [vmem:[%s253 + $0x28] sm:$0xff]
        %v2129 = vld [vmem:[%s253 + $0x30] sm:$0xff]
        %v2130 = vld [vmem:[%s253 + $0x38] sm:$0xff]
        %v2131 = vld [vmem:[%s253 + $0x40] sm:$0xff]
        %v2132 = vld [vmem:[%s253 + $0x48] sm:$0xff]
        %v2133 = vld [vmem:[%s253 + $0x50] sm:$0xff]
        %v2134 = vld [vmem:[%s253 + $0x58] sm:$0xff]
        %v2135 = vadd.f32 %v2111, %v2123
        %v2136 = vadd.f32 %v2112, %v2124
        %v2137 = vadd.f32 %v2113, %v2125
        %v2138 = vadd.f32 %v2114, %v2126
        %v2139 = vadd.f32 %v2115, %v2127
        %v2140 = vadd.f32 %v2116, %v2128
        %v2141 = vadd.f32 %v2117, %v2129
        %v2142 = vadd.f32 %v2118, %v2130
        %v2143 = vadd.f32 %v2119, %v2131
        %v2144 = vadd.f32 %v2120, %v2132
        %v2145 = vadd.f32 %v2121, %v2133
        %v2146 = vadd.f32 %v2122, %v2134
        %2147 = vst [vmem:[%s282] sm:$0xff] %v2135
        %2148 = vst [vmem:[%s282 + $0x8] sm:$0xff] %v2136
        %2149 = vst [vmem:[%s282 + $0x10] sm:$0xff] %v2137
        %2150 = vst [vmem:[%s282 + $0x18] sm:$0xff] %v2138
        %2151 = vst [vmem:[%s282 + $0x20] sm:$0xff] %v2139
        %2152 = vst [vmem:[%s282 + $0x28] sm:$0xff] %v2140
        %2153 = vst [vmem:[%s282 + $0x30] sm:$0xff] %v2141
        %2154 = vst [vmem:[%s282 + $0x38] sm:$0xff] %v2142
        %2155 = vst [vmem:[%s282 + $0x40] sm:$0xff] %v2143
        %2156 = vst [vmem:[%s282 + $0x48] sm:$0xff] %v2144
        %2157 = vst [vmem:[%s282 + $0x50] sm:$0xff] %v2145
        %2158 = vst [vmem:[%s282 + $0x58] sm:$0xff] %v2146
        %s2159 = sand.u32 %s127, 1
        %s2160 = scalar_lea.sflag [#allocation5], %s2159
        %s2161 = sand.u32 %s127, 1
        %s2162 = smul.addr %s2161, 96
        %s2163 = scalar_lea.vmem [#allocation11], %s2162
        // Predicated region
        $region53: #{a_call__.5} parent=35 // pred_check
          %p2164 = pneg %p137
        $region54: #{a_call__.5} parent=35 // pred_check_branch
          %2166 = sbr.rel (%p2164) target = $region56
        $region55: #{a_call__.5} parent=35 // pred_region
          %s2168 = ssub.s32 1536, 1536
          %2169 = vsyncadd %s2160, %s2168
          %s2170 = smul.addr %s25, 12
          %s2171 = smul.addr %s2170, 128
          %s2172 = scalar_lea.hbm %s4, %s2171
          %s2173 = sshll.u32 %s2163, 4
          %s2174 = int_to_ptr.vmem [resolvable:$true] %s2173
          %2179 = dma.vmem_to_hbm [thread:$0]  %s2174, 1536, %s2172, %s2160, 128, 128, 8
        $region56: #{a_call__.5} parent=35 // pred_fallthru
          _
      $region36: #{a_call__.5} parent=5 // pred_fallthru
        _
      %p2180 = scmp.le.s32.totalorder 2, %s20
      // Predicated region
      $region57: #{a_call__.5} parent=5 // pred_check
        %p2181 = pneg %p2180
      $region58: #{a_call__.5} parent=5 // pred_check_branch
        %2183 = sbr.rel (%p2181) target = $region60
      $region59: #{a_call__.5} parent=5 // pred_region
        %s2184 = ssub.s32 %s20, 2
        // Predicated region
        $region61: #{a_call__.5} parent=59 // pred_check
          %p2185 = pneg %p143
        $region62: #{a_call__.5} parent=59 // pred_check_branch
          %2187 = sbr.rel (%p2185) target = $region64
        $region63: #{a_call__.5} parent=59 // pred_region
          %s2188 = sand.u32 %s128, 1
          %s2189 = scalar_lea.sflag [#allocation5], %s2188
          %s2190 = sand.u32 %s128, 1
          %s2191 = smul.addr %s2190, 96
          %s2192 = scalar_lea.vmem [#allocation11], %s2191
          %2193 = dma.done %s2189, 1536
        $region64: #{a_call__.5} parent=59 // pred_fallthru
          _
      $region60: #{a_call__.5} parent=5 // pred_fallthru
        _
    $region6: #{a_call__.5} parent=1 // loop_footer
      %s24 = sadd.s32 1, %s20
    $region7: #{a_call__.5} parent=1 // loop_footer_branch
      %19 = sbr.rel target = $region3
    $region8: #{a_call__.5} parent=1 // loop_exit
      _
    %2194 = vsyncpa [#allocation4], 1
    %s2195 = scalar_lea.sflag [#allocation4], 1
    %2196 = vsyncpa %s2195, 1
    %2197 = vsyncpa [#allocation7], 1
    %2198 = vsyncpa [#allocation10], 1
    %s2199 = scalar_lea.sflag [#allocation10], 1
    %2200 = vsyncpa %s2199, 1
    %2201 = vsyncpa [#allocation5], 1
    %s2202 = scalar_lea.sflag [#allocation5], 1
    %2203 = vsyncpa %s2202, 1

// kernel: a_call__.3
$region0: #{a_call__.3}
  #allocation0 [shape = 'u32[]', space=smem, size = 0x4, offset = 0x4, fixed_abs, tag = 'smem constant byte address 0x4 - core index']
  #allocation1 [shape = 'u32[144,128]{1,0:T(1,128)}', space=vmem, size = 0x12000, scoped, tag = 'internal scratch']
  #allocation2 [shape = 'bf16[96,625]{1,0:T(16,128)(2,1)}', space=vmem, size = 0x1e000, scoped, tag = 'scratch operand']
  %s0 = inlined_call_operand.hbm [shape: bf16[2,160,25], index: 0, kind: input, shape index: {}]
  %s1 = inlined_call_operand.hbm [shape: bf16[625,128], index: 1, kind: input, shape index: {}]
  %s2 = inlined_call_operand.hbm [shape: f32[1,128], index: 2, kind: input, shape index: {}]
  %s3 = inlined_call_operand.hbm [shape: f32[2,96,128], index: 3, kind: output, shape index: {}]
  %s4 = sld [smem:[#allocation0]]
  $region57: #{a_call__.3} parent=0
    _
  %s6 = ssub.s32 1, %s4
  %s7 = scalar_select 0, %s6, %s4
  $region1: #{a_call__.3} parent=0
    #allocation3 [shape = 'u8[81920]{0}', space=vmem, size = 0x14000, scoped, tag = 'input window, operand 0']
    #allocation4 [shape = 's32[2]{0}', space=sflag, size = 0x8, scoped, tag = 'scoped memory for a_call__.3']
    #allocation5 [shape = 's32[2]{0}', space=sflag, size = 0x8, scoped, tag = 'scoped memory for a_call__.3']
    #allocation6 [shape = 'u8[161792]{0}', space=vmem, size = 0x27800, scoped, tag = 'input window, operand 1, single buffered']
    #allocation7 [shape = 's32[1]{0}', space=sflag, size = 0x4, scoped, tag = 'scoped memory for a_call__.3']
    #allocation8 [shape = 'u8[512]{0}', space=vmem, size = 0x400, scoped, tag = 'input window, operand 2, single buffered']
    #allocation9 [shape = 'u8[98304]{0}', space=vmem, size = 0x18000, scoped, tag = 'output window, operand 0']
    %8 = vsyncpa [#allocation4], 0
    %s9 = scalar_lea.sflag [#allocation4], 1
    %10 = vsyncpa %s9, 0
    %11 = vsyncpa [#allocation7], 0
    %12 = vsyncpa [#allocation5], 0
    %s13 = scalar_lea.sflag [#allocation5], 1
    %14 = vsyncpa %s13, 0
    loop: start=0, step=1, limit=4
    $region2: #{a_call__.3} parent=1 // loop_pre_header
      _
    $region3: #{a_call__.3} parent=1 // loop_header
      %s16 = sphi 0, %s20
      %p17 = scmp.ge.s32.totalorder %s16, 4
      %s26 = sphi 0, %s28
      %s29 = sphi 0, %s26
      %s30 = sphi 0, %s29
      %s46 = sphi 0, %s30
      %s50 = sphi 0, %s50
      %s52 = sphi 0, %s50
      %s53 = sphi 0, %s52
      %s67 = sphi 0, %s53
      %s71 = sphi 0, %s71
      %s73 = sphi 0, %s71
      %s74 = sphi 0, %s73
      %s88 = sphi 0, %s74
      %s94 = sphi 0, %s96
      %s97 = sphi 0, %s94
      %s98 = sphi 0, %s97
      %s114 = sphi 0, %s98
    $region4: #{a_call__.3} parent=1 // loop_header_branch
      %19 = sbr.rel (%p17) target = $region8
    $region5: #{a_call__.3} parent=1 // loop_body
      %s21 = ssub.s32 %s16, 1
      %s22 = ssub.s32 %s16, 2
      %s23 = sadd.s32 %s16, 1
      %s24 = ssub.s32 %s16, %s23
      %p25 = scmp.eq.s32.totalorder %s24, 0
      %s27 = sadd.s32 %s26, 1
      %s28 = scalar_select %p25, %s26, %s27
      %p31 = pneg %p25
      %p32 = scmp.eq.s32.totalorder %s16, 1
      %p33 = por %p31, %p32
      %p34 = scmp.ne.s32.totalorder %s26, %s29
      %p35 = scmp.eq.s32.totalorder %s16, 0
      %p36 = por %p34, %p35
      %p37 = scmp.ne.s32.totalorder %s26, %s29
      %p38 = scmp.eq.s32.totalorder %s21, 1
      %p39 = por %p37, %p38
      %p40 = scmp.ne.s32.totalorder %s29, %s30
      %p41 = scmp.eq.s32.totalorder %s21, 0
      %p42 = por %p40, %p41
      %p43 = scmp.ne.s32.totalorder %s29, %s30
      %p44 = scmp.eq.s32.totalorder %s22, 1
      %p45 = por %p43, %p44
      %p47 = scmp.ne.s32.totalorder %s30, %s46
      %p48 = scmp.eq.s32.totalorder %s22, 0
      %p49 = por %p47, %p48
      %s51 = sadd.s32 %s50, 1
      %p54 = scmp.eq.s32.totalorder %s16, 1
      %p55 = scmp.ne.s32.totalorder %s50, %s52
      %p56 = scmp.eq.s32.totalorder %s16, 0
      %p57 = por %p55, %p56
      %p58 = scmp.ne.s32.totalorder %s50, %s52
      %p59 = scmp.eq.s32.totalorder %s21, 1
      %p60 = por %p58, %p59
      %p61 = scmp.ne.s32.totalorder %s52, %s53
      %p62 = scmp.eq.s32.totalorder %s21, 0
      %p63 = por %p61, %p62
      %p64 = scmp.ne.s32.totalorder %s52, %s53
      %p65 = scmp.eq.s32.totalorder %s22, 1
      %p66 = por %p64, %p65
      %p68 = scmp.ne.s32.totalorder %s53, %s67
      %p69 = scmp.eq.s32.totalorder %s22, 0
      %p70 = por %p68, %p69
      %s72 = sadd.s32 %s71, 1
      %p75 = scmp.eq.s32.totalorder %s16, 1
      %p76 = scmp.ne.s32.totalorder %s71, %s73
      %p77 = scmp.eq.s32.totalorder %s16, 0
      %p78 = por %p76, %p77
      %p79 = scmp.ne.s32.totalorder %s71, %s73
      %p80 = scmp.eq.s32.totalorder %s21, 1
      %p81 = por %p79, %p80
      %p82 = scmp.ne.s32.totalorder %s73, %s74
      %p83 = scmp.eq.s32.totalorder %s21, 0
      %p84 = por %p82, %p83
      %p85 = scmp.ne.s32.totalorder %s73, %s74
      %p86 = scmp.eq.s32.totalorder %s22, 1
      %p87 = por %p85, %p86
      %p89 = scmp.ne.s32.totalorder %s74, %s88
      %p90 = scmp.eq.s32.totalorder %s22, 0
      %p91 = por %p89, %p90
      %s92 = ssub.s32 %s16, %s23
      %p93 = scmp.eq.s32.totalorder %s92, 0
      %s95 = sadd.s32 %s94, 1
      %s96 = scalar_select %p93, %s94, %s95
      %p99 = pneg %p93
      %p100 = scmp.eq.s32.totalorder %s16, 1
      %p101 = por %p99, %p100
      %p102 = scmp.ne.s32.totalorder %s94, %s97
      %p103 = scmp.eq.s32.totalorder %s16, 0
      %p104 = por %p102, %p103
      %p105 = scmp.ne.s32.totalorder %s94, %s97
      %p106 = scmp.eq.s32.totalorder %s21, 1
      %p107 = por %p105, %p106
      %p108 = scmp.ne.s32.totalorder %s97, %s98
      %p109 = scmp.eq.s32.totalorder %s21, 0
      %p110 = por %p108, %p109
      %p111 = scmp.ne.s32.totalorder %s97, %s98
      %p112 = scmp.eq.s32.totalorder %s22, 1
      %p113 = por %p111, %p112
      %p115 = scmp.ne.s32.totalorder %s98, %s114
      %p116 = scmp.eq.s32.totalorder %s22, 0
      %p117 = por %p115, %p116
      %p118 = scmp.le.s32.totalorder 1, %s16
      %p119 = scmp.lt.s32.totalorder %s16, 3
      %p120 = pnand %p118, %p119
      %p121 = pneg %p120
      // Predicated region
      $region9: #{a_call__.3} parent=5 // pred_check
        _
      $region10: #{a_call__.3} parent=5 // pred_check_branch
        %123 = sbr.rel (%p120) target = $region12
      $region11: #{a_call__.3} parent=5 // pred_region
        %s124 = ssub.s32 %s16, 1
        // Predicated region
        $region13: #{a_call__.3} parent=11 // pred_check
          %p125 = pneg %p63
        $region14: #{a_call__.3} parent=11 // pred_check_branch
          %127 = sbr.rel (%p125) target = $region16
        $region15: #{a_call__.3} parent=11 // pred_region
          %s129 = ssub.s32 5056, 5056
          %130 = vsyncadd [#allocation7], %s129
          %s131 = sshll.u32 [#allocation6], 4
          %s132 = int_to_ptr.vmem [resolvable:$true] %s131
          %137 = dma.hbm_to_vmem [thread:$0]  %s1, 5056, %s132, [#allocation7], 64, 64, 4
        $region16: #{a_call__.3} parent=11 // pred_fallthru
          _
        // Predicated region
        $region17: #{a_call__.3} parent=11 // pred_check
          %p138 = pneg %p84
        $region18: #{a_call__.3} parent=11 // pred_check_branch
          %140 = sbr.rel (%p138) target = $region20
        $region19: #{a_call__.3} parent=11 // pred_region
          %s142 = ssub.s32 16, 16
          %143 = vsyncadd [#allocation7], %s142
          %s145 = sshll.u32 [#allocation8], 4
          %s146 = int_to_ptr.vmem [resolvable:$true] %s145
          %148 = dma.hbm_to_vmem [thread:$0]  %s2, 16, %s146, [#allocation7]
        $region20: #{a_call__.3} parent=11 // pred_fallthru
          _
      $region12: #{a_call__.3} parent=5 // pred_fallthru
        _
      %p149 = scmp.lt.s32.totalorder %s16, 2
      // Predicated region
      $region21: #{a_call__.3} parent=5 // pred_check
        %p150 = pneg %p149
      $region22: #{a_call__.3} parent=5 // pred_check_branch
        %152 = sbr.rel (%p150) target = $region24
      $region23: #{a_call__.3} parent=5 // pred_region
        // Predicated region
        $region25: #{a_call__.3} parent=23 // pred_check
          %p153 = pneg %p36
        $region26: #{a_call__.3} parent=23 // pred_check_branch
          %155 = sbr.rel (%p153) target = $region28
        $region27: #{a_call__.3} parent=23 // pred_region
          %s156 = sand.u32 %s26, 1
          %s157 = scalar_lea.sflag [#allocation4], %s156
          %s158 = sand.u32 %s26, 1
          %s159 = smul.addr %s158, 80
          %s160 = scalar_lea.vmem [#allocation3], %s159
          %s162 = ssub.s32 1280, 1280
          %163 = vsyncadd %s157, %s162
          %s164 = smul.addr %s16, 20
          %s165 = smul.addr %s164, 64
          %s166 = scalar_lea.hbm %s0, %s165
          %s167 = sshll.u32 %s160, 4
          %s168 = int_to_ptr.vmem [resolvable:$true] %s167
          %173 = dma.hbm_to_vmem [thread:$0]  %s166, 1280, %s168, %s157, 64, 64, 4
        $region28: #{a_call__.3} parent=23 // pred_fallthru
          _
      $region24: #{a_call__.3} parent=5 // pred_fallthru
        _
      %p174 = scmp.le.s32.totalorder 1, %s16
      %p175 = scmp.lt.s32.totalorder %s16, 3
      %p176 = pnand %p174, %p175
      %p177 = pneg %p176
      // Predicated region
      $region29: #{a_call__.3} parent=5 // pred_check
        _
      $region30: #{a_call__.3} parent=5 // pred_check_branch
        %179 = sbr.rel (%p176) target = $region32
      $region31: #{a_call__.3} parent=5 // pred_region
        %s180 = ssub.s32 %s16, 1
        %s181 = sand.u32 %s29, 1
        %s182 = scalar_lea.sflag [#allocation4], %s181
        %s183 = sand.u32 %s29, 1
        %s184 = smul.addr %s183, 80
        %s185 = scalar_lea.vmem [#allocation3], %s184
        // Predicated region
        $region33: #{a_call__.3} parent=31 // pred_check
          %p186 = pneg %p42
        $region34: #{a_call__.3} parent=31 // pred_check_branch
          %188 = sbr.rel (%p186) target = $region36
        $region35: #{a_call__.3} parent=31 // pred_region
          %189 = dma.done %s182, 1280
        $region36: #{a_call__.3} parent=31 // pred_fallthru
          _
        // Predicated region
        $region37: #{a_call__.3} parent=31 // pred_check
          %p190 = pneg %p63
        $region38: #{a_call__.3} parent=31 // pred_check_branch
          %192 = sbr.rel (%p190) target = $region40
        $region39: #{a_call__.3} parent=31 // pred_region
          %193 = dma.done [#allocation7], 5056
        $region40: #{a_call__.3} parent=31 // pred_fallthru
          _
        // Predicated region
        $region41: #{a_call__.3} parent=31 // pred_check
          %p194 = pneg %p84
        $region42: #{a_call__.3} parent=31 // pred_check_branch
          %196 = sbr.rel (%p194) target = $region44
        $region43: #{a_call__.3} parent=31 // pred_region
          %197 = dma.done [#allocation7], 16
        $region44: #{a_call__.3} parent=31 // pred_fallthru
          _
        %s198 = sand.u32 %s29, 1
        %s199 = scalar_lea.sflag [#allocation4], %s198
        %s200 = sand.u32 %s29, 1
        %s201 = smul.addr %s200, 80
        %s202 = scalar_lea.vmem [#allocation3], %s201
        %p203 = pneg %p42
        %p204 = pneg %p39
        %p205 = pneg %p63
        %p206 = pneg %p60
        %p207 = pneg %p84
        %p208 = pneg %p81
        %p209 = pneg %p110
        %p210 = pneg %p107
        %s211 = sand.u32 %s97, 1
        %s212 = scalar_lea.sflag [#allocation5], %s211
        %s213 = sand.u32 %s97, 1
        %s214 = smul.addr %s213, 96
        %s215 = scalar_lea.vmem [#allocation9], %s214
        %v217 = vld [vmem:[%s185] sm:$0xf]
        %v218 = vld [vmem:[%s185 + $0x4] sm:$0xf]
        %v219 = vld [vmem:[%s185 + $0x8] sm:$0xf]
        %v220 = vld [vmem:[%s185 + $0xc] sm:$0xf]
        %v221 = vld [vmem:[%s185 + $0x10] sm:$0xf]
        %v222 = vld [vmem:[%s185 + $0x14] sm:$0xf]
        %v223 = vld [vmem:[%s185 + $0x18] sm:$0xf]
        %v224 = vld [vmem:[%s185 + $0x1c] sm:$0xf]
        %v225 = vld [vmem:[%s185 + $0x20] sm:$0xf]
        %v226 = vld [vmem:[%s185 + $0x24] sm:$0xf]
        %v227 = vld [vmem:[%s185 + $0x28] sm:$0xf]
        %v228 = vld [vmem:[%s185 + $0x2c] sm:$0xf]
        %v241 = vunpack.c.l.b16 %v217
        %v242 = vunpack.c.l.b16 %v218
        %v243 = vunpack.c.l.b16 %v219
        %v244 = vunpack.c.l.b16 %v220
        %v245 = vunpack.c.l.b16 %v221
        %v246 = vunpack.c.l.b16 %v222
        %v247 = vunpack.c.l.b16 %v223
        %v248 = vunpack.c.l.b16 %v224
        %v249 = vunpack.c.l.b16 %v225
        %v250 = vunpack.c.l.b16 %v226
        %v251 = vunpack.c.l.b16 %v227
        %v252 = vunpack.c.l.b16 %v228
        %v253 = vpack.c.b16 %v242, %v241
        %v254 = vpack.c.b16 %v244, %v243
        %v255 = vpack.c.b16 %v246, %v245
        %v256 = vpack.c.b16 %v248, %v247
        %v257 = vpack.c.b16 %v250, %v249
        %v258 = vpack.c.b16 %v252, %v251
        %vm265 = vcmask 203776
        %266 = vst.msk [vmem:[#allocation2] sm:$0xff] %vm265, %v253
        %267 = vst.msk [vmem:[#allocation2 + $0x28] sm:$0xff] %vm265, %v254
        %268 = vst.msk [vmem:[#allocation2 + $0x50] sm:$0xff] %vm265, %v255
        %269 = vst.msk [vmem:[#allocation2 + $0x78] sm:$0xff] %vm265, %v256
        %270 = vst.msk [vmem:[#allocation2 + $0xa0] sm:$0xff] %vm265, %v257
        %271 = vst.msk [vmem:[#allocation2 + $0xc8] sm:$0xff] %vm265, %v258
        %v272 = vld [vmem:[%s185] sm:$0xf]
        %v273 = vld [vmem:[%s185 + $0x4] sm:$0xf]
        %v274 = vld [vmem:[%s185 + $0x8] sm:$0xf]
        %v275 = vld [vmem:[%s185 + $0xc] sm:$0xf]
        %v276 = vld [vmem:[%s185 + $0x10] sm:$0xf]
        %v277 = vld [vmem:[%s185 + $0x14] sm:$0xf]
        %v278 = vld [vmem:[%s185 + $0x18] sm:$0xf]
        %v279 = vld [vmem:[%s185 + $0x1c] sm:$0xf]
        %v280 = vld [vmem:[%s185 + $0x20] sm:$0xf]
        %v281 = vld [vmem:[%s185 + $0x24] sm:$0xf]
        %v282 = vld [vmem:[%s185 + $0x28] sm:$0xf]
        %v283 = vld [vmem:[%s185 + $0x2c] sm:$0xf]
        %v284 = vld [vmem:[%s185 + $0x30] sm:$0x1]
        %v298 = vunpack.c.l.b16 %v272
        %v299 = vunpack.c.l.b16 %v273
        %v300 = vunpack.c.l.b16 %v274
        %v301 = vunpack.c.l.b16 %v275
        %v302 = vunpack.c.l.b16 %v276
        %v303 = vunpack.c.l.b16 %v277
        %v304 = vunpack.c.l.b16 %v278
        %v305 = vunpack.c.l.b16 %v279
        %v306 = vunpack.c.l.b16 %v280
        %v307 = vunpack.c.l.b16 %v281
        %v308 = vunpack.c.l.b16 %v282
        %v309 = vunpack.c.l.b16 %v283
        %v310 = vunpack.c.l.b16 %v284
        %v311 = vpack.c.b16 %v299, %v298
        %v312 = vpack.c.b16 %v301, %v300
        %v313 = vpack.c.b16 %v303, %v302
        %v314 = vpack.c.b16 %v305, %v304
        %v315 = vpack.c.b16 %v307, %v306
        %v316 = vpack.c.b16 %v309, %v308
        %v317 = vpack.c.b16 %v310, %v310
        %vm318 = vsmask.f32 7424
        %v320 = vshrl.u32 %v311, 16
        %v322 = vshll.u32 %v311, 16
        %v324 = vrot.slane %v322, 1
        %v325 = vor.u32 %v320, %v324
        %v327 = vshll.u32 %v312, 16
        %v329 = vrot.slane %v327, 1
        %v330 = vsel %vm318, %v325, %v329
        %v331 = vshrl.u32 %v312, 16
        %v333 = vor.u32 %v331, %v329
        %v335 = vshll.u32 %v313, 16
        %v337 = vrot.slane %v335, 1
        %v338 = vsel %vm318, %v333, %v337
        %v339 = vshrl.u32 %v313, 16
        %v341 = vor.u32 %v339, %v337
        %v343 = vshll.u32 %v314, 16
        %v345 = vrot.slane %v343, 1
        %v346 = vsel %vm318, %v341, %v345
        %v347 = vshrl.u32 %v314, 16
        %v349 = vor.u32 %v347, %v345
        %v351 = vshll.u32 %v315, 16
        %v353 = vrot.slane %v351, 1
        %v354 = vsel %vm318, %v349, %v353
        %v355 = vshrl.u32 %v315, 16
        %v357 = vor.u32 %v355, %v353
        %v359 = vshll.u32 %v316, 16
        %v361 = vrot.slane %v359, 1
        %v362 = vsel %vm318, %v357, %v361
        %v363 = vshrl.u32 %v316, 16
        %v365 = vor.u32 %v363, %v361
        %v367 = vshll.u32 %v317, 16
        %v369 = vrot.slane %v367, 1
        %v370 = vsel %vm318, %v365, %v369
        %371 = vrot.lane.b32.xlu0 %v330, 25
        %v372 = vpop.permute.xlu0 %371
        %373 = vrot.lane.b32.xlu0 %v338, 25
        %v374 = vpop.permute.xlu0 %373
        %375 = vrot.lane.b32.xlu0 %v346, 25
        %v376 = vpop.permute.xlu0 %375
        %377 = vrot.lane.b32.xlu0 %v354, 25
        %v378 = vpop.permute.xlu0 %377
        %379 = vrot.lane.b32.xlu0 %v362, 25
        %v380 = vpop.permute.xlu0 %379
        %381 = vrot.lane.b32.xlu0 %v370, 25
        %v382 = vpop.permute.xlu0 %381
        %vm389 = vcmask 408776
        %390 = vst.msk [vmem:[#allocation2] sm:$0xff] %vm389, %v372
        %391 = vst.msk [vmem:[#allocation2 + $0x28] sm:$0xff] %vm389, %v374
        %392 = vst.msk [vmem:[#allocation2 + $0x50] sm:$0xff] %vm389, %v376
        %393 = vst.msk [vmem:[#allocation2 + $0x78] sm:$0xff] %vm389, %v378
        %394 = vst.msk [vmem:[#allocation2 + $0xa0] sm:$0xff] %vm389, %v380
        %395 = vst.msk [vmem:[#allocation2 + $0xc8] sm:$0xff] %vm389, %v382
        %v396 = vld [vmem:[%s185] sm:$0xe]
        %v397 = vld [vmem:[%s185 + $0x4] sm:$0xf]
        %v398 = vld [vmem:[%s185 + $0x8] sm:$0xf]
        %v399 = vld [vmem:[%s185 + $0xc] sm:$0xf]
        %v400 = vld [vmem:[%s185 + $0x10] sm:$0xf]
        %v401 = vld [vmem:[%s185 + $0x14] sm:$0xf]
        %v402 = vld [vmem:[%s185 + $0x18] sm:$0xf]
        %v403 = vld [vmem:[%s185 + $0x1c] sm:$0xf]
        %v404 = vld [vmem:[%s185 + $0x20] sm:$0xf]
        %v405 = vld [vmem:[%s185 + $0x24] sm:$0xf]
        %v406 = vld [vmem:[%s185 + $0x28] sm:$0xf]
        %v407 = vld [vmem:[%s185 + $0x2c] sm:$0xf]
        %v408 = vld [vmem:[%s185 + $0x30] sm:$0x1]
        %v422 = vunpack.c.l.b16 %v396
        %v423 = vunpack.c.l.b16 %v397
        %v424 = vunpack.c.l.b16 %v398
        %v425 = vunpack.c.l.b16 %v399
        %v426 = vunpack.c.l.b16 %v400
        %v427 = vunpack.c.l.b16 %v401
        %v428 = vunpack.c.l.b16 %v402
        %v429 = vunpack.c.l.b16 %v403
        %v430 = vunpack.c.l.b16 %v404
        %v431 = vunpack.c.l.b16 %v405
        %v432 = vunpack.c.l.b16 %v406
        %v433 = vunpack.c.l.b16 %v407
        %v434 = vunpack.c.l.b16 %v408
        %v435 = vpack.c.b16 %v423, %v422
        %v436 = vpack.c.b16 %v425, %v424
        %v437 = vpack.c.b16 %v427, %v426
        %v438 = vpack.c.b16 %v429, %v428
        %v439 = vpack.c.b16 %v431, %v430
        %v440 = vpack.c.b16 %v433, %v432
        %v441 = vpack.c.b16 %v434, %v434
        %vm442 = vcmask 1046528
        %v443 = vrot.slane %v435, 1
        %v444 = vrot.slane %v436, 1
        %v445 = vsel %vm442, %v443, %v444
        %v446 = vrot.slane %v437, 1
        %v447 = vsel %vm442, %v444, %v446
        %v448 = vrot.slane %v438, 1
        %v449 = vsel %vm442, %v446, %v448
        %v450 = vrot.slane %v439, 1
        %v451 = vsel %vm442, %v448, %v450
        %v452 = vrot.slane %v440, 1
        %v453 = vsel %vm442, %v450, %v452
        %v454 = vrot.slane %v441, 1
        %v455 = vsel %vm442, %v452, %v454
        %456 = vrot.lane.b32.xlu0 %v445, 50
        %v457 = vpop.permute.xlu0 %456
        %458 = vrot.lane.b32.xlu0 %v447, 50
        %v459 = vpop.permute.xlu0 %458
        %460 = vrot.lane.b32.xlu0 %v449, 50
        %v461 = vpop.permute.xlu0 %460
        %462 = vrot.lane.b32.xlu0 %v451, 50
        %v463 = vpop.permute.xlu0 %462
        %464 = vrot.lane.b32.xlu0 %v453, 50
        %v465 = vpop.permute.xlu0 %464
        %466 = vrot.lane.b32.xlu0 %v455, 50
        %v467 = vpop.permute.xlu0 %466
        %vm474 = vcmask 613776
        %475 = vst.msk [vmem:[#allocation2] sm:$0xff] %vm474, %v457
        %476 = vst.msk [vmem:[#allocation2 + $0x28] sm:$0xff] %vm474, %v459
        %477 = vst.msk [vmem:[#allocation2 + $0x50] sm:$0xff] %vm474, %v461
        %478 = vst.msk [vmem:[#allocation2 + $0x78] sm:$0xff] %vm474, %v463
        %479 = vst.msk [vmem:[#allocation2 + $0xa0] sm:$0xff] %vm474, %v465
        %480 = vst.msk [vmem:[#allocation2 + $0xc8] sm:$0xff] %vm474, %v467
        %v481 = vld [vmem:[%s185] sm:$0xe]
        %v482 = vld [vmem:[%s185 + $0x4] sm:$0xf]
        %v483 = vld [vmem:[%s185 + $0x8] sm:$0xf]
        %v484 = vld [vmem:[%s185 + $0xc] sm:$0xf]
        %v485 = vld [vmem:[%s185 + $0x10] sm:$0xf]
        %v486 = vld [vmem:[%s185 + $0x14] sm:$0xf]
        %v487 = vld [vmem:[%s185 + $0x18] sm:$0xf]
        %v488 = vld [vmem:[%s185 + $0x1c] sm:$0xf]
        %v489 = vld [vmem:[%s185 + $0x20] sm:$0xf]
        %v490 = vld [vmem:[%s185 + $0x24] sm:$0xf]
        %v491 = vld [vmem:[%s185 + $0x28] sm:$0xf]
        %v492 = vld [vmem:[%s185 + $0x2c] sm:$0xf]
        %v493 = vld [vmem:[%s185 + $0x30] sm:$0x3]
        %v507 = vunpack.c.l.b16 %v481
        %v508 = vunpack.c.l.b16 %v482
        %v509 = vunpack.c.l.b16 %v483
        %v510 = vunpack.c.l.b16 %v484
        %v511 = vunpack.c.l.b16 %v485
        %v512 = vunpack.c.l.b16 %v486
        %v513 = vunpack.c.l.b16 %v487
        %v514 = vunpack.c.l.b16 %v488
        %v515 = vunpack.c.l.b16 %v489
        %v516 = vunpack.c.l.b16 %v490
        %v517 = vunpack.c.l.b16 %v491
        %v518 = vunpack.c.l.b16 %v492
        %v519 = vunpack.c.l.b16 %v493
        %v520 = vpack.c.b16 %v508, %v507
        %v521 = vpack.c.b16 %v510, %v509
        %v522 = vpack.c.b16 %v512, %v511
        %v523 = vpack.c.b16 %v514, %v513
        %v524 = vpack.c.b16 %v516, %v515
        %v525 = vpack.c.b16 %v518, %v517
        %v526 = vpack.c.b16 %v519, %v519
        %vm527 = vsmask.f32 6400
        %v529 = vshrl.u32 %v520, 16
        %v531 = vrot.slane %v529, 1
        %v532 = vshll.u32 %v520, 16
        %v534 = vrot.slane %v532, 2
        %v535 = vor.u32 %v531, %v534
        %v537 = vshrl.u32 %v521, 16
        %v539 = vrot.slane %v537, 1
        %v540 = vshll.u32 %v521, 16
        %v542 = vrot.slane %v540, 2
        %v543 = vor.u32 %v539, %v542
        %v544 = vsel %vm527, %v535, %v543
        %v546 = vshrl.u32 %v522, 16
        %v548 = vrot.slane %v546, 1
        %v549 = vshll.u32 %v522, 16
        %v551 = vrot.slane %v549, 2
        %v552 = vor.u32 %v548, %v551
        %v553 = vsel %vm527, %v543, %v552
        %v555 = vshrl.u32 %v523, 16
        %v557 = vrot.slane %v555, 1
        %v558 = vshll.u32 %v523, 16
        %v560 = vrot.slane %v558, 2
        %v561 = vor.u32 %v557, %v560
        %v562 = vsel %vm527, %v552, %v561
        %v564 = vshrl.u32 %v524, 16
        %v566 = vrot.slane %v564, 1
        %v567 = vshll.u32 %v524, 16
        %v569 = vrot.slane %v567, 2
        %v570 = vor.u32 %v566, %v569
        %v571 = vsel %vm527, %v561, %v570
        %v573 = vshrl.u32 %v525, 16
        %v575 = vrot.slane %v573, 1
        %v576 = vshll.u32 %v525, 16
        %v578 = vrot.slane %v576, 2
        %v579 = vor.u32 %v575, %v578
        %v580 = vsel %vm527, %v570, %v579
        %v582 = vshrl.u32 %v526, 16
        %v584 = vrot.slane %v582, 1
        %v585 = vshll.u32 %v526, 16
        %v587 = vrot.slane %v585, 2
        %v588 = vor.u32 %v584, %v587
        %v589 = vsel %vm527, %v579, %v588
        %590 = vrot.lane.b32.xlu0 %v544, 75
        %v591 = vpop.permute.xlu0 %590
        %592 = vrot.lane.b32.xlu0 %v553, 75
        %v593 = vpop.permute.xlu0 %592
        %594 = vrot.lane.b32.xlu0 %v562, 75
        %v595 = vpop.permute.xlu0 %594
        %596 = vrot.lane.b32.xlu0 %v571, 75
        %v597 = vpop.permute.xlu0 %596
        %598 = vrot.lane.b32.xlu0 %v580, 75
        %v599 = vpop.permute.xlu0 %598
        %600 = vrot.lane.b32.xlu0 %v589, 75
        %v601 = vpop.permute.xlu0 %600
        %vm608 = vcmask 818776
        %609 = vst.msk [vmem:[#allocation2] sm:$0xff] %vm608, %v591
        %610 = vst.msk [vmem:[#allocation2 + $0x28] sm:$0xff] %vm608, %v593
        %611 = vst.msk [vmem:[#allocation2 + $0x50] sm:$0xff] %vm608, %v595
        %612 = vst.msk [vmem:[#allocation2 + $0x78] sm:$0xff] %vm608, %v597
        %613 = vst.msk [vmem:[#allocation2 + $0xa0] sm:$0xff] %vm608, %v599
        %614 = vst.msk [vmem:[#allocation2 + $0xc8] sm:$0xff] %vm608, %v601
        %v615 = vld [vmem:[%s185] sm:$0xc]
        %v616 = vld [vmem:[%s185 + $0x4] sm:$0xf]
        %v617 = vld [vmem:[%s185 + $0x8] sm:$0xf]
        %v618 = vld [vmem:[%s185 + $0xc] sm:$0xf]
        %v619 = vld [vmem:[%s185 + $0x10] sm:$0xf]
        %v620 = vld [vmem:[%s185 + $0x14] sm:$0xf]
        %v621 = vld [vmem:[%s185 + $0x18] sm:$0xf]
        %v622 = vld [vmem:[%s185 + $0x1c] sm:$0xf]
        %v623 = vld [vmem:[%s185 + $0x20] sm:$0xf]
        %v624 = vld [vmem:[%s185 + $0x24] sm:$0xf]
        %v625 = vld [vmem:[%s185 + $0x28] sm:$0xf]
        %v626 = vld [vmem:[%s185 + $0x2c] sm:$0xf]
        %v627 = vld [vmem:[%s185 + $0x30] sm:$0x3]
        %v641 = vunpack.c.l.b16 %v615
        %v642 = vunpack.c.l.b16 %v616
        %v643 = vunpack.c.l.b16 %v617
        %v644 = vunpack.c.l.b16 %v618
        %v645 = vunpack.c.l.b16 %v619
        %v646 = vunpack.c.l.b16 %v620
        %v647 = vunpack.c.l.b16 %v621
        %v648 = vunpack.c.l.b16 %v622
        %v649 = vunpack.c.l.b16 %v623
        %v650 = vunpack.c.l.b16 %v624
        %v651 = vunpack.c.l.b16 %v625
        %v652 = vunpack.c.l.b16 %v626
        %v653 = vunpack.c.l.b16 %v627
        %v654 = vpack.c.b16 %v642, %v641
        %v655 = vpack.c.b16 %v644, %v643
        %v656 = vpack.c.b16 %v646, %v645
        %v657 = vpack.c.b16 %v648, %v647
        %v658 = vpack.c.b16 %v650, %v649
        %v659 = vpack.c.b16 %v652, %v651
        %v660 = vpack.c.b16 %v653, %v653
        %vm661 = vcmask 1045504
        %v662 = vrot.slane %v654, 2
        %v663 = vrot.slane %v655, 2
        %v664 = vsel %vm661, %v662, %v663
        %v665 = vrot.slane %v656, 2
        %v666 = vsel %vm661, %v663, %v665
        %v667 = vrot.slane %v657, 2
        %v668 = vsel %vm661, %v665, %v667
        %v669 = vrot.slane %v658, 2
        %v670 = vsel %vm661, %v667, %v669
        %v671 = vrot.slane %v659, 2
        %v672 = vsel %vm661, %v669, %v671
        %v673 = vrot.slane %v660, 2
        %v674 = vsel %vm661, %v671, %v673
        %675 = vrot.lane.b32.xlu0 %v664, 100
        %v676 = vpop.permute.xlu0 %675
        %677 = vrot.lane.b32.xlu0 %v666, 100
        %v678 = vpop.permute.xlu0 %677
        %679 = vrot.lane.b32.xlu0 %v668, 100
        %v680 = vpop.permute.xlu0 %679
        %681 = vrot.lane.b32.xlu0 %v670, 100
        %v682 = vpop.permute.xlu0 %681
        %683 = vrot.lane.b32.xlu0 %v672, 100
        %v684 = vpop.permute.xlu0 %683
        %685 = vrot.lane.b32.xlu0 %v674, 100
        %v686 = vpop.permute.xlu0 %685
        %vm693 = vcmask 1023776
        %694 = vst.msk [vmem:[#allocation2] sm:$0xff] %vm693, %v676
        %695 = vst.msk [vmem:[#allocation2 + $0x28] sm:$0xff] %vm693, %v678
        %696 = vst.msk [vmem:[#allocation2 + $0x50] sm:$0xff] %vm693, %v680
        %697 = vst.msk [vmem:[#allocation2 + $0x78] sm:$0xff] %vm693, %v682
        %698 = vst.msk [vmem:[#allocation2 + $0xa0] sm:$0xff] %vm693, %v684
        %699 = vst.msk [vmem:[#allocation2 + $0xc8] sm:$0xff] %vm693, %v686
        %v700 = vld [vmem:[%s185 + $0x4] sm:$0xc]
        %v701 = vld [vmem:[%s185 + $0x8] sm:$0xf]
        %v702 = vld [vmem:[%s185 + $0xc] sm:$0xf]
        %v703 = vld [vmem:[%s185 + $0x10] sm:$0xf]
        %v704 = vld [vmem:[%s185 + $0x14] sm:$0xf]
        %v705 = vld [vmem:[%s185 + $0x18] sm:$0xf]
        %v706 = vld [vmem:[%s185 + $0x1c] sm:$0xf]
        %v707 = vld [vmem:[%s185 + $0x20] sm:$0xf]
        %v708 = vld [vmem:[%s185 + $0x24] sm:$0xf]
        %v709 = vld [vmem:[%s185 + $0x28] sm:$0xf]
        %v710 = vld [vmem:[%s185 + $0x2c] sm:$0xf]
        %v711 = vld [vmem:[%s185 + $0x30] sm:$0xf]
        %v712 = vld [vmem:[%s185 + $0x34] sm:$0x3]
        %v726 = vunpack.c.l.b16 %v700
        %v727 = vunpack.c.l.b16 %v701
        %v728 = vunpack.c.l.b16 %v702
        %v729 = vunpack.c.l.b16 %v703
        %v730 = vunpack.c.l.b16 %v704
        %v731 = vunpack.c.l.b16 %v705
        %v732 = vunpack.c.l.b16 %v706
        %v733 = vunpack.c.l.b16 %v707
        %v734 = vunpack.c.l.b16 %v708
        %v735 = vunpack.c.l.b16 %v709
        %v736 = vunpack.c.l.b16 %v710
        %v737 = vunpack.c.l.b16 %v711
        %v738 = vunpack.c.l.b16 %v712
        %v739 = vpack.c.b16 %v727, %v726
        %v740 = vpack.c.b16 %v729, %v728
        %v741 = vpack.c.b16 %v731, %v730
        %v742 = vpack.c.b16 %v733, %v732
        %v743 = vpack.c.b16 %v735, %v734
        %v744 = vpack.c.b16 %v737, %v736
        %v745 = vpack.c.b16 %v738, %v738
        %v746 = vrot.slane %v739, 2
        %v747 = vrot.slane %v740, 2
        %v748 = vsel %vm661, %v746, %v747
        %v749 = vrot.slane %v741, 2
        %v750 = vsel %vm661, %v747, %v749
        %v751 = vrot.slane %v742, 2
        %v752 = vsel %vm661, %v749, %v751
        %v753 = vrot.slane %v743, 2
        %v754 = vsel %vm661, %v751, %v753
        %v755 = vrot.slane %v744, 2
        %v756 = vsel %vm661, %v753, %v755
        %v757 = vrot.slane %v745, 2
        %v758 = vsel %vm661, %v755, %v757
        %759 = vrot.lane.b32.xlu0 %v748, 125
        %v760 = vpop.permute.xlu0 %759
        %761 = vrot.lane.b32.xlu0 %v750, 125
        %v762 = vpop.permute.xlu0 %761
        %763 = vrot.lane.b32.xlu0 %v752, 125
        %v764 = vpop.permute.xlu0 %763
        %765 = vrot.lane.b32.xlu0 %v754, 125
        %v766 = vpop.permute.xlu0 %765
        %767 = vrot.lane.b32.xlu0 %v756, 125
        %v768 = vpop.permute.xlu0 %767
        %769 = vrot.lane.b32.xlu0 %v758, 125
        %v770 = vpop.permute.xlu0 %769
        %vm777 = vcmask 1048552
        %778 = vst.msk [vmem:[#allocation2] sm:$0xff] %vm777, %v760
        %vm779 = vcmask 179200
        %780 = vst.msk [vmem:[#allocation2 + $0x8] sm:$0xff] %vm779, %v760
        %781 = vst.msk [vmem:[#allocation2 + $0x28] sm:$0xff] %vm777, %v762
        %782 = vst.msk [vmem:[#allocation2 + $0x30] sm:$0xff] %vm779, %v762
        %783 = vst.msk [vmem:[#allocation2 + $0x50] sm:$0xff] %vm777, %v764
        %784 = vst.msk [vmem:[#allocation2 + $0x58] sm:$0xff] %vm779, %v764
        %785 = vst.msk [vmem:[#allocation2 + $0x78] sm:$0xff] %vm777, %v766
        %786 = vst.msk [vmem:[#allocation2 + $0x80] sm:$0xff] %vm779, %v766
        %787 = vst.msk [vmem:[#allocation2 + $0xa0] sm:$0xff] %vm777, %v768
        %788 = vst.msk [vmem:[#allocation2 + $0xa8] sm:$0xff] %vm779, %v768
        %789 = vst.msk [vmem:[#allocation2 + $0xc8] sm:$0xff] %vm777, %v770
        %790 = vst.msk [vmem:[#allocation2 + $0xd0] sm:$0xff] %vm779, %v770
        %v791 = vld [vmem:[%s185 + $0x4] sm:$0xc]
        %v792 = vld [vmem:[%s185 + $0x8] sm:$0xf]
        %v793 = vld [vmem:[%s185 + $0xc] sm:$0xf]
        %v794 = vld [vmem:[%s185 + $0x10] sm:$0xf]
        %v795 = vld [vmem:[%s185 + $0x14] sm:$0xf]
        %v796 = vld [vmem:[%s185 + $0x18] sm:$0xf]
        %v797 = vld [vmem:[%s185 + $0x1c] sm:$0xf]
        %v798 = vld [vmem:[%s185 + $0x20] sm:$0xf]
        %v799 = vld [vmem:[%s185 + $0x24] sm:$0xf]
        %v800 = vld [vmem:[%s185 + $0x28] sm:$0xf]
        %v801 = vld [vmem:[%s185 + $0x2c] sm:$0xf]
        %v802 = vld [vmem:[%s185 + $0x30] sm:$0xf]
        %v803 = vld [vmem:[%s185 + $0x34] sm:$0x7]
        %v817 = vunpack.c.l.b16 %v791
        %v818 = vunpack.c.l.b16 %v792
        %v819 = vunpack.c.l.b16 %v793
        %v820 = vunpack.c.l.b16 %v794
        %v821 = vunpack.c.l.b16 %v795
        %v822 = vunpack.c.l.b16 %v796
        %v823 = vunpack.c.l.b16 %v797
        %v824 = vunpack.c.l.b16 %v798
        %v825 = vunpack.c.l.b16 %v799
        %v826 = vunpack.c.l.b16 %v800
        %v827 = vunpack.c.l.b16 %v801
        %v828 = vunpack.c.l.b16 %v802
        %v829 = vunpack.c.l.b16 %v803
        %v830 = vpack.c.b16 %v818, %v817
        %v831 = vpack.c.b16 %v820, %v819
        %v832 = vpack.c.b16 %v822, %v821
        %v833 = vpack.c.b16 %v824, %v823
        %v834 = vpack.c.b16 %v826, %v825
        %v835 = vpack.c.b16 %v828, %v827
        %v836 = vpack.c.b16 %v829, %v829
        %vm837 = vsmask.f32 5376
        %v839 = vshrl.u32 %v830, 16
        %v841 = vrot.slane %v839, 2
        %v842 = vshll.u32 %v830, 16
        %v844 = vrot.slane %v842, 3
        %v845 = vor.u32 %v841, %v844
        %v847 = vshrl.u32 %v831, 16
        %v849 = vrot.slane %v847, 2
        %v850 = vshll.u32 %v831, 16
        %v852 = vrot.slane %v850, 3
        %v853 = vor.u32 %v849, %v852
        %v854 = vsel %vm837, %v845, %v853
        %v856 = vshrl.u32 %v832, 16
        %v858 = vrot.slane %v856, 2
        %v859 = vshll.u32 %v832, 16
        %v861 = vrot.slane %v859, 3
        %v862 = vor.u32 %v858, %v861
        %v863 = vsel %vm837, %v853, %v862
        %v865 = vshrl.u32 %v833, 16
        %v867 = vrot.slane %v865, 2
        %v868 = vshll.u32 %v833, 16
        %v870 = vrot.slane %v868, 3
        %v871 = vor.u32 %v867, %v870
        %v872 = vsel %vm837, %v862, %v871
        %v874 = vshrl.u32 %v834, 16
        %v876 = vrot.slane %v874, 2
        %v877 = vshll.u32 %v834, 16
        %v879 = vrot.slane %v877, 3
        %v880 = vor.u32 %v876, %v879
        %v881 = vsel %vm837, %v871, %v880
        %v883 = vshrl.u32 %v835, 16
        %v885 = vrot.slane %v883, 2
        %v886 = vshll.u32 %v835, 16
        %v888 = vrot.slane %v886, 3
        %v889 = vor.u32 %v885, %v888
        %v890 = vsel %vm837, %v880, %v889
        %v892 = vshrl.u32 %v836, 16
        %v894 = vrot.slane %v892, 2
        %v895 = vshll.u32 %v836, 16
        %v897 = vrot.slane %v895, 3
        %v898 = vor.u32 %v894, %v897
        %v899 = vsel %vm837, %v889, %v898
        %900 = vrot.lane.b32.xlu0 %v854, 22
        %v901 = vpop.permute.xlu0 %900
        %902 = vrot.lane.b32.xlu0 %v863, 22
        %v903 = vpop.permute.xlu0 %902
        %904 = vrot.lane.b32.xlu0 %v872, 22
        %v905 = vpop.permute.xlu0 %904
        %906 = vrot.lane.b32.xlu0 %v881, 22
        %v907 = vpop.permute.xlu0 %906
        %908 = vrot.lane.b32.xlu0 %v890, 22
        %v909 = vpop.permute.xlu0 %908
        %910 = vrot.lane.b32.xlu0 %v899, 22
        %v911 = vpop.permute.xlu0 %910
        %vm918 = vcmask 384176
        %919 = vst.msk [vmem:[#allocation2 + $0x8] sm:$0xff] %vm918, %v901
        %920 = vst.msk [vmem:[#allocation2 + $0x30] sm:$0xff] %vm918, %v903
        %921 = vst.msk [vmem:[#allocation2 + $0x58] sm:$0xff] %vm918, %v905
        %922 = vst.msk [vmem:[#allocation2 + $0x80] sm:$0xff] %vm918, %v907
        %923 = vst.msk [vmem:[#allocation2 + $0xa8] sm:$0xff] %vm918, %v909
        %924 = vst.msk [vmem:[#allocation2 + $0xd0] sm:$0xff] %vm918, %v911
        %v925 = vld [vmem:[%s185 + $0x4] sm:$0x8]
        %v926 = vld [vmem:[%s185 + $0x8] sm:$0xf]
        %v927 = vld [vmem:[%s185 + $0xc] sm:$0xf]
        %v928 = vld [vmem:[%s185 + $0x10] sm:$0xf]
        %v929 = vld [vmem:[%s185 + $0x14] sm:$0xf]
        %v930 = vld [vmem:[%s185 + $0x18] sm:$0xf]
        %v931 = vld [vmem:[%s185 + $0x1c] sm:$0xf]
        %v932 = vld [vmem:[%s185 + $0x20] sm:$0xf]
        %v933 = vld [vmem:[%s185 + $0x24] sm:$0xf]
        %v934 = vld [vmem:[%s185 + $0x28] sm:$0xf]
        %v935 = vld [vmem:[%s185 + $0x2c] sm:$0xf]
        %v936 = vld [vmem:[%s185 + $0x30] sm:$0xf]
        %v937 = vld [vmem:[%s185 + $0x34] sm:$0x7]
        %v951 = vunpack.c.l.b16 %v925
        %v952 = vunpack.c.l.b16 %v926
        %v953 = vunpack.c.l.b16 %v927
        %v954 = vunpack.c.l.b16 %v928
        %v955 = vunpack.c.l.b16 %v929
        %v956 = vunpack.c.l.b16 %v930
        %v957 = vunpack.c.l.b16 %v931
        %v958 = vunpack.c.l.b16 %v932
        %v959 = vunpack.c.l.b16 %v933
        %v960 = vunpack.c.l.b16 %v934
        %v961 = vunpack.c.l.b16 %v935
        %v962 = vunpack.c.l.b16 %v936
        %v963 = vunpack.c.l.b16 %v937
        %v964 = vpack.c.b16 %v952, %v951
        %v965 = vpack.c.b16 %v954, %v953
        %v966 = vpack.c.b16 %v956, %v955
        %v967 = vpack.c.b16 %v958, %v957
        %v968 = vpack.c.b16 %v960, %v959
        %v969 = vpack.c.b16 %v962, %v961
        %v970 = vpack.c.b16 %v963, %v963
        %vm971 = vcmask 1044480
        %v972 = vrot.slane %v964, 3
        %v973 = vrot.slane %v965, 3
        %v974 = vsel %vm971, %v972, %v973
        %v975 = vrot.slane %v966, 3
        %v976 = vsel %vm971, %v973, %v975
        %v977 = vrot.slane %v967, 3
        %v978 = vsel %vm971, %v975, %v977
        %v979 = vrot.slane %v968, 3
        %v980 = vsel %vm971, %v977, %v979
        %v981 = vrot.slane %v969, 3
        %v982 = vsel %vm971, %v979, %v981
        %v983 = vrot.slane %v970, 3
        %v984 = vsel %vm971, %v981, %v983
        %985 = vrot.lane.b32.xlu0 %v974, 47
        %v986 = vpop.permute.xlu0 %985
        %987 = vrot.lane.b32.xlu0 %v976, 47
        %v988 = vpop.permute.xlu0 %987
        %989 = vrot.lane.b32.xlu0 %v978, 47
        %v990 = vpop.permute.xlu0 %989
        %991 = vrot.lane.b32.xlu0 %v980, 47
        %v992 = vpop.permute.xlu0 %991
        %993 = vrot.lane.b32.xlu0 %v982, 47
        %v994 = vpop.permute.xlu0 %993
        %995 = vrot.lane.b32.xlu0 %v984, 47
        %v996 = vpop.permute.xlu0 %995
        %vm1003 = vcmask 589176
        %1004 = vst.msk [vmem:[#allocation2 + $0x8] sm:$0xff] %vm1003, %v986
        %1005 = vst.msk [vmem:[#allocation2 + $0x30] sm:$0xff] %vm1003, %v988
        %1006 = vst.msk [vmem:[#allocation2 + $0x58] sm:$0xff] %vm1003, %v990
        %1007 = vst.msk [vmem:[#allocation2 + $0x80] sm:$0xff] %vm1003, %v992
        %1008 = vst.msk [vmem:[#allocation2 + $0xa8] sm:$0xff] %vm1003, %v994
        %1009 = vst.msk [vmem:[#allocation2 + $0xd0] sm:$0xff] %vm1003, %v996
        %v1010 = vld [vmem:[%s185 + $0x4] sm:$0x8]
        %v1011 = vld [vmem:[%s185 + $0x8] sm:$0xf]
        %v1012 = vld [vmem:[%s185 + $0xc] sm:$0xf]
        %v1013 = vld [vmem:[%s185 + $0x10] sm:$0xf]
        %v1014 = vld [vmem:[%s185 + $0x14] sm:$0xf]
        %v1015 = vld [vmem:[%s185 + $0x18] sm:$0xf]
        %v1016 = vld [vmem:[%s185 + $0x1c] sm:$0xf]
        %v1017 = vld [vmem:[%s185 + $0x20] sm:$0xf]
        %v1018 = vld [vmem:[%s185 + $0x24] sm:$0xf]
        %v1019 = vld [vmem:[%s185 + $0x28] sm:$0xf]
        %v1020 = vld [vmem:[%s185 + $0x2c] sm:$0xf]
        %v1021 = vld [vmem:[%s185 + $0x30] sm:$0xf]
        %v1022 = vld [vmem:[%s185 + $0x34] sm:$0xf]
        %v1036 = vunpack.c.l.b16 %v1010
        %v1037 = vunpack.c.l.b16 %v1011
        %v1038 = vunpack.c.l.b16 %v1012
        %v1039 = vunpack.c.l.b16 %v1013
        %v1040 = vunpack.c.l.b16 %v1014
        %v1041 = vunpack.c.l.b16 %v1015
        %v1042 = vunpack.c.l.b16 %v1016
        %v1043 = vunpack.c.l.b16 %v1017
        %v1044 = vunpack.c.l.b16 %v1018
        %v1045 = vunpack.c.l.b16 %v1019
        %v1046 = vunpack.c.l.b16 %v1020
        %v1047 = vunpack.c.l.b16 %v1021
        %v1048 = vunpack.c.l.b16 %v1022
        %v1049 = vpack.c.b16 %v1037, %v1036
        %v1050 = vpack.c.b16 %v1039, %v1038
        %v1051 = vpack.c.b16 %v1041, %v1040
        %v1052 = vpack.c.b16 %v1043, %v1042
        %v1053 = vpack.c.b16 %v1045, %v1044
        %v1054 = vpack.c.b16 %v1047, %v1046
        %v1055 = vpack.c.b16 %v1048, %v1048
        %vm1056 = vsmask.f32 4352
        %v1058 = vshrl.u32 %v1049, 16
        %v1060 = vrot.slane %v1058, 3
        %v1061 = vshll.u32 %v1049, 16
        %v1063 = vrot.slane %v1061, 4
        %v1064 = vor.u32 %v1060, %v1063
        %v1066 = vshrl.u32 %v1050, 16
        %v1068 = vrot.slane %v1066, 3
        %v1069 = vshll.u32 %v1050, 16
        %v1071 = vrot.slane %v1069, 4
        %v1072 = vor.u32 %v1068, %v1071
        %v1073 = vsel %vm1056, %v1064, %v1072
        %v1075 = vshrl.u32 %v1051, 16
        %v1077 = vrot.slane %v1075, 3
        %v1078 = vshll.u32 %v1051, 16
        %v1080 = vrot.slane %v1078, 4
        %v1081 = vor.u32 %v1077, %v1080
        %v1082 = vsel %vm1056, %v1072, %v1081
        %v1084 = vshrl.u32 %v1052, 16
        %v1086 = vrot.slane %v1084, 3
        %v1087 = vshll.u32 %v1052, 16
        %v1089 = vrot.slane %v1087, 4
        %v1090 = vor.u32 %v1086, %v1089
        %v1091 = vsel %vm1056, %v1081, %v1090
        %v1093 = vshrl.u32 %v1053, 16
        %v1095 = vrot.slane %v1093, 3
        %v1096 = vshll.u32 %v1053, 16
        %v1098 = vrot.slane %v1096, 4
        %v1099 = vor.u32 %v1095, %v1098
        %v1100 = vsel %vm1056, %v1090, %v1099
        %v1102 = vshrl.u32 %v1054, 16
        %v1104 = vrot.slane %v1102, 3
        %v1105 = vshll.u32 %v1054, 16
        %v1107 = vrot.slane %v1105, 4
        %v1108 = vor.u32 %v1104, %v1107
        %v1109 = vsel %vm1056, %v1099, %v1108
        %v1111 = vshrl.u32 %v1055, 16
        %v1113 = vrot.slane %v1111, 3
        %v1114 = vshll.u32 %v1055, 16
        %v1116 = vrot.slane %v1114, 4
        %v1117 = vor.u32 %v1113, %v1116
        %v1118 = vsel %vm1056, %v1108, %v1117
        %1119 = vrot.lane.b32.xlu0 %v1073, 72
        %v1120 = vpop.permute.xlu0 %1119
        %1121 = vrot.lane.b32.xlu0 %v1082, 72
        %v1122 = vpop.permute.xlu0 %1121
        %1123 = vrot.lane.b32.xlu0 %v1091, 72
        %v1124 = vpop.permute.xlu0 %1123
        %1125 = vrot.lane.b32.xlu0 %v1100, 72
        %v1126 = vpop.permute.xlu0 %1125
        %1127 = vrot.lane.b32.xlu0 %v1109, 72
        %v1128 = vpop.permute.xlu0 %1127
        %1129 = vrot.lane.b32.xlu0 %v1118, 72
        %v1130 = vpop.permute.xlu0 %1129
        %vm1137 = vcmask 794176
        %1138 = vst.msk [vmem:[#allocation2 + $0x8] sm:$0xff] %vm1137, %v1120
        %1139 = vst.msk [vmem:[#allocation2 + $0x30] sm:$0xff] %vm1137, %v1122
        %1140 = vst.msk [vmem:[#allocation2 + $0x58] sm:$0xff] %vm1137, %v1124
        %1141 = vst.msk [vmem:[#allocation2 + $0x80] sm:$0xff] %vm1137, %v1126
        %1142 = vst.msk [vmem:[#allocation2 + $0xa8] sm:$0xff] %vm1137, %v1128
        %1143 = vst.msk [vmem:[#allocation2 + $0xd0] sm:$0xff] %vm1137, %v1130
        %v1144 = vld [vmem:[%s185 + $0x8] sm:$0xf]
        %v1145 = vld [vmem:[%s185 + $0xc] sm:$0xf]
        %v1146 = vld [vmem:[%s185 + $0x10] sm:$0xf]
        %v1147 = vld [vmem:[%s185 + $0x14] sm:$0xf]
        %v1148 = vld [vmem:[%s185 + $0x18] sm:$0xf]
        %v1149 = vld [vmem:[%s185 + $0x1c] sm:$0xf]
        %v1150 = vld [vmem:[%s185 + $0x20] sm:$0xf]
        %v1151 = vld [vmem:[%s185 + $0x24] sm:$0xf]
        %v1152 = vld [vmem:[%s185 + $0x28] sm:$0xf]
        %v1153 = vld [vmem:[%s185 + $0x2c] sm:$0xf]
        %v1154 = vld [vmem:[%s185 + $0x30] sm:$0xf]
        %v1155 = vld [vmem:[%s185 + $0x34] sm:$0xf]
        %v1168 = vunpack.c.l.b16 %v1144
        %v1169 = vunpack.c.l.b16 %v1145
        %v1170 = vunpack.c.l.b16 %v1146
        %v1171 = vunpack.c.l.b16 %v1147
        %v1172 = vunpack.c.l.b16 %v1148
        %v1173 = vunpack.c.l.b16 %v1149
        %v1174 = vunpack.c.l.b16 %v1150
        %v1175 = vunpack.c.l.b16 %v1151
        %v1176 = vunpack.c.l.b16 %v1152
        %v1177 = vunpack.c.l.b16 %v1153
        %v1178 = vunpack.c.l.b16 %v1154
        %v1179 = vunpack.c.l.b16 %v1155
        %v1180 = vpack.c.b16 %v1169, %v1168
        %v1181 = vpack.c.b16 %v1171, %v1170
        %v1182 = vpack.c.b16 %v1173, %v1172
        %v1183 = vpack.c.b16 %v1175, %v1174
        %v1184 = vpack.c.b16 %v1177, %v1176
        %v1185 = vpack.c.b16 %v1179, %v1178
        %1186 = vrot.lane.b32.xlu0 %v1180, 97
        %v1187 = vpop.permute.xlu0 %1186
        %1188 = vrot.lane.b32.xlu0 %v1181, 97
        %v1189 = vpop.permute.xlu0 %1188
        %1190 = vrot.lane.b32.xlu0 %v1182, 97
        %v1191 = vpop.permute.xlu0 %1190
        %1192 = vrot.lane.b32.xlu0 %v1183, 97
        %v1193 = vpop.permute.xlu0 %1192
        %1194 = vrot.lane.b32.xlu0 %v1184, 97
        %v1195 = vpop.permute.xlu0 %1194
        %1196 = vrot.lane.b32.xlu0 %v1185, 97
        %v1197 = vpop.permute.xlu0 %1196
        %vm1204 = vcmask 999176
        %1205 = vst.msk [vmem:[#allocation2 + $0x8] sm:$0xff] %vm1204, %v1187
        %1206 = vst.msk [vmem:[#allocation2 + $0x30] sm:$0xff] %vm1204, %v1189
        %1207 = vst.msk [vmem:[#allocation2 + $0x58] sm:$0xff] %vm1204, %v1191
        %1208 = vst.msk [vmem:[#allocation2 + $0x80] sm:$0xff] %vm1204, %v1193
        %1209 = vst.msk [vmem:[#allocation2 + $0xa8] sm:$0xff] %vm1204, %v1195
        %1210 = vst.msk [vmem:[#allocation2 + $0xd0] sm:$0xff] %vm1204, %v1197
        %v1211 = vld [vmem:[%s185 + $0xc] sm:$0xf]
        %v1212 = vld [vmem:[%s185 + $0x10] sm:$0xf]
        %v1213 = vld [vmem:[%s185 + $0x14] sm:$0xf]
        %v1214 = vld [vmem:[%s185 + $0x18] sm:$0xf]
        %v1215 = vld [vmem:[%s185 + $0x1c] sm:$0xf]
        %v1216 = vld [vmem:[%s185 + $0x20] sm:$0xf]
        %v1217 = vld [vmem:[%s185 + $0x24] sm:$0xf]
        %v1218 = vld [vmem:[%s185 + $0x28] sm:$0xf]
        %v1219 = vld [vmem:[%s185 + $0x2c] sm:$0xf]
        %v1220 = vld [vmem:[%s185 + $0x30] sm:$0xf]
        %v1221 = vld [vmem:[%s185 + $0x34] sm:$0xf]
        %v1222 = vld [vmem:[%s185 + $0x38] sm:$0xf]
        %v1235 = vunpack.c.l.b16 %v1211
        %v1236 = vunpack.c.l.b16 %v1212
        %v1237 = vunpack.c.l.b16 %v1213
        %v1238 = vunpack.c.l.b16 %v1214
        %v1239 = vunpack.c.l.b16 %v1215
        %v1240 = vunpack.c.l.b16 %v1216
        %v1241 = vunpack.c.l.b16 %v1217
        %v1242 = vunpack.c.l.b16 %v1218
        %v1243 = vunpack.c.l.b16 %v1219
        %v1244 = vunpack.c.l.b16 %v1220
        %v1245 = vunpack.c.l.b16 %v1221
        %v1246 = vunpack.c.l.b16 %v1222
        %v1247 = vpack.c.b16 %v1236, %v1235
        %v1248 = vpack.c.b16 %v1238, %v1237
        %v1249 = vpack.c.b16 %v1240, %v1239
        %v1250 = vpack.c.b16 %v1242, %v1241
        %v1251 = vpack.c.b16 %v1244, %v1243
        %v1252 = vpack.c.b16 %v1246, %v1245
        %1253 = vrot.lane.b32.xlu0 %v1247, 122
        %v1254 = vpop.permute.xlu0 %1253
        %1255 = vrot.lane.b32.xlu0 %v1248, 122
        %v1256 = vpop.permute.xlu0 %1255
        %1257 = vrot.lane.b32.xlu0 %v1249, 122
        %v1258 = vpop.permute.xlu0 %1257
        %1259 = vrot.lane.b32.xlu0 %v1250, 122
        %v1260 = vpop.permute.xlu0 %1259
        %1261 = vrot.lane.b32.xlu0 %v1251, 122
        %v1262 = vpop.permute.xlu0 %1261
        %1263 = vrot.lane.b32.xlu0 %v1252, 122
        %v1264 = vpop.permute.xlu0 %1263
        %vm1271 = vcmask 1048528
        %1272 = vst.msk [vmem:[#allocation2 + $0x8] sm:$0xff] %vm1271, %v1254
        %vm1273 = vcmask 154624
        %1274 = vst.msk [vmem:[#allocation2 + $0x10] sm:$0xff] %vm1273, %v1254
        %1275 = vst.msk [vmem:[#allocation2 + $0x30] sm:$0xff] %vm1271, %v1256
        %1276 = vst.msk [vmem:[#allocation2 + $0x38] sm:$0xff] %vm1273, %v1256
        %1277 = vst.msk [vmem:[#allocation2 + $0x58] sm:$0xff] %vm1271, %v1258
        %1278 = vst.msk [vmem:[#allocation2 + $0x60] sm:$0xff] %vm1273, %v1258
        %1279 = vst.msk [vmem:[#allocation2 + $0x80] sm:$0xff] %vm1271, %v1260
        %1280 = vst.msk [vmem:[#allocation2 + $0x88] sm:$0xff] %vm1273, %v1260
        %1281 = vst.msk [vmem:[#allocation2 + $0xa8] sm:$0xff] %vm1271, %v1262
        %1282 = vst.msk [vmem:[#allocation2 + $0xb0] sm:$0xff] %vm1273, %v1262
        %1283 = vst.msk [vmem:[#allocation2 + $0xd0] sm:$0xff] %vm1271, %v1264
        %1284 = vst.msk [vmem:[#allocation2 + $0xd8] sm:$0xff] %vm1273, %v1264
        %v1285 = vld [vmem:[%s185 + $0xc] sm:$0xf]
        %v1286 = vld [vmem:[%s185 + $0x10] sm:$0xf]
        %v1287 = vld [vmem:[%s185 + $0x14] sm:$0xf]
        %v1288 = vld [vmem:[%s185 + $0x18] sm:$0xf]
        %v1289 = vld [vmem:[%s185 + $0x1c] sm:$0xf]
        %v1290 = vld [vmem:[%s185 + $0x20] sm:$0xf]
        %v1291 = vld [vmem:[%s185 + $0x24] sm:$0xf]
        %v1292 = vld [vmem:[%s185 + $0x28] sm:$0xf]
        %v1293 = vld [vmem:[%s185 + $0x2c] sm:$0xf]
        %v1294 = vld [vmem:[%s185 + $0x30] sm:$0xf]
        %v1295 = vld [vmem:[%s185 + $0x34] sm:$0xf]
        %v1296 = vld [vmem:[%s185 + $0x38] sm:$0xf]
        %v1297 = vld [vmem:[%s185 + $0x3c] sm:$0x1]
        %v1311 = vunpack.c.l.b16 %v1285
        %v1312 = vunpack.c.l.b16 %v1286
        %v1313 = vunpack.c.l.b16 %v1287
        %v1314 = vunpack.c.l.b16 %v1288
        %v1315 = vunpack.c.l.b16 %v1289
        %v1316 = vunpack.c.l.b16 %v1290
        %v1317 = vunpack.c.l.b16 %v1291
        %v1318 = vunpack.c.l.b16 %v1292
        %v1319 = vunpack.c.l.b16 %v1293
        %v1320 = vunpack.c.l.b16 %v1294
        %v1321 = vunpack.c.l.b16 %v1295
        %v1322 = vunpack.c.l.b16 %v1296
        %v1323 = vunpack.c.l.b16 %v1297
        %v1324 = vpack.c.b16 %v1312, %v1311
        %v1325 = vpack.c.b16 %v1314, %v1313
        %v1326 = vpack.c.b16 %v1316, %v1315
        %v1327 = vpack.c.b16 %v1318, %v1317
        %v1328 = vpack.c.b16 %v1320, %v1319
        %v1329 = vpack.c.b16 %v1322, %v1321
        %v1330 = vpack.c.b16 %v1323, %v1323
        %v1332 = vshrl.u32 %v1324, 16
        %v1334 = vshll.u32 %v1324, 16
        %v1336 = vrot.slane %v1334, 1
        %v1337 = vor.u32 %v1332, %v1336
        %v1339 = vshll.u32 %v1325, 16
        %v1341 = vrot.slane %v1339, 1
        %v1342 = vsel %vm318, %v1337, %v1341
        %v1343 = vshrl.u32 %v1325, 16
        %v1345 = vor.u32 %v1343, %v1341
        %v1347 = vshll.u32 %v1326, 16
        %v1349 = vrot.slane %v1347, 1
        %v1350 = vsel %vm318, %v1345, %v1349
        %v1351 = vshrl.u32 %v1326, 16
        %v1353 = vor.u32 %v1351, %v1349
        %v1355 = vshll.u32 %v1327, 16
        %v1357 = vrot.slane %v1355, 1
        %v1358 = vsel %vm318, %v1353, %v1357
        %v1359 = vshrl.u32 %v1327, 16
        %v1361 = vor.u32 %v1359, %v1357
        %v1363 = vshll.u32 %v1328, 16
        %v1365 = vrot.slane %v1363, 1
        %v1366 = vsel %vm318, %v1361, %v1365
        %v1367 = vshrl.u32 %v1328, 16
        %v1369 = vor.u32 %v1367, %v1365
        %v1371 = vshll.u32 %v1329, 16
        %v1373 = vrot.slane %v1371, 1
        %v1374 = vsel %vm318, %v1369, %v1373
        %v1375 = vshrl.u32 %v1329, 16
        %v1377 = vor.u32 %v1375, %v1373
        %v1379 = vshll.u32 %v1330, 16
        %v1381 = vrot.slane %v1379, 1
        %v1382 = vsel %vm318, %v1377, %v1381
        %1383 = vrot.lane.b32.xlu0 %v1342, 19
        %v1384 = vpop.permute.xlu0 %1383
        %1385 = vrot.lane.b32.xlu0 %v1350, 19
        %v1386 = vpop.permute.xlu0 %1385
        %1387 = vrot.lane.b32.xlu0 %v1358, 19
        %v1388 = vpop.permute.xlu0 %1387
        %1389 = vrot.lane.b32.xlu0 %v1366, 19
        %v1390 = vpop.permute.xlu0 %1389
        %1391 = vrot.lane.b32.xlu0 %v1374, 19
        %v1392 = vpop.permute.xlu0 %1391
        %1393 = vrot.lane.b32.xlu0 %v1382, 19
        %v1394 = vpop.permute.xlu0 %1393
        %vm1401 = vcmask 359576
        %1402 = vst.msk [vmem:[#allocation2 + $0x10] sm:$0xff] %vm1401, %v1384
        %1403 = vst.msk [vmem:[#allocation2 + $0x38] sm:$0xff] %vm1401, %v1386
        %1404 = vst.msk [vmem:[#allocation2 + $0x60] sm:$0xff] %vm1401, %v1388
        %1405 = vst.msk [vmem:[#allocation2 + $0x88] sm:$0xff] %vm1401, %v1390
        %1406 = vst.msk [vmem:[#allocation2 + $0xb0] sm:$0xff] %vm1401, %v1392
        %1407 = vst.msk [vmem:[#allocation2 + $0xd8] sm:$0xff] %vm1401, %v1394
        %v1408 = vld [vmem:[%s185 + $0xc] sm:$0xe]
        %v1409 = vld [vmem:[%s185 + $0x10] sm:$0xf]
        %v1410 = vld [vmem:[%s185 + $0x14] sm:$0xf]
        %v1411 = vld [vmem:[%s185 + $0x18] sm:$0xf]
        %v1412 = vld [vmem:[%s185 + $0x1c] sm:$0xf]
        %v1413 = vld [vmem:[%s185 + $0x20] sm:$0xf]
        %v1414 = vld [vmem:[%s185 + $0x24] sm:$0xf]
        %v1415 = vld [vmem:[%s185 + $0x28] sm:$0xf]
        %v1416 = vld [vmem:[%s185 + $0x2c] sm:$0xf]
        %v1417 = vld [vmem:[%s185 + $0x30] sm:$0xf]
        %v1418 = vld [vmem:[%s185 + $0x34] sm:$0xf]
        %v1419 = vld [vmem:[%s185 + $0x38] sm:$0xf]
        %v1420 = vld [vmem:[%s185 + $0x3c] sm:$0x1]
        %v1434 = vunpack.c.l.b16 %v1408
        %v1435 = vunpack.c.l.b16 %v1409
        %v1436 = vunpack.c.l.b16 %v1410
        %v1437 = vunpack.c.l.b16 %v1411
        %v1438 = vunpack.c.l.b16 %v1412
        %v1439 = vunpack.c.l.b16 %v1413
        %v1440 = vunpack.c.l.b16 %v1414
        %v1441 = vunpack.c.l.b16 %v1415
        %v1442 = vunpack.c.l.b16 %v1416
        %v1443 = vunpack.c.l.b16 %v1417
        %v1444 = vunpack.c.l.b16 %v1418
        %v1445 = vunpack.c.l.b16 %v1419
        %v1446 = vunpack.c.l.b16 %v1420
        %v1447 = vpack.c.b16 %v1435, %v1434
        %v1448 = vpack.c.b16 %v1437, %v1436
        %v1449 = vpack.c.b16 %v1439, %v1438
        %v1450 = vpack.c.b16 %v1441, %v1440
        %v1451 = vpack.c.b16 %v1443, %v1442
        %v1452 = vpack.c.b16 %v1445, %v1444
        %v1453 = vpack.c.b16 %v1446, %v1446
        %v1454 = vrot.slane %v1447, 1
        %v1455 = vrot.slane %v1448, 1
        %v1456 = vsel %vm442, %v1454, %v1455
        %v1457 = vrot.slane %v1449, 1
        %v1458 = vsel %vm442, %v1455, %v1457
        %v1459 = vrot.slane %v1450, 1
        %v1460 = vsel %vm442, %v1457, %v1459
        %v1461 = vrot.slane %v1451, 1
        %v1462 = vsel %vm442, %v1459, %v1461
        %v1463 = vrot.slane %v1452, 1
        %v1464 = vsel %vm442, %v1461, %v1463
        %v1465 = vrot.slane %v1453, 1
        %v1466 = vsel %vm442, %v1463, %v1465
        %1467 = vrot.lane.b32.xlu0 %v1456, 44
        %v1468 = vpop.permute.xlu0 %1467
        %1469 = vrot.lane.b32.xlu0 %v1458, 44
        %v1470 = vpop.permute.xlu0 %1469
        %1471 = vrot.lane.b32.xlu0 %v1460, 44
        %v1472 = vpop.permute.xlu0 %1471
        %1473 = vrot.lane.b32.xlu0 %v1462, 44
        %v1474 = vpop.permute.xlu0 %1473
        %1475 = vrot.lane.b32.xlu0 %v1464, 44
        %v1476 = vpop.permute.xlu0 %1475
        %1477 = vrot.lane.b32.xlu0 %v1466, 44
        %v1478 = vpop.permute.xlu0 %1477
        %vm1485 = vcmask 564576
        %1486 = vst.msk [vmem:[#allocation2 + $0x10] sm:$0xff] %vm1485, %v1468
        %1487 = vst.msk [vmem:[#allocation2 + $0x38] sm:$0xff] %vm1485, %v1470
        %1488 = vst.msk [vmem:[#allocation2 + $0x60] sm:$0xff] %vm1485, %v1472
        %1489 = vst.msk [vmem:[#allocation2 + $0x88] sm:$0xff] %vm1485, %v1474
        %1490 = vst.msk [vmem:[#allocation2 + $0xb0] sm:$0xff] %vm1485, %v1476
        %1491 = vst.msk [vmem:[#allocation2 + $0xd8] sm:$0xff] %vm1485, %v1478
        %v1492 = vld [vmem:[%s185 + $0xc] sm:$0xe]
        %v1493 = vld [vmem:[%s185 + $0x10] sm:$0xf]
        %v1494 = vld [vmem:[%s185 + $0x14] sm:$0xf]
        %v1495 = vld [vmem:[%s185 + $0x18] sm:$0xf]
        %v1496 = vld [vmem:[%s185 + $0x1c] sm:$0xf]
        %v1497 = vld [vmem:[%s185 + $0x20] sm:$0xf]
        %v1498 = vld [vmem:[%s185 + $0x24] sm:$0xf]
        %v1499 = vld [vmem:[%s185 + $0x28] sm:$0xf]
        %v1500 = vld [vmem:[%s185 + $0x2c] sm:$0xf]
        %v1501 = vld [vmem:[%s185 + $0x30] sm:$0xf]
        %v1502 = vld [vmem:[%s185 + $0x34] sm:$0xf]
        %v1503 = vld [vmem:[%s185 + $0x38] sm:$0xf]
        %v1504 = vld [vmem:[%s185 + $0x3c] sm:$0x3]
        %v1518 = vunpack.c.l.b16 %v1492
        %v1519 = vunpack.c.l.b16 %v1493
        %v1520 = vunpack.c.l.b16 %v1494
        %v1521 = vunpack.c.l.b16 %v1495
        %v1522 = vunpack.c.l.b16 %v1496
        %v1523 = vunpack.c.l.b16 %v1497
        %v1524 = vunpack.c.l.b16 %v1498
        %v1525 = vunpack.c.l.b16 %v1499
        %v1526 = vunpack.c.l.b16 %v1500
        %v1527 = vunpack.c.l.b16 %v1501
        %v1528 = vunpack.c.l.b16 %v1502
        %v1529 = vunpack.c.l.b16 %v1503
        %v1530 = vunpack.c.l.b16 %v1504
        %v1531 = vpack.c.b16 %v1519, %v1518
        %v1532 = vpack.c.b16 %v1521, %v1520
        %v1533 = vpack.c.b16 %v1523, %v1522
        %v1534 = vpack.c.b16 %v1525, %v1524
        %v1535 = vpack.c.b16 %v1527, %v1526
        %v1536 = vpack.c.b16 %v1529, %v1528
        %v1537 = vpack.c.b16 %v1530, %v1530
        %v1539 = vshrl.u32 %v1531, 16
        %v1541 = vrot.slane %v1539, 1
        %v1542 = vshll.u32 %v1531, 16
        %v1544 = vrot.slane %v1542, 2
        %v1545 = vor.u32 %v1541, %v1544
        %v1547 = vshrl.u32 %v1532, 16
        %v1549 = vrot.slane %v1547, 1
        %v1550 = vshll.u32 %v1532, 16
        %v1552 = vrot.slane %v1550, 2
        %v1553 = vor.u32 %v1549, %v1552
        %v1554 = vsel %vm527, %v1545, %v1553
        %v1556 = vshrl.u32 %v1533, 16
        %v1558 = vrot.slane %v1556, 1
        %v1559 = vshll.u32 %v1533, 16
        %v1561 = vrot.slane %v1559, 2
        %v1562 = vor.u32 %v1558, %v1561
        %v1563 = vsel %vm527, %v1553, %v1562
        %v1565 = vshrl.u32 %v1534, 16
        %v1567 = vrot.slane %v1565, 1
        %v1568 = vshll.u32 %v1534, 16
        %v1570 = vrot.slane %v1568, 2
        %v1571 = vor.u32 %v1567, %v1570
        %v1572 = vsel %vm527, %v1562, %v1571
        %v1574 = vshrl.u32 %v1535, 16
        %v1576 = vrot.slane %v1574, 1
        %v1577 = vshll.u32 %v1535, 16
        %v1579 = vrot.slane %v1577, 2
        %v1580 = vor.u32 %v1576, %v1579
        %v1581 = vsel %vm527, %v1571, %v1580
        %v1583 = vshrl.u32 %v1536, 16
        %v1585 = vrot.slane %v1583, 1
        %v1586 = vshll.u32 %v1536, 16
        %v1588 = vrot.slane %v1586, 2
        %v1589 = vor.u32 %v1585, %v1588
        %v1590 = vsel %vm527, %v1580, %v1589
        %v1592 = vshrl.u32 %v1537, 16
        %v1594 = vrot.slane %v1592, 1
        %v1595 = vshll.u32 %v1537, 16
        %v1597 = vrot.slane %v1595, 2
        %v1598 = vor.u32 %v1594, %v1597
        %v1599 = vsel %vm527, %v1589, %v1598
        %1600 = vrot.lane.b32.xlu0 %v1554, 69
        %v1601 = vpop.permute.xlu0 %1600
        %1602 = vrot.lane.b32.xlu0 %v1563, 69
        %v1603 = vpop.permute.xlu0 %1602
        %1604 = vrot.lane.b32.xlu0 %v1572, 69
        %v1605 = vpop.permute.xlu0 %1604
        %1606 = vrot.lane.b32.xlu0 %v1581, 69
        %v1607 = vpop.permute.xlu0 %1606
        %1608 = vrot.lane.b32.xlu0 %v1590, 69
        %v1609 = vpop.permute.xlu0 %1608
        %1610 = vrot.lane.b32.xlu0 %v1599, 69
        %v1611 = vpop.permute.xlu0 %1610
        %vm1618 = vcmask 769576
        %1619 = vst.msk [vmem:[#allocation2 + $0x10] sm:$0xff] %vm1618, %v1601
        %1620 = vst.msk [vmem:[#allocation2 + $0x38] sm:$0xff] %vm1618, %v1603
        %1621 = vst.msk [vmem:[#allocation2 + $0x60] sm:$0xff] %vm1618, %v1605
        %1622 = vst.msk [vmem:[#allocation2 + $0x88] sm:$0xff] %vm1618, %v1607
        %1623 = vst.msk [vmem:[#allocation2 + $0xb0] sm:$0xff] %vm1618, %v1609
        %1624 = vst.msk [vmem:[#allocation2 + $0xd8] sm:$0xff] %vm1618, %v1611
        %v1625 = vld [vmem:[%s185 + $0xc] sm:$0xc]
        %v1626 = vld [vmem:[%s185 + $0x10] sm:$0xf]
        %v1627 = vld [vmem:[%s185 + $0x14] sm:$0xf]
        %v1628 = vld [vmem:[%s185 + $0x18] sm:$0xf]
        %v1629 = vld [vmem:[%s185 + $0x1c] sm:$0xf]
        %v1630 = vld [vmem:[%s185 + $0x20] sm:$0xf]
        %v1631 = vld [vmem:[%s185 + $0x24] sm:$0xf]
        %v1632 = vld [vmem:[%s185 + $0x28] sm:$0xf]
        %v1633 = vld [vmem:[%s185 + $0x2c] sm:$0xf]
        %v1634 = vld [vmem:[%s185 + $0x30] sm:$0xf]
        %v1635 = vld [vmem:[%s185 + $0x34] sm:$0xf]
        %v1636 = vld [vmem:[%s185 + $0x38] sm:$0xf]
        %v1637 = vld [vmem:[%s185 + $0x3c] sm:$0x3]
        %v1651 = vunpack.c.l.b16 %v1625
        %v1652 = vunpack.c.l.b16 %v1626
        %v1653 = vunpack.c.l.b16 %v1627
        %v1654 = vunpack.c.l.b16 %v1628
        %v1655 = vunpack.c.l.b16 %v1629
        %v1656 = vunpack.c.l.b16 %v1630
        %v1657 = vunpack.c.l.b16 %v1631
        %v1658 = vunpack.c.l.b16 %v1632
        %v1659 = vunpack.c.l.b16 %v1633
        %v1660 = vunpack.c.l.b16 %v1634
        %v1661 = vunpack.c.l.b16 %v1635
        %v1662 = vunpack.c.l.b16 %v1636
        %v1663 = vunpack.c.l.b16 %v1637
        %v1664 = vpack.c.b16 %v1652, %v1651
        %v1665 = vpack.c.b16 %v1654, %v1653
        %v1666 = vpack.c.b16 %v1656, %v1655
        %v1667 = vpack.c.b16 %v1658, %v1657
        %v1668 = vpack.c.b16 %v1660, %v1659
        %v1669 = vpack.c.b16 %v1662, %v1661
        %v1670 = vpack.c.b16 %v1663, %v1663
        %v1671 = vrot.slane %v1664, 2
        %v1672 = vrot.slane %v1665, 2
        %v1673 = vsel %vm661, %v1671, %v1672
        %v1674 = vrot.slane %v1666, 2
        %v1675 = vsel %vm661, %v1672, %v1674
        %v1676 = vrot.slane %v1667, 2
        %v1677 = vsel %vm661, %v1674, %v1676
        %v1678 = vrot.slane %v1668, 2
        %v1679 = vsel %vm661, %v1676, %v1678
        %v1680 = vrot.slane %v1669, 2
        %v1681 = vsel %vm661, %v1678, %v1680
        %v1682 = vrot.slane %v1670, 2
        %v1683 = vsel %vm661, %v1680, %v1682
        %1684 = vrot.lane.b32.xlu0 %v1673, 94
        %v1685 = vpop.permute.xlu0 %1684
        %1686 = vrot.lane.b32.xlu0 %v1675, 94
        %v1687 = vpop.permute.xlu0 %1686
        %1688 = vrot.lane.b32.xlu0 %v1677, 94
        %v1689 = vpop.permute.xlu0 %1688
        %1690 = vrot.lane.b32.xlu0 %v1679, 94
        %v1691 = vpop.permute.xlu0 %1690
        %1692 = vrot.lane.b32.xlu0 %v1681, 94
        %v1693 = vpop.permute.xlu0 %1692
        %1694 = vrot.lane.b32.xlu0 %v1683, 94
        %v1695 = vpop.permute.xlu0 %1694
        %vm1702 = vcmask 974576
        %1703 = vst.msk [vmem:[#allocation2 + $0x10] sm:$0xff] %vm1702, %v1685
        %1704 = vst.msk [vmem:[#allocation2 + $0x38] sm:$0xff] %vm1702, %v1687
        %1705 = vst.msk [vmem:[#allocation2 + $0x60] sm:$0xff] %vm1702, %v1689
        %1706 = vst.msk [vmem:[#allocation2 + $0x88] sm:$0xff] %vm1702, %v1691
        %1707 = vst.msk [vmem:[#allocation2 + $0xb0] sm:$0xff] %vm1702, %v1693
        %1708 = vst.msk [vmem:[#allocation2 + $0xd8] sm:$0xff] %vm1702, %v1695
        %v1709 = vld [vmem:[%s185 + $0x10] sm:$0xc]
        %v1710 = vld [vmem:[%s185 + $0x14] sm:$0xf]
        %v1711 = vld [vmem:[%s185 + $0x18] sm:$0xf]
        %v1712 = vld [vmem:[%s185 + $0x1c] sm:$0xf]
        %v1713 = vld [vmem:[%s185 + $0x20] sm:$0xf]
        %v1714 = vld [vmem:[%s185 + $0x24] sm:$0xf]
        %v1715 = vld [vmem:[%s185 + $0x28] sm:$0xf]
        %v1716 = vld [vmem:[%s185 + $0x2c] sm:$0xf]
        %v1717 = vld [vmem:[%s185 + $0x30] sm:$0xf]
        %v1718 = vld [vmem:[%s185 + $0x34] sm:$0xf]
        %v1719 = vld [vmem:[%s185 + $0x38] sm:$0xf]
        %v1720 = vld [vmem:[%s185 + $0x3c] sm:$0xf]
        %v1721 = vld [vmem:[%s185 + $0x40] sm:$0x3]
        %v1735 = vunpack.c.l.b16 %v1709
        %v1736 = vunpack.c.l.b16 %v1710
        %v1737 = vunpack.c.l.b16 %v1711
        %v1738 = vunpack.c.l.b16 %v1712
        %v1739 = vunpack.c.l.b16 %v1713
        %v1740 = vunpack.c.l.b16 %v1714
        %v1741 = vunpack.c.l.b16 %v1715
        %v1742 = vunpack.c.l.b16 %v1716
        %v1743 = vunpack.c.l.b16 %v1717
        %v1744 = vunpack.c.l.b16 %v1718
        %v1745 = vunpack.c.l.b16 %v1719
        %v1746 = vunpack.c.l.b16 %v1720
        %v1747 = vunpack.c.l.b16 %v1721
        %v1748 = vpack.c.b16 %v1736, %v1735
        %v1749 = vpack.c.b16 %v1738, %v1737
        %v1750 = vpack.c.b16 %v1740, %v1739
        %v1751 = vpack.c.b16 %v1742, %v1741
        %v1752 = vpack.c.b16 %v1744, %v1743
        %v1753 = vpack.c.b16 %v1746, %v1745
        %v1754 = vpack.c.b16 %v1747, %v1747
        %v1755 = vrot.slane %v1748, 2
        %v1756 = vrot.slane %v1749, 2
        %v1757 = vsel %vm661, %v1755, %v1756
        %v1758 = vrot.slane %v1750, 2
        %v1759 = vsel %vm661, %v1756, %v1758
        %v1760 = vrot.slane %v1751, 2
        %v1761 = vsel %vm661, %v1758, %v1760
        %v1762 = vrot.slane %v1752, 2
        %v1763 = vsel %vm661, %v1760, %v1762
        %v1764 = vrot.slane %v1753, 2
        %v1765 = vsel %vm661, %v1762, %v1764
        %v1766 = vrot.slane %v1754, 2
        %v1767 = vsel %vm661, %v1764, %v1766
        %1768 = vrot.lane.b32.xlu0 %v1757, 119
        %v1769 = vpop.permute.xlu0 %1768
        %1770 = vrot.lane.b32.xlu0 %v1759, 119
        %v1771 = vpop.permute.xlu0 %1770
        %1772 = vrot.lane.b32.xlu0 %v1761, 119
        %v1773 = vpop.permute.xlu0 %1772
        %1774 = vrot.lane.b32.xlu0 %v1763, 119
        %v1775 = vpop.permute.xlu0 %1774
        %1776 = vrot.lane.b32.xlu0 %v1765, 119
        %v1777 = vpop.permute.xlu0 %1776
        %1778 = vrot.lane.b32.xlu0 %v1767, 119
        %v1779 = vpop.permute.xlu0 %1778
        %vm1786 = vcmask 1048504
        %1787 = vst.msk [vmem:[#allocation2 + $0x10] sm:$0xff] %vm1786, %v1769
        %vm1788 = vcmask 130048
        %1789 = vst.msk [vmem:[#allocation2 + $0x18] sm:$0xff] %vm1788, %v1769
        %1790 = vst.msk [vmem:[#allocation2 + $0x38] sm:$0xff] %vm1786, %v1771
        %1791 = vst.msk [vmem:[#allocation2 + $0x40] sm:$0xff] %vm1788, %v1771
        %1792 = vst.msk [vmem:[#allocation2 + $0x60] sm:$0xff] %vm1786, %v1773
        %1793 = vst.msk [vmem:[#allocation2 + $0x68] sm:$0xff] %vm1788, %v1773
        %1794 = vst.msk [vmem:[#allocation2 + $0x88] sm:$0xff] %vm1786, %v1775
        %1795 = vst.msk [vmem:[#allocation2 + $0x90] sm:$0xff] %vm1788, %v1775
        %1796 = vst.msk [vmem:[#allocation2 + $0xb0] sm:$0xff] %vm1786, %v1777
        %1797 = vst.msk [vmem:[#allocation2 + $0xb8] sm:$0xff] %vm1788, %v1777
        %1798 = vst.msk [vmem:[#allocation2 + $0xd8] sm:$0xff] %vm1786, %v1779
        %1799 = vst.msk [vmem:[#allocation2 + $0xe0] sm:$0xff] %vm1788, %v1779
        %v1800 = vld [vmem:[%s185 + $0x10] sm:$0xc]
        %v1801 = vld [vmem:[%s185 + $0x14] sm:$0xf]
        %v1802 = vld [vmem:[%s185 + $0x18] sm:$0xf]
        %v1803 = vld [vmem:[%s185 + $0x1c] sm:$0xf]
        %v1804 = vld [vmem:[%s185 + $0x20] sm:$0xf]
        %v1805 = vld [vmem:[%s185 + $0x24] sm:$0xf]
        %v1806 = vld [vmem:[%s185 + $0x28] sm:$0xf]
        %v1807 = vld [vmem:[%s185 + $0x2c] sm:$0xf]
        %v1808 = vld [vmem:[%s185 + $0x30] sm:$0xf]
        %v1809 = vld [vmem:[%s185 + $0x34] sm:$0xf]
        %v1810 = vld [vmem:[%s185 + $0x38] sm:$0xf]
        %v1811 = vld [vmem:[%s185 + $0x3c] sm:$0xf]
        %v1812 = vld [vmem:[%s185 + $0x40] sm:$0x7]
        %v1826 = vunpack.c.l.b16 %v1800
        %v1827 = vunpack.c.l.b16 %v1801
        %v1828 = vunpack.c.l.b16 %v1802
        %v1829 = vunpack.c.l.b16 %v1803
        %v1830 = vunpack.c.l.b16 %v1804
        %v1831 = vunpack.c.l.b16 %v1805
        %v1832 = vunpack.c.l.b16 %v1806
        %v1833 = vunpack.c.l.b16 %v1807
        %v1834 = vunpack.c.l.b16 %v1808
        %v1835 = vunpack.c.l.b16 %v1809
        %v1836 = vunpack.c.l.b16 %v1810
        %v1837 = vunpack.c.l.b16 %v1811
        %v1838 = vunpack.c.l.b16 %v1812
        %v1839 = vpack.c.b16 %v1827, %v1826
        %v1840 = vpack.c.b16 %v1829, %v1828
        %v1841 = vpack.c.b16 %v1831, %v1830
        %v1842 = vpack.c.b16 %v1833, %v1832
        %v1843 = vpack.c.b16 %v1835, %v1834
        %v1844 = vpack.c.b16 %v1837, %v1836
        %v1845 = vpack.c.b16 %v1838, %v1838
        %v1847 = vshrl.u32 %v1839, 16
        %v1849 = vrot.slane %v1847, 2
        %v1850 = vshll.u32 %v1839, 16
        %v1852 = vrot.slane %v1850, 3
        %v1853 = vor.u32 %v1849, %v1852
        %v1855 = vshrl.u32 %v1840, 16
        %v1857 = vrot.slane %v1855, 2
        %v1858 = vshll.u32 %v1840, 16
        %v1860 = vrot.slane %v1858, 3
        %v1861 = vor.u32 %v1857, %v1860
        %v1862 = vsel %vm837, %v1853, %v1861
        %v1864 = vshrl.u32 %v1841, 16
        %v1866 = vrot.slane %v1864, 2
        %v1867 = vshll.u32 %v1841, 16
        %v1869 = vrot.slane %v1867, 3
        %v1870 = vor.u32 %v1866, %v1869
        %v1871 = vsel %vm837, %v1861, %v1870
        %v1873 = vshrl.u32 %v1842, 16
        %v1875 = vrot.slane %v1873, 2
        %v1876 = vshll.u32 %v1842, 16
        %v1878 = vrot.slane %v1876, 3
        %v1879 = vor.u32 %v1875, %v1878
        %v1880 = vsel %vm837, %v1870, %v1879
        %v1882 = vshrl.u32 %v1843, 16
        %v1884 = vrot.slane %v1882, 2
        %v1885 = vshll.u32 %v1843, 16
        %v1887 = vrot.slane %v1885, 3
        %v1888 = vor.u32 %v1884, %v1887
        %v1889 = vsel %vm837, %v1879, %v1888
        %v1891 = vshrl.u32 %v1844, 16
        %v1893 = vrot.slane %v1891, 2
        %v1894 = vshll.u32 %v1844, 16
        %v1896 = vrot.slane %v1894, 3
        %v1897 = vor.u32 %v1893, %v1896
        %v1898 = vsel %vm837, %v1888, %v1897
        %v1900 = vshrl.u32 %v1845, 16
        %v1902 = vrot.slane %v1900, 2
        %v1903 = vshll.u32 %v1845, 16
        %v1905 = vrot.slane %v1903, 3
        %v1906 = vor.u32 %v1902, %v1905
        %v1907 = vsel %vm837, %v1897, %v1906
        %1908 = vrot.lane.b32.xlu0 %v1862, 16
        %v1909 = vpop.permute.xlu0 %1908
        %1910 = vrot.lane.b32.xlu0 %v1871, 16
        %v1911 = vpop.permute.xlu0 %1910
        %1912 = vrot.lane.b32.xlu0 %v1880, 16
        %v1913 = vpop.permute.xlu0 %1912
        %1914 = vrot.lane.b32.xlu0 %v1889, 16
        %v1915 = vpop.permute.xlu0 %1914
        %1916 = vrot.lane.b32.xlu0 %v1898, 16
        %v1917 = vpop.permute.xlu0 %1916
        %1918 = vrot.lane.b32.xlu0 %v1907, 16
        %v1919 = vpop.permute.xlu0 %1918
        %vm1926 = vcmask 334976
        %1927 = vst.msk [vmem:[#allocation2 + $0x18] sm:$0xff] %vm1926, %v1909
        %1928 = vst.msk [vmem:[#allocation2 + $0x40] sm:$0xff] %vm1926, %v1911
        %1929 = vst.msk [vmem:[#allocation2 + $0x68] sm:$0xff] %vm1926, %v1913
        %1930 = vst.msk [vmem:[#allocation2 + $0x90] sm:$0xff] %vm1926, %v1915
        %1931 = vst.msk [vmem:[#allocation2 + $0xb8] sm:$0xff] %vm1926, %v1917
        %1932 = vst.msk [vmem:[#allocation2 + $0xe0] sm:$0xff] %vm1926, %v1919
        %v1933 = vld [vmem:[%s185 + $0x10] sm:$0x8]
        %v1934 = vld [vmem:[%s185 + $0x14] sm:$0xf]
        %v1935 = vld [vmem:[%s185 + $0x18] sm:$0xf]
        %v1936 = vld [vmem:[%s185 + $0x1c] sm:$0xf]
        %v1937 = vld [vmem:[%s185 + $0x20] sm:$0xf]
        %v1938 = vld [vmem:[%s185 + $0x24] sm:$0xf]
        %v1939 = vld [vmem:[%s185 + $0x28] sm:$0xf]
        %v1940 = vld [vmem:[%s185 + $0x2c] sm:$0xf]
        %v1941 = vld [vmem:[%s185 + $0x30] sm:$0xf]
        %v1942 = vld [vmem:[%s185 + $0x34] sm:$0xf]
        %v1943 = vld [vmem:[%s185 + $0x38] sm:$0xf]
        %v1944 = vld [vmem:[%s185 + $0x3c] sm:$0xf]
        %v1945 = vld [vmem:[%s185 + $0x40] sm:$0x7]
        %v1959 = vunpack.c.l.b16 %v1933
        %v1960 = vunpack.c.l.b16 %v1934
        %v1961 = vunpack.c.l.b16 %v1935
        %v1962 = vunpack.c.l.b16 %v1936
        %v1963 = vunpack.c.l.b16 %v1937
        %v1964 = vunpack.c.l.b16 %v1938
        %v1965 = vunpack.c.l.b16 %v1939
        %v1966 = vunpack.c.l.b16 %v1940
        %v1967 = vunpack.c.l.b16 %v1941
        %v1968 = vunpack.c.l.b16 %v1942
        %v1969 = vunpack.c.l.b16 %v1943
        %v1970 = vunpack.c.l.b16 %v1944
        %v1971 = vunpack.c.l.b16 %v1945
        %v1972 = vpack.c.b16 %v1960, %v1959
        %v1973 = vpack.c.b16 %v1962, %v1961
        %v1974 = vpack.c.b16 %v1964, %v1963
        %v1975 = vpack.c.b16 %v1966, %v1965
        %v1976 = vpack.c.b16 %v1968, %v1967
        %v1977 = vpack.c.b16 %v1970, %v1969
        %v1978 = vpack.c.b16 %v1971, %v1971
        %v1979 = vrot.slane %v1972, 3
        %v1980 = vrot.slane %v1973, 3
        %v1981 = vsel %vm971, %v1979, %v1980
        %v1982 = vrot.slane %v1974, 3
        %v1983 = vsel %vm971, %v1980, %v1982
        %v1984 = vrot.slane %v1975, 3
        %v1985 = vsel %vm971, %v1982, %v1984
        %v1986 = vrot.slane %v1976, 3
        %v1987 = vsel %vm971, %v1984, %v1986
        %v1988 = vrot.slane %v1977, 3
        %v1989 = vsel %vm971, %v1986, %v1988
        %v1990 = vrot.slane %v1978, 3
        %v1991 = vsel %vm971, %v1988, %v1990
        %1992 = vrot.lane.b32.xlu0 %v1981, 41
        %v1993 = vpop.permute.xlu0 %1992
        %1994 = vrot.lane.b32.xlu0 %v1983, 41
        %v1995 = vpop.permute.xlu0 %1994
        %1996 = vrot.lane.b32.xlu0 %v1985, 41
        %v1997 = vpop.permute.xlu0 %1996
        %1998 = vrot.lane.b32.xlu0 %v1987, 41
        %v1999 = vpop.permute.xlu0 %1998
        %2000 = vrot.lane.b32.xlu0 %v1989, 41
        %v2001 = vpop.permute.xlu0 %2000
        %2002 = vrot.lane.b32.xlu0 %v1991, 41
        %v2003 = vpop.permute.xlu0 %2002
        %vm2010 = vcmask 539976
        %2011 = vst.msk [vmem:[#allocation2 + $0x18] sm:$0xff] %vm2010, %v1993
        %2012 = vst.msk [vmem:[#allocation2 + $0x40] sm:$0xff] %vm2010, %v1995
        %2013 = vst.msk [vmem:[#allocation2 + $0x68] sm:$0xff] %vm2010, %v1997
        %2014 = vst.msk [vmem:[#allocation2 + $0x90] sm:$0xff] %vm2010, %v1999
        %2015 = vst.msk [vmem:[#allocation2 + $0xb8] sm:$0xff] %vm2010, %v2001
        %2016 = vst.msk [vmem:[#allocation2 + $0xe0] sm:$0xff] %vm2010, %v2003
        %v2017 = vld [vmem:[%s185 + $0x10] sm:$0x8]
        %v2018 = vld [vmem:[%s185 + $0x14] sm:$0xf]
        %v2019 = vld [vmem:[%s185 + $0x18] sm:$0xf]
        %v2020 = vld [vmem:[%s185 + $0x1c] sm:$0xf]
        %v2021 = vld [vmem:[%s185 + $0x20] sm:$0xf]
        %v2022 = vld [vmem:[%s185 + $0x24] sm:$0xf]
        %v2023 = vld [vmem:[%s185 + $0x28] sm:$0xf]
        %v2024 = vld [vmem:[%s185 + $0x2c] sm:$0xf]
        %v2025 = vld [vmem:[%s185 + $0x30] sm:$0xf]
        %v2026 = vld [vmem:[%s185 + $0x34] sm:$0xf]
        %v2027 = vld [vmem:[%s185 + $0x38] sm:$0xf]
        %v2028 = vld [vmem:[%s185 + $0x3c] sm:$0xf]
        %v2029 = vld [vmem:[%s185 + $0x40] sm:$0xf]
        %v2043 = vunpack.c.l.b16 %v2017
        %v2044 = vunpack.c.l.b16 %v2018
        %v2045 = vunpack.c.l.b16 %v2019
        %v2046 = vunpack.c.l.b16 %v2020
        %v2047 = vunpack.c.l.b16 %v2021
        %v2048 = vunpack.c.l.b16 %v2022
        %v2049 = vunpack.c.l.b16 %v2023
        %v2050 = vunpack.c.l.b16 %v2024
        %v2051 = vunpack.c.l.b16 %v2025
        %v2052 = vunpack.c.l.b16 %v2026
        %v2053 = vunpack.c.l.b16 %v2027
        %v2054 = vunpack.c.l.b16 %v2028
        %v2055 = vunpack.c.l.b16 %v2029
        %v2056 = vpack.c.b16 %v2044, %v2043
        %v2057 = vpack.c.b16 %v2046, %v2045
        %v2058 = vpack.c.b16 %v2048, %v2047
        %v2059 = vpack.c.b16 %v2050, %v2049
        %v2060 = vpack.c.b16 %v2052, %v2051
        %v2061 = vpack.c.b16 %v2054, %v2053
        %v2062 = vpack.c.b16 %v2055, %v2055
        %v2064 = vshrl.u32 %v2056, 16
        %v2066 = vrot.slane %v2064, 3
        %v2067 = vshll.u32 %v2056, 16
        %v2069 = vrot.slane %v2067, 4
        %v2070 = vor.u32 %v2066, %v2069
        %v2072 = vshrl.u32 %v2057, 16
        %v2074 = vrot.slane %v2072, 3
        %v2075 = vshll.u32 %v2057, 16
        %v2077 = vrot.slane %v2075, 4
        %v2078 = vor.u32 %v2074, %v2077
        %v2079 = vsel %vm1056, %v2070, %v2078
        %v2081 = vshrl.u32 %v2058, 16
        %v2083 = vrot.slane %v2081, 3
        %v2084 = vshll.u32 %v2058, 16
        %v2086 = vrot.slane %v2084, 4
        %v2087 = vor.u32 %v2083, %v2086
        %v2088 = vsel %vm1056, %v2078, %v2087
        %v2090 = vshrl.u32 %v2059, 16
        %v2092 = vrot.slane %v2090, 3
        %v2093 = vshll.u32 %v2059, 16
        %v2095 = vrot.slane %v2093, 4
        %v2096 = vor.u32 %v2092, %v2095
        %v2097 = vsel %vm1056, %v2087, %v2096
        %v2099 = vshrl.u32 %v2060, 16
        %v2101 = vrot.slane %v2099, 3
        %v2102 = vshll.u32 %v2060, 16
        %v2104 = vrot.slane %v2102, 4
        %v2105 = vor.u32 %v2101, %v2104
        %v2106 = vsel %vm1056, %v2096, %v2105
        %v2108 = vshrl.u32 %v2061, 16
        %v2110 = vrot.slane %v2108, 3
        %v2111 = vshll.u32 %v2061, 16
        %v2113 = vrot.slane %v2111, 4
        %v2114 = vor.u32 %v2110, %v2113
        %v2115 = vsel %vm1056, %v2105, %v2114
        %v2117 = vshrl.u32 %v2062, 16
        %v2119 = vrot.slane %v2117, 3
        %v2120 = vshll.u32 %v2062, 16
        %v2122 = vrot.slane %v2120, 4
        %v2123 = vor.u32 %v2119, %v2122
        %v2124 = vsel %vm1056, %v2114, %v2123
        %2125 = vrot.lane.b32.xlu0 %v2079, 66
        %v2126 = vpop.permute.xlu0 %2125
        %2127 = vrot.lane.b32.xlu0 %v2088, 66
        %v2128 = vpop.permute.xlu0 %2127
        %2129 = vrot.lane.b32.xlu0 %v2097, 66
        %v2130 = vpop.permute.xlu0 %2129
        %2131 = vrot.lane.b32.xlu0 %v2106, 66
        %v2132 = vpop.permute.xlu0 %2131
        %2133 = vrot.lane.b32.xlu0 %v2115, 66
        %v2134 = vpop.permute.xlu0 %2133
        %2135 = vrot.lane.b32.xlu0 %v2124, 66
        %v2136 = vpop.permute.xlu0 %2135
        %vm2143 = vcmask 744976
        %2144 = vst.msk [vmem:[#allocation2 + $0x18] sm:$0xff] %vm2143, %v2126
        %2145 = vst.msk [vmem:[#allocation2 + $0x40] sm:$0xff] %vm2143, %v2128
        %2146 = vst.msk [vmem:[#allocation2 + $0x68] sm:$0xff] %vm2143, %v2130
        %2147 = vst.msk [vmem:[#allocation2 + $0x90] sm:$0xff] %vm2143, %v2132
        %2148 = vst.msk [vmem:[#allocation2 + $0xb8] sm:$0xff] %vm2143, %v2134
        %2149 = vst.msk [vmem:[#allocation2 + $0xe0] sm:$0xff] %vm2143, %v2136
        %v2150 = vld [vmem:[%s185 + $0x14] sm:$0xf]
        %v2151 = vld [vmem:[%s185 + $0x18] sm:$0xf]
        %v2152 = vld [vmem:[%s185 + $0x1c] sm:$0xf]
        %v2153 = vld [vmem:[%s185 + $0x20] sm:$0xf]
        %v2154 = vld [vmem:[%s185 + $0x24] sm:$0xf]
        %v2155 = vld [vmem:[%s185 + $0x28] sm:$0xf]
        %v2156 = vld [vmem:[%s185 + $0x2c] sm:$0xf]
        %v2157 = vld [vmem:[%s185 + $0x30] sm:$0xf]
        %v2158 = vld [vmem:[%s185 + $0x34] sm:$0xf]
        %v2159 = vld [vmem:[%s185 + $0x38] sm:$0xf]
        %v2160 = vld [vmem:[%s185 + $0x3c] sm:$0xf]
        %v2161 = vld [vmem:[%s185 + $0x40] sm:$0xf]
        %v2174 = vunpack.c.l.b16 %v2150
        %v2175 = vunpack.c.l.b16 %v2151
        %v2176 = vunpack.c.l.b16 %v2152
        %v2177 = vunpack.c.l.b16 %v2153
        %v2178 = vunpack.c.l.b16 %v2154
        %v2179 = vunpack.c.l.b16 %v2155
        %v2180 = vunpack.c.l.b16 %v2156
        %v2181 = vunpack.c.l.b16 %v2157
        %v2182 = vunpack.c.l.b16 %v2158
        %v2183 = vunpack.c.l.b16 %v2159
        %v2184 = vunpack.c.l.b16 %v2160
        %v2185 = vunpack.c.l.b16 %v2161
        %v2186 = vpack.c.b16 %v2175, %v2174
        %v2187 = vpack.c.b16 %v2177, %v2176
        %v2188 = vpack.c.b16 %v2179, %v2178
        %v2189 = vpack.c.b16 %v2181, %v2180
        %v2190 = vpack.c.b16 %v2183, %v2182
        %v2191 = vpack.c.b16 %v2185, %v2184
        %2192 = vrot.lane.b32.xlu0 %v2186, 91
        %v2193 = vpop.permute.xlu0 %2192
        %2194 = vrot.lane.b32.xlu0 %v2187, 91
        %v2195 = vpop.permute.xlu0 %2194
        %2196 = vrot.lane.b32.xlu0 %v2188, 91
        %v2197 = vpop.permute.xlu0 %2196
        %2198 = vrot.lane.b32.xlu0 %v2189, 91
        %v2199 = vpop.permute.xlu0 %2198
        %2200 = vrot.lane.b32.xlu0 %v2190, 91
        %v2201 = vpop.permute.xlu0 %2200
        %2202 = vrot.lane.b32.xlu0 %v2191, 91
        %v2203 = vpop.permute.xlu0 %2202
        %vm2210 = vcmask 949976
        %2211 = vst.msk [vmem:[#allocation2 + $0x18] sm:$0xff] %vm2210, %v2193
        %2212 = vst.msk [vmem:[#allocation2 + $0x40] sm:$0xff] %vm2210, %v2195
        %2213 = vst.msk [vmem:[#allocation2 + $0x68] sm:$0xff] %vm2210, %v2197
        %2214 = vst.msk [vmem:[#allocation2 + $0x90] sm:$0xff] %vm2210, %v2199
        %2215 = vst.msk [vmem:[#allocation2 + $0xb8] sm:$0xff] %vm2210, %v2201
        %2216 = vst.msk [vmem:[#allocation2 + $0xe0] sm:$0xff] %vm2210, %v2203
        %v2217 = vld [vmem:[%s185 + $0x18] sm:$0xf]
        %v2218 = vld [vmem:[%s185 + $0x1c] sm:$0xf]
        %v2219 = vld [vmem:[%s185 + $0x20] sm:$0xf]
        %v2220 = vld [vmem:[%s185 + $0x24] sm:$0xf]
        %v2221 = vld [vmem:[%s185 + $0x28] sm:$0xf]
        %v2222 = vld [vmem:[%s185 + $0x2c] sm:$0xf]
        %v2223 = vld [vmem:[%s185 + $0x30] sm:$0xf]
        %v2224 = vld [vmem:[%s185 + $0x34] sm:$0xf]
        %v2225 = vld [vmem:[%s185 + $0x38] sm:$0xf]
        %v2226 = vld [vmem:[%s185 + $0x3c] sm:$0xf]
        %v2227 = vld [vmem:[%s185 + $0x40] sm:$0xf]
        %v2228 = vld [vmem:[%s185 + $0x44] sm:$0xf]
        %v2241 = vunpack.c.l.b16 %v2217
        %v2242 = vunpack.c.l.b16 %v2218
        %v2243 = vunpack.c.l.b16 %v2219
        %v2244 = vunpack.c.l.b16 %v2220
        %v2245 = vunpack.c.l.b16 %v2221
        %v2246 = vunpack.c.l.b16 %v2222
        %v2247 = vunpack.c.l.b16 %v2223
        %v2248 = vunpack.c.l.b16 %v2224
        %v2249 = vunpack.c.l.b16 %v2225
        %v2250 = vunpack.c.l.b16 %v2226
        %v2251 = vunpack.c.l.b16 %v2227
        %v2252 = vunpack.c.l.b16 %v2228
        %v2253 = vpack.c.b16 %v2242, %v2241
        %v2254 = vpack.c.b16 %v2244, %v2243
        %v2255 = vpack.c.b16 %v2246, %v2245
        %v2256 = vpack.c.b16 %v2248, %v2247
        %v2257 = vpack.c.b16 %v2250, %v2249
        %v2258 = vpack.c.b16 %v2252, %v2251
        %2259 = vrot.lane.b32.xlu0 %v2253, 116
        %v2260 = vpop.permute.xlu0 %2259
        %2261 = vrot.lane.b32.xlu0 %v2254, 116
        %v2262 = vpop.permute.xlu0 %2261
        %2263 = vrot.lane.b32.xlu0 %v2255, 116
        %v2264 = vpop.permute.xlu0 %2263
        %2265 = vrot.lane.b32.xlu0 %v2256, 116
        %v2266 = vpop.permute.xlu0 %2265
        %2267 = vrot.lane.b32.xlu0 %v2257, 116
        %v2268 = vpop.permute.xlu0 %2267
        %2269 = vrot.lane.b32.xlu0 %v2258, 116
        %v2270 = vpop.permute.xlu0 %2269
        %vm2277 = vcmask 1048480
        %2278 = vst.msk [vmem:[#allocation2 + $0x18] sm:$0xff] %vm2277, %v2260
        %vm2279 = vcmask 105472
        %2280 = vst.msk [vmem:[#allocation2 + $0x20] sm:$0xff] %vm2279, %v2260
        %2281 = vst.msk [vmem:[#allocation2 + $0x40] sm:$0xff] %vm2277, %v2262
        %2282 = vst.msk [vmem:[#allocation2 + $0x48] sm:$0xff] %vm2279, %v2262
        %2283 = vst.msk [vmem:[#allocation2 + $0x68] sm:$0xff] %vm2277, %v2264
        %2284 = vst.msk [vmem:[#allocation2 + $0x70] sm:$0xff] %vm2279, %v2264
        %2285 = vst.msk [vmem:[#allocation2 + $0x90] sm:$0xff] %vm2277, %v2266
        %2286 = vst.msk [vmem:[#allocation2 + $0x98] sm:$0xff] %vm2279, %v2266
        %2287 = vst.msk [vmem:[#allocation2 + $0xb8] sm:$0xff] %vm2277, %v2268
        %2288 = vst.msk [vmem:[#allocation2 + $0xc0] sm:$0xff] %vm2279, %v2268
        %2289 = vst.msk [vmem:[#allocation2 + $0xe0] sm:$0xff] %vm2277, %v2270
        %2290 = vst.msk [vmem:[#allocation2 + $0xe8] sm:$0xff] %vm2279, %v2270
        %v2291 = vld [vmem:[%s185 + $0x18] sm:$0xf]
        %v2292 = vld [vmem:[%s185 + $0x1c] sm:$0xf]
        %v2293 = vld [vmem:[%s185 + $0x20] sm:$0xf]
        %v2294 = vld [vmem:[%s185 + $0x24] sm:$0xf]
        %v2295 = vld [vmem:[%s185 + $0x28] sm:$0xf]
        %v2296 = vld [vmem:[%s185 + $0x2c] sm:$0xf]
        %v2297 = vld [vmem:[%s185 + $0x30] sm:$0xf]
        %v2298 = vld [vmem:[%s185 + $0x34] sm:$0xf]
        %v2299 = vld [vmem:[%s185 + $0x38] sm:$0xf]
        %v2300 = vld [vmem:[%s185 + $0x3c] sm:$0xf]
        %v2301 = vld [vmem:[%s185 + $0x40] sm:$0xf]
        %v2302 = vld [vmem:[%s185 + $0x44] sm:$0xf]
        %v2303 = vld [vmem:[%s185 + $0x48] sm:$0x1]
        %v2317 = vunpack.c.l.b16 %v2291
        %v2318 = vunpack.c.l.b16 %v2292
        %v2319 = vunpack.c.l.b16 %v2293
        %v2320 = vunpack.c.l.b16 %v2294
        %v2321 = vunpack.c.l.b16 %v2295
        %v2322 = vunpack.c.l.b16 %v2296
        %v2323 = vunpack.c.l.b16 %v2297
        %v2324 = vunpack.c.l.b16 %v2298
        %v2325 = vunpack.c.l.b16 %v2299
        %v2326 = vunpack.c.l.b16 %v2300
        %v2327 = vunpack.c.l.b16 %v2301
        %v2328 = vunpack.c.l.b16 %v2302
        %v2329 = vunpack.c.l.b16 %v2303
        %v2330 = vpack.c.b16 %v2318, %v2317
        %v2331 = vpack.c.b16 %v2320, %v2319
        %v2332 = vpack.c.b16 %v2322, %v2321
        %v2333 = vpack.c.b16 %v2324, %v2323
        %v2334 = vpack.c.b16 %v2326, %v2325
        %v2335 = vpack.c.b16 %v2328, %v2327
        %v2336 = vpack.c.b16 %v2329, %v2329
        %v2338 = vshrl.u32 %v2330, 16
        %v2340 = vshll.u32 %v2330, 16
        %v2342 = vrot.slane %v2340, 1
        %v2343 = vor.u32 %v2338, %v2342
        %v2345 = vshll.u32 %v2331, 16
        %v2347 = vrot.slane %v2345, 1
        %v2348 = vsel %vm318, %v2343, %v2347
        %v2349 = vshrl.u32 %v2331, 16
        %v2351 = vor.u32 %v2349, %v2347
        %v2353 = vshll.u32 %v2332, 16
        %v2355 = vrot.slane %v2353, 1
        %v2356 = vsel %vm318, %v2351, %v2355
        %v2357 = vshrl.u32 %v2332, 16
        %v2359 = vor.u32 %v2357, %v2355
        %v2361 = vshll.u32 %v2333, 16
        %v2363 = vrot.slane %v2361, 1
        %v2364 = vsel %vm318, %v2359, %v2363
        %v2365 = vshrl.u32 %v2333, 16
        %v2367 = vor.u32 %v2365, %v2363
        %v2369 = vshll.u32 %v2334, 16
        %v2371 = vrot.slane %v2369, 1
        %v2372 = vsel %vm318, %v2367, %v2371
        %v2373 = vshrl.u32 %v2334, 16
        %v2375 = vor.u32 %v2373, %v2371
        %v2377 = vshll.u32 %v2335, 16
        %v2379 = vrot.slane %v2377, 1
        %v2380 = vsel %vm318, %v2375, %v2379
        %v2381 = vshrl.u32 %v2335, 16
        %v2383 = vor.u32 %v2381, %v2379
        %v2385 = vshll.u32 %v2336, 16
        %v2387 = vrot.slane %v2385, 1
        %v2388 = vsel %vm318, %v2383, %v2387
        %2389 = vrot.lane.b32.xlu0 %v2348, 13
        %v2390 = vpop.permute.xlu0 %2389
        %2391 = vrot.lane.b32.xlu0 %v2356, 13
        %v2392 = vpop.permute.xlu0 %2391
        %2393 = vrot.lane.b32.xlu0 %v2364, 13
        %v2394 = vpop.permute.xlu0 %2393
        %2395 = vrot.lane.b32.xlu0 %v2372, 13
        %v2396 = vpop.permute.xlu0 %2395
        %2397 = vrot.lane.b32.xlu0 %v2380, 13
        %v2398 = vpop.permute.xlu0 %2397
        %2399 = vrot.lane.b32.xlu0 %v2388, 13
        %v2400 = vpop.permute.xlu0 %2399
        %vm2407 = vcmask 310376
        %2408 = vst.msk [vmem:[#allocation2 + $0x20] sm:$0xff] %vm2407, %v2390
        %2409 = vst.msk [vmem:[#allocation2 + $0x48] sm:$0xff] %vm2407, %v2392
        %2410 = vst.msk [vmem:[#allocation2 + $0x70] sm:$0xff] %vm2407, %v2394
        %2411 = vst.msk [vmem:[#allocation2 + $0x98] sm:$0xff] %vm2407, %v2396
        %2412 = vst.msk [vmem:[#allocation2 + $0xc0] sm:$0xff] %vm2407, %v2398
        %2413 = vst.msk [vmem:[#allocation2 + $0xe8] sm:$0xff] %vm2407, %v2400
        %v2414 = vld [vmem:[%s185 + $0x18] sm:$0xe]
        %v2415 = vld [vmem:[%s185 + $0x1c] sm:$0xf]
        %v2416 = vld [vmem:[%s185 + $0x20] sm:$0xf]
        %v2417 = vld [vmem:[%s185 + $0x24] sm:$0xf]
        %v2418 = vld [vmem:[%s185 + $0x28] sm:$0xf]
        %v2419 = vld [vmem:[%s185 + $0x2c] sm:$0xf]
        %v2420 = vld [vmem:[%s185 + $0x30] sm:$0xf]
        %v2421 = vld [vmem:[%s185 + $0x34] sm:$0xf]
        %v2422 = vld [vmem:[%s185 + $0x38] sm:$0xf]
        %v2423 = vld [vmem:[%s185 + $0x3c] sm:$0xf]
        %v2424 = vld [vmem:[%s185 + $0x40] sm:$0xf]
        %v2425 = vld [vmem:[%s185 + $0x44] sm:$0xf]
        %v2426 = vld [vmem:[%s185 + $0x48] sm:$0x1]
        %v2440 = vunpack.c.l.b16 %v2414
        %v2441 = vunpack.c.l.b16 %v2415
        %v2442 = vunpack.c.l.b16 %v2416
        %v2443 = vunpack.c.l.b16 %v2417
        %v2444 = vunpack.c.l.b16 %v2418
        %v2445 = vunpack.c.l.b16 %v2419
        %v2446 = vunpack.c.l.b16 %v2420
        %v2447 = vunpack.c.l.b16 %v2421
        %v2448 = vunpack.c.l.b16 %v2422
        %v2449 = vunpack.c.l.b16 %v2423
        %v2450 = vunpack.c.l.b16 %v2424
        %v2451 = vunpack.c.l.b16 %v2425
        %v2452 = vunpack.c.l.b16 %v2426
        %v2453 = vpack.c.b16 %v2441, %v2440
        %v2454 = vpack.c.b16 %v2443, %v2442
        %v2455 = vpack.c.b16 %v2445, %v2444
        %v2456 = vpack.c.b16 %v2447, %v2446
        %v2457 = vpack.c.b16 %v2449, %v2448
        %v2458 = vpack.c.b16 %v2451, %v2450
        %v2459 = vpack.c.b16 %v2452, %v2452
        %v2460 = vrot.slane %v2453, 1
        %v2461 = vrot.slane %v2454, 1
        %v2462 = vsel %vm442, %v2460, %v2461
        %v2463 = vrot.slane %v2455, 1
        %v2464 = vsel %vm442, %v2461, %v2463
        %v2465 = vrot.slane %v2456, 1
        %v2466 = vsel %vm442, %v2463, %v2465
        %v2467 = vrot.slane %v2457, 1
        %v2468 = vsel %vm442, %v2465, %v2467
        %v2469 = vrot.slane %v2458, 1
        %v2470 = vsel %vm442, %v2467, %v2469
        %v2471 = vrot.slane %v2459, 1
        %v2472 = vsel %vm442, %v2469, %v2471
        %2473 = vrot.lane.b32.xlu0 %v2462, 38
        %v2474 = vpop.permute.xlu0 %2473
        %2475 = vrot.lane.b32.xlu0 %v2464, 38
        %v2476 = vpop.permute.xlu0 %2475
        %2477 = vrot.lane.b32.xlu0 %v2466, 38
        %v2478 = vpop.permute.xlu0 %2477
        %2479 = vrot.lane.b32.xlu0 %v2468, 38
        %v2480 = vpop.permute.xlu0 %2479
        %2481 = vrot.lane.b32.xlu0 %v2470, 38
        %v2482 = vpop.permute.xlu0 %2481
        %2483 = vrot.lane.b32.xlu0 %v2472, 38
        %v2484 = vpop.permute.xlu0 %2483
        %vm2491 = vcmask 515376
        %2492 = vst.msk [vmem:[#allocation2 + $0x20] sm:$0xff] %vm2491, %v2474
        %2493 = vst.msk [vmem:[#allocation2 + $0x48] sm:$0xff] %vm2491, %v2476
        %2494 = vst.msk [vmem:[#allocation2 + $0x70] sm:$0xff] %vm2491, %v2478
        %2495 = vst.msk [vmem:[#allocation2 + $0x98] sm:$0xff] %vm2491, %v2480
        %2496 = vst.msk [vmem:[#allocation2 + $0xc0] sm:$0xff] %vm2491, %v2482
        %2497 = vst.msk [vmem:[#allocation2 + $0xe8] sm:$0xff] %vm2491, %v2484
        %v2498 = vld [vmem:[%s185 + $0x18] sm:$0xe]
        %v2499 = vld [vmem:[%s185 + $0x1c] sm:$0xf]
        %v2500 = vld [vmem:[%s185 + $0x20] sm:$0xf]
        %v2501 = vld [vmem:[%s185 + $0x24] sm:$0xf]
        %v2502 = vld [vmem:[%s185 + $0x28] sm:$0xf]
        %v2503 = vld [vmem:[%s185 + $0x2c] sm:$0xf]
        %v2504 = vld [vmem:[%s185 + $0x30] sm:$0xf]
        %v2505 = vld [vmem:[%s185 + $0x34] sm:$0xf]
        %v2506 = vld [vmem:[%s185 + $0x38] sm:$0xf]
        %v2507 = vld [vmem:[%s185 + $0x3c] sm:$0xf]
        %v2508 = vld [vmem:[%s185 + $0x40] sm:$0xf]
        %v2509 = vld [vmem:[%s185 + $0x44] sm:$0xf]
        %v2510 = vld [vmem:[%s185 + $0x48] sm:$0x3]
        %v2524 = vunpack.c.l.b16 %v2498
        %v2525 = vunpack.c.l.b16 %v2499
        %v2526 = vunpack.c.l.b16 %v2500
        %v2527 = vunpack.c.l.b16 %v2501
        %v2528 = vunpack.c.l.b16 %v2502
        %v2529 = vunpack.c.l.b16 %v2503
        %v2530 = vunpack.c.l.b16 %v2504
        %v2531 = vunpack.c.l.b16 %v2505
        %v2532 = vunpack.c.l.b16 %v2506
        %v2533 = vunpack.c.l.b16 %v2507
        %v2534 = vunpack.c.l.b16 %v2508
        %v2535 = vunpack.c.l.b16 %v2509
        %v2536 = vunpack.c.l.b16 %v2510
        %v2537 = vpack.c.b16 %v2525, %v2524
        %v2538 = vpack.c.b16 %v2527, %v2526
        %v2539 = vpack.c.b16 %v2529, %v2528
        %v2540 = vpack.c.b16 %v2531, %v2530
        %v2541 = vpack.c.b16 %v2533, %v2532
        %v2542 = vpack.c.b16 %v2535, %v2534
        %v2543 = vpack.c.b16 %v2536, %v2536
        %v2545 = vshrl.u32 %v2537, 16
        %v2547 = vrot.slane %v2545, 1
        %v2548 = vshll.u32 %v2537, 16
        %v2550 = vrot.slane %v2548, 2
        %v2551 = vor.u32 %v2547, %v2550
        %v2553 = vshrl.u32 %v2538, 16
        %v2555 = vrot.slane %v2553, 1
        %v2556 = vshll.u32 %v2538, 16
        %v2558 = vrot.slane %v2556, 2
        %v2559 = vor.u32 %v2555, %v2558
        %v2560 = vsel %vm527, %v2551, %v2559
        %v2562 = vshrl.u32 %v2539, 16
        %v2564 = vrot.slane %v2562, 1
        %v2565 = vshll.u32 %v2539, 16
        %v2567 = vrot.slane %v2565, 2
        %v2568 = vor.u32 %v2564, %v2567
        %v2569 = vsel %vm527, %v2559, %v2568
        %v2571 = vshrl.u32 %v2540, 16
        %v2573 = vrot.slane %v2571, 1
        %v2574 = vshll.u32 %v2540, 16
        %v2576 = vrot.slane %v2574, 2
        %v2577 = vor.u32 %v2573, %v2576
        %v2578 = vsel %vm527, %v2568, %v2577
        %v2580 = vshrl.u32 %v2541, 16
        %v2582 = vrot.slane %v2580, 1
        %v2583 = vshll.u32 %v2541, 16
        %v2585 = vrot.slane %v2583, 2
        %v2586 = vor.u32 %v2582, %v2585
        %v2587 = vsel %vm527, %v2577, %v2586
        %v2589 = vshrl.u32 %v2542, 16
        %v2591 = vrot.slane %v2589, 1
        %v2592 = vshll.u32 %v2542, 16
        %v2594 = vrot.slane %v2592, 2
        %v2595 = vor.u32 %v2591, %v2594
        %v2596 = vsel %vm527, %v2586, %v2595
        %v2598 = vshrl.u32 %v2543, 16
        %v2600 = vrot.slane %v2598, 1
        %v2601 = vshll.u32 %v2543, 16
        %v2603 = vrot.slane %v2601, 2
        %v2604 = vor.u32 %v2600, %v2603
        %v2605 = vsel %vm527, %v2595, %v2604
        %2606 = vrot.lane.b32.xlu0 %v2560, 63
        %v2607 = vpop.permute.xlu0 %2606
        %2608 = vrot.lane.b32.xlu0 %v2569, 63
        %v2609 = vpop.permute.xlu0 %2608
        %2610 = vrot.lane.b32.xlu0 %v2578, 63
        %v2611 = vpop.permute.xlu0 %2610
        %2612 = vrot.lane.b32.xlu0 %v2587, 63
        %v2613 = vpop.permute.xlu0 %2612
        %2614 = vrot.lane.b32.xlu0 %v2596, 63
        %v2615 = vpop.permute.xlu0 %2614
        %2616 = vrot.lane.b32.xlu0 %v2605, 63
        %v2617 = vpop.permute.xlu0 %2616
        %vm2624 = vcmask 720376
        %2625 = vst.msk [vmem:[#allocation2 + $0x20] sm:$0xff] %vm2624, %v2607
        %2626 = vst.msk [vmem:[#allocation2 + $0x48] sm:$0xff] %vm2624, %v2609
        %2627 = vst.msk [vmem:[#allocation2 + $0x70] sm:$0xff] %vm2624, %v2611
        %2628 = vst.msk [vmem:[#allocation2 + $0x98] sm:$0xff] %vm2624, %v2613
        %2629 = vst.msk [vmem:[#allocation2 + $0xc0] sm:$0xff] %vm2624, %v2615
        %2630 = vst.msk [vmem:[#allocation2 + $0xe8] sm:$0xff] %vm2624, %v2617
        %v2631 = vld [vmem:[%s185 + $0x18] sm:$0xc]
        %v2632 = vld [vmem:[%s185 + $0x1c] sm:$0xf]
        %v2633 = vld [vmem:[%s185 + $0x20] sm:$0xf]
        %v2634 = vld [vmem:[%s185 + $0x24] sm:$0xf]
        %v2635 = vld [vmem:[%s185 + $0x28] sm:$0xf]
        %v2636 = vld [vmem:[%s185 + $0x2c] sm:$0xf]
        %v2637 = vld [vmem:[%s185 + $0x30] sm:$0xf]
        %v2638 = vld [vmem:[%s185 + $0x34] sm:$0xf]
        %v2639 = vld [vmem:[%s185 + $0x38] sm:$0xf]
        %v2640 = vld [vmem:[%s185 + $0x3c] sm:$0xf]
        %v2641 = vld [vmem:[%s185 + $0x40] sm:$0xf]
        %v2642 = vld [vmem:[%s185 + $0x44] sm:$0xf]
        %v2643 = vld [vmem:[%s185 + $0x48] sm:$0x3]
        %v2657 = vunpack.c.l.b16 %v2631
        %v2658 = vunpack.c.l.b16 %v2632
        %v2659 = vunpack.c.l.b16 %v2633
        %v2660 = vunpack.c.l.b16 %v2634
        %v2661 = vunpack.c.l.b16 %v2635
        %v2662 = vunpack.c.l.b16 %v2636
        %v2663 = vunpack.c.l.b16 %v2637
        %v2664 = vunpack.c.l.b16 %v2638
        %v2665 = vunpack.c.l.b16 %v2639
        %v2666 = vunpack.c.l.b16 %v2640
        %v2667 = vunpack.c.l.b16 %v2641
        %v2668 = vunpack.c.l.b16 %v2642
        %v2669 = vunpack.c.l.b16 %v2643
        %v2670 = vpack.c.b16 %v2658, %v2657
        %v2671 = vpack.c.b16 %v2660, %v2659
        %v2672 = vpack.c.b16 %v2662, %v2661
        %v2673 = vpack.c.b16 %v2664, %v2663
        %v2674 = vpack.c.b16 %v2666, %v2665
        %v2675 = vpack.c.b16 %v2668, %v2667
        %v2676 = vpack.c.b16 %v2669, %v2669
        %v2677 = vrot.slane %v2670, 2
        %v2678 = vrot.slane %v2671, 2
        %v2679 = vsel %vm661, %v2677, %v2678
        %v2680 = vrot.slane %v2672, 2
        %v2681 = vsel %vm661, %v2678, %v2680
        %v2682 = vrot.slane %v2673, 2
        %v2683 = vsel %vm661, %v2680, %v2682
        %v2684 = vrot.slane %v2674, 2
        %v2685 = vsel %vm661, %v2682, %v2684
        %v2686 = vrot.slane %v2675, 2
        %v2687 = vsel %vm661, %v2684, %v2686
        %v2688 = vrot.slane %v2676, 2
        %v2689 = vsel %vm661, %v2686, %v2688
        %2690 = vrot.lane.b32.xlu0 %v2679, 88
        %v2691 = vpop.permute.xlu0 %2690
        %2692 = vrot.lane.b32.xlu0 %v2681, 88
        %v2693 = vpop.permute.xlu0 %2692
        %2694 = vrot.lane.b32.xlu0 %v2683, 88
        %v2695 = vpop.permute.xlu0 %2694
        %2696 = vrot.lane.b32.xlu0 %v2685, 88
        %v2697 = vpop.permute.xlu0 %2696
        %2698 = vrot.lane.b32.xlu0 %v2687, 88
        %v2699 = vpop.permute.xlu0 %2698
        %2700 = vrot.lane.b32.xlu0 %v2689, 88
        %v2701 = vpop.permute.xlu0 %2700
        %vm2708 = vcmask 925376
        %2709 = vst.msk [vmem:[#allocation2 + $0x20] sm:$0xff] %vm2708, %v2691
        %2710 = vst.msk [vmem:[#allocation2 + $0x48] sm:$0xff] %vm2708, %v2693
        %2711 = vst.msk [vmem:[#allocation2 + $0x70] sm:$0xff] %vm2708, %v2695
        %2712 = vst.msk [vmem:[#allocation2 + $0x98] sm:$0xff] %vm2708, %v2697
        %2713 = vst.msk [vmem:[#allocation2 + $0xc0] sm:$0xff] %vm2708, %v2699
        %2714 = vst.msk [vmem:[#allocation2 + $0xe8] sm:$0xff] %vm2708, %v2701
        %v2715 = vld [vmem:[#allocation2] sm:$0xff]
        %v2716 = vld [vmem:[#allocation2 + $0x8] sm:$0xff]
        %v2717 = vld [vmem:[#allocation2 + $0x10] sm:$0xff]
        %v2718 = vld [vmem:[#allocation2 + $0x18] sm:$0xff]
        %v2719 = vld [vmem:[#allocation2 + $0x20] sm:$0xff]
        %v2720 = vld [vmem:[#allocation2 + $0x28] sm:$0xff]
        %v2721 = vld [vmem:[#allocation2 + $0x30] sm:$0xff]
        %v2722 = vld [vmem:[#allocation2 + $0x38] sm:$0xff]
        %v2723 = vld [vmem:[#allocation2 + $0x40] sm:$0xff]
        %v2724 = vld [vmem:[#allocation2 + $0x48] sm:$0xff]
        %v2725 = vld [vmem:[#allocation2 + $0x50] sm:$0xff]
        %v2726 = vld [vmem:[#allocation2 + $0x58] sm:$0xff]
        %v2727 = vld [vmem:[#allocation2 + $0x60] sm:$0xff]
        %v2728 = vld [vmem:[#allocation2 + $0x68] sm:$0xff]
        %v2729 = vld [vmem:[#allocation2 + $0x70] sm:$0xff]
        %v2730 = vld [vmem:[#allocation2 + $0x78] sm:$0xff]
        %v2731 = vld [vmem:[#allocation2 + $0x80] sm:$0xff]
        %v2732 = vld [vmem:[#allocation2 + $0x88] sm:$0xff]
        %v2733 = vld [vmem:[#allocation2 + $0x90] sm:$0xff]
        %v2734 = vld [vmem:[#allocation2 + $0x98] sm:$0xff]
        %v2735 = vld [vmem:[#allocation2 + $0xa0] sm:$0xff]
        %v2736 = vld [vmem:[#allocation2 + $0xa8] sm:$0xff]
        %v2737 = vld [vmem:[#allocation2 + $0xb0] sm:$0xff]
        %v2738 = vld [vmem:[#allocation2 + $0xb8] sm:$0xff]
        %v2739 = vld [vmem:[#allocation2 + $0xc0] sm:$0xff]
        %v2740 = vld [vmem:[#allocation2 + $0xc8] sm:$0xff]
        %v2741 = vld [vmem:[#allocation2 + $0xd0] sm:$0xff]
        %v2742 = vld [vmem:[#allocation2 + $0xd8] sm:$0xff]
        %v2743 = vld [vmem:[#allocation2 + $0xe0] sm:$0xff]
        %v2744 = vld [vmem:[#allocation2 + $0xe8] sm:$0xff]
        %v2745 = vld [vmem:[#allocation6] sm:$0xf]
        %v2746 = vld [vmem:[#allocation6 + $0x4] sm:$0xf]
        %v2747 = vld [vmem:[#allocation6 + $0x8] sm:$0xf]
        %v2748 = vld [vmem:[#allocation6 + $0xc] sm:$0xf]
        %v2749 = vld [vmem:[#allocation6 + $0x10] sm:$0xf]
        %v2750 = vld [vmem:[#allocation6 + $0x14] sm:$0xf]
        %v2751 = vld [vmem:[#allocation6 + $0x18] sm:$0xf]
        %v2752 = vld [vmem:[#allocation6 + $0x1c] sm:$0xf]
        %v2753 = vld [vmem:[#allocation6 + $0x20] sm:$0xf]
        %v2754 = vld [vmem:[#allocation6 + $0x24] sm:$0xf]
        %v2755 = vld [vmem:[#allocation6 + $0x28] sm:$0xf]
        %v2756 = vld [vmem:[#allocation6 + $0x2c] sm:$0xf]
        %v2757 = vld [vmem:[#allocation6 + $0x30] sm:$0xf]
        %v2758 = vld [vmem:[#allocation6 + $0x34] sm:$0xf]
        %v2759 = vld [vmem:[#allocation6 + $0x38] sm:$0xf]
        %v2760 = vld [vmem:[#allocation6 + $0x3c] sm:$0xf]
        %v2761 = vld [vmem:[#allocation6 + $0x40] sm:$0xf]
        %v2762 = vld [vmem:[#allocation6 + $0x44] sm:$0xf]
        %v2763 = vld [vmem:[#allocation6 + $0x48] sm:$0xf]
        %v2764 = vld [vmem:[#allocation6 + $0x4c] sm:$0xf]
        %v2765 = vld [vmem:[#allocation6 + $0x50] sm:$0xf]
        %v2766 = vld [vmem:[#allocation6 + $0x54] sm:$0xf]
        %v2767 = vld [vmem:[#allocation6 + $0x58] sm:$0xf]
        %v2768 = vld [vmem:[#allocation6 + $0x5c] sm:$0xf]
        %v2769 = vld [vmem:[#allocation6 + $0x60] sm:$0xf]
        %v2770 = vld [vmem:[#allocation6 + $0x64] sm:$0xf]
        %v2771 = vld [vmem:[#allocation6 + $0x68] sm:$0xf]
        %v2772 = vld [vmem:[#allocation6 + $0x6c] sm:$0xf]
        %v2773 = vld [vmem:[#allocation6 + $0x70] sm:$0xf]
        %v2774 = vld [vmem:[#allocation6 + $0x74] sm:$0xf]
        %v2775 = vld [vmem:[#allocation6 + $0x78] sm:$0xf]
        %v2776 = vld [vmem:[#allocation6 + $0x7c] sm:$0xf]
        %v2777 = vld [vmem:[#allocation6 + $0x80] sm:$0xf]
        %v2778 = vld [vmem:[#allocation6 + $0x84] sm:$0xf]
        %v2779 = vld [vmem:[#allocation6 + $0x88] sm:$0xf]
        %v2780 = vld [vmem:[#allocation6 + $0x8c] sm:$0xf]
        %v2781 = vld [vmem:[#allocation6 + $0x90] sm:$0xf]
        %v2782 = vld [vmem:[#allocation6 + $0x94] sm:$0xf]
        %v2783 = vld [vmem:[#allocation6 + $0x98] sm:$0xf]
        %v2784 = vld [vmem:[#allocation6 + $0x9c] sm:$0xf]
        %v2785 = vld [vmem:[#allocation6 + $0xa0] sm:$0xf]
        %v2786 = vld [vmem:[#allocation6 + $0xa4] sm:$0xf]
        %v2787 = vld [vmem:[#allocation6 + $0xa8] sm:$0xf]
        %v2788 = vld [vmem:[#allocation6 + $0xac] sm:$0xf]
        %v2789 = vld [vmem:[#allocation6 + $0xb0] sm:$0xf]
        %v2790 = vld [vmem:[#allocation6 + $0xb4] sm:$0xf]
        %v2791 = vld [vmem:[#allocation6 + $0xb8] sm:$0xf]
        %v2792 = vld [vmem:[#allocation6 + $0xbc] sm:$0xf]
        %v2793 = vld [vmem:[#allocation6 + $0xc0] sm:$0xf]
        %v2794 = vld [vmem:[#allocation6 + $0xc4] sm:$0xf]
        %v2795 = vld [vmem:[#allocation6 + $0xc8] sm:$0xf]
        %v2796 = vld [vmem:[#allocation6 + $0xcc] sm:$0xf]
        %v2797 = vld [vmem:[#allocation6 + $0xd0] sm:$0xf]
        %v2798 = vld [vmem:[#allocation6 + $0xd4] sm:$0xf]
        %v2799 = vld [vmem:[#allocation6 + $0xd8] sm:$0xf]
        %v2800 = vld [vmem:[#allocation6 + $0xdc] sm:$0xf]
        %v2801 = vld [vmem:[#allocation6 + $0xe0] sm:$0xf]
        %v2802 = vld [vmem:[#allocation6 + $0xe4] sm:$0xf]
        %v2803 = vld [vmem:[#allocation6 + $0xe8] sm:$0xf]
        %v2804 = vld [vmem:[#allocation6 + $0xec] sm:$0xf]
        %v2805 = vld [vmem:[#allocation6 + $0xf0] sm:$0xf]
        %v2806 = vld [vmem:[#allocation6 + $0xf4] sm:$0xf]
        %v2807 = vld [vmem:[#allocation6 + $0xf8] sm:$0xf]
        %v2808 = vld [vmem:[#allocation6 + $0xfc] sm:$0xf]
        %v2809 = vld [vmem:[#allocation6 + $0x100] sm:$0xf]
        %v2810 = vld [vmem:[#allocation6 + $0x104] sm:$0xf]
        %v2811 = vld [vmem:[#allocation6 + $0x108] sm:$0xf]
        %v2812 = vld [vmem:[#allocation6 + $0x10c] sm:$0xf]
        %v2813 = vld [vmem:[#allocation6 + $0x110] sm:$0xf]
        %v2814 = vld [vmem:[#allocation6 + $0x114] sm:$0xf]
        %v2815 = vld [vmem:[#allocation6 + $0x118] sm:$0xf]
        %v2816 = vld [vmem:[#allocation6 + $0x11c] sm:$0xf]
        %v2817 = vld [vmem:[#allocation6 + $0x120] sm:$0xf]
        %v2818 = vld [vmem:[#allocation6 + $0x124] sm:$0xf]
        %v2819 = vld [vmem:[#allocation6 + $0x128] sm:$0xf]
        %v2820 = vld [vmem:[#allocation6 + $0x12c] sm:$0xf]
        %v2821 = vld [vmem:[#allocation6 + $0x130] sm:$0xf]
        %v2822 = vld [vmem:[#allocation6 + $0x134] sm:$0xf]
        %v2823 = vld [vmem:[#allocation6 + $0x138] sm:$0x1]
        %v2824 = vld [vmem:[#allocation8] sm:$0x1]
        %v2826 = vlaneseq
        %v2827 = vshrl.u32 %v2826, 7
        %v2828 = vsub.s32 0, %v2827
        %v2829 = vrot.slane %v2824, %v2828
        %v2910 = vunpack.c.l.b16 %v2745
        %v2911 = vunpack.c.l.b16 %v2746
        %v2912 = vunpack.c.l.b16 %v2747
        %v2913 = vunpack.c.l.b16 %v2748
        %v2914 = vunpack.c.l.b16 %v2749
        %v2915 = vunpack.c.l.b16 %v2750
        %v2916 = vunpack.c.l.b16 %v2751
        %v2917 = vunpack.c.l.b16 %v2752
        %v2918 = vunpack.c.l.b16 %v2753
        %v2919 = vunpack.c.l.b16 %v2754
        %v2920 = vunpack.c.l.b16 %v2755
        %v2921 = vunpack.c.l.b16 %v2756
        %v2922 = vunpack.c.l.b16 %v2757
        %v2923 = vunpack.c.l.b16 %v2758
        %v2924 = vunpack.c.l.b16 %v2759
        %v2925 = vunpack.c.l.b16 %v2760
        %v2926 = vunpack.c.l.b16 %v2761
        %v2927 = vunpack.c.l.b16 %v2762
        %v2928 = vunpack.c.l.b16 %v2763
        %v2929 = vunpack.c.l.b16 %v2764
        %v2930 = vunpack.c.l.b16 %v2765
        %v2931 = vunpack.c.l.b16 %v2766
        %v2932 = vunpack.c.l.b16 %v2767
        %v2933 = vunpack.c.l.b16 %v2768
        %v2934 = vunpack.c.l.b16 %v2769
        %v2935 = vunpack.c.l.b16 %v2770
        %v2936 = vunpack.c.l.b16 %v2771
        %v2937 = vunpack.c.l.b16 %v2772
        %v2938 = vunpack.c.l.b16 %v2773
        %v2939 = vunpack.c.l.b16 %v2774
        %v2940 = vunpack.c.l.b16 %v2775
        %v2941 = vunpack.c.l.b16 %v2776
        %v2942 = vunpack.c.l.b16 %v2777
        %v2943 = vunpack.c.l.b16 %v2778
        %v2944 = vunpack.c.l.b16 %v2779
        %v2945 = vunpack.c.l.b16 %v2780
        %v2946 = vunpack.c.l.b16 %v2781
        %v2947 = vunpack.c.l.b16 %v2782
        %v2948 = vunpack.c.l.b16 %v2783
        %v2949 = vunpack.c.l.b16 %v2784
        %v2950 = vunpack.c.l.b16 %v2785
        %v2951 = vunpack.c.l.b16 %v2786
        %v2952 = vunpack.c.l.b16 %v2787
        %v2953 = vunpack.c.l.b16 %v2788
        %v2954 = vunpack.c.l.b16 %v2789
        %v2955 = vunpack.c.l.b16 %v2790
        %v2956 = vunpack.c.l.b16 %v2791
        %v2957 = vunpack.c.l.b16 %v2792
        %v2958 = vunpack.c.l.b16 %v2793
        %v2959 = vunpack.c.l.b16 %v2794
        %v2960 = vunpack.c.l.b16 %v2795
        %v2961 = vunpack.c.l.b16 %v2796
        %v2962 = vunpack.c.l.b16 %v2797
        %v2963 = vunpack.c.l.b16 %v2798
        %v2964 = vunpack.c.l.b16 %v2799
        %v2965 = vunpack.c.l.b16 %v2800
        %v2966 = vunpack.c.l.b16 %v2801
        %v2967 = vunpack.c.l.b16 %v2802
        %v2968 = vunpack.c.l.b16 %v2803
        %v2969 = vunpack.c.l.b16 %v2804
        %v2970 = vunpack.c.l.b16 %v2805
        %v2971 = vunpack.c.l.b16 %v2806
        %v2972 = vunpack.c.l.b16 %v2807
        %v2973 = vunpack.c.l.b16 %v2808
        %v2974 = vunpack.c.l.b16 %v2809
        %v2975 = vunpack.c.l.b16 %v2810
        %v2976 = vunpack.c.l.b16 %v2811
        %v2977 = vunpack.c.l.b16 %v2812
        %v2978 = vunpack.c.l.b16 %v2813
        %v2979 = vunpack.c.l.b16 %v2814
        %v2980 = vunpack.c.l.b16 %v2815
        %v2981 = vunpack.c.l.b16 %v2816
        %v2982 = vunpack.c.l.b16 %v2817
        %v2983 = vunpack.c.l.b16 %v2818
        %v2984 = vunpack.c.l.b16 %v2819
        %v2985 = vunpack.c.l.b16 %v2820
        %v2986 = vunpack.c.l.b16 %v2821
        %v2987 = vunpack.c.l.b16 %v2822
        %v2988 = vunpack.c.l.b16 %v2823
        %v2989 = vpack.c.b16 %v2911, %v2910
        %v2990 = vpack.c.b16 %v2913, %v2912
        %v2991 = vpack.c.b16 %v2915, %v2914
        %v2992 = vpack.c.b16 %v2917, %v2916
        %v2993 = vpack.c.b16 %v2919, %v2918
        %v2994 = vpack.c.b16 %v2921, %v2920
        %v2995 = vpack.c.b16 %v2923, %v2922
        %v2996 = vpack.c.b16 %v2925, %v2924
        %v2997 = vpack.c.b16 %v2927, %v2926
        %v2998 = vpack.c.b16 %v2929, %v2928
        %v2999 = vpack.c.b16 %v2931, %v2930
        %v3000 = vpack.c.b16 %v2933, %v2932
        %v3001 = vpack.c.b16 %v2935, %v2934
        %v3002 = vpack.c.b16 %v2937, %v2936
        %v3003 = vpack.c.b16 %v2939, %v2938
        %v3004 = vpack.c.b16 %v2941, %v2940
        %v3005 = vpack.c.b16 %v2943, %v2942
        %v3006 = vpack.c.b16 %v2945, %v2944
        %v3007 = vpack.c.b16 %v2947, %v2946
        %v3008 = vpack.c.b16 %v2949, %v2948
        %v3009 = vpack.c.b16 %v2951, %v2950
        %v3010 = vpack.c.b16 %v2953, %v2952
        %v3011 = vpack.c.b16 %v2955, %v2954
        %v3012 = vpack.c.b16 %v2957, %v2956
        %v3013 = vpack.c.b16 %v2959, %v2958
        %v3014 = vpack.c.b16 %v2961, %v2960
        %v3015 = vpack.c.b16 %v2963, %v2962
        %v3016 = vpack.c.b16 %v2965, %v2964
        %v3017 = vpack.c.b16 %v2967, %v2966
        %v3018 = vpack.c.b16 %v2969, %v2968
        %v3019 = vpack.c.b16 %v2971, %v2970
        %v3020 = vpack.c.b16 %v2973, %v2972
        %v3021 = vpack.c.b16 %v2975, %v2974
        %v3022 = vpack.c.b16 %v2977, %v2976
        %v3023 = vpack.c.b16 %v2979, %v2978
        %v3024 = vpack.c.b16 %v2981, %v2980
        %v3025 = vpack.c.b16 %v2983, %v2982
        %v3026 = vpack.c.b16 %v2985, %v2984
        %v3027 = vpack.c.b16 %v2987, %v2986
        %v3028 = vpack.c.b16 %v2988, %v2988
        %vm3068 = vcmask 924672
        %v3070 = vsel %vm3068, %v2719, 0
        %v3073 = vsel %vm3068, %v2724, 0
        %v3076 = vsel %vm3068, %v2729, 0
        %v3079 = vsel %vm3068, %v2734, 0
        %v3082 = vsel %vm3068, %v2739, 0
        %v3085 = vsel %vm3068, %v2744, 0
        %vm3087 = vcmask 1040384
        %v3088 = vsel 0, 4294967295, 65535
        %v3089 = vsel %vm3087, %v3088, 0
        %v3091 = vand.u32 %v3028, %v3089
        %3093 = vmatprep.subr.bf16.mxu0 0
        %3094 = vmatpush1.bf16.msra.mxu0 %v2989
        %3095 = vmatprep.subr.bf16.mxu0 0
        %3096 = vmatpush1.bf16.msra.mxu0 %v2990
        %3097 = vmatprep.subr.bf16.mxu0 0
        %3098 = vmatpush1.bf16.msra.mxu0 %v2991
        %3099 = vmatprep.subr.bf16.mxu0 0
        %3100 = vmatpush1.bf16.msra.mxu0 %v2992
        %3101 = vmatprep.subr.bf16.mxu0 0
        %3102 = vmatpush1.bf16.msra.mxu0 %v2993
        %3103 = vmatprep.subr.bf16.mxu0 0
        %3104 = vmatpush1.bf16.msra.mxu0 %v2994
        %3105 = vmatprep.subr.bf16.mxu0 0
        %3106 = vmatpush1.bf16.msra.mxu0 %v2995
        %3107 = vmatprep.subr.bf16.mxu0 0
        %3108 = vmatpush1.bf16.msra.mxu0 %v2996
        %3109 = vmatprep.subr.bf16.mxu0 0
        %3110 = vmatpush1.bf16.msra.mxu0 %v2997
        %3111 = vmatprep.subr.bf16.mxu0 0
        %3112 = vmatpush1.bf16.msra.mxu0 %v2998
        %3113 = vmatprep.subr.bf16.mxu0 0
        %3114 = vmatpush1.bf16.msra.mxu0 %v2999
        %3115 = vmatprep.subr.bf16.mxu0 0
        %3116 = vmatpush1.bf16.msra.mxu0 %v3000
        %3117 = vmatprep.subr.bf16.mxu0 0
        %3118 = vmatpush1.bf16.msra.mxu0 %v3001
        %3119 = vmatprep.subr.bf16.mxu0 0
        %3120 = vmatpush1.bf16.msra.mxu0 %v3002
        %3121 = vmatprep.subr.bf16.mxu0 0
        %3122 = vmatpush1.bf16.msra.mxu0 %v3003
        %3123 = vmatprep.subr.bf16.mxu0 0
        %3124 = vmatpush1.bf16.msra.mxu0 %v3004
        %3125 = vmatprep.mubr.bf16.mxu0 %v2716
        %3126 = vmatmul.mubr.bf16.gmra.mrb[0].mxu0 %v2715
        %v3127 = vpop.f32.mrb[0].mxu0
        %v3128 = vadd.f32 %v2829, %v3127
        %v3129 = vpop.f32.mrb[0].mxu0
        %v3130 = vpop.f32.mrb[0].mxu0
        %v3131 = vadd.f32 %v2829, %v3130
        %v3132 = vpop.f32.mrb[0].mxu0
        %3133 = vmatprep.mubr.bf16.mxu0 %v2721
        %3134 = vmatmul.mubr.bf16.gmra.mrb[0].mxu0 %v2720
        %v3135 = vpop.f32.mrb[0].mxu0
        %v3136 = vadd.f32 %v2829, %v3135
        %v3137 = vpop.f32.mrb[0].mxu0
        %v3138 = vpop.f32.mrb[0].mxu0
        %v3139 = vadd.f32 %v2829, %v3138
        %v3140 = vpop.f32.mrb[0].mxu0
        %3141 = vmatprep.mubr.bf16.mxu0 %v2726
        %3142 = vmatmul.mubr.bf16.gmra.mrb[0].mxu0 %v2725
        %v3143 = vpop.f32.mrb[0].mxu0
        %v3144 = vadd.f32 %v2829, %v3143
        %v3145 = vpop.f32.mrb[0].mxu0
        %v3146 = vpop.f32.mrb[0].mxu0
        %v3147 = vadd.f32 %v2829, %v3146
        %v3148 = vpop.f32.mrb[0].mxu0
        %3149 = vmatprep.mubr.bf16.mxu0 %v2731
        %3150 = vmatmul.mubr.bf16.gmra.mrb[0].mxu0 %v2730
        %v3151 = vpop.f32.mrb[0].mxu0
        %v3152 = vadd.f32 %v2829, %v3151
        %v3153 = vpop.f32.mrb[0].mxu0
        %v3154 = vpop.f32.mrb[0].mxu0
        %v3155 = vadd.f32 %v2829, %v3154
        %v3156 = vpop.f32.mrb[0].mxu0
        %3157 = vmatprep.mubr.bf16.mxu0 %v2736
        %3158 = vmatmul.mubr.bf16.gmra.mrb[0].mxu0 %v2735
        %v3159 = vpop.f32.mrb[0].mxu0
        %v3160 = vadd.f32 %v2829, %v3159
        %v3161 = vpop.f32.mrb[0].mxu0
        %v3162 = vpop.f32.mrb[0].mxu0
        %v3163 = vadd.f32 %v2829, %v3162
        %v3164 = vpop.f32.mrb[0].mxu0
        %3165 = vmatprep.mubr.bf16.mxu0 %v2741
        %3166 = vmatmul.mubr.bf16.gmra.mrb[0].mxu0 %v2740
        %v3167 = vpop.f32.mrb[0].mxu0
        %v3168 = vadd.f32 %v2829, %v3167
        %v3169 = vpop.f32.mrb[0].mxu0
        %v3170 = vpop.f32.mrb[0].mxu0
        %v3171 = vadd.f32 %v2829, %v3170
        %v3172 = vpop.f32.mrb[0].mxu0
        %3173 = vdwg.mxu0
        %3174 = vmatprep.subr.bf16.mxu0 0
        %3175 = vmatpush1.bf16.msra.mxu0 %v3005
        %3176 = vmatprep.subr.bf16.mxu0 0
        %3177 = vmatpush1.bf16.msra.mxu0 %v3006
        %3178 = vmatprep.subr.bf16.mxu0 0
        %3179 = vmatpush1.bf16.msra.mxu0 %v3007
        %3180 = vmatprep.subr.bf16.mxu0 0
        %3181 = vmatpush1.bf16.msra.mxu0 %v3008
        %3182 = vmatprep.subr.bf16.mxu0 0
        %3183 = vmatpush1.bf16.msra.mxu0 %v3009
        %3184 = vmatprep.subr.bf16.mxu0 0
        %3185 = vmatpush1.bf16.msra.mxu0 %v3010
        %3186 = vmatprep.subr.bf16.mxu0 0
        %3187 = vmatpush1.bf16.msra.mxu0 %v3011
        %3188 = vmatprep.subr.bf16.mxu0 0
        %3189 = vmatpush1.bf16.msra.mxu0 %v3012
        %3190 = vmatprep.subr.bf16.mxu0 0
        %3191 = vmatpush1.bf16.msra.mxu0 %v3013
        %3192 = vmatprep.subr.bf16.mxu0 0
        %3193 = vmatpush1.bf16.msra.mxu0 %v3014
        %3194 = vmatprep.subr.bf16.mxu0 0
        %3195 = vmatpush1.bf16.msra.mxu0 %v3015
        %3196 = vmatprep.subr.bf16.mxu0 0
        %3197 = vmatpush1.bf16.msra.mxu0 %v3016
        %3198 = vmatprep.subr.bf16.mxu0 0
        %3199 = vmatpush1.bf16.msra.mxu0 %v3017
        %3200 = vmatprep.subr.bf16.mxu0 0
        %3201 = vmatpush1.bf16.msra.mxu0 %v3018
        %3202 = vmatprep.subr.bf16.mxu0 0
        %3203 = vmatpush1.bf16.msra.mxu0 %v3019
        %3204 = vmatprep.subr.bf16.mxu0 0
        %3205 = vmatpush1.bf16.msra.mxu0 %v3020
        %3206 = vmatprep.mubr.bf16.mxu0 %v2718
        %3207 = vmatmul.mubr.bf16.gmra.mrb[0].mxu0 %v2717
        %v3208 = vpop.f32.mrb[0].mxu0
        %v3209 = vadd.f32 %v3128, %v3208
        %v3210 = vpop.f32.mrb[0].mxu0
        %v3211 = vpop.f32.mrb[0].mxu0
        %v3212 = vadd.f32 %v3131, %v3211
        %v3213 = vpop.f32.mrb[0].mxu0
        %3214 = vmatprep.mubr.bf16.mxu0 %v2723
        %3215 = vmatmul.mubr.bf16.gmra.mrb[0].mxu0 %v2722
        %v3216 = vpop.f32.mrb[0].mxu0
        %v3217 = vadd.f32 %v3136, %v3216
        %v3218 = vpop.f32.mrb[0].mxu0
        %v3219 = vpop.f32.mrb[0].mxu0
        %v3220 = vadd.f32 %v3139, %v3219
        %v3221 = vpop.f32.mrb[0].mxu0
        %3222 = vmatprep.mubr.bf16.mxu0 %v2728
        %3223 = vmatmul.mubr.bf16.gmra.mrb[0].mxu0 %v2727
        %v3224 = vpop.f32.mrb[0].mxu0
        %v3225 = vadd.f32 %v3144, %v3224
        %v3226 = vpop.f32.mrb[0].mxu0
        %v3227 = vpop.f32.mrb[0].mxu0
        %v3228 = vadd.f32 %v3147, %v3227
        %v3229 = vpop.f32.mrb[0].mxu0
        %3230 = vmatprep.mubr.bf16.mxu0 %v2733
        %3231 = vmatmul.mubr.bf16.gmra.mrb[0].mxu0 %v2732
        %v3232 = vpop.f32.mrb[0].mxu0
        %v3233 = vadd.f32 %v3152, %v3232
        %v3234 = vpop.f32.mrb[0].mxu0
        %v3235 = vpop.f32.mrb[0].mxu0
        %v3236 = vadd.f32 %v3155, %v3235
        %v3237 = vpop.f32.mrb[0].mxu0
        %3238 = vmatprep.mubr.bf16.mxu0 %v2738
        %3239 = vmatmul.mubr.bf16.gmra.mrb[0].mxu0 %v2737
        %v3240 = vpop.f32.mrb[0].mxu0
        %v3241 = vadd.f32 %v3160, %v3240
        %v3242 = vpop.f32.mrb[0].mxu0
        %v3243 = vpop.f32.mrb[0].mxu0
        %v3244 = vadd.f32 %v3163, %v3243
        %v3245 = vpop.f32.mrb[0].mxu0
        %3246 = vmatprep.mubr.bf16.mxu0 %v2743
        %3247 = vmatmul.mubr.bf16.gmra.mrb[0].mxu0 %v2742
        %v3248 = vpop.f32.mrb[0].mxu0
        %v3249 = vadd.f32 %v3168, %v3248
        %v3250 = vpop.f32.mrb[0].mxu0
        %v3251 = vpop.f32.mrb[0].mxu0
        %v3252 = vadd.f32 %v3171, %v3251
        %v3253 = vpop.f32.mrb[0].mxu0
        %3254 = vdwg.mxu0
        %3255 = vmatprep.subr.bf16.mxu0 0
        %3256 = vmatpush1.bf16.msra.mxu0 %v3021
        %3257 = vmatprep.subr.bf16.mxu0 0
        %3258 = vmatpush1.bf16.msra.mxu0 %v3022
        %3259 = vmatprep.subr.bf16.mxu0 0
        %3260 = vmatpush1.bf16.msra.mxu0 %v3023
        %3261 = vmatprep.subr.bf16.mxu0 0
        %3262 = vmatpush1.bf16.msra.mxu0 %v3024
        %3263 = vmatprep.subr.bf16.mxu0 0
        %3264 = vmatpush1.bf16.msra.mxu0 %v3025
        %3265 = vmatprep.subr.bf16.mxu0 0
        %3266 = vmatpush1.bf16.msra.mxu0 %v3026
        %3267 = vmatprep.subr.bf16.mxu0 0
        %3268 = vmatpush1.bf16.msra.mxu0 %v3027
        %3269 = vmatprep.subr.bf16.mxu0 0
        %3270 = vmatpush1.bf16.msra.mxu0 %v3091
        %3271 = vmatprep.subr.bf16.mxu0 0
        %3272 = vmatpush1.bf16.msra.mxu0 0
        %3273 = vmatprep.subr.bf16.mxu0 0
        %3274 = vmatpush1.bf16.msra.mxu0 0
        %3275 = vmatprep.subr.bf16.mxu0 0
        %3276 = vmatpush1.bf16.msra.mxu0 0
        %3277 = vmatprep.subr.bf16.mxu0 0
        %3278 = vmatpush1.bf16.msra.mxu0 0
        %3279 = vmatprep.subr.bf16.mxu0 0
        %3280 = vmatpush1.bf16.msra.mxu0 0
        %3281 = vmatprep.subr.bf16.mxu0 0
        %3282 = vmatpush1.bf16.msra.mxu0 0
        %3283 = vmatprep.subr.bf16.mxu0 0
        %3284 = vmatpush1.bf16.msra.mxu0 0
        %3285 = vmatprep.subr.bf16.mxu0 0
        %3286 = vmatpush1.bf16.msra.mxu0 0
        %3287 = vmatprep.mubr.bf16.mxu0 0
        %3288 = vmatmul.mubr.bf16.gmra.mrb[0].mxu0 %v3070
        %v3289 = vpop.f32.mrb[0].mxu0
        %v3290 = vadd.f32 %v3209, %v3289
        %v3291 = vpop.f32.mrb[0].mxu0
        %v3292 = vpop.f32.mrb[0].mxu0
        %v3293 = vadd.f32 %v3212, %v3292
        %v3294 = vpop.f32.mrb[0].mxu0
        %3295 = vmatprep.mubr.bf16.mxu0 0
        %3296 = vmatmul.mubr.bf16.gmra.mrb[0].mxu0 %v3073
        %v3297 = vpop.f32.mrb[0].mxu0
        %v3298 = vadd.f32 %v3217, %v3297
        %v3299 = vpop.f32.mrb[0].mxu0
        %v3300 = vpop.f32.mrb[0].mxu0
        %v3301 = vadd.f32 %v3220, %v3300
        %v3302 = vpop.f32.mrb[0].mxu0
        %3303 = vmatprep.mubr.bf16.mxu0 0
        %3304 = vmatmul.mubr.bf16.gmra.mrb[0].mxu0 %v3076
        %v3305 = vpop.f32.mrb[0].mxu0
        %v3306 = vadd.f32 %v3225, %v3305
        %v3307 = vpop.f32.mrb[0].mxu0
        %v3308 = vpop.f32.mrb[0].mxu0
        %v3309 = vadd.f32 %v3228, %v3308
        %v3310 = vpop.f32.mrb[0].mxu0
        %3311 = vmatprep.mubr.bf16.mxu0 0
        %3312 = vmatmul.mubr.bf16.gmra.mrb[0].mxu0 %v3079
        %v3313 = vpop.f32.mrb[0].mxu0
        %v3314 = vadd.f32 %v3233, %v3313
        %v3315 = vpop.f32.mrb[0].mxu0
        %v3316 = vpop.f32.mrb[0].mxu0
        %v3317 = vadd.f32 %v3236, %v3316
        %v3318 = vpop.f32.mrb[0].mxu0
        %3319 = vmatprep.mubr.bf16.mxu0 0
        %3320 = vmatmul.mubr.bf16.gmra.mrb[0].mxu0 %v3082
        %v3321 = vpop.f32.mrb[0].mxu0
        %v3322 = vadd.f32 %v3241, %v3321
        %v3323 = vpop.f32.mrb[0].mxu0
        %v3324 = vpop.f32.mrb[0].mxu0
        %v3325 = vadd.f32 %v3244, %v3324
        %v3326 = vpop.f32.mrb[0].mxu0
        %3327 = vmatprep.mubr.bf16.mxu0 0
        %3328 = vmatmul.mubr.bf16.gmra.mrb[0].mxu0 %v3085
        %v3329 = vpop.f32.mrb[0].mxu0
        %v3330 = vadd.f32 %v3249, %v3329
        %v3331 = vpop.f32.mrb[0].mxu0
        %v3332 = vpop.f32.mrb[0].mxu0
        %v3333 = vadd.f32 %v3252, %v3332
        %v3334 = vpop.f32.mrb[0].mxu0
        %3335 = vdwg.mxu0
        %v3336 = vmax.f32 %v3290, 0.0
        %v3337 = vmax.f32 %v3293, 0.0
        %v3338 = vmax.f32 %v3298, 0.0
        %v3339 = vmax.f32 %v3301, 0.0
        %v3340 = vmax.f32 %v3306, 0.0
        %v3341 = vmax.f32 %v3309, 0.0
        %v3342 = vmax.f32 %v3314, 0.0
        %v3343 = vmax.f32 %v3317, 0.0
        %v3344 = vmax.f32 %v3322, 0.0
        %v3345 = vmax.f32 %v3325, 0.0
        %v3346 = vmax.f32 %v3330, 0.0
        %v3347 = vmax.f32 %v3333, 0.0
        %3348 = vst [vmem:[%s215] sm:$0xff] %v3336
        %3349 = vst [vmem:[%s215 + $0x8] sm:$0xff] %v3337
        %3350 = vst [vmem:[%s215 + $0x10] sm:$0xff] %v3338
        %3351 = vst [vmem:[%s215 + $0x18] sm:$0xff] %v3339
        %3352 = vst [vmem:[%s215 + $0x20] sm:$0xff] %v3340
        %3353 = vst [vmem:[%s215 + $0x28] sm:$0xff] %v3341
        %3354 = vst [vmem:[%s215 + $0x30] sm:$0xff] %v3342
        %3355 = vst [vmem:[%s215 + $0x38] sm:$0xff] %v3343
        %3356 = vst [vmem:[%s215 + $0x40] sm:$0xff] %v3344
        %3357 = vst [vmem:[%s215 + $0x48] sm:$0xff] %v3345
        %3358 = vst [vmem:[%s215 + $0x50] sm:$0xff] %v3346
        %3359 = vst [vmem:[%s215 + $0x58] sm:$0xff] %v3347
        %s3360 = sand.u32 %s97, 1
        %s3361 = scalar_lea.sflag [#allocation5], %s3360
        %s3362 = sand.u32 %s97, 1
        %s3363 = smul.addr %s3362, 96
        %s3364 = scalar_lea.vmem [#allocation9], %s3363
        // Predicated region
        $region45: #{a_call__.3} parent=31 // pred_check
          %p3365 = pneg %p107
        $region46: #{a_call__.3} parent=31 // pred_check_branch
          %3367 = sbr.rel (%p3365) target = $region48
        $region47: #{a_call__.3} parent=31 // pred_region
          %s3369 = ssub.s32 1536, 1536
          %3370 = vsyncadd %s3361, %s3369
          %s3371 = smul.addr %s21, 12
          %s3372 = smul.addr %s3371, 128
          %s3373 = scalar_lea.hbm %s3, %s3372
          %s3374 = sshll.u32 %s3364, 4
          %s3375 = int_to_ptr.vmem [resolvable:$true] %s3374
          %3380 = dma.vmem_to_hbm [thread:$0]  %s3375, 1536, %s3373, %s3361, 128, 128, 8
        $region48: #{a_call__.3} parent=31 // pred_fallthru
          _
      $region32: #{a_call__.3} parent=5 // pred_fallthru
        _
      %p3381 = scmp.le.s32.totalorder 2, %s16
      // Predicated region
      $region49: #{a_call__.3} parent=5 // pred_check
        %p3382 = pneg %p3381
      $region50: #{a_call__.3} parent=5 // pred_check_branch
        %3384 = sbr.rel (%p3382) target = $region52
      $region51: #{a_call__.3} parent=5 // pred_region
        %s3385 = ssub.s32 %s16, 2
        // Predicated region
        $region53: #{a_call__.3} parent=51 // pred_check
          %p3386 = pneg %p113
        $region54: #{a_call__.3} parent=51 // pred_check_branch
          %3388 = sbr.rel (%p3386) target = $region56
        $region55: #{a_call__.3} parent=51 // pred_region
          %s3389 = sand.u32 %s98, 1
          %s3390 = scalar_lea.sflag [#allocation5], %s3389
          %s3391 = sand.u32 %s98, 1
          %s3392 = smul.addr %s3391, 96
          %s3393 = scalar_lea.vmem [#allocation9], %s3392
          %3394 = dma.done %s3390, 1536
        $region56: #{a_call__.3} parent=51 // pred_fallthru
          _
      $region52: #{a_call__.3} parent=5 // pred_fallthru
        _
    $region6: #{a_call__.3} parent=1 // loop_footer
      %s20 = sadd.s32 1, %s16
    $region7: #{a_call__.3} parent=1 // loop_footer_branch
      %15 = sbr.rel target = $region3
    $region8: #{a_call__.3} parent=1 // loop_exit
      _
    %3395 = vsyncpa [#allocation4], 1
    %s3396 = scalar_lea.sflag [#allocation4], 1
    %3397 = vsyncpa %s3396, 1
    %3398 = vsyncpa [#allocation7], 1
    %3399 = vsyncpa [#allocation5], 1
    %s3400 = scalar_lea.sflag [#allocation5], 1
    %3401 = vsyncpa %s3400, 1

</llo_original>
